<compile_context>
chip_gen: v7x
topology: tpu7x:2x2x1
jax: 0.10.0
libtpu: 0.0.40
codegen_flags: <defaults>
</compile_context>

<pallas_src>
import functools

import jax
import jax.numpy as jnp
from jax.experimental import pallas as pl
from jax.experimental.pallas import tpu as pltpu

N_ACTIONS = 6     # q_basic = nn.Linear(emb, 6)
NA_PAD = 128      # lane padding for the q head (unmasked 128-lane stores)


def _round_up(x, m):
    return (x + m - 1) // m * m


def _layernorm(x, gamma, beta, eps=1e-5):
    mu = jnp.mean(x, axis=-1, keepdims=True)
    var = jnp.mean((x - mu) ** 2, axis=-1, keepdims=True)
    return (x - mu) * jax.lax.rsqrt(var + eps) * gamma + beta


# ----------------------------- Pallas kernel ------------------------------ #
def updet_kernel(inp_ref, hid_ref, we_ref, be_ref, wqkv_ref, wu_ref,
                 wf1_ref, bf1_ref, wf2_ref, lv_ref, wp_ref, bp_ref,
                 wqb_ref, bqb_ref, h_ref, q_ref, *, t_real):
    f32 = jnp.float32
    bf16 = jnp.bfloat16

    bb, t_pad, token_dim = inp_ref.shape           # batch block, padded tokens
    emb = we_ref.shape[1]
    depth = wqkv_ref.shape[0]
    he = wqkv_ref.shape[2] // 3                    # heads * emb
    heads = he // emb
    R = bb * t_pad
    n_q = q_ref.shape[1]
    hid_row = t_real - 1                           # row index of the hidden token

    # ---- token embedding over the whole (bb * t_pad, token_dim) row slab ----
    x_in = inp_ref[...].reshape(R, token_dim).astype(bf16)
    tok2 = jnp.dot(x_in, we_ref[...], preferred_element_type=f32) + be_ref[...]
    tok3 = tok2.reshape(bb, t_pad, emb)

    # splice hidden state into row `hid_row`  (== torch.cat((emb(inputs), h), 1))
    row = jax.lax.broadcasted_iota(jnp.int32, (t_pad, emb), 0)
    is_hid = jnp.broadcast_to((row == hid_row)[None], (bb, t_pad, emb))
    hid_b = jnp.broadcast_to(hid_ref[...], (bb, t_pad, emb))
    x2 = jnp.where(is_hid, hid_b, tok3).reshape(R, emb)          # f32 residual stream

    # key-padding bias: pad token columns (>= t_real) never receive attention weight
    col = jax.lax.broadcasted_iota(jnp.int32, (t_pad, t_pad), 1)
    key_bias = jnp.where(col < t_real, 0.0, -1e9).astype(f32)
    key_bias = jnp.broadcast_to(key_bias[None], (bb, t_pad, t_pad))

    inv_scale = 1.0 / (emb ** 0.5)   # folds the two 1/e**0.25 scalings of q and k

    for d in range(depth):                         # static unroll over depth
        lv = lv_ref[d]                             # (6, emb): [bu, g1, b1, g2, b2, bf2]
        bu, g1, b1, g2, b2, bff2 = (lv[i:i + 1, :] for i in range(6))

        # ---- fused q/k/v projection: one full-width (3*heads*emb) matmul ----
        proj2 = jnp.dot(x2.astype(bf16), wqkv_ref[d], preferred_element_type=f32)
        proj3 = proj2.reshape(bb, t_pad, 3 * he)

        outs = []
        for hh in range(heads):                    # static unroll over heads
            q_h = proj3[:, :, hh * emb:(hh + 1) * emb].astype(bf16)
            k_h = proj3[:, :, he + hh * emb:he + (hh + 1) * emb].astype(bf16)
            v_h = proj3[:, :, 2 * he + hh * emb:2 * he + (hh + 1) * emb].astype(bf16)

            scores = jnp.einsum('bte,bse->bts', q_h, k_h,
                                preferred_element_type=f32) * inv_scale
            scores = scores + key_bias
            m = jnp.max(scores, axis=-1, keepdims=True)
            e = jnp.exp(scores - m)
            denom = jnp.sum(e, axis=-1, keepdims=True)
            p = e * pl.reciprocal(denom, approx=True)            # softmax(dim=2)
            outs.append(jnp.einsum('bts,bse->bte', p.astype(bf16), v_h,
                                   preferred_element_type=f32))

        # concat heads and unify with a single full-width matmul
        o2 = jnp.concatenate(outs, axis=-1).reshape(R, he)
        attended = jnp.dot(o2.astype(bf16), wu_ref[d],
                           preferred_element_type=f32) + bu

        # ---- residual + LayerNorm 1 (dropout p=0 -> identity) ----
        x2 = _layernorm(attended + x2, g1, b1)

        # ---- feed forward: Linear -> ReLU -> Linear ----
        ff_h = jnp.dot(x2.astype(bf16), wf1_ref[d],
                       preferred_element_type=f32) + bf1_ref[d]
        ff_h = jnp.maximum(ff_h, 0.0)
        ff = jnp.dot(ff_h.astype(bf16), wf2_ref[d],
                     preferred_element_type=f32) + bff2

        # ---- residual + LayerNorm 2 ----
        x2 = _layernorm(ff + x2, g2, b2)

    # ---- toprobs projection + q_basic head (lane-padded to 128 columns) ----
    out2 = jnp.dot(x2.astype(bf16), wp_ref[...], preferred_element_type=f32) + bp_ref[...]
    q2 = jnp.dot(out2.astype(bf16), wqb_ref[...], preferred_element_type=f32) + bqb_ref[...]

    out3 = out2.reshape(bb, t_pad, emb)
    q3 = q2.reshape(bb, t_pad, q_ref.shape[2])

    # only store what the wrapper consumes: hidden row + first n_q token q-rows
    h_ref[...] = out3[:, hid_row:hid_row + 1, :]
    q_ref[...] = q3[:, :n_q, :]


# ------------------------------- wrapper ---------------------------------- #
def updet_forward(params, inputs, hidden_state, task_enemy_num=None, task_ally_num=None):
    b, n_tokens, token_dim = inputs.shape
    emb = params["we"].shape[1]
    depth = params["wk"].shape[0]
    heads = params["wk"].shape[2] // emb
    he = heads * emb
    n_act = params["wqb"].shape[1]

    t_real = n_tokens + 1                      # observation tokens + hidden token
    t_pad = _round_up(t_real, 8)

    # NOTE: mirrors the (fragile) PyTorch condition exactly.
    use_enemy = bool(task_enemy_num) and (task_ally_num is not None)
    n_q = (1 + int(task_enemy_num)) if use_enemy else 1

    # batch blocking: amortize per-step overhead; cap keeps >=2 grid steps for large b
    # so both v7x TensorCores get work.
    block_b = min(32, _round_up(b, 8))
    b_pad = _round_up(b, block_b)
    grid = (b_pad // block_b,)

    f32, bf16 = jnp.float32, jnp.bfloat16

    # pad batch and tokens with zeros (pad rows never leak into real rows)
    inp = jnp.zeros((b_pad, t_pad, token_dim), f32).at[:b, :n_tokens, :].set(
        inputs.astype(f32))
    hid = jnp.zeros((b_pad, 1, emb), f32).at[:b].set(hidden_state.astype(f32))

    # fused / packed weights
    wqkv = jnp.concatenate([params["wq"], params["wk"], params["wv"]],
                           axis=2).astype(bf16)                      # (depth, emb, 3*he)
    layer_vecs = jnp.concatenate([params["bu"], params["g1"], params["b1"],
                                  params["g2"], params["b2"], params["bf2"]],
                                 axis=1)                             # (depth, 6, emb) f32
    wqb_pad = jnp.pad(params["wqb"], ((0, 0), (0, NA_PAD - n_act))).astype(bf16)
    bqb_pad = jnp.pad(params["bqb"], ((0, 0), (0, NA_PAD - n_act)))

    args = [inp, hid,
            params["we"].astype(bf16), params["be"],
            wqkv, params["wu"].astype(bf16),
            params["wf1"].astype(bf16), params["bf1"],
            params["wf2"].astype(bf16), layer_vecs,
            params["wp"].astype(bf16), params["bp"],
            wqb_pad, bqb_pad]

    in_specs = [
        pl.BlockSpec((block_b, t_pad, token_dim), lambda i: (i, 0, 0)),   # inputs
        pl.BlockSpec((block_b, 1, emb), lambda i: (i, 0, 0)),             # hidden
        pl.BlockSpec((token_dim, emb), lambda i: (0, 0)),                 # token emb W
        pl.BlockSpec((1, emb), lambda i: (0, 0)),                         # token emb b
        pl.BlockSpec((depth, emb, 3 * he), lambda i: (0, 0, 0)),          # fused Wqkv
        pl.BlockSpec((depth, he, emb), lambda i: (0, 0, 0)),              # unifyheads W
        pl.BlockSpec((depth, emb, 4 * emb), lambda i: (0, 0, 0)),         # ff1 W
        pl.BlockSpec((depth, 1, 4 * emb), lambda i: (0, 0, 0)),           # ff1 b
        pl.BlockSpec((depth, 4 * emb, emb), lambda i: (0, 0, 0)),         # ff2 W
        pl.BlockSpec((depth, 6, emb), lambda i: (0, 0, 0)),               # packed vecs
        pl.BlockSpec((emb, emb), lambda i: (0, 0)),                       # toprobs W
        pl.BlockSpec((1, emb), lambda i: (0, 0)),                         # toprobs b
        pl.BlockSpec((emb, NA_PAD), lambda i: (0, 0)),                    # q_basic W (pad)
        pl.BlockSpec((1, NA_PAD), lambda i: (0, 0)),                      # q_basic b (pad)
    ]
    out_specs = (
        pl.BlockSpec((block_b, 1, emb), lambda i: (i, 0, 0)),             # hidden row
        pl.BlockSpec((block_b, n_q, NA_PAD), lambda i: (i, 0, 0)),        # q rows
    )
    out_shape = (jax.ShapeDtypeStruct((b_pad, 1, emb), f32),
                 jax.ShapeDtypeStruct((b_pad, n_q, NA_PAD), f32))

    h_out, q_out = pl.pallas_call(
        functools.partial(updet_kernel, t_real=t_real),
        out_shape=out_shape,
        grid=grid,
        in_specs=in_specs,
        out_specs=out_specs,
        compiler_params=pltpu.CompilerParams(dimension_semantics=("parallel",)),
    )(*args)

    q_basic_actions = q_out[:b, 0, :n_act]
    h = h_out[:b]
    if use_enemy:
        # per-enemy Q = mean over the 6 basic actions of q_basic(enemy token)
        q_enemies = jnp.mean(q_out[:b, 1:1 + int(task_enemy_num), :n_act], axis=2)
        q = jnp.concatenate([q_basic_actions, q_enemies], axis=1)
    else:
        q = q_basic_actions
    return q, h


# ------------------------ pure-JAX reference (PyTorch-style) -------------- #
def reference_forward(params, inputs, hidden_state, task_enemy_num, task_ally_num):
    b = inputs.shape[0]
    emb = params["we"].shape[1]
    depth = params["wk"].shape[0]
    heads = params["wk"].shape[2] // emb

    tok = inputs @ params["we"] + params["be"]
    x = jnp.concatenate([tok, hidden_state], axis=1)
    t = x.shape[1]
    e = emb
    for d in range(depth):
        keys = (x @ params["wk"][d]).reshape(b, t, heads, e)
        queries = (x @ params["wq"][d]).reshape(b, t, heads, e)
        values = (x @ params["wv"][d]).reshape(b, t, heads, e)
        keys = jnp.transpose(keys, (0, 2, 1, 3)).reshape(b * heads, t, e)
        queries = jnp.transpose(queries, (0, 2, 1, 3)).reshape(b * heads, t, e)
        values = jnp.transpose(values, (0, 2, 1, 3)).reshape(b * heads, t, e)
        queries = queries / e ** 0.25
        keys = keys / e ** 0.25
        dot = jnp.einsum("bte,bse->bts", queries, keys)
        dot = jax.nn.softmax(dot, axis=2)
        out = jnp.einsum("bts,bse->bte", dot, values).reshape(b, heads, t, e)
        out = jnp.transpose(out, (0, 2, 1, 3)).reshape(b, t, heads * e)
        attended = out @ params["wu"][d] + params["bu"][d]
        x = _layernorm(attended + x, params["g1"][d], params["b1"][d])
        ff = jax.nn.relu(x @ params["wf1"][d] + params["bf1"][d]) @ params["wf2"][d] + params["bf2"][d]
        x = _layernorm(ff + x, params["g2"][d], params["b2"][d])
    out = x @ params["wp"] + params["bp"]
    q_all = out @ params["wqb"] + params["bqb"]
    q_basic = q_all[:, 0, :]
    h = out[:, -1:, :]
    q_en = jnp.mean(q_all[:, 1:1 + task_enemy_num, :], axis=2)
    q = jnp.concatenate([q_basic, q_en], axis=1)
    return q, h


# ------------------------------ params ------------------------------------ #
def init_params(key, token_dim, emb, heads, depth, n_actions=N_ACTIONS):
    keys = iter(jax.random.split(key, 20))

    def w(shape, scale=0.1):
        return (scale * jax.random.normal(next(keys), shape)).astype(jnp.float32)

    return dict(
        we=w((token_dim, emb)), be=w((1, emb)),
        wk=w((depth, emb, heads * emb)),
        wq=w((depth, emb, heads * emb)),
        wv=w((depth, emb, heads * emb)),
        wu=w((depth, heads * emb, emb)), bu=w((depth, 1, emb)),
        g1=jnp.ones((depth, 1, emb), jnp.float32),
        b1=jnp.zeros((depth, 1, emb), jnp.float32),
        g2=jnp.ones((depth, 1, emb), jnp.float32),
        b2=jnp.zeros((depth, 1, emb), jnp.float32),
        wf1=w((depth, emb, 4 * emb)), bf1=w((depth, 1, 4 * emb)),
        wf2=w((depth, 4 * emb, emb)), bf2=w((depth, 1, emb)),
        wp=w((emb, emb)), bp=w((1, emb)),
        wqb=w((emb, n_actions)), bqb=w((1, n_actions)),
    )


if __name__ == "__main__":
    # args: token_dim=8, emb=32, heads=2, depth=2
    b = 2
    token_dim = 8
    n_tokens = 8          # 1 own + 3 enemy + 4 ally observation tokens
    emb = 32
    heads = 2
    depth = 2
    task_enemy_num = 3
    task_ally_num = 4

    key = jax.random.PRNGKey(0)
    kp, ki, kh = jax.random.split(key, 3)
    params = init_params(kp, token_dim, emb, heads, depth)
    inputs = jax.random.normal(ki, (b, n_tokens, token_dim), jnp.float32)
    hidden = 0.1 * jax.random.normal(kh, (b, 1, emb), jnp.float32)  # recurrent hidden token

    q, h = updet_forward(params, inputs, hidden, task_enemy_num, task_ally_num)
    q = jax.block_until_ready(q)
    h = jax.block_until_ready(h)

    with jax.default_matmul_precision("highest"):
        q_ref, h_ref = reference_forward(params, inputs, hidden, task_enemy_num, task_ally_num)

    assert q.shape == (b, N_ACTIONS + task_enemy_num), q.shape
    assert h.shape == (b, 1, emb), h.shape
    # tolerance widened slightly vs the pure-f32 kernel: matmul operands are bf16 now
    ok = (jnp.allclose(q, q_ref, atol=3e-2, rtol=3e-2)
          and jnp.allclose(h, h_ref, atol=3e-2, rtol=3e-2))
    if ok:
        print("KERNEL_OK")
    else:
        print("MISMATCH",
              float(jnp.max(jnp.abs(q - q_ref))),
              float(jnp.max(jnp.abs(h - h_ref))))
</pallas_src>

<mosaic_0001>
module attributes {stable_mosaic.version = 11 : i64} {
  func.func @updet_kernel(%arg0: i32, %arg1: memref<8x16x8xf32, #tpu.memory_space<vmem>>, %arg2: memref<8x1x32xf32, #tpu.memory_space<vmem>>, %arg3: memref<8x32xbf16, #tpu.memory_space<vmem>>, %arg4: memref<1x32xf32, #tpu.memory_space<vmem>>, %arg5: memref<2x32x192xbf16, #tpu.memory_space<vmem>>, %arg6: memref<2x64x32xbf16, #tpu.memory_space<vmem>>, %arg7: memref<2x32x128xbf16, #tpu.memory_space<vmem>>, %arg8: memref<2x1x128xf32, #tpu.memory_space<vmem>>, %arg9: memref<2x128x32xbf16, #tpu.memory_space<vmem>>, %arg10: memref<2x6x32xf32, #tpu.memory_space<vmem>>, %arg11: memref<32x32xbf16, #tpu.memory_space<vmem>>, %arg12: memref<1x32xf32, #tpu.memory_space<vmem>>, %arg13: memref<32x128xbf16, #tpu.memory_space<vmem>>, %arg14: memref<1x128xf32, #tpu.memory_space<vmem>>, %arg15: memref<8x1x32xf32, #tpu.memory_space<vmem>>, %arg16: memref<8x4x128xf32, #tpu.memory_space<vmem>>) attributes {dimension_semantics = [#tpu.dimension_semantics<parallel>], iteration_bounds = array<i64: 1>, scalar_prefetch = 0 : i64, scratch_operands = 0 : i64, tpu.core_type = #tpu.core_type<tc>, window_params = [{transform_indices = @transform_0, window_bounds = array<i64: 8, 16, 8>}, {transform_indices = @transform_1, window_bounds = array<i64: 8, 1, 32>}, {pipeline_mode = #tpu.pipeline_mode<synchronous>, transform_indices = @transform_2, window_bounds = array<i64: 8, 32>}, {pipeline_mode = #tpu.pipeline_mode<synchronous>, transform_indices = @transform_3, window_bounds = array<i64: 1, 32>}, {pipeline_mode = #tpu.pipeline_mode<synchronous>, transform_indices = @transform_4, window_bounds = array<i64: 2, 32, 192>}, {pipeline_mode = #tpu.pipeline_mode<synchronous>, transform_indices = @transform_5, window_bounds = array<i64: 2, 64, 32>}, {pipeline_mode = #tpu.pipeline_mode<synchronous>, transform_indices = @transform_6, window_bounds = array<i64: 2, 32, 128>}, {pipeline_mode = #tpu.pipeline_mode<synchronous>, transform_indices = @transform_7, window_bounds = array<i64: 2, 1, 128>}, {pipeline_mode = #tpu.pipeline_mode<synchronous>, transform_indices = @transform_8, window_bounds = array<i64: 2, 128, 32>}, {pipeline_mode = #tpu.pipeline_mode<synchronous>, transform_indices = @transform_9, window_bounds = array<i64: 2, 6, 32>}, {pipeline_mode = #tpu.pipeline_mode<synchronous>, transform_indices = @transform_10, window_bounds = array<i64: 32, 32>}, {pipeline_mode = #tpu.pipeline_mode<synchronous>, transform_indices = @transform_11, window_bounds = array<i64: 1, 32>}, {pipeline_mode = #tpu.pipeline_mode<synchronous>, transform_indices = @transform_12, window_bounds = array<i64: 32, 128>}, {pipeline_mode = #tpu.pipeline_mode<synchronous>, transform_indices = @transform_13, window_bounds = array<i64: 1, 128>}, {transform_indices = @transform_14, window_bounds = array<i64: 8, 1, 32>}, {transform_indices = @transform_15, window_bounds = array<i64: 8, 4, 128>}]} {
    %c0 = arith.constant 0 : index
    %c0_0 = arith.constant 0 : index
    %c0_1 = arith.constant 0 : index
    %0 = vector.load %arg1[%c0, %c0_0, %c0_1] : memref<8x16x8xf32, #tpu.memory_space<vmem>>, vector<8x16x8xf32>
    %1 = vector.shape_cast %0 : vector<8x16x8xf32> to vector<128x8xf32>
    %2 = arith.truncf %1 : vector<128x8xf32> to vector<128x8xbf16>
    %c0_2 = arith.constant 0 : index
    %c0_3 = arith.constant 0 : index
    %3 = vector.load %arg3[%c0_2, %c0_3] : memref<8x32xbf16, #tpu.memory_space<vmem>>, vector<8x32xbf16>
    %cst = arith.constant dense<0.000000e+00> : vector<128x32xf32>
    %4 = tpu.matmul %2, %3, %cst {dimension_numbers = #tpu.dot_dimension_numbers<[1], [0], [0], [1], [0, 0, 1, 1], [], []>} : vector<128x8xbf16>, vector<8x32xbf16>, vector<128x32xf32> -> vector<128x32xf32>
    %c0_4 = arith.constant 0 : index
    %c0_5 = arith.constant 0 : index
    %5 = vector.load %arg4[%c0_4, %c0_5] : memref<1x32xf32, #tpu.memory_space<vmem>>, vector<1x32xf32>
    %6 = vector.broadcast %5 : vector<1x32xf32> to vector<128x32xf32>
    %7 = arith.addf %4, %6 : vector<128x32xf32>
    %8 = vector.shape_cast %7 : vector<128x32xf32> to vector<8x16x32xf32>
    %9 = tpu.iota {dimensions = array<i32: 0>} : vector<16x32xi32>
    %c8_i32 = arith.constant 8 : i32
    %10 = vector.broadcast %c8_i32 : i32 to vector<16x32xi32>
    %11 = arith.cmpi eq, %9, %10 : vector<16x32xi32>
    %12 = vector.shape_cast %11 : vector<16x32xi1> to vector<1x16x32xi1>
    %13 = vector.shape_cast %12 : vector<1x16x32xi1> to vector<1x16x32xi1>
    %14 = vector.broadcast %13 : vector<1x16x32xi1> to vector<8x16x32xi1>
    %c0_6 = arith.constant 0 : index
    %c0_7 = arith.constant 0 : index
    %c0_8 = arith.constant 0 : index
    %15 = vector.load %arg2[%c0_6, %c0_7, %c0_8] : memref<8x1x32xf32, #tpu.memory_space<vmem>>, vector<8x1x32xf32>
    %16 = vector.shape_cast %15 : vector<8x1x32xf32> to vector<8x1x32xf32>
    %17 = vector.broadcast %16 : vector<8x1x32xf32> to vector<8x16x32xf32>
    %18 = arith.select %14, %17, %8 : vector<8x16x32xi1>, vector<8x16x32xf32>
    %19 = vector.shape_cast %18 : vector<8x16x32xf32> to vector<128x32xf32>
    %20 = tpu.iota {dimensions = array<i32: 1>} : vector<16x16xi32>
    %c9_i32 = arith.constant 9 : i32
    %21 = vector.broadcast %c9_i32 : i32 to vector<16x16xi32>
    %22 = arith.cmpi slt, %20, %21 : vector<16x16xi32>
    %cst_9 = arith.constant 0.000000e+00 : f32
    %cst_10 = arith.constant -1.000000e+09 : f32
    %23 = vector.broadcast %cst_9 : f32 to vector<16x16xf32>
    %24 = vector.broadcast %cst_10 : f32 to vector<16x16xf32>
    %25 = arith.select %22, %23, %24 : vector<16x16xi1>, vector<16x16xf32>
    %26 = vector.shape_cast %25 : vector<16x16xf32> to vector<1x16x16xf32>
    %27 = vector.shape_cast %26 : vector<1x16x16xf32> to vector<1x16x16xf32>
    %28 = vector.broadcast %27 : vector<1x16x16xf32> to vector<8x16x16xf32>
    %c0_11 = arith.constant 0 : index
    %c0_12 = arith.constant 0 : index
    %c0_13 = arith.constant 0 : index
    %29 = vector.load %arg10[%c0_11, %c0_12, %c0_13] : memref<2x6x32xf32, #tpu.memory_space<vmem>>, vector<1x6x32xf32>
    %30 = vector.shape_cast %29 : vector<1x6x32xf32> to vector<6x32xf32>
    %31 = vector.extract_strided_slice %30 {offsets = [0, 0], sizes = [1, 32], strides = [1, 1]} : vector<6x32xf32> to vector<1x32xf32>
    %32 = vector.extract_strided_slice %30 {offsets = [1, 0], sizes = [1, 32], strides = [1, 1]} : vector<6x32xf32> to vector<1x32xf32>
    %33 = vector.extract_strided_slice %30 {offsets = [2, 0], sizes = [1, 32], strides = [1, 1]} : vector<6x32xf32> to vector<1x32xf32>
    %34 = vector.extract_strided_slice %30 {offsets = [3, 0], sizes = [1, 32], strides = [1, 1]} : vector<6x32xf32> to vector<1x32xf32>
    %35 = vector.extract_strided_slice %30 {offsets = [4, 0], sizes = [1, 32], strides = [1, 1]} : vector<6x32xf32> to vector<1x32xf32>
    %36 = vector.extract_strided_slice %30 {offsets = [5, 0], sizes = [1, 32], strides = [1, 1]} : vector<6x32xf32> to vector<1x32xf32>
    %37 = arith.truncf %19 : vector<128x32xf32> to vector<128x32xbf16>
    %c0_14 = arith.constant 0 : index
    %c0_15 = arith.constant 0 : index
    %c0_16 = arith.constant 0 : index
    %38 = vector.load %arg5[%c0_14, %c0_15, %c0_16] : memref<2x32x192xbf16, #tpu.memory_space<vmem>>, vector<1x32x192xbf16>
    %39 = vector.shape_cast %38 : vector<1x32x192xbf16> to vector<32x192xbf16>
    %cst_17 = arith.constant dense<0.000000e+00> : vector<128x192xf32>
    %40 = tpu.matmul %37, %39, %cst_17 {dimension_numbers = #tpu.dot_dimension_numbers<[1], [0], [0], [1], [0, 0, 1, 1], [], []>} : vector<128x32xbf16>, vector<32x192xbf16>, vector<128x192xf32> -> vector<128x192xf32>
    %41 = vector.shape_cast %40 : vector<128x192xf32> to vector<8x16x192xf32>
    %42 = vector.extract_strided_slice %41 {offsets = [0, 0, 0], sizes = [8, 16, 32], strides = [1, 1, 1]} : vector<8x16x192xf32> to vector<8x16x32xf32>
    %43 = arith.truncf %42 : vector<8x16x32xf32> to vector<8x16x32xbf16>
    %44 = vector.extract_strided_slice %41 {offsets = [0, 0, 64], sizes = [8, 16, 32], strides = [1, 1, 1]} : vector<8x16x192xf32> to vector<8x16x32xf32>
    %45 = arith.truncf %44 : vector<8x16x32xf32> to vector<8x16x32xbf16>
    %46 = vector.extract_strided_slice %41 {offsets = [0, 0, 128], sizes = [8, 16, 32], strides = [1, 1, 1]} : vector<8x16x192xf32> to vector<8x16x32xf32>
    %47 = arith.truncf %46 : vector<8x16x32xf32> to vector<8x16x32xbf16>
    "tpu.trace_start"() <{level = 10 : i32, message = "bte,bse->bts"}> : () -> ()
    %cst_18 = arith.constant dense<0.000000e+00> : vector<8x16x16xf32>
    %48 = tpu.matmul %43, %45, %cst_18 {dimension_numbers = #tpu.dot_dimension_numbers<[2], [2], [1], [1], [0, 0, 0, 1, 1, 1], [0], [0]>} : vector<8x16x32xbf16>, vector<8x16x32xbf16>, vector<8x16x16xf32> -> vector<8x16x16xf32>
    "tpu.trace_stop"() : () -> ()
    %cst_19 = arith.constant 0.176776692 : f32
    %49 = vector.broadcast %cst_19 : f32 to vector<8x16x16xf32>
    %50 = arith.mulf %48, %49 : vector<8x16x16xf32>
    %51 = arith.addf %50, %28 : vector<8x16x16xf32>
    %cst_20 = arith.constant dense<0xFF800000> : vector<8x16xf32>
    %52 = vector.multi_reduction <maximumf>, %51, %cst_20 [2] : vector<8x16x16xf32> to vector<8x16xf32>
    %53 = vector.shape_cast %52 : vector<8x16xf32> to vector<8x16x1xf32>
    %54 = vector.broadcast %53 : vector<8x16x1xf32> to vector<8x16x16xf32>
    %55 = arith.subf %51, %54 : vector<8x16x16xf32>
    %56 = math.exp %55 : vector<8x16x16xf32>
    %cst_21 = arith.constant dense<0.000000e+00> : vector<8x16xf32>
    %57 = vector.multi_reduction <add>, %56, %cst_21 [2] : vector<8x16x16xf32> to vector<8x16xf32>
    %58 = vector.shape_cast %57 : vector<8x16xf32> to vector<8x16x1xf32>
    %59 = tpu.reciprocal %58 {approx = true} : vector<8x16x1xf32> -> vector<8x16x1xf32>
    %60 = vector.broadcast %59 : vector<8x16x1xf32> to vector<8x16x16xf32>
    %61 = arith.mulf %56, %60 : vector<8x16x16xf32>
    %62 = arith.truncf %61 : vector<8x16x16xf32> to vector<8x16x16xbf16>
    "tpu.trace_start"() <{level = 10 : i32, message = "bts,bse->bte"}> : () -> ()
    %cst_22 = arith.constant dense<0.000000e+00> : vector<8x16x32xf32>
    %63 = tpu.matmul %62, %47, %cst_22 {dimension_numbers = #tpu.dot_dimension_numbers<[2], [1], [1], [2], [0, 0, 0, 1, 1, 2], [0], [0]>} : vector<8x16x16xbf16>, vector<8x16x32xbf16>, vector<8x16x32xf32> -> vector<8x16x32xf32>
    "tpu.trace_stop"() : () -> ()
    %64 = vector.extract_strided_slice %41 {offsets = [0, 0, 32], sizes = [8, 16, 32], strides = [1, 1, 1]} : vector<8x16x192xf32> to vector<8x16x32xf32>
    %65 = arith.truncf %64 : vector<8x16x32xf32> to vector<8x16x32xbf16>
    %66 = vector.extract_strided_slice %41 {offsets = [0, 0, 96], sizes = [8, 16, 32], strides = [1, 1, 1]} : vector<8x16x192xf32> to vector<8x16x32xf32>
    %67 = arith.truncf %66 : vector<8x16x32xf32> to vector<8x16x32xbf16>
    %68 = vector.extract_strided_slice %41 {offsets = [0, 0, 160], sizes = [8, 16, 32], strides = [1, 1, 1]} : vector<8x16x192xf32> to vector<8x16x32xf32>
    %69 = arith.truncf %68 : vector<8x16x32xf32> to vector<8x16x32xbf16>
    "tpu.trace_start"() <{level = 10 : i32, message = "bte,bse->bts"}> : () -> ()
    %cst_23 = arith.constant dense<0.000000e+00> : vector<8x16x16xf32>
    %70 = tpu.matmul %65, %67, %cst_23 {dimension_numbers = #tpu.dot_dimension_numbers<[2], [2], [1], [1], [0, 0, 0, 1, 1, 1], [0], [0]>} : vector<8x16x32xbf16>, vector<8x16x32xbf16>, vector<8x16x16xf32> -> vector<8x16x16xf32>
    "tpu.trace_stop"() : () -> ()
    %cst_24 = arith.constant 0.176776692 : f32
    %71 = vector.broadcast %cst_24 : f32 to vector<8x16x16xf32>
    %72 = arith.mulf %70, %71 : vector<8x16x16xf32>
    %73 = arith.addf %72, %28 : vector<8x16x16xf32>
    %cst_25 = arith.constant dense<0xFF800000> : vector<8x16xf32>
    %74 = vector.multi_reduction <maximumf>, %73, %cst_25 [2] : vector<8x16x16xf32> to vector<8x16xf32>
    %75 = vector.shape_cast %74 : vector<8x16xf32> to vector<8x16x1xf32>
    %76 = vector.broadcast %75 : vector<8x16x1xf32> to vector<8x16x16xf32>
    %77 = arith.subf %73, %76 : vector<8x16x16xf32>
    %78 = math.exp %77 : vector<8x16x16xf32>
    %cst_26 = arith.constant dense<0.000000e+00> : vector<8x16xf32>
    %79 = vector.multi_reduction <add>, %78, %cst_26 [2] : vector<8x16x16xf32> to vector<8x16xf32>
    %80 = vector.shape_cast %79 : vector<8x16xf32> to vector<8x16x1xf32>
    %81 = tpu.reciprocal %80 {approx = true} : vector<8x16x1xf32> -> vector<8x16x1xf32>
    %82 = vector.broadcast %81 : vector<8x16x1xf32> to vector<8x16x16xf32>
    %83 = arith.mulf %78, %82 : vector<8x16x16xf32>
    %84 = arith.truncf %83 : vector<8x16x16xf32> to vector<8x16x16xbf16>
    "tpu.trace_start"() <{level = 10 : i32, message = "bts,bse->bte"}> : () -> ()
    %cst_27 = arith.constant dense<0.000000e+00> : vector<8x16x32xf32>
    %85 = tpu.matmul %84, %69, %cst_27 {dimension_numbers = #tpu.dot_dimension_numbers<[2], [1], [1], [2], [0, 0, 0, 1, 1, 2], [0], [0]>} : vector<8x16x16xbf16>, vector<8x16x32xbf16>, vector<8x16x32xf32> -> vector<8x16x32xf32>
    "tpu.trace_stop"() : () -> ()
    %86 = tpu.concatenate %63, %85 in 2 : vector<8x16x32xf32>, vector<8x16x32xf32> -> vector<8x16x64xf32>
    %87 = vector.shape_cast %86 : vector<8x16x64xf32> to vector<128x64xf32>
    %88 = arith.truncf %87 : vector<128x64xf32> to vector<128x64xbf16>
    %c0_28 = arith.constant 0 : index
    %c0_29 = arith.constant 0 : index
    %c0_30 = arith.constant 0 : index
    %89 = vector.load %arg6[%c0_28, %c0_29, %c0_30] : memref<2x64x32xbf16, #tpu.memory_space<vmem>>, vector<1x64x32xbf16>
    %90 = vector.shape_cast %89 : vector<1x64x32xbf16> to vector<64x32xbf16>
    %cst_31 = arith.constant dense<0.000000e+00> : vector<128x32xf32>
    %91 = tpu.matmul %88, %90, %cst_31 {dimension_numbers = #tpu.dot_dimension_numbers<[1], [0], [0], [1], [0, 0, 1, 1], [], []>} : vector<128x64xbf16>, vector<64x32xbf16>, vector<128x32xf32> -> vector<128x32xf32>
    %92 = vector.broadcast %31 : vector<1x32xf32> to vector<128x32xf32>
    %93 = arith.addf %91, %92 : vector<128x32xf32>
    %94 = arith.addf %93, %19 : vector<128x32xf32>
    %cst_32 = arith.constant dense<0.000000e+00> : vector<128xf32>
    %95 = vector.multi_reduction <add>, %94, %cst_32 [1] : vector<128x32xf32> to vector<128xf32>
    %96 = vector.shape_cast %95 : vector<128xf32> to vector<128x1xf32>
    %cst_33 = arith.constant 3.200000e+01 : f32
    %97 = vector.broadcast %cst_33 : f32 to vector<128x1xf32>
    %98 = arith.divf %96, %97 : vector<128x1xf32>
    %99 = vector.broadcast %98 : vector<128x1xf32> to vector<128x32xf32>
    %100 = arith.subf %94, %99 : vector<128x32xf32>
    %101 = arith.mulf %100, %100 : vector<128x32xf32>
    %cst_34 = arith.constant dense<0.000000e+00> : vector<128xf32>
    %102 = vector.multi_reduction <add>, %101, %cst_34 [1] : vector<128x32xf32> to vector<128xf32>
    %103 = vector.shape_cast %102 : vector<128xf32> to vector<128x1xf32>
    %cst_35 = arith.constant 3.200000e+01 : f32
    %104 = vector.broadcast %cst_35 : f32 to vector<128x1xf32>
    %105 = arith.divf %103, %104 : vector<128x1xf32>
    %106 = vector.broadcast %98 : vector<128x1xf32> to vector<128x32xf32>
    %107 = arith.subf %94, %106 : vector<128x32xf32>
    %cst_36 = arith.constant 9.99999974E-6 : f32
    %108 = vector.broadcast %cst_36 : f32 to vector<128x1xf32>
    %109 = arith.addf %105, %108 : vector<128x1xf32>
    %110 = math.rsqrt %109 : vector<128x1xf32>
    %111 = vector.broadcast %110 : vector<128x1xf32> to vector<128x32xf32>
    %112 = arith.mulf %107, %111 : vector<128x32xf32>
    %113 = vector.broadcast %32 : vector<1x32xf32> to vector<128x32xf32>
    %114 = arith.mulf %112, %113 : vector<128x32xf32>
    %115 = vector.broadcast %33 : vector<1x32xf32> to vector<128x32xf32>
    %116 = arith.addf %114, %115 : vector<128x32xf32>
    %117 = arith.truncf %116 : vector<128x32xf32> to vector<128x32xbf16>
    %c0_37 = arith.constant 0 : index
    %c0_38 = arith.constant 0 : index
    %c0_39 = arith.constant 0 : index
    %118 = vector.load %arg7[%c0_37, %c0_38, %c0_39] : memref<2x32x128xbf16, #tpu.memory_space<vmem>>, vector<1x32x128xbf16>
    %119 = vector.shape_cast %118 : vector<1x32x128xbf16> to vector<32x128xbf16>
    %cst_40 = arith.constant dense<0.000000e+00> : vector<128x128xf32>
    %120 = tpu.matmul %117, %119, %cst_40 {dimension_numbers = #tpu.dot_dimension_numbers<[1], [0], [0], [1], [0, 0, 1, 1], [], []>} : vector<128x32xbf16>, vector<32x128xbf16>, vector<128x128xf32> -> vector<128x128xf32>
    %c0_41 = arith.constant 0 : index
    %c0_42 = arith.constant 0 : index
    %c0_43 = arith.constant 0 : index
    %121 = vector.load %arg8[%c0_41, %c0_42, %c0_43] : memref<2x1x128xf32, #tpu.memory_space<vmem>>, vector<1x1x128xf32>
    %122 = vector.shape_cast %121 : vector<1x1x128xf32> to vector<1x128xf32>
    %123 = vector.broadcast %122 : vector<1x128xf32> to vector<128x128xf32>
    %124 = arith.addf %120, %123 : vector<128x128xf32>
    %cst_44 = arith.constant 0.000000e+00 : f32
    %125 = vector.broadcast %cst_44 : f32 to vector<128x128xf32>
    %126 = arith.maximumf %124, %125 : vector<128x128xf32>
    %127 = arith.truncf %126 : vector<128x128xf32> to vector<128x128xbf16>
    %c0_45 = arith.constant 0 : index
    %c0_46 = arith.constant 0 : index
    %c0_47 = arith.constant 0 : index
    %128 = vector.load %arg9[%c0_45, %c0_46, %c0_47] : memref<2x128x32xbf16, #tpu.memory_space<vmem>>, vector<1x128x32xbf16>
    %129 = vector.shape_cast %128 : vector<1x128x32xbf16> to vector<128x32xbf16>
    %cst_48 = arith.constant dense<0.000000e+00> : vector<128x32xf32>
    %130 = tpu.matmul %127, %129, %cst_48 {dimension_numbers = #tpu.dot_dimension_numbers<[1], [0], [0], [1], [0, 0, 1, 1], [], []>} : vector<128x128xbf16>, vector<128x32xbf16>, vector<128x32xf32> -> vector<128x32xf32>
    %131 = vector.broadcast %36 : vector<1x32xf32> to vector<128x32xf32>
    %132 = arith.addf %130, %131 : vector<128x32xf32>
    %133 = arith.addf %132, %116 : vector<128x32xf32>
    %cst_49 = arith.constant dense<0.000000e+00> : vector<128xf32>
    %134 = vector.multi_reduction <add>, %133, %cst_49 [1] : vector<128x32xf32> to vector<128xf32>
    %135 = vector.shape_cast %134 : vector<128xf32> to vector<128x1xf32>
    %cst_50 = arith.constant 3.200000e+01 : f32
    %136 = vector.broadcast %cst_50 : f32 to vector<128x1xf32>
    %137 = arith.divf %135, %136 : vector<128x1xf32>
    %138 = vector.broadcast %137 : vector<128x1xf32> to vector<128x32xf32>
    %139 = arith.subf %133, %138 : vector<128x32xf32>
    %140 = arith.mulf %139, %139 : vector<128x32xf32>
    %cst_51 = arith.constant dense<0.000000e+00> : vector<128xf32>
    %141 = vector.multi_reduction <add>, %140, %cst_51 [1] : vector<128x32xf32> to vector<128xf32>
    %142 = vector.shape_cast %141 : vector<128xf32> to vector<128x1xf32>
    %cst_52 = arith.constant 3.200000e+01 : f32
    %143 = vector.broadcast %cst_52 : f32 to vector<128x1xf32>
    %144 = arith.divf %142, %143 : vector<128x1xf32>
    %145 = vector.broadcast %137 : vector<128x1xf32> to vector<128x32xf32>
    %146 = arith.subf %133, %145 : vector<128x32xf32>
    %cst_53 = arith.constant 9.99999974E-6 : f32
    %147 = vector.broadcast %cst_53 : f32 to vector<128x1xf32>
    %148 = arith.addf %144, %147 : vector<128x1xf32>
    %149 = math.rsqrt %148 : vector<128x1xf32>
    %150 = vector.broadcast %149 : vector<128x1xf32> to vector<128x32xf32>
    %151 = arith.mulf %146, %150 : vector<128x32xf32>
    %152 = vector.broadcast %34 : vector<1x32xf32> to vector<128x32xf32>
    %153 = arith.mulf %151, %152 : vector<128x32xf32>
    %154 = vector.broadcast %35 : vector<1x32xf32> to vector<128x32xf32>
    %155 = arith.addf %153, %154 : vector<128x32xf32>
    %c1 = arith.constant 1 : index
    %c0_54 = arith.constant 0 : index
    %c0_55 = arith.constant 0 : index
    %156 = vector.load %arg10[%c1, %c0_54, %c0_55] : memref<2x6x32xf32, #tpu.memory_space<vmem>>, vector<1x6x32xf32>
    %157 = vector.shape_cast %156 : vector<1x6x32xf32> to vector<6x32xf32>
    %158 = vector.extract_strided_slice %157 {offsets = [0, 0], sizes = [1, 32], strides = [1, 1]} : vector<6x32xf32> to vector<1x32xf32>
    %159 = vector.extract_strided_slice %157 {offsets = [1, 0], sizes = [1, 32], strides = [1, 1]} : vector<6x32xf32> to vector<1x32xf32>
    %160 = vector.extract_strided_slice %157 {offsets = [2, 0], sizes = [1, 32], strides = [1, 1]} : vector<6x32xf32> to vector<1x32xf32>
    %161 = vector.extract_strided_slice %157 {offsets = [3, 0], sizes = [1, 32], strides = [1, 1]} : vector<6x32xf32> to vector<1x32xf32>
    %162 = vector.extract_strided_slice %157 {offsets = [4, 0], sizes = [1, 32], strides = [1, 1]} : vector<6x32xf32> to vector<1x32xf32>
    %163 = vector.extract_strided_slice %157 {offsets = [5, 0], sizes = [1, 32], strides = [1, 1]} : vector<6x32xf32> to vector<1x32xf32>
    %164 = arith.truncf %155 : vector<128x32xf32> to vector<128x32xbf16>
    %c1_56 = arith.constant 1 : index
    %c0_57 = arith.constant 0 : index
    %c0_58 = arith.constant 0 : index
    %165 = vector.load %arg5[%c1_56, %c0_57, %c0_58] : memref<2x32x192xbf16, #tpu.memory_space<vmem>>, vector<1x32x192xbf16>
    %166 = vector.shape_cast %165 : vector<1x32x192xbf16> to vector<32x192xbf16>
    %cst_59 = arith.constant dense<0.000000e+00> : vector<128x192xf32>
    %167 = tpu.matmul %164, %166, %cst_59 {dimension_numbers = #tpu.dot_dimension_numbers<[1], [0], [0], [1], [0, 0, 1, 1], [], []>} : vector<128x32xbf16>, vector<32x192xbf16>, vector<128x192xf32> -> vector<128x192xf32>
    %168 = vector.shape_cast %167 : vector<128x192xf32> to vector<8x16x192xf32>
    %169 = vector.extract_strided_slice %168 {offsets = [0, 0, 0], sizes = [8, 16, 32], strides = [1, 1, 1]} : vector<8x16x192xf32> to vector<8x16x32xf32>
    %170 = arith.truncf %169 : vector<8x16x32xf32> to vector<8x16x32xbf16>
    %171 = vector.extract_strided_slice %168 {offsets = [0, 0, 64], sizes = [8, 16, 32], strides = [1, 1, 1]} : vector<8x16x192xf32> to vector<8x16x32xf32>
    %172 = arith.truncf %171 : vector<8x16x32xf32> to vector<8x16x32xbf16>
    %173 = vector.extract_strided_slice %168 {offsets = [0, 0, 128], sizes = [8, 16, 32], strides = [1, 1, 1]} : vector<8x16x192xf32> to vector<8x16x32xf32>
    %174 = arith.truncf %173 : vector<8x16x32xf32> to vector<8x16x32xbf16>
    "tpu.trace_start"() <{level = 10 : i32, message = "bte,bse->bts"}> : () -> ()
    %cst_60 = arith.constant dense<0.000000e+00> : vector<8x16x16xf32>
    %175 = tpu.matmul %170, %172, %cst_60 {dimension_numbers = #tpu.dot_dimension_numbers<[2], [2], [1], [1], [0, 0, 0, 1, 1, 1], [0], [0]>} : vector<8x16x32xbf16>, vector<8x16x32xbf16>, vector<8x16x16xf32> -> vector<8x16x16xf32>
    "tpu.trace_stop"() : () -> ()
    %cst_61 = arith.constant 0.176776692 : f32
    %176 = vector.broadcast %cst_61 : f32 to vector<8x16x16xf32>
    %177 = arith.mulf %175, %176 : vector<8x16x16xf32>
    %178 = arith.addf %177, %28 : vector<8x16x16xf32>
    %cst_62 = arith.constant dense<0xFF800000> : vector<8x16xf32>
    %179 = vector.multi_reduction <maximumf>, %178, %cst_62 [2] : vector<8x16x16xf32> to vector<8x16xf32>
    %180 = vector.shape_cast %179 : vector<8x16xf32> to vector<8x16x1xf32>
    %181 = vector.broadcast %180 : vector<8x16x1xf32> to vector<8x16x16xf32>
    %182 = arith.subf %178, %181 : vector<8x16x16xf32>
    %183 = math.exp %182 : vector<8x16x16xf32>
    %cst_63 = arith.constant dense<0.000000e+00> : vector<8x16xf32>
    %184 = vector.multi_reduction <add>, %183, %cst_63 [2] : vector<8x16x16xf32> to vector<8x16xf32>
    %185 = vector.shape_cast %184 : vector<8x16xf32> to vector<8x16x1xf32>
    %186 = tpu.reciprocal %185 {approx = true} : vector<8x16x1xf32> -> vector<8x16x1xf32>
    %187 = vector.broadcast %186 : vector<8x16x1xf32> to vector<8x16x16xf32>
    %188 = arith.mulf %183, %187 : vector<8x16x16xf32>
    %189 = arith.truncf %188 : vector<8x16x16xf32> to vector<8x16x16xbf16>
    "tpu.trace_start"() <{level = 10 : i32, message = "bts,bse->bte"}> : () -> ()
    %cst_64 = arith.constant dense<0.000000e+00> : vector<8x16x32xf32>
    %190 = tpu.matmul %189, %174, %cst_64 {dimension_numbers = #tpu.dot_dimension_numbers<[2], [1], [1], [2], [0, 0, 0, 1, 1, 2], [0], [0]>} : vector<8x16x16xbf16>, vector<8x16x32xbf16>, vector<8x16x32xf32> -> vector<8x16x32xf32>
    "tpu.trace_stop"() : () -> ()
    %191 = vector.extract_strided_slice %168 {offsets = [0, 0, 32], sizes = [8, 16, 32], strides = [1, 1, 1]} : vector<8x16x192xf32> to vector<8x16x32xf32>
    %192 = arith.truncf %191 : vector<8x16x32xf32> to vector<8x16x32xbf16>
    %193 = vector.extract_strided_slice %168 {offsets = [0, 0, 96], sizes = [8, 16, 32], strides = [1, 1, 1]} : vector<8x16x192xf32> to vector<8x16x32xf32>
    %194 = arith.truncf %193 : vector<8x16x32xf32> to vector<8x16x32xbf16>
    %195 = vector.extract_strided_slice %168 {offsets = [0, 0, 160], sizes = [8, 16, 32], strides = [1, 1, 1]} : vector<8x16x192xf32> to vector<8x16x32xf32>
    %196 = arith.truncf %195 : vector<8x16x32xf32> to vector<8x16x32xbf16>
    "tpu.trace_start"() <{level = 10 : i32, message = "bte,bse->bts"}> : () -> ()
    %cst_65 = arith.constant dense<0.000000e+00> : vector<8x16x16xf32>
    %197 = tpu.matmul %192, %194, %cst_65 {dimension_numbers = #tpu.dot_dimension_numbers<[2], [2], [1], [1], [0, 0, 0, 1, 1, 1], [0], [0]>} : vector<8x16x32xbf16>, vector<8x16x32xbf16>, vector<8x16x16xf32> -> vector<8x16x16xf32>
    "tpu.trace_stop"() : () -> ()
    %cst_66 = arith.constant 0.176776692 : f32
    %198 = vector.broadcast %cst_66 : f32 to vector<8x16x16xf32>
    %199 = arith.mulf %197, %198 : vector<8x16x16xf32>
    %200 = arith.addf %199, %28 : vector<8x16x16xf32>
    %cst_67 = arith.constant dense<0xFF800000> : vector<8x16xf32>
    %201 = vector.multi_reduction <maximumf>, %200, %cst_67 [2] : vector<8x16x16xf32> to vector<8x16xf32>
    %202 = vector.shape_cast %201 : vector<8x16xf32> to vector<8x16x1xf32>
    %203 = vector.broadcast %202 : vector<8x16x1xf32> to vector<8x16x16xf32>
    %204 = arith.subf %200, %203 : vector<8x16x16xf32>
    %205 = math.exp %204 : vector<8x16x16xf32>
    %cst_68 = arith.constant dense<0.000000e+00> : vector<8x16xf32>
    %206 = vector.multi_reduction <add>, %205, %cst_68 [2] : vector<8x16x16xf32> to vector<8x16xf32>
    %207 = vector.shape_cast %206 : vector<8x16xf32> to vector<8x16x1xf32>
    %208 = tpu.reciprocal %207 {approx = true} : vector<8x16x1xf32> -> vector<8x16x1xf32>
    %209 = vector.broadcast %208 : vector<8x16x1xf32> to vector<8x16x16xf32>
    %210 = arith.mulf %205, %209 : vector<8x16x16xf32>
    %211 = arith.truncf %210 : vector<8x16x16xf32> to vector<8x16x16xbf16>
    "tpu.trace_start"() <{level = 10 : i32, message = "bts,bse->bte"}> : () -> ()
    %cst_69 = arith.constant dense<0.000000e+00> : vector<8x16x32xf32>
    %212 = tpu.matmul %211, %196, %cst_69 {dimension_numbers = #tpu.dot_dimension_numbers<[2], [1], [1], [2], [0, 0, 0, 1, 1, 2], [0], [0]>} : vector<8x16x16xbf16>, vector<8x16x32xbf16>, vector<8x16x32xf32> -> vector<8x16x32xf32>
    "tpu.trace_stop"() : () -> ()
    %213 = tpu.concatenate %190, %212 in 2 : vector<8x16x32xf32>, vector<8x16x32xf32> -> vector<8x16x64xf32>
    %214 = vector.shape_cast %213 : vector<8x16x64xf32> to vector<128x64xf32>
    %215 = arith.truncf %214 : vector<128x64xf32> to vector<128x64xbf16>
    %c1_70 = arith.constant 1 : index
    %c0_71 = arith.constant 0 : index
    %c0_72 = arith.constant 0 : index
    %216 = vector.load %arg6[%c1_70, %c0_71, %c0_72] : memref<2x64x32xbf16, #tpu.memory_space<vmem>>, vector<1x64x32xbf16>
    %217 = vector.shape_cast %216 : vector<1x64x32xbf16> to vector<64x32xbf16>
    %cst_73 = arith.constant dense<0.000000e+00> : vector<128x32xf32>
    %218 = tpu.matmul %215, %217, %cst_73 {dimension_numbers = #tpu.dot_dimension_numbers<[1], [0], [0], [1], [0, 0, 1, 1], [], []>} : vector<128x64xbf16>, vector<64x32xbf16>, vector<128x32xf32> -> vector<128x32xf32>
    %219 = vector.broadcast %158 : vector<1x32xf32> to vector<128x32xf32>
    %220 = arith.addf %218, %219 : vector<128x32xf32>
    %221 = arith.addf %220, %155 : vector<128x32xf32>
    %cst_74 = arith.constant dense<0.000000e+00> : vector<128xf32>
    %222 = vector.multi_reduction <add>, %221, %cst_74 [1] : vector<128x32xf32> to vector<128xf32>
    %223 = vector.shape_cast %222 : vector<128xf32> to vector<128x1xf32>
    %cst_75 = arith.constant 3.200000e+01 : f32
    %224 = vector.broadcast %cst_75 : f32 to vector<128x1xf32>
    %225 = arith.divf %223, %224 : vector<128x1xf32>
    %226 = vector.broadcast %225 : vector<128x1xf32> to vector<128x32xf32>
    %227 = arith.subf %221, %226 : vector<128x32xf32>
    %228 = arith.mulf %227, %227 : vector<128x32xf32>
    %cst_76 = arith.constant dense<0.000000e+00> : vector<128xf32>
    %229 = vector.multi_reduction <add>, %228, %cst_76 [1] : vector<128x32xf32> to vector<128xf32>
    %230 = vector.shape_cast %229 : vector<128xf32> to vector<128x1xf32>
    %cst_77 = arith.constant 3.200000e+01 : f32
    %231 = vector.broadcast %cst_77 : f32 to vector<128x1xf32>
    %232 = arith.divf %230, %231 : vector<128x1xf32>
    %233 = vector.broadcast %225 : vector<128x1xf32> to vector<128x32xf32>
    %234 = arith.subf %221, %233 : vector<128x32xf32>
    %cst_78 = arith.constant 9.99999974E-6 : f32
    %235 = vector.broadcast %cst_78 : f32 to vector<128x1xf32>
    %236 = arith.addf %232, %235 : vector<128x1xf32>
    %237 = math.rsqrt %236 : vector<128x1xf32>
    %238 = vector.broadcast %237 : vector<128x1xf32> to vector<128x32xf32>
    %239 = arith.mulf %234, %238 : vector<128x32xf32>
    %240 = vector.broadcast %159 : vector<1x32xf32> to vector<128x32xf32>
    %241 = arith.mulf %239, %240 : vector<128x32xf32>
    %242 = vector.broadcast %160 : vector<1x32xf32> to vector<128x32xf32>
    %243 = arith.addf %241, %242 : vector<128x32xf32>
    %244 = arith.truncf %243 : vector<128x32xf32> to vector<128x32xbf16>
    %c1_79 = arith.constant 1 : index
    %c0_80 = arith.constant 0 : index
    %c0_81 = arith.constant 0 : index
    %245 = vector.load %arg7[%c1_79, %c0_80, %c0_81] : memref<2x32x128xbf16, #tpu.memory_space<vmem>>, vector<1x32x128xbf16>
    %246 = vector.shape_cast %245 : vector<1x32x128xbf16> to vector<32x128xbf16>
    %cst_82 = arith.constant dense<0.000000e+00> : vector<128x128xf32>
    %247 = tpu.matmul %244, %246, %cst_82 {dimension_numbers = #tpu.dot_dimension_numbers<[1], [0], [0], [1], [0, 0, 1, 1], [], []>} : vector<128x32xbf16>, vector<32x128xbf16>, vector<128x128xf32> -> vector<128x128xf32>
    %c1_83 = arith.constant 1 : index
    %c0_84 = arith.constant 0 : index
    %c0_85 = arith.constant 0 : index
    %248 = vector.load %arg8[%c1_83, %c0_84, %c0_85] : memref<2x1x128xf32, #tpu.memory_space<vmem>>, vector<1x1x128xf32>
    %249 = vector.shape_cast %248 : vector<1x1x128xf32> to vector<1x128xf32>
    %250 = vector.broadcast %249 : vector<1x128xf32> to vector<128x128xf32>
    %251 = arith.addf %247, %250 : vector<128x128xf32>
    %cst_86 = arith.constant 0.000000e+00 : f32
    %252 = vector.broadcast %cst_86 : f32 to vector<128x128xf32>
    %253 = arith.maximumf %251, %252 : vector<128x128xf32>
    %254 = arith.truncf %253 : vector<128x128xf32> to vector<128x128xbf16>
    %c1_87 = arith.constant 1 : index
    %c0_88 = arith.constant 0 : index
    %c0_89 = arith.constant 0 : index
    %255 = vector.load %arg9[%c1_87, %c0_88, %c0_89] : memref<2x128x32xbf16, #tpu.memory_space<vmem>>, vector<1x128x32xbf16>
    %256 = vector.shape_cast %255 : vector<1x128x32xbf16> to vector<128x32xbf16>
    %cst_90 = arith.constant dense<0.000000e+00> : vector<128x32xf32>
    %257 = tpu.matmul %254, %256, %cst_90 {dimension_numbers = #tpu.dot_dimension_numbers<[1], [0], [0], [1], [0, 0, 1, 1], [], []>} : vector<128x128xbf16>, vector<128x32xbf16>, vector<128x32xf32> -> vector<128x32xf32>
    %258 = vector.broadcast %163 : vector<1x32xf32> to vector<128x32xf32>
    %259 = arith.addf %257, %258 : vector<128x32xf32>
    %260 = arith.addf %259, %243 : vector<128x32xf32>
    %cst_91 = arith.constant dense<0.000000e+00> : vector<128xf32>
    %261 = vector.multi_reduction <add>, %260, %cst_91 [1] : vector<128x32xf32> to vector<128xf32>
    %262 = vector.shape_cast %261 : vector<128xf32> to vector<128x1xf32>
    %cst_92 = arith.constant 3.200000e+01 : f32
    %263 = vector.broadcast %cst_92 : f32 to vector<128x1xf32>
    %264 = arith.divf %262, %263 : vector<128x1xf32>
    %265 = vector.broadcast %264 : vector<128x1xf32> to vector<128x32xf32>
    %266 = arith.subf %260, %265 : vector<128x32xf32>
    %267 = arith.mulf %266, %266 : vector<128x32xf32>
    %cst_93 = arith.constant dense<0.000000e+00> : vector<128xf32>
    %268 = vector.multi_reduction <add>, %267, %cst_93 [1] : vector<128x32xf32> to vector<128xf32>
    %269 = vector.shape_cast %268 : vector<128xf32> to vector<128x1xf32>
    %cst_94 = arith.constant 3.200000e+01 : f32
    %270 = vector.broadcast %cst_94 : f32 to vector<128x1xf32>
    %271 = arith.divf %269, %270 : vector<128x1xf32>
    %272 = vector.broadcast %264 : vector<128x1xf32> to vector<128x32xf32>
    %273 = arith.subf %260, %272 : vector<128x32xf32>
    %cst_95 = arith.constant 9.99999974E-6 : f32
    %274 = vector.broadcast %cst_95 : f32 to vector<128x1xf32>
    %275 = arith.addf %271, %274 : vector<128x1xf32>
    %276 = math.rsqrt %275 : vector<128x1xf32>
    %277 = vector.broadcast %276 : vector<128x1xf32> to vector<128x32xf32>
    %278 = arith.mulf %273, %277 : vector<128x32xf32>
    %279 = vector.broadcast %161 : vector<1x32xf32> to vector<128x32xf32>
    %280 = arith.mulf %278, %279 : vector<128x32xf32>
    %281 = vector.broadcast %162 : vector<1x32xf32> to vector<128x32xf32>
    %282 = arith.addf %280, %281 : vector<128x32xf32>
    %283 = arith.truncf %282 : vector<128x32xf32> to vector<128x32xbf16>
    %c0_96 = arith.constant 0 : index
    %c0_97 = arith.constant 0 : index
    %284 = vector.load %arg11[%c0_96, %c0_97] : memref<32x32xbf16, #tpu.memory_space<vmem>>, vector<32x32xbf16>
    %cst_98 = arith.constant dense<0.000000e+00> : vector<128x32xf32>
    %285 = tpu.matmul %283, %284, %cst_98 {dimension_numbers = #tpu.dot_dimension_numbers<[1], [0], [0], [1], [0, 0, 1, 1], [], []>} : vector<128x32xbf16>, vector<32x32xbf16>, vector<128x32xf32> -> vector<128x32xf32>
    %c0_99 = arith.constant 0 : index
    %c0_100 = arith.constant 0 : index
    %286 = vector.load %arg12[%c0_99, %c0_100] : memref<1x32xf32, #tpu.memory_space<vmem>>, vector<1x32xf32>
    %287 = vector.broadcast %286 : vector<1x32xf32> to vector<128x32xf32>
    %288 = arith.addf %285, %287 : vector<128x32xf32>
    %289 = arith.truncf %288 : vector<128x32xf32> to vector<128x32xbf16>
    %c0_101 = arith.constant 0 : index
    %c0_102 = arith.constant 0 : index
    %290 = vector.load %arg13[%c0_101, %c0_102] : memref<32x128xbf16, #tpu.memory_space<vmem>>, vector<32x128xbf16>
    %cst_103 = arith.constant dense<0.000000e+00> : vector<128x128xf32>
    %291 = tpu.matmul %289, %290, %cst_103 {dimension_numbers = #tpu.dot_dimension_numbers<[1], [0], [0], [1], [0, 0, 1, 1], [], []>} : vector<128x32xbf16>, vector<32x128xbf16>, vector<128x128xf32> -> vector<128x128xf32>
    %c0_104 = arith.constant 0 : index
    %c0_105 = arith.constant 0 : index
    %292 = vector.load %arg14[%c0_104, %c0_105] : memref<1x128xf32, #tpu.memory_space<vmem>>, vector<1x128xf32>
    %293 = vector.broadcast %292 : vector<1x128xf32> to vector<128x128xf32>
    %294 = arith.addf %291, %293 : vector<128x128xf32>
    %295 = vector.shape_cast %288 : vector<128x32xf32> to vector<8x16x32xf32>
    %296 = vector.shape_cast %294 : vector<128x128xf32> to vector<8x16x128xf32>
    %297 = vector.extract_strided_slice %295 {offsets = [0, 8, 0], sizes = [8, 1, 32], strides = [1, 1, 1]} : vector<8x16x32xf32> to vector<8x1x32xf32>
    %c0_106 = arith.constant 0 : index
    %c0_107 = arith.constant 0 : index
    %c0_108 = arith.constant 0 : index
    %298 = vector.load %arg15[%c0_106, %c0_107, %c0_108] : memref<8x1x32xf32, #tpu.memory_space<vmem>>, vector<8x1x32xf32>
    tpu.vector_store %arg15[%c0_106, %c0_107, %c0_108], %297 {strides = array<i32>} : memref<8x1x32xf32, #tpu.memory_space<vmem>>, vector<8x1x32xf32>,
    %299 = vector.extract_strided_slice %296 {offsets = [0, 0, 0], sizes = [8, 4, 128], strides = [1, 1, 1]} : vector<8x16x128xf32> to vector<8x4x128xf32>
    %c0_109 = arith.constant 0 : index
    %c0_110 = arith.constant 0 : index
    %c0_111 = arith.constant 0 : index
    %300 = vector.load %arg16[%c0_109, %c0_110, %c0_111] : memref<8x4x128xf32, #tpu.memory_space<vmem>>, vector<8x4x128xf32>
    tpu.vector_store %arg16[%c0_109, %c0_110, %c0_111], %299 {strides = array<i32>} : memref<8x4x128xf32, #tpu.memory_space<vmem>>, vector<8x4x128xf32>,
    return
  }
  func.func @transform_0(%arg0: i32) -> (i32, i32, i32) {
    %c0_i32 = arith.constant 0 : i32
    %c0_i32_0 = arith.constant 0 : i32
    %c0_i32_1 = arith.constant 0 : i32
    return %arg0, %c0_i32, %c0_i32_0 : i32, i32, i32
  }
  func.func @transform_1(%arg0: i32) -> (i32, i32, i32) {
    %c0_i32 = arith.constant 0 : i32
    %c0_i32_0 = arith.constant 0 : i32
    %c0_i32_1 = arith.constant 0 : i32
    return %arg0, %c0_i32, %c0_i32_0 : i32, i32, i32
  }
  func.func @transform_2(%arg0: i32) -> (i32, i32) {
    %c0_i32 = arith.constant 0 : i32
    %c0_i32_0 = arith.constant 0 : i32
    %c0_i32_1 = arith.constant 0 : i32
    return %c0_i32, %c0_i32_0 : i32, i32
  }
  func.func @transform_3(%arg0: i32) -> (i32, i32) {
    %c0_i32 = arith.constant 0 : i32
    %c0_i32_0 = arith.constant 0 : i32
    %c0_i32_1 = arith.constant 0 : i32
    return %c0_i32, %c0_i32_0 : i32, i32
  }
  func.func @transform_4(%arg0: i32) -> (i32, i32, i32) {
    %c0_i32 = arith.constant 0 : i32
    %c0_i32_0 = arith.constant 0 : i32
    %c0_i32_1 = arith.constant 0 : i32
    %c0_i32_2 = arith.constant 0 : i32
    return %c0_i32, %c0_i32_0, %c0_i32_1 : i32, i32, i32
  }
  func.func @transform_5(%arg0: i32) -> (i32, i32, i32) {
    %c0_i32 = arith.constant 0 : i32
    %c0_i32_0 = arith.constant 0 : i32
    %c0_i32_1 = arith.constant 0 : i32
    %c0_i32_2 = arith.constant 0 : i32
    return %c0_i32, %c0_i32_0, %c0_i32_1 : i32, i32, i32
  }
  func.func @transform_6(%arg0: i32) -> (i32, i32, i32) {
    %c0_i32 = arith.constant 0 : i32
    %c0_i32_0 = arith.constant 0 : i32
    %c0_i32_1 = arith.constant 0 : i32
    %c0_i32_2 = arith.constant 0 : i32
    return %c0_i32, %c0_i32_0, %c0_i32_1 : i32, i32, i32
  }
  func.func @transform_7(%arg0: i32) -> (i32, i32, i32) {
    %c0_i32 = arith.constant 0 : i32
    %c0_i32_0 = arith.constant 0 : i32
    %c0_i32_1 = arith.constant 0 : i32
    %c0_i32_2 = arith.constant 0 : i32
    return %c0_i32, %c0_i32_0, %c0_i32_1 : i32, i32, i32
  }
  func.func @transform_8(%arg0: i32) -> (i32, i32, i32) {
    %c0_i32 = arith.constant 0 : i32
    %c0_i32_0 = arith.constant 0 : i32
    %c0_i32_1 = arith.constant 0 : i32
    %c0_i32_2 = arith.constant 0 : i32
    return %c0_i32, %c0_i32_0, %c0_i32_1 : i32, i32, i32
  }
  func.func @transform_9(%arg0: i32) -> (i32, i32, i32) {
    %c0_i32 = arith.constant 0 : i32
    %c0_i32_0 = arith.constant 0 : i32
    %c0_i32_1 = arith.constant 0 : i32
    %c0_i32_2 = arith.constant 0 : i32
    return %c0_i32, %c0_i32_0, %c0_i32_1 : i32, i32, i32
  }
  func.func @transform_10(%arg0: i32) -> (i32, i32) {
    %c0_i32 = arith.constant 0 : i32
    %c0_i32_0 = arith.constant 0 : i32
    %c0_i32_1 = arith.constant 0 : i32
    return %c0_i32, %c0_i32_0 : i32, i32
  }
  func.func @transform_11(%arg0: i32) -> (i32, i32) {
    %c0_i32 = arith.constant 0 : i32
    %c0_i32_0 = arith.constant 0 : i32
    %c0_i32_1 = arith.constant 0 : i32
    return %c0_i32, %c0_i32_0 : i32, i32
  }
  func.func @transform_12(%arg0: i32) -> (i32, i32) {
    %c0_i32 = arith.constant 0 : i32
    %c0_i32_0 = arith.constant 0 : i32
    %c0_i32_1 = arith.constant 0 : i32
    return %c0_i32, %c0_i32_0 : i32, i32
  }
  func.func @transform_13(%arg0: i32) -> (i32, i32) {
    %c0_i32 = arith.constant 0 : i32
    %c0_i32_0 = arith.constant 0 : i32
    %c0_i32_1 = arith.constant 0 : i32
    return %c0_i32, %c0_i32_0 : i32, i32
  }
  func.func @transform_14(%arg0: i32) -> (i32, i32, i32) {
    %c0_i32 = arith.constant 0 : i32
    %c0_i32_0 = arith.constant 0 : i32
    %c0_i32_1 = arith.constant 0 : i32
    return %arg0, %c0_i32, %c0_i32_0 : i32, i32, i32
  }
  func.func @transform_15(%arg0: i32) -> (i32, i32, i32) {
    %c0_i32 = arith.constant 0 : i32
    %c0_i32_0 = arith.constant 0 : i32
    %c0_i32_1 = arith.constant 0 : i32
    return %arg0, %c0_i32, %c0_i32_0 : i32, i32, i32
  }
}

</mosaic_0001>

<llo_original>
// kernel: tpu_custom_call.1
$region0: #{tpu_custom_call.1}
  #allocation0 [shape = 'u32[]', space=smem, size = 0x4, offset = 0x4, fixed_abs, tag = 'smem constant byte address 0x4 - core index']
  #allocation1 [shape = 'u32[144,128]{1,0:T(1,128)}', space=vmem, size = 0x12000, scoped, tag = 'internal scratch']
  %s0 = inlined_call_operand.vmem [shape: f32[8,16,8], index: 0, kind: input, shape index: {}]
  %s1 = inlined_call_operand.vmem [shape: f32[8,1,32], index: 1, kind: input, shape index: {}]
  %s2 = inlined_call_operand.vmem [shape: bf16[8,32], index: 2, kind: input, shape index: {}]
  %s3 = inlined_call_operand.vmem [shape: f32[1,32], index: 3, kind: input, shape index: {}]
  %s4 = inlined_call_operand.vmem [shape: bf16[2,32,192], index: 4, kind: input, shape index: {}]
  %s5 = inlined_call_operand.vmem [shape: bf16[2,64,32], index: 5, kind: input, shape index: {}]
  %s6 = inlined_call_operand.vmem [shape: bf16[2,32,128], index: 6, kind: input, shape index: {}]
  %s7 = inlined_call_operand.vmem [shape: f32[2,1,128], index: 7, kind: input, shape index: {}]
  %s8 = inlined_call_operand.vmem [shape: bf16[2,128,32], index: 8, kind: input, shape index: {}]
  %s9 = inlined_call_operand.vmem [shape: f32[2,6,32], index: 9, kind: input, shape index: {}]
  %s10 = inlined_call_operand.vmem [shape: bf16[32,32], index: 10, kind: input, shape index: {}]
  %s11 = inlined_call_operand.vmem [shape: f32[1,32], index: 11, kind: input, shape index: {}]
  %s12 = inlined_call_operand.vmem [shape: bf16[32,128], index: 12, kind: input, shape index: {}]
  %s13 = inlined_call_operand.vmem [shape: f32[1,128], index: 13, kind: input, shape index: {}]
  %s14 = inlined_call_operand.hbm [shape: f32[8,1,32], index: 14, kind: output, shape index: {0}]
  %s15 = inlined_call_operand.hbm [shape: f32[8,4,128], index: 15, kind: output, shape index: {1}]
  %16 = xla_tuple %s14, %s15
  %s17 = sld [smem:[#allocation0]]
  $region74: #{tpu_custom_call.1} parent=0
    _
  %s19 = ssub.s32 1, %s17
  %s20 = scalar_select 0, %s19, %s17
  $region1: #{tpu_custom_call.1} parent=0
    #allocation2 [shape = 'u8[4096]{0}', space=vmem, size = 0x1000, scoped, tag = 'output window, operand 0, single buffered']
    #allocation3 [shape = 's32[1]{0}', space=sflag, size = 0x4, scoped, tag = 'scoped memory for tpu_custom_call.1']
    #allocation4 [shape = 'u8[16384]{0}', space=vmem, size = 0x4000, scoped, tag = 'output window, operand 1, single buffered']
    #allocation5 [shape = 's32[1]{0}', space=sflag, size = 0x4, scoped, tag = 'scoped memory for tpu_custom_call.1']
    %21 = vsyncpa [#allocation3], 0
    %22 = vsyncpa [#allocation5], 0
    // Predicated region
    $region2: #{tpu_custom_call.1} parent=1 // pred_check
      _
    $region3: #{tpu_custom_call.1} parent=1 // pred_check_branch
      %24 = sbr.rel (0) target = $region5
    $region4: #{tpu_custom_call.1} parent=1 // pred_region
      _
    $region5: #{tpu_custom_call.1} parent=1 // pred_fallthru
      _
    // Predicated region
    $region6: #{tpu_custom_call.1} parent=1 // pred_check
      _
    $region7: #{tpu_custom_call.1} parent=1 // pred_check_branch
      %26 = sbr.rel (0) target = $region9
    $region8: #{tpu_custom_call.1} parent=1 // pred_region
      _
    $region9: #{tpu_custom_call.1} parent=1 // pred_fallthru
      _
    // Predicated region
    $region10: #{tpu_custom_call.1} parent=1 // pred_check
      _
    $region11: #{tpu_custom_call.1} parent=1 // pred_check_branch
      %28 = sbr.rel (0) target = $region13
    $region12: #{tpu_custom_call.1} parent=1 // pred_region
      _
    $region13: #{tpu_custom_call.1} parent=1 // pred_fallthru
      _
    // Predicated region
    $region14: #{tpu_custom_call.1} parent=1 // pred_check
      _
    $region15: #{tpu_custom_call.1} parent=1 // pred_check_branch
      %30 = sbr.rel (0) target = $region17
    $region16: #{tpu_custom_call.1} parent=1 // pred_region
      _
    $region17: #{tpu_custom_call.1} parent=1 // pred_fallthru
      _
    // Predicated region
    $region18: #{tpu_custom_call.1} parent=1 // pred_check
      _
    $region19: #{tpu_custom_call.1} parent=1 // pred_check_branch
      %32 = sbr.rel (0) target = $region21
    $region20: #{tpu_custom_call.1} parent=1 // pred_region
      _
    $region21: #{tpu_custom_call.1} parent=1 // pred_fallthru
      _
    // Predicated region
    $region22: #{tpu_custom_call.1} parent=1 // pred_check
      _
    $region23: #{tpu_custom_call.1} parent=1 // pred_check_branch
      %34 = sbr.rel (0) target = $region25
    $region24: #{tpu_custom_call.1} parent=1 // pred_region
      _
    $region25: #{tpu_custom_call.1} parent=1 // pred_fallthru
      _
    // Predicated region
    $region26: #{tpu_custom_call.1} parent=1 // pred_check
      _
    $region27: #{tpu_custom_call.1} parent=1 // pred_check_branch
      %36 = sbr.rel (0) target = $region29
    $region28: #{tpu_custom_call.1} parent=1 // pred_region
      _
    $region29: #{tpu_custom_call.1} parent=1 // pred_fallthru
      _
    // Predicated region
    $region30: #{tpu_custom_call.1} parent=1 // pred_check
      _
    $region31: #{tpu_custom_call.1} parent=1 // pred_check_branch
      %38 = sbr.rel (0) target = $region33
    $region32: #{tpu_custom_call.1} parent=1 // pred_region
      _
    $region33: #{tpu_custom_call.1} parent=1 // pred_fallthru
      _
    // Predicated region
    $region34: #{tpu_custom_call.1} parent=1 // pred_check
      _
    $region35: #{tpu_custom_call.1} parent=1 // pred_check_branch
      %40 = sbr.rel (0) target = $region37
    $region36: #{tpu_custom_call.1} parent=1 // pred_region
      _
    $region37: #{tpu_custom_call.1} parent=1 // pred_fallthru
      _
    // Predicated region
    $region38: #{tpu_custom_call.1} parent=1 // pred_check
      _
    $region39: #{tpu_custom_call.1} parent=1 // pred_check_branch
      %42 = sbr.rel (0) target = $region41
    $region40: #{tpu_custom_call.1} parent=1 // pred_region
      _
    $region41: #{tpu_custom_call.1} parent=1 // pred_fallthru
      _
    // Predicated region
    $region42: #{tpu_custom_call.1} parent=1 // pred_check
      _
    $region43: #{tpu_custom_call.1} parent=1 // pred_check_branch
      %44 = sbr.rel (0) target = $region45
    $region44: #{tpu_custom_call.1} parent=1 // pred_region
      _
    $region45: #{tpu_custom_call.1} parent=1 // pred_fallthru
      _
    // Predicated region
    $region46: #{tpu_custom_call.1} parent=1 // pred_check
      _
    $region47: #{tpu_custom_call.1} parent=1 // pred_check_branch
      %46 = sbr.rel (0) target = $region49
    $region48: #{tpu_custom_call.1} parent=1 // pred_region
      _
    $region49: #{tpu_custom_call.1} parent=1 // pred_fallthru
      _
    // Predicated region
    $region50: #{tpu_custom_call.1} parent=1 // pred_check
      _
    $region51: #{tpu_custom_call.1} parent=1 // pred_check_branch
      %48 = sbr.rel (0) target = $region53
    $region52: #{tpu_custom_call.1} parent=1 // pred_region
      _
    $region53: #{tpu_custom_call.1} parent=1 // pred_fallthru
      _
    // Predicated region
    $region54: #{tpu_custom_call.1} parent=1 // pred_check
      _
    $region55: #{tpu_custom_call.1} parent=1 // pred_check_branch
      %50 = sbr.rel (0) target = $region57
    $region56: #{tpu_custom_call.1} parent=1 // pred_region
      _
    $region57: #{tpu_custom_call.1} parent=1 // pred_fallthru
      _
    %v52 = vld [vmem:[%s0] sm:$0xff]
    %v53 = vld [vmem:[%s0 + $0x8] sm:$0xff]
    %v54 = vld [vmem:[%s0 + $0x10] sm:$0xff]
    %v55 = vld [vmem:[%s0 + $0x18] sm:$0xff]
    %v56 = vld [vmem:[%s0 + $0x20] sm:$0xff]
    %v57 = vld [vmem:[%s0 + $0x28] sm:$0xff]
    %v58 = vld [vmem:[%s0 + $0x30] sm:$0xff]
    %v59 = vld [vmem:[%s0 + $0x38] sm:$0xff]
    %v60 = vld [vmem:[%s0 + $0x40] sm:$0xff]
    %v61 = vld [vmem:[%s0 + $0x48] sm:$0xff]
    %v62 = vld [vmem:[%s0 + $0x50] sm:$0xff]
    %v63 = vld [vmem:[%s0 + $0x58] sm:$0xff]
    %v64 = vld [vmem:[%s0 + $0x60] sm:$0xff]
    %v65 = vld [vmem:[%s0 + $0x68] sm:$0xff]
    %v66 = vld [vmem:[%s0 + $0x70] sm:$0xff]
    %v67 = vld [vmem:[%s0 + $0x78] sm:$0xff]
    %v68 = vpack.c.bf16 %v53, %v52
    %v69 = vpack.c.bf16 %v55, %v54
    %v70 = vpack.c.bf16 %v57, %v56
    %v71 = vpack.c.bf16 %v59, %v58
    %v72 = vpack.c.bf16 %v61, %v60
    %v73 = vpack.c.bf16 %v63, %v62
    %v74 = vpack.c.bf16 %v65, %v64
    %v75 = vpack.c.bf16 %v67, %v66
    %v76 = vld [vmem:[%s2] sm:$0xf]
    %v77 = vld [vmem:[%s3] sm:$0x1]
    %v79 = vlaneseq
    %v80 = vshrl.u32 %v79, 7
    %v81 = vsub.s32 0, %v80
    %v82 = vrot.slane %v77, %v81
    %vm84 = vcmask 64512
    %v86 = vsel %vm84, %v68, 0
    %v89 = vsel %vm84, %v69, 0
    %v92 = vsel %vm84, %v70, 0
    %v95 = vsel %vm84, %v71, 0
    %v98 = vsel %vm84, %v72, 0
    %v101 = vsel %vm84, %v73, 0
    %v104 = vsel %vm84, %v74, 0
    %v107 = vsel %vm84, %v75, 0
    %vm109 = vcmask 1043456
    %v111 = vsel %vm109, %v76, 0
    %113 = vmatprep.subr.bf16.mxu0 0
    %114 = vmatpush1.bf16.msra.mxu0 %v111
    %115 = vmatprep.subr.bf16.mxu0 0
    %116 = vmatpush1.bf16.msra.mxu0 0
    %117 = vmatprep.subr.bf16.mxu0 0
    %118 = vmatpush1.bf16.msra.mxu0 0
    %119 = vmatprep.subr.bf16.mxu0 0
    %120 = vmatpush1.bf16.msra.mxu0 0
    %121 = vmatprep.subr.bf16.mxu0 0
    %122 = vmatpush1.bf16.msra.mxu0 0
    %123 = vmatprep.subr.bf16.mxu0 0
    %124 = vmatpush1.bf16.msra.mxu0 0
    %125 = vmatprep.subr.bf16.mxu0 0
    %126 = vmatpush1.bf16.msra.mxu0 0
    %127 = vmatprep.subr.bf16.mxu0 0
    %128 = vmatpush1.bf16.msra.mxu0 0
    %129 = vmatprep.subr.bf16.mxu0 0
    %130 = vmatpush1.bf16.msra.mxu0 0
    %131 = vmatprep.subr.bf16.mxu0 0
    %132 = vmatpush1.bf16.msra.mxu0 0
    %133 = vmatprep.subr.bf16.mxu0 0
    %134 = vmatpush1.bf16.msra.mxu0 0
    %135 = vmatprep.subr.bf16.mxu0 0
    %136 = vmatpush1.bf16.msra.mxu0 0
    %137 = vmatprep.subr.bf16.mxu0 0
    %138 = vmatpush1.bf16.msra.mxu0 0
    %139 = vmatprep.subr.bf16.mxu0 0
    %140 = vmatpush1.bf16.msra.mxu0 0
    %141 = vmatprep.subr.bf16.mxu0 0
    %142 = vmatpush1.bf16.msra.mxu0 0
    %143 = vmatprep.subr.bf16.mxu0 0
    %144 = vmatpush1.bf16.msra.mxu0 0
    %145 = vmatprep.mubr.bf16.mxu0 0
    %146 = vmatmul.mubr.bf16.gmra.mrb[0].mxu0 %v86
    %v147 = vpop.f32.mrb[0].mxu0
    %v148 = vadd.f32 %v82, %v147
    %v149 = vpop.f32.mrb[0].mxu0
    %v150 = vpop.f32.mrb[0].mxu0
    %v151 = vadd.f32 %v82, %v150
    %v152 = vpop.f32.mrb[0].mxu0
    %153 = vmatprep.mubr.bf16.mxu0 0
    %154 = vmatmul.mubr.bf16.gmra.mrb[0].mxu0 %v89
    %v155 = vpop.f32.mrb[0].mxu0
    %v156 = vadd.f32 %v82, %v155
    %v157 = vpop.f32.mrb[0].mxu0
    %v158 = vpop.f32.mrb[0].mxu0
    %v159 = vadd.f32 %v82, %v158
    %v160 = vpop.f32.mrb[0].mxu0
    %161 = vmatprep.mubr.bf16.mxu0 0
    %162 = vmatmul.mubr.bf16.gmra.mrb[0].mxu0 %v92
    %v163 = vpop.f32.mrb[0].mxu0
    %v164 = vadd.f32 %v82, %v163
    %v165 = vpop.f32.mrb[0].mxu0
    %v166 = vpop.f32.mrb[0].mxu0
    %v167 = vadd.f32 %v82, %v166
    %v168 = vpop.f32.mrb[0].mxu0
    %169 = vmatprep.mubr.bf16.mxu0 0
    %170 = vmatmul.mubr.bf16.gmra.mrb[0].mxu0 %v95
    %v171 = vpop.f32.mrb[0].mxu0
    %v172 = vadd.f32 %v82, %v171
    %v173 = vpop.f32.mrb[0].mxu0
    %v174 = vpop.f32.mrb[0].mxu0
    %v175 = vadd.f32 %v82, %v174
    %v176 = vpop.f32.mrb[0].mxu0
    %177 = vmatprep.mubr.bf16.mxu0 0
    %178 = vmatmul.mubr.bf16.gmra.mrb[0].mxu0 %v98
    %v179 = vpop.f32.mrb[0].mxu0
    %v180 = vadd.f32 %v82, %v179
    %v181 = vpop.f32.mrb[0].mxu0
    %v182 = vpop.f32.mrb[0].mxu0
    %v183 = vadd.f32 %v82, %v182
    %v184 = vpop.f32.mrb[0].mxu0
    %185 = vmatprep.mubr.bf16.mxu0 0
    %186 = vmatmul.mubr.bf16.gmra.mrb[0].mxu0 %v101
    %v187 = vpop.f32.mrb[0].mxu0
    %v188 = vadd.f32 %v82, %v187
    %v189 = vpop.f32.mrb[0].mxu0
    %v190 = vpop.f32.mrb[0].mxu0
    %v191 = vadd.f32 %v82, %v190
    %v192 = vpop.f32.mrb[0].mxu0
    %193 = vmatprep.mubr.bf16.mxu0 0
    %194 = vmatmul.mubr.bf16.gmra.mrb[0].mxu0 %v104
    %v195 = vpop.f32.mrb[0].mxu0
    %v196 = vadd.f32 %v82, %v195
    %v197 = vpop.f32.mrb[0].mxu0
    %v198 = vpop.f32.mrb[0].mxu0
    %v199 = vadd.f32 %v82, %v198
    %v200 = vpop.f32.mrb[0].mxu0
    %201 = vmatprep.mubr.bf16.mxu0 0
    %202 = vmatmul.mubr.bf16.gmra.mrb[0].mxu0 %v107
    %v203 = vpop.f32.mrb[0].mxu0
    %v204 = vadd.f32 %v82, %v203
    %v205 = vpop.f32.mrb[0].mxu0
    %v206 = vpop.f32.mrb[0].mxu0
    %v207 = vadd.f32 %v82, %v206
    %v208 = vpop.f32.mrb[0].mxu0
    %209 = vdwg.mxu0
    %v210 = vlaneseq
    %v211 = vshrl.u32 %v210, 7
    %v212 = vadd.s32 %v211, 8
    %vm213 = vcmp.eq.s32.totalorder %v211, 8
    %vm214 = vcmp.eq.s32.totalorder %v212, 8
    %v215 = vsel %vm213, 1, 0
    %v216 = vsel %vm214, 1, 0
    %vm217 = vcmp.eq.s32.totalorder %v215, 1
    %vm218 = vcmp.eq.s32.totalorder %v216, 1
    %v219 = vld [vmem:[%s1] sm:$0x1]
    %v220 = vld [vmem:[%s1 + $0x1] sm:$0x1]
    %v221 = vld [vmem:[%s1 + $0x2] sm:$0x1]
    %v222 = vld [vmem:[%s1 + $0x3] sm:$0x1]
    %v223 = vld [vmem:[%s1 + $0x4] sm:$0x1]
    %v224 = vld [vmem:[%s1 + $0x5] sm:$0x1]
    %v225 = vld [vmem:[%s1 + $0x6] sm:$0x1]
    %v226 = vld [vmem:[%s1 + $0x7] sm:$0x1]
    %v235 = vlaneseq
    %v236 = vshrl.u32 %v235, 7
    %v237 = vsub.s32 0, %v236
    %v238 = vrot.slane %v219, %v237
    %v239 = vlaneseq
    %v240 = vshrl.u32 %v239, 7
    %v241 = vsub.s32 0, %v240
    %v242 = vrot.slane %v220, %v241
    %v243 = vlaneseq
    %v244 = vshrl.u32 %v243, 7
    %v245 = vsub.s32 0, %v244
    %v246 = vrot.slane %v221, %v245
    %v247 = vlaneseq
    %v248 = vshrl.u32 %v247, 7
    %v249 = vsub.s32 0, %v248
    %v250 = vrot.slane %v222, %v249
    %v251 = vlaneseq
    %v252 = vshrl.u32 %v251, 7
    %v253 = vsub.s32 0, %v252
    %v254 = vrot.slane %v223, %v253
    %v255 = vlaneseq
    %v256 = vshrl.u32 %v255, 7
    %v257 = vsub.s32 0, %v256
    %v258 = vrot.slane %v224, %v257
    %v259 = vlaneseq
    %v260 = vshrl.u32 %v259, 7
    %v261 = vsub.s32 0, %v260
    %v262 = vrot.slane %v225, %v261
    %v263 = vlaneseq
    %v264 = vshrl.u32 %v263, 7
    %v265 = vsub.s32 0, %v264
    %v266 = vrot.slane %v226, %v265
    %v275 = vsel %vm217, %v238, %v148
    %v276 = vsel %vm218, %v238, %v151
    %v277 = vsel %vm217, %v242, %v156
    %v278 = vsel %vm218, %v242, %v159
    %v279 = vsel %vm217, %v246, %v164
    %v280 = vsel %vm218, %v246, %v167
    %v281 = vsel %vm217, %v250, %v172
    %v282 = vsel %vm218, %v250, %v175
    %v283 = vsel %vm217, %v254, %v180
    %v284 = vsel %vm218, %v254, %v183
    %v285 = vsel %vm217, %v258, %v188
    %v286 = vsel %vm218, %v258, %v191
    %v287 = vsel %vm217, %v262, %v196
    %v288 = vsel %vm218, %v262, %v199
    %v289 = vsel %vm217, %v266, %v204
    %v290 = vsel %vm218, %v266, %v207
    %v291 = vlaneseq
    %v292 = vand.u32 %v291, 127
    %vm293 = vcmp.lt.s32.totalorder %v292, 9
    %v294 = vsel %vm293, 0.0, -1e+09
    %v295 = vld [vmem:[%s9] sm:$0x3f]
    %v296 = vpack.c.bf16 %v276, %v275
    %v297 = vpack.c.bf16 %v278, %v277
    %v298 = vpack.c.bf16 %v280, %v279
    %v299 = vpack.c.bf16 %v282, %v281
    %v300 = vpack.c.bf16 %v284, %v283
    %v301 = vpack.c.bf16 %v286, %v285
    %v302 = vpack.c.bf16 %v288, %v287
    %v303 = vpack.c.bf16 %v290, %v289
    %v304 = vld [vmem:[%s4] sm:$0xff]
    %v305 = vld [vmem:[%s4 + $0x8] sm:$0xff]
    %v306 = vld [vmem:[%s4 + $0x10] sm:$0xff]
    %v307 = vld [vmem:[%s4 + $0x18] sm:$0xff]
    %v312 = vunpack.c.l.b16 %v304
    %v313 = vunpack.c.h.b16 %v304
    %v314 = vunpack.c.l.b16 %v305
    %v315 = vunpack.c.h.b16 %v305
    %v316 = vunpack.c.l.b16 %v306
    %v317 = vunpack.c.h.b16 %v306
    %v318 = vunpack.c.l.b16 %v307
    %v319 = vunpack.c.h.b16 %v307
    %v320 = vpack.c.b16 %v314, %v312
    %v321 = vpack.c.b16 %v315, %v313
    %v322 = vpack.c.b16 %v318, %v316
    %v323 = vpack.c.b16 %v319, %v317
    %vm328 = vcmask 261120
    %v330 = vsel %vm328, %v296, 0
    %v333 = vsel %vm328, %v297, 0
    %v336 = vsel %vm328, %v298, 0
    %v339 = vsel %vm328, %v299, 0
    %v342 = vsel %vm328, %v300, 0
    %v345 = vsel %vm328, %v301, 0
    %v348 = vsel %vm328, %v302, 0
    %v351 = vsel %vm328, %v303, 0
    %353 = vmatprep.subr.bf16.mxu0 %v321
    %354 = vmatpush1.bf16.msra.mxu0 %v320
    %355 = vmatprep.subr.bf16.mxu0 %v323
    %356 = vmatpush1.bf16.msra.mxu0 %v322
    %357 = vmatprep.subr.bf16.mxu0 0
    %358 = vmatpush1.bf16.msra.mxu0 0
    %359 = vmatprep.subr.bf16.mxu0 0
    %360 = vmatpush1.bf16.msra.mxu0 0
    %361 = vmatprep.subr.bf16.mxu0 0
    %362 = vmatpush1.bf16.msra.mxu0 0
    %363 = vmatprep.subr.bf16.mxu0 0
    %364 = vmatpush1.bf16.msra.mxu0 0
    %365 = vmatprep.subr.bf16.mxu0 0
    %366 = vmatpush1.bf16.msra.mxu0 0
    %367 = vmatprep.subr.bf16.mxu0 0
    %368 = vmatpush1.bf16.msra.mxu0 0
    %369 = vmatprep.subr.bf16.mxu0 0
    %370 = vmatpush1.bf16.msra.mxu0 0
    %371 = vmatprep.subr.bf16.mxu0 0
    %372 = vmatpush1.bf16.msra.mxu0 0
    %373 = vmatprep.subr.bf16.mxu0 0
    %374 = vmatpush1.bf16.msra.mxu0 0
    %375 = vmatprep.subr.bf16.mxu0 0
    %376 = vmatpush1.bf16.msra.mxu0 0
    %377 = vmatprep.subr.bf16.mxu0 0
    %378 = vmatpush1.bf16.msra.mxu0 0
    %379 = vmatprep.subr.bf16.mxu0 0
    %380 = vmatpush1.bf16.msra.mxu0 0
    %381 = vmatprep.subr.bf16.mxu0 0
    %382 = vmatpush1.bf16.msra.mxu0 0
    %383 = vmatprep.subr.bf16.mxu0 0
    %384 = vmatpush1.bf16.msra.mxu0 0
    %385 = vmatprep.mubr.bf16.mxu0 0
    %386 = vmatmul.mubr.bf16.gmra.mrb[0].mxu0 %v330
    %v387 = vpop.f32.mrb[0].mxu0
    %v388 = vadd.f32 0.0, %v387
    %v389 = vpop.f32.mrb[0].mxu0
    %v390 = vadd.f32 0.0, %v389
    %v391 = vpop.f32.mrb[0].mxu0
    %v392 = vadd.f32 0.0, %v391
    %v393 = vpop.f32.mrb[0].mxu0
    %v394 = vadd.f32 0.0, %v393
    %395 = vmatprep.mubr.bf16.mxu0 0
    %396 = vmatmul.mubr.bf16.gmra.mrb[0].mxu0 %v333
    %v397 = vpop.f32.mrb[0].mxu0
    %v398 = vadd.f32 0.0, %v397
    %v399 = vpop.f32.mrb[0].mxu0
    %v400 = vadd.f32 0.0, %v399
    %v401 = vpop.f32.mrb[0].mxu0
    %v402 = vadd.f32 0.0, %v401
    %v403 = vpop.f32.mrb[0].mxu0
    %v404 = vadd.f32 0.0, %v403
    %405 = vmatprep.mubr.bf16.mxu0 0
    %406 = vmatmul.mubr.bf16.gmra.mrb[0].mxu0 %v336
    %v407 = vpop.f32.mrb[0].mxu0
    %v408 = vadd.f32 0.0, %v407
    %v409 = vpop.f32.mrb[0].mxu0
    %v410 = vadd.f32 0.0, %v409
    %v411 = vpop.f32.mrb[0].mxu0
    %v412 = vadd.f32 0.0, %v411
    %v413 = vpop.f32.mrb[0].mxu0
    %v414 = vadd.f32 0.0, %v413
    %415 = vmatprep.mubr.bf16.mxu0 0
    %416 = vmatmul.mubr.bf16.gmra.mrb[0].mxu0 %v339
    %v417 = vpop.f32.mrb[0].mxu0
    %v418 = vadd.f32 0.0, %v417
    %v419 = vpop.f32.mrb[0].mxu0
    %v420 = vadd.f32 0.0, %v419
    %v421 = vpop.f32.mrb[0].mxu0
    %v422 = vadd.f32 0.0, %v421
    %v423 = vpop.f32.mrb[0].mxu0
    %v424 = vadd.f32 0.0, %v423
    %425 = vmatprep.mubr.bf16.mxu0 0
    %426 = vmatmul.mubr.bf16.gmra.mrb[0].mxu0 %v342
    %v427 = vpop.f32.mrb[0].mxu0
    %v428 = vadd.f32 0.0, %v427
    %v429 = vpop.f32.mrb[0].mxu0
    %v430 = vadd.f32 0.0, %v429
    %v431 = vpop.f32.mrb[0].mxu0
    %v432 = vadd.f32 0.0, %v431
    %v433 = vpop.f32.mrb[0].mxu0
    %v434 = vadd.f32 0.0, %v433
    %435 = vmatprep.mubr.bf16.mxu0 0
    %436 = vmatmul.mubr.bf16.gmra.mrb[0].mxu0 %v345
    %v437 = vpop.f32.mrb[0].mxu0
    %v438 = vadd.f32 0.0, %v437
    %v439 = vpop.f32.mrb[0].mxu0
    %v440 = vadd.f32 0.0, %v439
    %v441 = vpop.f32.mrb[0].mxu0
    %v442 = vadd.f32 0.0, %v441
    %v443 = vpop.f32.mrb[0].mxu0
    %v444 = vadd.f32 0.0, %v443
    %445 = vmatprep.mubr.bf16.mxu0 0
    %446 = vmatmul.mubr.bf16.gmra.mrb[0].mxu0 %v348
    %v447 = vpop.f32.mrb[0].mxu0
    %v448 = vadd.f32 0.0, %v447
    %v449 = vpop.f32.mrb[0].mxu0
    %v450 = vadd.f32 0.0, %v449
    %v451 = vpop.f32.mrb[0].mxu0
    %v452 = vadd.f32 0.0, %v451
    %v453 = vpop.f32.mrb[0].mxu0
    %v454 = vadd.f32 0.0, %v453
    %455 = vmatprep.mubr.bf16.mxu0 0
    %456 = vmatmul.mubr.bf16.gmra.mrb[0].mxu0 %v351
    %v457 = vpop.f32.mrb[0].mxu0
    %v458 = vadd.f32 0.0, %v457
    %v459 = vpop.f32.mrb[0].mxu0
    %v460 = vadd.f32 0.0, %v459
    %v461 = vpop.f32.mrb[0].mxu0
    %v462 = vadd.f32 0.0, %v461
    %v463 = vpop.f32.mrb[0].mxu0
    %v464 = vadd.f32 0.0, %v463
    %465 = vdwg.mxu0
    %v466 = vpack.c.bf16 %v392, %v388
    %v467 = vpack.c.bf16 %v402, %v398
    %v468 = vpack.c.bf16 %v412, %v408
    %v469 = vpack.c.bf16 %v422, %v418
    %v470 = vpack.c.bf16 %v432, %v428
    %v471 = vpack.c.bf16 %v442, %v438
    %v472 = vpack.c.bf16 %v452, %v448
    %v473 = vpack.c.bf16 %v462, %v458
    %v474 = vpack.c.bf16 %v394, %v390
    %v475 = vpack.c.bf16 %v404, %v400
    %v476 = vpack.c.bf16 %v414, %v410
    %v477 = vpack.c.bf16 %v424, %v420
    %v478 = vpack.c.bf16 %v434, %v430
    %v479 = vpack.c.bf16 %v444, %v440
    %v480 = vpack.c.bf16 %v454, %v450
    %v481 = vpack.c.bf16 %v464, %v460
    %483 = vrot.lane.b32.xlu0 %v466, 64
    %v484 = vpop.permute.xlu0 %483
    %v486 = vsel %vm328, %v466, 0
    %v489 = vsel %vm328, %v484, 0
    %491 = vmatprep.subr.bf16.mxu0 0
    %492 = vmatpush1.bf16.xpose.msra.mxu0 %v489
    %493 = vmatprep.subr.bf16.mxu0 0
    %494 = vmatpush1.bf16.xpose.msra.mxu0 0
    %495 = vmatprep.subr.bf16.mxu0 0
    %496 = vmatpush1.bf16.xpose.msra.mxu0 0
    %497 = vmatprep.subr.bf16.mxu0 0
    %498 = vmatpush1.bf16.xpose.msra.mxu0 0
    %499 = vmatprep.subr.bf16.mxu0 0
    %500 = vmatpush1.bf16.xpose.msra.mxu0 0
    %501 = vmatprep.subr.bf16.mxu0 0
    %502 = vmatpush1.bf16.xpose.msra.mxu0 0
    %503 = vmatprep.subr.bf16.mxu0 0
    %504 = vmatpush1.bf16.xpose.msra.mxu0 0
    %505 = vmatprep.subr.bf16.mxu0 0
    %506 = vmatpush1.bf16.xpose.msra.mxu0 0
    %507 = vmatprep.subr.bf16.mxu0 0
    %508 = vmatpush1.bf16.xpose.msra.mxu0 0
    %509 = vmatprep.subr.bf16.mxu0 0
    %510 = vmatpush1.bf16.xpose.msra.mxu0 0
    %511 = vmatprep.subr.bf16.mxu0 0
    %512 = vmatpush1.bf16.xpose.msra.mxu0 0
    %513 = vmatprep.subr.bf16.mxu0 0
    %514 = vmatpush1.bf16.xpose.msra.mxu0 0
    %515 = vmatprep.subr.bf16.mxu0 0
    %516 = vmatpush1.bf16.xpose.msra.mxu0 0
    %517 = vmatprep.subr.bf16.mxu0 0
    %518 = vmatpush1.bf16.xpose.msra.mxu0 0
    %519 = vmatprep.subr.bf16.mxu0 0
    %520 = vmatpush1.bf16.xpose.msra.mxu0 0
    %521 = vmatprep.subr.bf16.mxu0 0
    %522 = vmatpush1.bf16.xpose.msra.mxu0 0
    %523 = vmatprep.mubr.bf16.mxu0 0
    %524 = vmatmul.mubr.bf16.gmra.mrb[0].mxu0 %v486
    %v525 = vpop.f32.mrb[0].mxu0
    %v526 = vadd.f32 0.0, %v525
    %v527 = vpop.f32.mrb[0].mxu0
    %v528 = vpop.f32.mrb[0].mxu0
    %v529 = vadd.f32 0.0, %v528
    %v530 = vpop.f32.mrb[0].mxu0
    %531 = vdwg.mxu0
    %533 = vrot.lane.b32.xlu0 %v467, 64
    %v534 = vpop.permute.xlu0 %533
    %v536 = vsel %vm328, %v467, 0
    %v539 = vsel %vm328, %v534, 0
    %541 = vmatprep.subr.bf16.mxu0 0
    %542 = vmatpush1.bf16.xpose.msra.mxu0 %v539
    %543 = vmatprep.subr.bf16.mxu0 0
    %544 = vmatpush1.bf16.xpose.msra.mxu0 0
    %545 = vmatprep.subr.bf16.mxu0 0
    %546 = vmatpush1.bf16.xpose.msra.mxu0 0
    %547 = vmatprep.subr.bf16.mxu0 0
    %548 = vmatpush1.bf16.xpose.msra.mxu0 0
    %549 = vmatprep.subr.bf16.mxu0 0
    %550 = vmatpush1.bf16.xpose.msra.mxu0 0
    %551 = vmatprep.subr.bf16.mxu0 0
    %552 = vmatpush1.bf16.xpose.msra.mxu0 0
    %553 = vmatprep.subr.bf16.mxu0 0
    %554 = vmatpush1.bf16.xpose.msra.mxu0 0
    %555 = vmatprep.subr.bf16.mxu0 0
    %556 = vmatpush1.bf16.xpose.msra.mxu0 0
    %557 = vmatprep.subr.bf16.mxu0 0
    %558 = vmatpush1.bf16.xpose.msra.mxu0 0
    %559 = vmatprep.subr.bf16.mxu0 0
    %560 = vmatpush1.bf16.xpose.msra.mxu0 0
    %561 = vmatprep.subr.bf16.mxu0 0
    %562 = vmatpush1.bf16.xpose.msra.mxu0 0
    %563 = vmatprep.subr.bf16.mxu0 0
    %564 = vmatpush1.bf16.xpose.msra.mxu0 0
    %565 = vmatprep.subr.bf16.mxu0 0
    %566 = vmatpush1.bf16.xpose.msra.mxu0 0
    %567 = vmatprep.subr.bf16.mxu0 0
    %568 = vmatpush1.bf16.xpose.msra.mxu0 0
    %569 = vmatprep.subr.bf16.mxu0 0
    %570 = vmatpush1.bf16.xpose.msra.mxu0 0
    %571 = vmatprep.subr.bf16.mxu0 0
    %572 = vmatpush1.bf16.xpose.msra.mxu0 0
    %573 = vmatprep.mubr.bf16.mxu0 0
    %574 = vmatmul.mubr.bf16.gmra.mrb[0].mxu0 %v536
    %v575 = vpop.f32.mrb[0].mxu0
    %v576 = vadd.f32 0.0, %v575
    %v577 = vpop.f32.mrb[0].mxu0
    %v578 = vpop.f32.mrb[0].mxu0
    %v579 = vadd.f32 0.0, %v578
    %v580 = vpop.f32.mrb[0].mxu0
    %581 = vdwg.mxu0
    %583 = vrot.lane.b32.xlu0 %v468, 64
    %v584 = vpop.permute.xlu0 %583
    %v586 = vsel %vm328, %v468, 0
    %v589 = vsel %vm328, %v584, 0
    %591 = vmatprep.subr.bf16.mxu0 0
    %592 = vmatpush1.bf16.xpose.msra.mxu0 %v589
    %593 = vmatprep.subr.bf16.mxu0 0
    %594 = vmatpush1.bf16.xpose.msra.mxu0 0
    %595 = vmatprep.subr.bf16.mxu0 0
    %596 = vmatpush1.bf16.xpose.msra.mxu0 0
    %597 = vmatprep.subr.bf16.mxu0 0
    %598 = vmatpush1.bf16.xpose.msra.mxu0 0
    %599 = vmatprep.subr.bf16.mxu0 0
    %600 = vmatpush1.bf16.xpose.msra.mxu0 0
    %601 = vmatprep.subr.bf16.mxu0 0
    %602 = vmatpush1.bf16.xpose.msra.mxu0 0
    %603 = vmatprep.subr.bf16.mxu0 0
    %604 = vmatpush1.bf16.xpose.msra.mxu0 0
    %605 = vmatprep.subr.bf16.mxu0 0
    %606 = vmatpush1.bf16.xpose.msra.mxu0 0
    %607 = vmatprep.subr.bf16.mxu0 0
    %608 = vmatpush1.bf16.xpose.msra.mxu0 0
    %609 = vmatprep.subr.bf16.mxu0 0
    %610 = vmatpush1.bf16.xpose.msra.mxu0 0
    %611 = vmatprep.subr.bf16.mxu0 0
    %612 = vmatpush1.bf16.xpose.msra.mxu0 0
    %613 = vmatprep.subr.bf16.mxu0 0
    %614 = vmatpush1.bf16.xpose.msra.mxu0 0
    %615 = vmatprep.subr.bf16.mxu0 0
    %616 = vmatpush1.bf16.xpose.msra.mxu0 0
    %617 = vmatprep.subr.bf16.mxu0 0
    %618 = vmatpush1.bf16.xpose.msra.mxu0 0
    %619 = vmatprep.subr.bf16.mxu0 0
    %620 = vmatpush1.bf16.xpose.msra.mxu0 0
    %621 = vmatprep.subr.bf16.mxu0 0
    %622 = vmatpush1.bf16.xpose.msra.mxu0 0
    %623 = vmatprep.mubr.bf16.mxu0 0
    %624 = vmatmul.mubr.bf16.gmra.mrb[0].mxu0 %v586
    %v625 = vpop.f32.mrb[0].mxu0
    %v626 = vadd.f32 0.0, %v625
    %v627 = vpop.f32.mrb[0].mxu0
    %v628 = vpop.f32.mrb[0].mxu0
    %v629 = vadd.f32 0.0, %v628
    %v630 = vpop.f32.mrb[0].mxu0
    %631 = vdwg.mxu0
    %633 = vrot.lane.b32.xlu0 %v469, 64
    %v634 = vpop.permute.xlu0 %633
    %v636 = vsel %vm328, %v469, 0
    %v639 = vsel %vm328, %v634, 0
    %641 = vmatprep.subr.bf16.mxu0 0
    %642 = vmatpush1.bf16.xpose.msra.mxu0 %v639
    %643 = vmatprep.subr.bf16.mxu0 0
    %644 = vmatpush1.bf16.xpose.msra.mxu0 0
    %645 = vmatprep.subr.bf16.mxu0 0
    %646 = vmatpush1.bf16.xpose.msra.mxu0 0
    %647 = vmatprep.subr.bf16.mxu0 0
    %648 = vmatpush1.bf16.xpose.msra.mxu0 0
    %649 = vmatprep.subr.bf16.mxu0 0
    %650 = vmatpush1.bf16.xpose.msra.mxu0 0
    %651 = vmatprep.subr.bf16.mxu0 0
    %652 = vmatpush1.bf16.xpose.msra.mxu0 0
    %653 = vmatprep.subr.bf16.mxu0 0
    %654 = vmatpush1.bf16.xpose.msra.mxu0 0
    %655 = vmatprep.subr.bf16.mxu0 0
    %656 = vmatpush1.bf16.xpose.msra.mxu0 0
    %657 = vmatprep.subr.bf16.mxu0 0
    %658 = vmatpush1.bf16.xpose.msra.mxu0 0
    %659 = vmatprep.subr.bf16.mxu0 0
    %660 = vmatpush1.bf16.xpose.msra.mxu0 0
    %661 = vmatprep.subr.bf16.mxu0 0
    %662 = vmatpush1.bf16.xpose.msra.mxu0 0
    %663 = vmatprep.subr.bf16.mxu0 0
    %664 = vmatpush1.bf16.xpose.msra.mxu0 0
    %665 = vmatprep.subr.bf16.mxu0 0
    %666 = vmatpush1.bf16.xpose.msra.mxu0 0
    %667 = vmatprep.subr.bf16.mxu0 0
    %668 = vmatpush1.bf16.xpose.msra.mxu0 0
    %669 = vmatprep.subr.bf16.mxu0 0
    %670 = vmatpush1.bf16.xpose.msra.mxu0 0
    %671 = vmatprep.subr.bf16.mxu0 0
    %672 = vmatpush1.bf16.xpose.msra.mxu0 0
    %673 = vmatprep.mubr.bf16.mxu0 0
    %674 = vmatmul.mubr.bf16.gmra.mrb[0].mxu0 %v636
    %v675 = vpop.f32.mrb[0].mxu0
    %v676 = vadd.f32 0.0, %v675
    %v677 = vpop.f32.mrb[0].mxu0
    %v678 = vpop.f32.mrb[0].mxu0
    %v679 = vadd.f32 0.0, %v678
    %v680 = vpop.f32.mrb[0].mxu0
    %681 = vdwg.mxu0
    %683 = vrot.lane.b32.xlu0 %v470, 64
    %v684 = vpop.permute.xlu0 %683
    %v686 = vsel %vm328, %v470, 0
    %v689 = vsel %vm328, %v684, 0
    %691 = vmatprep.subr.bf16.mxu0 0
    %692 = vmatpush1.bf16.xpose.msra.mxu0 %v689
    %693 = vmatprep.subr.bf16.mxu0 0
    %694 = vmatpush1.bf16.xpose.msra.mxu0 0
    %695 = vmatprep.subr.bf16.mxu0 0
    %696 = vmatpush1.bf16.xpose.msra.mxu0 0
    %697 = vmatprep.subr.bf16.mxu0 0
    %698 = vmatpush1.bf16.xpose.msra.mxu0 0
    %699 = vmatprep.subr.bf16.mxu0 0
    %700 = vmatpush1.bf16.xpose.msra.mxu0 0
    %701 = vmatprep.subr.bf16.mxu0 0
    %702 = vmatpush1.bf16.xpose.msra.mxu0 0
    %703 = vmatprep.subr.bf16.mxu0 0
    %704 = vmatpush1.bf16.xpose.msra.mxu0 0
    %705 = vmatprep.subr.bf16.mxu0 0
    %706 = vmatpush1.bf16.xpose.msra.mxu0 0
    %707 = vmatprep.subr.bf16.mxu0 0
    %708 = vmatpush1.bf16.xpose.msra.mxu0 0
    %709 = vmatprep.subr.bf16.mxu0 0
    %710 = vmatpush1.bf16.xpose.msra.mxu0 0
    %711 = vmatprep.subr.bf16.mxu0 0
    %712 = vmatpush1.bf16.xpose.msra.mxu0 0
    %713 = vmatprep.subr.bf16.mxu0 0
    %714 = vmatpush1.bf16.xpose.msra.mxu0 0
    %715 = vmatprep.subr.bf16.mxu0 0
    %716 = vmatpush1.bf16.xpose.msra.mxu0 0
    %717 = vmatprep.subr.bf16.mxu0 0
    %718 = vmatpush1.bf16.xpose.msra.mxu0 0
    %719 = vmatprep.subr.bf16.mxu0 0
    %720 = vmatpush1.bf16.xpose.msra.mxu0 0
    %721 = vmatprep.subr.bf16.mxu0 0
    %722 = vmatpush1.bf16.xpose.msra.mxu0 0
    %723 = vmatprep.mubr.bf16.mxu0 0
    %724 = vmatmul.mubr.bf16.gmra.mrb[0].mxu0 %v686
    %v725 = vpop.f32.mrb[0].mxu0
    %v726 = vadd.f32 0.0, %v725
    %v727 = vpop.f32.mrb[0].mxu0
    %v728 = vpop.f32.mrb[0].mxu0
    %v729 = vadd.f32 0.0, %v728
    %v730 = vpop.f32.mrb[0].mxu0
    %731 = vdwg.mxu0
    %733 = vrot.lane.b32.xlu0 %v471, 64
    %v734 = vpop.permute.xlu0 %733
    %v736 = vsel %vm328, %v471, 0
    %v739 = vsel %vm328, %v734, 0
    %741 = vmatprep.subr.bf16.mxu0 0
    %742 = vmatpush1.bf16.xpose.msra.mxu0 %v739
    %743 = vmatprep.subr.bf16.mxu0 0
    %744 = vmatpush1.bf16.xpose.msra.mxu0 0
    %745 = vmatprep.subr.bf16.mxu0 0
    %746 = vmatpush1.bf16.xpose.msra.mxu0 0
    %747 = vmatprep.subr.bf16.mxu0 0
    %748 = vmatpush1.bf16.xpose.msra.mxu0 0
    %749 = vmatprep.subr.bf16.mxu0 0
    %750 = vmatpush1.bf16.xpose.msra.mxu0 0
    %751 = vmatprep.subr.bf16.mxu0 0
    %752 = vmatpush1.bf16.xpose.msra.mxu0 0
    %753 = vmatprep.subr.bf16.mxu0 0
    %754 = vmatpush1.bf16.xpose.msra.mxu0 0
    %755 = vmatprep.subr.bf16.mxu0 0
    %756 = vmatpush1.bf16.xpose.msra.mxu0 0
    %757 = vmatprep.subr.bf16.mxu0 0
    %758 = vmatpush1.bf16.xpose.msra.mxu0 0
    %759 = vmatprep.subr.bf16.mxu0 0
    %760 = vmatpush1.bf16.xpose.msra.mxu0 0
    %761 = vmatprep.subr.bf16.mxu0 0
    %762 = vmatpush1.bf16.xpose.msra.mxu0 0
    %763 = vmatprep.subr.bf16.mxu0 0
    %764 = vmatpush1.bf16.xpose.msra.mxu0 0
    %765 = vmatprep.subr.bf16.mxu0 0
    %766 = vmatpush1.bf16.xpose.msra.mxu0 0
    %767 = vmatprep.subr.bf16.mxu0 0
    %768 = vmatpush1.bf16.xpose.msra.mxu0 0
    %769 = vmatprep.subr.bf16.mxu0 0
    %770 = vmatpush1.bf16.xpose.msra.mxu0 0
    %771 = vmatprep.subr.bf16.mxu0 0
    %772 = vmatpush1.bf16.xpose.msra.mxu0 0
    %773 = vmatprep.mubr.bf16.mxu0 0
    %774 = vmatmul.mubr.bf16.gmra.mrb[0].mxu0 %v736
    %v775 = vpop.f32.mrb[0].mxu0
    %v776 = vadd.f32 0.0, %v775
    %v777 = vpop.f32.mrb[0].mxu0
    %v778 = vpop.f32.mrb[0].mxu0
    %v779 = vadd.f32 0.0, %v778
    %v780 = vpop.f32.mrb[0].mxu0
    %781 = vdwg.mxu0
    %783 = vrot.lane.b32.xlu0 %v472, 64
    %v784 = vpop.permute.xlu0 %783
    %v786 = vsel %vm328, %v472, 0
    %v789 = vsel %vm328, %v784, 0
    %791 = vmatprep.subr.bf16.mxu0 0
    %792 = vmatpush1.bf16.xpose.msra.mxu0 %v789
    %793 = vmatprep.subr.bf16.mxu0 0
    %794 = vmatpush1.bf16.xpose.msra.mxu0 0
    %795 = vmatprep.subr.bf16.mxu0 0
    %796 = vmatpush1.bf16.xpose.msra.mxu0 0
    %797 = vmatprep.subr.bf16.mxu0 0
    %798 = vmatpush1.bf16.xpose.msra.mxu0 0
    %799 = vmatprep.subr.bf16.mxu0 0
    %800 = vmatpush1.bf16.xpose.msra.mxu0 0
    %801 = vmatprep.subr.bf16.mxu0 0
    %802 = vmatpush1.bf16.xpose.msra.mxu0 0
    %803 = vmatprep.subr.bf16.mxu0 0
    %804 = vmatpush1.bf16.xpose.msra.mxu0 0
    %805 = vmatprep.subr.bf16.mxu0 0
    %806 = vmatpush1.bf16.xpose.msra.mxu0 0
    %807 = vmatprep.subr.bf16.mxu0 0
    %808 = vmatpush1.bf16.xpose.msra.mxu0 0
    %809 = vmatprep.subr.bf16.mxu0 0
    %810 = vmatpush1.bf16.xpose.msra.mxu0 0
    %811 = vmatprep.subr.bf16.mxu0 0
    %812 = vmatpush1.bf16.xpose.msra.mxu0 0
    %813 = vmatprep.subr.bf16.mxu0 0
    %814 = vmatpush1.bf16.xpose.msra.mxu0 0
    %815 = vmatprep.subr.bf16.mxu0 0
    %816 = vmatpush1.bf16.xpose.msra.mxu0 0
    %817 = vmatprep.subr.bf16.mxu0 0
    %818 = vmatpush1.bf16.xpose.msra.mxu0 0
    %819 = vmatprep.subr.bf16.mxu0 0
    %820 = vmatpush1.bf16.xpose.msra.mxu0 0
    %821 = vmatprep.subr.bf16.mxu0 0
    %822 = vmatpush1.bf16.xpose.msra.mxu0 0
    %823 = vmatprep.mubr.bf16.mxu0 0
    %824 = vmatmul.mubr.bf16.gmra.mrb[0].mxu0 %v786
    %v825 = vpop.f32.mrb[0].mxu0
    %v826 = vadd.f32 0.0, %v825
    %v827 = vpop.f32.mrb[0].mxu0
    %v828 = vpop.f32.mrb[0].mxu0
    %v829 = vadd.f32 0.0, %v828
    %v830 = vpop.f32.mrb[0].mxu0
    %831 = vdwg.mxu0
    %833 = vrot.lane.b32.xlu0 %v473, 64
    %v834 = vpop.permute.xlu0 %833
    %v836 = vsel %vm328, %v473, 0
    %v839 = vsel %vm328, %v834, 0
    %841 = vmatprep.subr.bf16.mxu0 0
    %842 = vmatpush1.bf16.xpose.msra.mxu0 %v839
    %843 = vmatprep.subr.bf16.mxu0 0
    %844 = vmatpush1.bf16.xpose.msra.mxu0 0
    %845 = vmatprep.subr.bf16.mxu0 0
    %846 = vmatpush1.bf16.xpose.msra.mxu0 0
    %847 = vmatprep.subr.bf16.mxu0 0
    %848 = vmatpush1.bf16.xpose.msra.mxu0 0
    %849 = vmatprep.subr.bf16.mxu0 0
    %850 = vmatpush1.bf16.xpose.msra.mxu0 0
    %851 = vmatprep.subr.bf16.mxu0 0
    %852 = vmatpush1.bf16.xpose.msra.mxu0 0
    %853 = vmatprep.subr.bf16.mxu0 0
    %854 = vmatpush1.bf16.xpose.msra.mxu0 0
    %855 = vmatprep.subr.bf16.mxu0 0
    %856 = vmatpush1.bf16.xpose.msra.mxu0 0
    %857 = vmatprep.subr.bf16.mxu0 0
    %858 = vmatpush1.bf16.xpose.msra.mxu0 0
    %859 = vmatprep.subr.bf16.mxu0 0
    %860 = vmatpush1.bf16.xpose.msra.mxu0 0
    %861 = vmatprep.subr.bf16.mxu0 0
    %862 = vmatpush1.bf16.xpose.msra.mxu0 0
    %863 = vmatprep.subr.bf16.mxu0 0
    %864 = vmatpush1.bf16.xpose.msra.mxu0 0
    %865 = vmatprep.subr.bf16.mxu0 0
    %866 = vmatpush1.bf16.xpose.msra.mxu0 0
    %867 = vmatprep.subr.bf16.mxu0 0
    %868 = vmatpush1.bf16.xpose.msra.mxu0 0
    %869 = vmatprep.subr.bf16.mxu0 0
    %870 = vmatpush1.bf16.xpose.msra.mxu0 0
    %871 = vmatprep.subr.bf16.mxu0 0
    %872 = vmatpush1.bf16.xpose.msra.mxu0 0
    %873 = vmatprep.mubr.bf16.mxu0 0
    %874 = vmatmul.mubr.bf16.gmra.mrb[0].mxu0 %v836
    %v875 = vpop.f32.mrb[0].mxu0
    %v876 = vadd.f32 0.0, %v875
    %v877 = vpop.f32.mrb[0].mxu0
    %v878 = vpop.f32.mrb[0].mxu0
    %v879 = vadd.f32 0.0, %v878
    %v880 = vpop.f32.mrb[0].mxu0
    %881 = vdwg.mxu0
    %v882 = vmul.f32 %v526, 0.17677669
    %v883 = vmul.f32 %v529, 0.17677669
    %v884 = vmul.f32 %v576, 0.17677669
    %v885 = vmul.f32 %v579, 0.17677669
    %v886 = vmul.f32 %v626, 0.17677669
    %v887 = vmul.f32 %v629, 0.17677669
    %v888 = vmul.f32 %v676, 0.17677669
    %v889 = vmul.f32 %v679, 0.17677669
    %v890 = vmul.f32 %v726, 0.17677669
    %v891 = vmul.f32 %v729, 0.17677669
    %v892 = vmul.f32 %v776, 0.17677669
    %v893 = vmul.f32 %v779, 0.17677669
    %v894 = vmul.f32 %v826, 0.17677669
    %v895 = vmul.f32 %v829, 0.17677669
    %v896 = vmul.f32 %v876, 0.17677669
    %v897 = vmul.f32 %v879, 0.17677669
    %v898 = vadd.f32 %v882, %v294
    %v899 = vadd.f32 %v883, %v294
    %v900 = vadd.f32 %v884, %v294
    %v901 = vadd.f32 %v885, %v294
    %v902 = vadd.f32 %v886, %v294
    %v903 = vadd.f32 %v887, %v294
    %v904 = vadd.f32 %v888, %v294
    %v905 = vadd.f32 %v889, %v294
    %v906 = vadd.f32 %v890, %v294
    %v907 = vadd.f32 %v891, %v294
    %v908 = vadd.f32 %v892, %v294
    %v909 = vadd.f32 %v893, %v294
    %v910 = vadd.f32 %v894, %v294
    %v911 = vadd.f32 %v895, %v294
    %v912 = vadd.f32 %v896, %v294
    %v913 = vadd.f32 %v897, %v294
    %vm914 = vcmask 130048
    %v915 = vsel %vm914, %v898, -inf
    %916 = vmax.xlane.f32.xlu0 %v915
    %v917 = vpop.xlane.xlu0 %916
    %v918 = vsel %vm914, %v899, -inf
    %919 = vmax.xlane.f32.xlu0 %v918
    %v920 = vpop.xlane.xlu0 %919
    %v921 = vsel %vm914, %v900, -inf
    %922 = vmax.xlane.f32.xlu0 %v921
    %v923 = vpop.xlane.xlu0 %922
    %v924 = vsel %vm914, %v901, -inf
    %925 = vmax.xlane.f32.xlu0 %v924
    %v926 = vpop.xlane.xlu0 %925
    %v927 = vsel %vm914, %v902, -inf
    %928 = vmax.xlane.f32.xlu0 %v927
    %v929 = vpop.xlane.xlu0 %928
    %v930 = vsel %vm914, %v903, -inf
    %931 = vmax.xlane.f32.xlu0 %v930
    %v932 = vpop.xlane.xlu0 %931
    %v933 = vsel %vm914, %v904, -inf
    %934 = vmax.xlane.f32.xlu0 %v933
    %v935 = vpop.xlane.xlu0 %934
    %v936 = vsel %vm914, %v905, -inf
    %937 = vmax.xlane.f32.xlu0 %v936
    %v938 = vpop.xlane.xlu0 %937
    %v939 = vsel %vm914, %v906, -inf
    %940 = vmax.xlane.f32.xlu0 %v939
    %v941 = vpop.xlane.xlu0 %940
    %v942 = vsel %vm914, %v907, -inf
    %943 = vmax.xlane.f32.xlu0 %v942
    %v944 = vpop.xlane.xlu0 %943
    %v945 = vsel %vm914, %v908, -inf
    %946 = vmax.xlane.f32.xlu0 %v945
    %v947 = vpop.xlane.xlu0 %946
    %v948 = vsel %vm914, %v909, -inf
    %949 = vmax.xlane.f32.xlu0 %v948
    %v950 = vpop.xlane.xlu0 %949
    %v951 = vsel %vm914, %v910, -inf
    %952 = vmax.xlane.f32.xlu0 %v951
    %v953 = vpop.xlane.xlu0 %952
    %v954 = vsel %vm914, %v911, -inf
    %955 = vmax.xlane.f32.xlu0 %v954
    %v956 = vpop.xlane.xlu0 %955
    %v957 = vsel %vm914, %v912, -inf
    %958 = vmax.xlane.f32.xlu0 %v957
    %v959 = vpop.xlane.xlu0 %958
    %v960 = vsel %vm914, %v913, -inf
    %961 = vmax.xlane.f32.xlu0 %v960
    %v962 = vpop.xlane.xlu0 %961
    %v963 = vsub.f32 %v898, %v917
    %v964 = vsub.f32 %v899, %v920
    %v965 = vsub.f32 %v900, %v923
    %v966 = vsub.f32 %v901, %v926
    %v967 = vsub.f32 %v902, %v929
    %v968 = vsub.f32 %v903, %v932
    %v969 = vsub.f32 %v904, %v935
    %v970 = vsub.f32 %v905, %v938
    %v971 = vsub.f32 %v906, %v941
    %v972 = vsub.f32 %v907, %v944
    %v973 = vsub.f32 %v908, %v947
    %v974 = vsub.f32 %v909, %v950
    %v975 = vsub.f32 %v910, %v953
    %v976 = vsub.f32 %v911, %v956
    %v977 = vsub.f32 %v912, %v959
    %v978 = vsub.f32 %v913, %v962
    %v979 = vmul.f32 %v963, 1.442695
    %v980 = vpow.pop %v979
    %v981 = vmul.f32 %v964, 1.442695
    %v982 = vpow.pop %v981
    %v983 = vmul.f32 %v965, 1.442695
    %v984 = vpow.pop %v983
    %v985 = vmul.f32 %v966, 1.442695
    %v986 = vpow.pop %v985
    %v987 = vmul.f32 %v967, 1.442695
    %v988 = vpow.pop %v987
    %v989 = vmul.f32 %v968, 1.442695
    %v990 = vpow.pop %v989
    %v991 = vmul.f32 %v969, 1.442695
    %v992 = vpow.pop %v991
    %v993 = vmul.f32 %v970, 1.442695
    %v994 = vpow.pop %v993
    %v995 = vmul.f32 %v971, 1.442695
    %v996 = vpow.pop %v995
    %v997 = vmul.f32 %v972, 1.442695
    %v998 = vpow.pop %v997
    %v999 = vmul.f32 %v973, 1.442695
    %v1000 = vpow.pop %v999
    %v1001 = vmul.f32 %v974, 1.442695
    %v1002 = vpow.pop %v1001
    %v1003 = vmul.f32 %v975, 1.442695
    %v1004 = vpow.pop %v1003
    %v1005 = vmul.f32 %v976, 1.442695
    %v1006 = vpow.pop %v1005
    %v1007 = vmul.f32 %v977, 1.442695
    %v1008 = vpow.pop %v1007
    %v1009 = vmul.f32 %v978, 1.442695
    %v1010 = vpow.pop %v1009
    %v1011 = vsel %vm914, %v980, 0.0
    %1012 = vadd.xlane.f32.xlu0 %v1011
    %v1013 = vpop.xlane.xlu0 %1012
    %v1014 = vsel %vm914, %v982, 0.0
    %1015 = vadd.xlane.f32.xlu0 %v1014
    %v1016 = vpop.xlane.xlu0 %1015
    %v1017 = vsel %vm914, %v984, 0.0
    %1018 = vadd.xlane.f32.xlu0 %v1017
    %v1019 = vpop.xlane.xlu0 %1018
    %v1020 = vsel %vm914, %v986, 0.0
    %1021 = vadd.xlane.f32.xlu0 %v1020
    %v1022 = vpop.xlane.xlu0 %1021
    %v1023 = vsel %vm914, %v988, 0.0
    %1024 = vadd.xlane.f32.xlu0 %v1023
    %v1025 = vpop.xlane.xlu0 %1024
    %v1026 = vsel %vm914, %v990, 0.0
    %1027 = vadd.xlane.f32.xlu0 %v1026
    %v1028 = vpop.xlane.xlu0 %1027
    %v1029 = vsel %vm914, %v992, 0.0
    %1030 = vadd.xlane.f32.xlu0 %v1029
    %v1031 = vpop.xlane.xlu0 %1030
    %v1032 = vsel %vm914, %v994, 0.0
    %1033 = vadd.xlane.f32.xlu0 %v1032
    %v1034 = vpop.xlane.xlu0 %1033
    %v1035 = vsel %vm914, %v996, 0.0
    %1036 = vadd.xlane.f32.xlu0 %v1035
    %v1037 = vpop.xlane.xlu0 %1036
    %v1038 = vsel %vm914, %v998, 0.0
    %1039 = vadd.xlane.f32.xlu0 %v1038
    %v1040 = vpop.xlane.xlu0 %1039
    %v1041 = vsel %vm914, %v1000, 0.0
    %1042 = vadd.xlane.f32.xlu0 %v1041
    %v1043 = vpop.xlane.xlu0 %1042
    %v1044 = vsel %vm914, %v1002, 0.0
    %1045 = vadd.xlane.f32.xlu0 %v1044
    %v1046 = vpop.xlane.xlu0 %1045
    %v1047 = vsel %vm914, %v1004, 0.0
    %1048 = vadd.xlane.f32.xlu0 %v1047
    %v1049 = vpop.xlane.xlu0 %1048
    %v1050 = vsel %vm914, %v1006, 0.0
    %1051 = vadd.xlane.f32.xlu0 %v1050
    %v1052 = vpop.xlane.xlu0 %1051
    %v1053 = vsel %vm914, %v1008, 0.0
    %1054 = vadd.xlane.f32.xlu0 %v1053
    %v1055 = vpop.xlane.xlu0 %1054
    %v1056 = vsel %vm914, %v1010, 0.0
    %1057 = vadd.xlane.f32.xlu0 %v1056
    %v1058 = vpop.xlane.xlu0 %1057
    %v1059 = vrcp.pop %v1013
    %v1060 = vrcp.pop %v1016
    %v1061 = vrcp.pop %v1019
    %v1062 = vrcp.pop %v1022
    %v1063 = vrcp.pop %v1025
    %v1064 = vrcp.pop %v1028
    %v1065 = vrcp.pop %v1031
    %v1066 = vrcp.pop %v1034
    %v1067 = vrcp.pop %v1037
    %v1068 = vrcp.pop %v1040
    %v1069 = vrcp.pop %v1043
    %v1070 = vrcp.pop %v1046
    %v1071 = vrcp.pop %v1049
    %v1072 = vrcp.pop %v1052
    %v1073 = vrcp.pop %v1055
    %v1074 = vrcp.pop %v1058
    %v1075 = vmul.f32 %v980, %v1059
    %v1076 = vmul.f32 %v982, %v1060
    %v1077 = vmul.f32 %v984, %v1061
    %v1078 = vmul.f32 %v986, %v1062
    %v1079 = vmul.f32 %v988, %v1063
    %v1080 = vmul.f32 %v990, %v1064
    %v1081 = vmul.f32 %v992, %v1065
    %v1082 = vmul.f32 %v994, %v1066
    %v1083 = vmul.f32 %v996, %v1067
    %v1084 = vmul.f32 %v998, %v1068
    %v1085 = vmul.f32 %v1000, %v1069
    %v1086 = vmul.f32 %v1002, %v1070
    %v1087 = vmul.f32 %v1004, %v1071
    %v1088 = vmul.f32 %v1006, %v1072
    %v1089 = vmul.f32 %v1008, %v1073
    %v1090 = vmul.f32 %v1010, %v1074
    %v1091 = vpack.c.bf16 %v1076, %v1075
    %v1092 = vpack.c.bf16 %v1078, %v1077
    %v1093 = vpack.c.bf16 %v1080, %v1079
    %v1094 = vpack.c.bf16 %v1082, %v1081
    %v1095 = vpack.c.bf16 %v1084, %v1083
    %v1096 = vpack.c.bf16 %v1086, %v1085
    %v1097 = vpack.c.bf16 %v1088, %v1087
    %v1098 = vpack.c.bf16 %v1090, %v1089
    %v1100 = vsel %vm914, %v1091, 0
    %1102 = vmatprep.subr.bf16.mxu0 0
    %1103 = vmatpush1.bf16.msra.mxu0 %v474
    %1104 = vmatprep.subr.bf16.mxu0 0
    %1105 = vmatpush1.bf16.msra.mxu0 0
    %1106 = vmatprep.subr.bf16.mxu0 0
    %1107 = vmatpush1.bf16.msra.mxu0 0
    %1108 = vmatprep.subr.bf16.mxu0 0
    %1109 = vmatpush1.bf16.msra.mxu0 0
    %1110 = vmatprep.subr.bf16.mxu0 0
    %1111 = vmatpush1.bf16.msra.mxu0 0
    %1112 = vmatprep.subr.bf16.mxu0 0
    %1113 = vmatpush1.bf16.msra.mxu0 0
    %1114 = vmatprep.subr.bf16.mxu0 0
    %1115 = vmatpush1.bf16.msra.mxu0 0
    %1116 = vmatprep.subr.bf16.mxu0 0
    %1117 = vmatpush1.bf16.msra.mxu0 0
    %1118 = vmatprep.subr.bf16.mxu0 0
    %1119 = vmatpush1.bf16.msra.mxu0 0
    %1120 = vmatprep.subr.bf16.mxu0 0
    %1121 = vmatpush1.bf16.msra.mxu0 0
    %1122 = vmatprep.subr.bf16.mxu0 0
    %1123 = vmatpush1.bf16.msra.mxu0 0
    %1124 = vmatprep.subr.bf16.mxu0 0
    %1125 = vmatpush1.bf16.msra.mxu0 0
    %1126 = vmatprep.subr.bf16.mxu0 0
    %1127 = vmatpush1.bf16.msra.mxu0 0
    %1128 = vmatprep.subr.bf16.mxu0 0
    %1129 = vmatpush1.bf16.msra.mxu0 0
    %1130 = vmatprep.subr.bf16.mxu0 0
    %1131 = vmatpush1.bf16.msra.mxu0 0
    %1132 = vmatprep.subr.bf16.mxu0 0
    %1133 = vmatpush1.bf16.msra.mxu0 0
    %1134 = vmatprep.mubr.bf16.mxu0 0
    %1135 = vmatmul.mubr.bf16.gmra.mrb[0].mxu0 %v1100
    %v1136 = vpop.f32.mrb[0].mxu0
    %v1137 = vadd.f32 0.0, %v1136
    %v1138 = vpop.f32.mrb[0].mxu0
    %v1139 = vpop.f32.mrb[0].mxu0
    %v1140 = vadd.f32 0.0, %v1139
    %v1141 = vpop.f32.mrb[0].mxu0
    %1142 = vdwg.mxu0
    %v1144 = vsel %vm914, %v1092, 0
    %1146 = vmatprep.subr.bf16.mxu0 0
    %1147 = vmatpush1.bf16.msra.mxu0 %v475
    %1148 = vmatprep.subr.bf16.mxu0 0
    %1149 = vmatpush1.bf16.msra.mxu0 0
    %1150 = vmatprep.subr.bf16.mxu0 0
    %1151 = vmatpush1.bf16.msra.mxu0 0
    %1152 = vmatprep.subr.bf16.mxu0 0
    %1153 = vmatpush1.bf16.msra.mxu0 0
    %1154 = vmatprep.subr.bf16.mxu0 0
    %1155 = vmatpush1.bf16.msra.mxu0 0
    %1156 = vmatprep.subr.bf16.mxu0 0
    %1157 = vmatpush1.bf16.msra.mxu0 0
    %1158 = vmatprep.subr.bf16.mxu0 0
    %1159 = vmatpush1.bf16.msra.mxu0 0
    %1160 = vmatprep.subr.bf16.mxu0 0
    %1161 = vmatpush1.bf16.msra.mxu0 0
    %1162 = vmatprep.subr.bf16.mxu0 0
    %1163 = vmatpush1.bf16.msra.mxu0 0
    %1164 = vmatprep.subr.bf16.mxu0 0
    %1165 = vmatpush1.bf16.msra.mxu0 0
    %1166 = vmatprep.subr.bf16.mxu0 0
    %1167 = vmatpush1.bf16.msra.mxu0 0
    %1168 = vmatprep.subr.bf16.mxu0 0
    %1169 = vmatpush1.bf16.msra.mxu0 0
    %1170 = vmatprep.subr.bf16.mxu0 0
    %1171 = vmatpush1.bf16.msra.mxu0 0
    %1172 = vmatprep.subr.bf16.mxu0 0
    %1173 = vmatpush1.bf16.msra.mxu0 0
    %1174 = vmatprep.subr.bf16.mxu0 0
    %1175 = vmatpush1.bf16.msra.mxu0 0
    %1176 = vmatprep.subr.bf16.mxu0 0
    %1177 = vmatpush1.bf16.msra.mxu0 0
    %1178 = vmatprep.mubr.bf16.mxu0 0
    %1179 = vmatmul.mubr.bf16.gmra.mrb[0].mxu0 %v1144
    %v1180 = vpop.f32.mrb[0].mxu0
    %v1181 = vadd.f32 0.0, %v1180
    %v1182 = vpop.f32.mrb[0].mxu0
    %v1183 = vpop.f32.mrb[0].mxu0
    %v1184 = vadd.f32 0.0, %v1183
    %v1185 = vpop.f32.mrb[0].mxu0
    %1186 = vdwg.mxu0
    %v1188 = vsel %vm914, %v1093, 0
    %1190 = vmatprep.subr.bf16.mxu0 0
    %1191 = vmatpush1.bf16.msra.mxu0 %v476
    %1192 = vmatprep.subr.bf16.mxu0 0
    %1193 = vmatpush1.bf16.msra.mxu0 0
    %1194 = vmatprep.subr.bf16.mxu0 0
    %1195 = vmatpush1.bf16.msra.mxu0 0
    %1196 = vmatprep.subr.bf16.mxu0 0
    %1197 = vmatpush1.bf16.msra.mxu0 0
    %1198 = vmatprep.subr.bf16.mxu0 0
    %1199 = vmatpush1.bf16.msra.mxu0 0
    %1200 = vmatprep.subr.bf16.mxu0 0
    %1201 = vmatpush1.bf16.msra.mxu0 0
    %1202 = vmatprep.subr.bf16.mxu0 0
    %1203 = vmatpush1.bf16.msra.mxu0 0
    %1204 = vmatprep.subr.bf16.mxu0 0
    %1205 = vmatpush1.bf16.msra.mxu0 0
    %1206 = vmatprep.subr.bf16.mxu0 0
    %1207 = vmatpush1.bf16.msra.mxu0 0
    %1208 = vmatprep.subr.bf16.mxu0 0
    %1209 = vmatpush1.bf16.msra.mxu0 0
    %1210 = vmatprep.subr.bf16.mxu0 0
    %1211 = vmatpush1.bf16.msra.mxu0 0
    %1212 = vmatprep.subr.bf16.mxu0 0
    %1213 = vmatpush1.bf16.msra.mxu0 0
    %1214 = vmatprep.subr.bf16.mxu0 0
    %1215 = vmatpush1.bf16.msra.mxu0 0
    %1216 = vmatprep.subr.bf16.mxu0 0
    %1217 = vmatpush1.bf16.msra.mxu0 0
    %1218 = vmatprep.subr.bf16.mxu0 0
    %1219 = vmatpush1.bf16.msra.mxu0 0
    %1220 = vmatprep.subr.bf16.mxu0 0
    %1221 = vmatpush1.bf16.msra.mxu0 0
    %1222 = vmatprep.mubr.bf16.mxu0 0
    %1223 = vmatmul.mubr.bf16.gmra.mrb[0].mxu0 %v1188
    %v1224 = vpop.f32.mrb[0].mxu0
    %v1225 = vadd.f32 0.0, %v1224
    %v1226 = vpop.f32.mrb[0].mxu0
    %v1227 = vpop.f32.mrb[0].mxu0
    %v1228 = vadd.f32 0.0, %v1227
    %v1229 = vpop.f32.mrb[0].mxu0
    %1230 = vdwg.mxu0
    %v1232 = vsel %vm914, %v1094, 0
    %1234 = vmatprep.subr.bf16.mxu0 0
    %1235 = vmatpush1.bf16.msra.mxu0 %v477
    %1236 = vmatprep.subr.bf16.mxu0 0
    %1237 = vmatpush1.bf16.msra.mxu0 0
    %1238 = vmatprep.subr.bf16.mxu0 0
    %1239 = vmatpush1.bf16.msra.mxu0 0
    %1240 = vmatprep.subr.bf16.mxu0 0
    %1241 = vmatpush1.bf16.msra.mxu0 0
    %1242 = vmatprep.subr.bf16.mxu0 0
    %1243 = vmatpush1.bf16.msra.mxu0 0
    %1244 = vmatprep.subr.bf16.mxu0 0
    %1245 = vmatpush1.bf16.msra.mxu0 0
    %1246 = vmatprep.subr.bf16.mxu0 0
    %1247 = vmatpush1.bf16.msra.mxu0 0
    %1248 = vmatprep.subr.bf16.mxu0 0
    %1249 = vmatpush1.bf16.msra.mxu0 0
    %1250 = vmatprep.subr.bf16.mxu0 0
    %1251 = vmatpush1.bf16.msra.mxu0 0
    %1252 = vmatprep.subr.bf16.mxu0 0
    %1253 = vmatpush1.bf16.msra.mxu0 0
    %1254 = vmatprep.subr.bf16.mxu0 0
    %1255 = vmatpush1.bf16.msra.mxu0 0
    %1256 = vmatprep.subr.bf16.mxu0 0
    %1257 = vmatpush1.bf16.msra.mxu0 0
    %1258 = vmatprep.subr.bf16.mxu0 0
    %1259 = vmatpush1.bf16.msra.mxu0 0
    %1260 = vmatprep.subr.bf16.mxu0 0
    %1261 = vmatpush1.bf16.msra.mxu0 0
    %1262 = vmatprep.subr.bf16.mxu0 0
    %1263 = vmatpush1.bf16.msra.mxu0 0
    %1264 = vmatprep.subr.bf16.mxu0 0
    %1265 = vmatpush1.bf16.msra.mxu0 0
    %1266 = vmatprep.mubr.bf16.mxu0 0
    %1267 = vmatmul.mubr.bf16.gmra.mrb[0].mxu0 %v1232
    %v1268 = vpop.f32.mrb[0].mxu0
    %v1269 = vadd.f32 0.0, %v1268
    %v1270 = vpop.f32.mrb[0].mxu0
    %v1271 = vpop.f32.mrb[0].mxu0
    %v1272 = vadd.f32 0.0, %v1271
    %v1273 = vpop.f32.mrb[0].mxu0
    %1274 = vdwg.mxu0
    %v1276 = vsel %vm914, %v1095, 0
    %1278 = vmatprep.subr.bf16.mxu0 0
    %1279 = vmatpush1.bf16.msra.mxu0 %v478
    %1280 = vmatprep.subr.bf16.mxu0 0
    %1281 = vmatpush1.bf16.msra.mxu0 0
    %1282 = vmatprep.subr.bf16.mxu0 0
    %1283 = vmatpush1.bf16.msra.mxu0 0
    %1284 = vmatprep.subr.bf16.mxu0 0
    %1285 = vmatpush1.bf16.msra.mxu0 0
    %1286 = vmatprep.subr.bf16.mxu0 0
    %1287 = vmatpush1.bf16.msra.mxu0 0
    %1288 = vmatprep.subr.bf16.mxu0 0
    %1289 = vmatpush1.bf16.msra.mxu0 0
    %1290 = vmatprep.subr.bf16.mxu0 0
    %1291 = vmatpush1.bf16.msra.mxu0 0
    %1292 = vmatprep.subr.bf16.mxu0 0
    %1293 = vmatpush1.bf16.msra.mxu0 0
    %1294 = vmatprep.subr.bf16.mxu0 0
    %1295 = vmatpush1.bf16.msra.mxu0 0
    %1296 = vmatprep.subr.bf16.mxu0 0
    %1297 = vmatpush1.bf16.msra.mxu0 0
    %1298 = vmatprep.subr.bf16.mxu0 0
    %1299 = vmatpush1.bf16.msra.mxu0 0
    %1300 = vmatprep.subr.bf16.mxu0 0
    %1301 = vmatpush1.bf16.msra.mxu0 0
    %1302 = vmatprep.subr.bf16.mxu0 0
    %1303 = vmatpush1.bf16.msra.mxu0 0
    %1304 = vmatprep.subr.bf16.mxu0 0
    %1305 = vmatpush1.bf16.msra.mxu0 0
    %1306 = vmatprep.subr.bf16.mxu0 0
    %1307 = vmatpush1.bf16.msra.mxu0 0
    %1308 = vmatprep.subr.bf16.mxu0 0
    %1309 = vmatpush1.bf16.msra.mxu0 0
    %1310 = vmatprep.mubr.bf16.mxu0 0
    %1311 = vmatmul.mubr.bf16.gmra.mrb[0].mxu0 %v1276
    %v1312 = vpop.f32.mrb[0].mxu0
    %v1313 = vadd.f32 0.0, %v1312
    %v1314 = vpop.f32.mrb[0].mxu0
    %v1315 = vpop.f32.mrb[0].mxu0
    %v1316 = vadd.f32 0.0, %v1315
    %v1317 = vpop.f32.mrb[0].mxu0
    %1318 = vdwg.mxu0
    %v1320 = vsel %vm914, %v1096, 0
    %1322 = vmatprep.subr.bf16.mxu0 0
    %1323 = vmatpush1.bf16.msra.mxu0 %v479
    %1324 = vmatprep.subr.bf16.mxu0 0
    %1325 = vmatpush1.bf16.msra.mxu0 0
    %1326 = vmatprep.subr.bf16.mxu0 0
    %1327 = vmatpush1.bf16.msra.mxu0 0
    %1328 = vmatprep.subr.bf16.mxu0 0
    %1329 = vmatpush1.bf16.msra.mxu0 0
    %1330 = vmatprep.subr.bf16.mxu0 0
    %1331 = vmatpush1.bf16.msra.mxu0 0
    %1332 = vmatprep.subr.bf16.mxu0 0
    %1333 = vmatpush1.bf16.msra.mxu0 0
    %1334 = vmatprep.subr.bf16.mxu0 0
    %1335 = vmatpush1.bf16.msra.mxu0 0
    %1336 = vmatprep.subr.bf16.mxu0 0
    %1337 = vmatpush1.bf16.msra.mxu0 0
    %1338 = vmatprep.subr.bf16.mxu0 0
    %1339 = vmatpush1.bf16.msra.mxu0 0
    %1340 = vmatprep.subr.bf16.mxu0 0
    %1341 = vmatpush1.bf16.msra.mxu0 0
    %1342 = vmatprep.subr.bf16.mxu0 0
    %1343 = vmatpush1.bf16.msra.mxu0 0
    %1344 = vmatprep.subr.bf16.mxu0 0
    %1345 = vmatpush1.bf16.msra.mxu0 0
    %1346 = vmatprep.subr.bf16.mxu0 0
    %1347 = vmatpush1.bf16.msra.mxu0 0
    %1348 = vmatprep.subr.bf16.mxu0 0
    %1349 = vmatpush1.bf16.msra.mxu0 0
    %1350 = vmatprep.subr.bf16.mxu0 0
    %1351 = vmatpush1.bf16.msra.mxu0 0
    %1352 = vmatprep.subr.bf16.mxu0 0
    %1353 = vmatpush1.bf16.msra.mxu0 0
    %1354 = vmatprep.mubr.bf16.mxu0 0
    %1355 = vmatmul.mubr.bf16.gmra.mrb[0].mxu0 %v1320
    %v1356 = vpop.f32.mrb[0].mxu0
    %v1357 = vadd.f32 0.0, %v1356
    %v1358 = vpop.f32.mrb[0].mxu0
    %v1359 = vpop.f32.mrb[0].mxu0
    %v1360 = vadd.f32 0.0, %v1359
    %v1361 = vpop.f32.mrb[0].mxu0
    %1362 = vdwg.mxu0
    %v1364 = vsel %vm914, %v1097, 0
    %1366 = vmatprep.subr.bf16.mxu0 0
    %1367 = vmatpush1.bf16.msra.mxu0 %v480
    %1368 = vmatprep.subr.bf16.mxu0 0
    %1369 = vmatpush1.bf16.msra.mxu0 0
    %1370 = vmatprep.subr.bf16.mxu0 0
    %1371 = vmatpush1.bf16.msra.mxu0 0
    %1372 = vmatprep.subr.bf16.mxu0 0
    %1373 = vmatpush1.bf16.msra.mxu0 0
    %1374 = vmatprep.subr.bf16.mxu0 0
    %1375 = vmatpush1.bf16.msra.mxu0 0
    %1376 = vmatprep.subr.bf16.mxu0 0
    %1377 = vmatpush1.bf16.msra.mxu0 0
    %1378 = vmatprep.subr.bf16.mxu0 0
    %1379 = vmatpush1.bf16.msra.mxu0 0
    %1380 = vmatprep.subr.bf16.mxu0 0
    %1381 = vmatpush1.bf16.msra.mxu0 0
    %1382 = vmatprep.subr.bf16.mxu0 0
    %1383 = vmatpush1.bf16.msra.mxu0 0
    %1384 = vmatprep.subr.bf16.mxu0 0
    %1385 = vmatpush1.bf16.msra.mxu0 0
    %1386 = vmatprep.subr.bf16.mxu0 0
    %1387 = vmatpush1.bf16.msra.mxu0 0
    %1388 = vmatprep.subr.bf16.mxu0 0
    %1389 = vmatpush1.bf16.msra.mxu0 0
    %1390 = vmatprep.subr.bf16.mxu0 0
    %1391 = vmatpush1.bf16.msra.mxu0 0
    %1392 = vmatprep.subr.bf16.mxu0 0
    %1393 = vmatpush1.bf16.msra.mxu0 0
    %1394 = vmatprep.subr.bf16.mxu0 0
    %1395 = vmatpush1.bf16.msra.mxu0 0
    %1396 = vmatprep.subr.bf16.mxu0 0
    %1397 = vmatpush1.bf16.msra.mxu0 0
    %1398 = vmatprep.mubr.bf16.mxu0 0
    %1399 = vmatmul.mubr.bf16.gmra.mrb[0].mxu0 %v1364
    %v1400 = vpop.f32.mrb[0].mxu0
    %v1401 = vadd.f32 0.0, %v1400
    %v1402 = vpop.f32.mrb[0].mxu0
    %v1403 = vpop.f32.mrb[0].mxu0
    %v1404 = vadd.f32 0.0, %v1403
    %v1405 = vpop.f32.mrb[0].mxu0
    %1406 = vdwg.mxu0
    %v1408 = vsel %vm914, %v1098, 0
    %1410 = vmatprep.subr.bf16.mxu0 0
    %1411 = vmatpush1.bf16.msra.mxu0 %v481
    %1412 = vmatprep.subr.bf16.mxu0 0
    %1413 = vmatpush1.bf16.msra.mxu0 0
    %1414 = vmatprep.subr.bf16.mxu0 0
    %1415 = vmatpush1.bf16.msra.mxu0 0
    %1416 = vmatprep.subr.bf16.mxu0 0
    %1417 = vmatpush1.bf16.msra.mxu0 0
    %1418 = vmatprep.subr.bf16.mxu0 0
    %1419 = vmatpush1.bf16.msra.mxu0 0
    %1420 = vmatprep.subr.bf16.mxu0 0
    %1421 = vmatpush1.bf16.msra.mxu0 0
    %1422 = vmatprep.subr.bf16.mxu0 0
    %1423 = vmatpush1.bf16.msra.mxu0 0
    %1424 = vmatprep.subr.bf16.mxu0 0
    %1425 = vmatpush1.bf16.msra.mxu0 0
    %1426 = vmatprep.subr.bf16.mxu0 0
    %1427 = vmatpush1.bf16.msra.mxu0 0
    %1428 = vmatprep.subr.bf16.mxu0 0
    %1429 = vmatpush1.bf16.msra.mxu0 0
    %1430 = vmatprep.subr.bf16.mxu0 0
    %1431 = vmatpush1.bf16.msra.mxu0 0
    %1432 = vmatprep.subr.bf16.mxu0 0
    %1433 = vmatpush1.bf16.msra.mxu0 0
    %1434 = vmatprep.subr.bf16.mxu0 0
    %1435 = vmatpush1.bf16.msra.mxu0 0
    %1436 = vmatprep.subr.bf16.mxu0 0
    %1437 = vmatpush1.bf16.msra.mxu0 0
    %1438 = vmatprep.subr.bf16.mxu0 0
    %1439 = vmatpush1.bf16.msra.mxu0 0
    %1440 = vmatprep.subr.bf16.mxu0 0
    %1441 = vmatpush1.bf16.msra.mxu0 0
    %1442 = vmatprep.mubr.bf16.mxu0 0
    %1443 = vmatmul.mubr.bf16.gmra.mrb[0].mxu0 %v1408
    %v1444 = vpop.f32.mrb[0].mxu0
    %v1445 = vadd.f32 0.0, %v1444
    %v1446 = vpop.f32.mrb[0].mxu0
    %v1447 = vpop.f32.mrb[0].mxu0
    %v1448 = vadd.f32 0.0, %v1447
    %v1449 = vpop.f32.mrb[0].mxu0
    %1450 = vdwg.mxu0
    %1451 = vrot.lane.b32.xlu0 %v466, 96
    %v1452 = vpop.permute.xlu0 %1451
    %1453 = vrot.lane.b32.xlu0 %v466, 32
    %v1454 = vpop.permute.xlu0 %1453
    %v1456 = vsel %vm328, %v1452, 0
    %v1459 = vsel %vm328, %v1454, 0
    %1461 = vmatprep.subr.bf16.mxu0 0
    %1462 = vmatpush1.bf16.xpose.msra.mxu0 %v1459
    %1463 = vmatprep.subr.bf16.mxu0 0
    %1464 = vmatpush1.bf16.xpose.msra.mxu0 0
    %1465 = vmatprep.subr.bf16.mxu0 0
    %1466 = vmatpush1.bf16.xpose.msra.mxu0 0
    %1467 = vmatprep.subr.bf16.mxu0 0
    %1468 = vmatpush1.bf16.xpose.msra.mxu0 0
    %1469 = vmatprep.subr.bf16.mxu0 0
    %1470 = vmatpush1.bf16.xpose.msra.mxu0 0
    %1471 = vmatprep.subr.bf16.mxu0 0
    %1472 = vmatpush1.bf16.xpose.msra.mxu0 0
    %1473 = vmatprep.subr.bf16.mxu0 0
    %1474 = vmatpush1.bf16.xpose.msra.mxu0 0
    %1475 = vmatprep.subr.bf16.mxu0 0
    %1476 = vmatpush1.bf16.xpose.msra.mxu0 0
    %1477 = vmatprep.subr.bf16.mxu0 0
    %1478 = vmatpush1.bf16.xpose.msra.mxu0 0
    %1479 = vmatprep.subr.bf16.mxu0 0
    %1480 = vmatpush1.bf16.xpose.msra.mxu0 0
    %1481 = vmatprep.subr.bf16.mxu0 0
    %1482 = vmatpush1.bf16.xpose.msra.mxu0 0
    %1483 = vmatprep.subr.bf16.mxu0 0
    %1484 = vmatpush1.bf16.xpose.msra.mxu0 0
    %1485 = vmatprep.subr.bf16.mxu0 0
    %1486 = vmatpush1.bf16.xpose.msra.mxu0 0
    %1487 = vmatprep.subr.bf16.mxu0 0
    %1488 = vmatpush1.bf16.xpose.msra.mxu0 0
    %1489 = vmatprep.subr.bf16.mxu0 0
    %1490 = vmatpush1.bf16.xpose.msra.mxu0 0
    %1491 = vmatprep.subr.bf16.mxu0 0
    %1492 = vmatpush1.bf16.xpose.msra.mxu0 0
    %1493 = vmatprep.mubr.bf16.mxu0 0
    %1494 = vmatmul.mubr.bf16.gmra.mrb[0].mxu0 %v1456
    %v1495 = vpop.f32.mrb[0].mxu0
    %v1496 = vadd.f32 0.0, %v1495
    %v1497 = vpop.f32.mrb[0].mxu0
    %v1498 = vpop.f32.mrb[0].mxu0
    %v1499 = vadd.f32 0.0, %v1498
    %v1500 = vpop.f32.mrb[0].mxu0
    %1501 = vdwg.mxu0
    %1502 = vrot.lane.b32.xlu0 %v467, 96
    %v1503 = vpop.permute.xlu0 %1502
    %1504 = vrot.lane.b32.xlu0 %v467, 32
    %v1505 = vpop.permute.xlu0 %1504
    %v1507 = vsel %vm328, %v1503, 0
    %v1510 = vsel %vm328, %v1505, 0
    %1512 = vmatprep.subr.bf16.mxu0 0
    %1513 = vmatpush1.bf16.xpose.msra.mxu0 %v1510
    %1514 = vmatprep.subr.bf16.mxu0 0
    %1515 = vmatpush1.bf16.xpose.msra.mxu0 0
    %1516 = vmatprep.subr.bf16.mxu0 0
    %1517 = vmatpush1.bf16.xpose.msra.mxu0 0
    %1518 = vmatprep.subr.bf16.mxu0 0
    %1519 = vmatpush1.bf16.xpose.msra.mxu0 0
    %1520 = vmatprep.subr.bf16.mxu0 0
    %1521 = vmatpush1.bf16.xpose.msra.mxu0 0
    %1522 = vmatprep.subr.bf16.mxu0 0
    %1523 = vmatpush1.bf16.xpose.msra.mxu0 0
    %1524 = vmatprep.subr.bf16.mxu0 0
    %1525 = vmatpush1.bf16.xpose.msra.mxu0 0
    %1526 = vmatprep.subr.bf16.mxu0 0
    %1527 = vmatpush1.bf16.xpose.msra.mxu0 0
    %1528 = vmatprep.subr.bf16.mxu0 0
    %1529 = vmatpush1.bf16.xpose.msra.mxu0 0
    %1530 = vmatprep.subr.bf16.mxu0 0
    %1531 = vmatpush1.bf16.xpose.msra.mxu0 0
    %1532 = vmatprep.subr.bf16.mxu0 0
    %1533 = vmatpush1.bf16.xpose.msra.mxu0 0
    %1534 = vmatprep.subr.bf16.mxu0 0
    %1535 = vmatpush1.bf16.xpose.msra.mxu0 0
    %1536 = vmatprep.subr.bf16.mxu0 0
    %1537 = vmatpush1.bf16.xpose.msra.mxu0 0
    %1538 = vmatprep.subr.bf16.mxu0 0
    %1539 = vmatpush1.bf16.xpose.msra.mxu0 0
    %1540 = vmatprep.subr.bf16.mxu0 0
    %1541 = vmatpush1.bf16.xpose.msra.mxu0 0
    %1542 = vmatprep.subr.bf16.mxu0 0
    %1543 = vmatpush1.bf16.xpose.msra.mxu0 0
    %1544 = vmatprep.mubr.bf16.mxu0 0
    %1545 = vmatmul.mubr.bf16.gmra.mrb[0].mxu0 %v1507
    %v1546 = vpop.f32.mrb[0].mxu0
    %v1547 = vadd.f32 0.0, %v1546
    %v1548 = vpop.f32.mrb[0].mxu0
    %v1549 = vpop.f32.mrb[0].mxu0
    %v1550 = vadd.f32 0.0, %v1549
    %v1551 = vpop.f32.mrb[0].mxu0
    %1552 = vdwg.mxu0
    %1553 = vrot.lane.b32.xlu0 %v468, 96
    %v1554 = vpop.permute.xlu0 %1553
    %1555 = vrot.lane.b32.xlu0 %v468, 32
    %v1556 = vpop.permute.xlu0 %1555
    %v1558 = vsel %vm328, %v1554, 0
    %v1561 = vsel %vm328, %v1556, 0
    %1563 = vmatprep.subr.bf16.mxu0 0
    %1564 = vmatpush1.bf16.xpose.msra.mxu0 %v1561
    %1565 = vmatprep.subr.bf16.mxu0 0
    %1566 = vmatpush1.bf16.xpose.msra.mxu0 0
    %1567 = vmatprep.subr.bf16.mxu0 0
    %1568 = vmatpush1.bf16.xpose.msra.mxu0 0
    %1569 = vmatprep.subr.bf16.mxu0 0
    %1570 = vmatpush1.bf16.xpose.msra.mxu0 0
    %1571 = vmatprep.subr.bf16.mxu0 0
    %1572 = vmatpush1.bf16.xpose.msra.mxu0 0
    %1573 = vmatprep.subr.bf16.mxu0 0
    %1574 = vmatpush1.bf16.xpose.msra.mxu0 0
    %1575 = vmatprep.subr.bf16.mxu0 0
    %1576 = vmatpush1.bf16.xpose.msra.mxu0 0
    %1577 = vmatprep.subr.bf16.mxu0 0
    %1578 = vmatpush1.bf16.xpose.msra.mxu0 0
    %1579 = vmatprep.subr.bf16.mxu0 0
    %1580 = vmatpush1.bf16.xpose.msra.mxu0 0
    %1581 = vmatprep.subr.bf16.mxu0 0
    %1582 = vmatpush1.bf16.xpose.msra.mxu0 0
    %1583 = vmatprep.subr.bf16.mxu0 0
    %1584 = vmatpush1.bf16.xpose.msra.mxu0 0
    %1585 = vmatprep.subr.bf16.mxu0 0
    %1586 = vmatpush1.bf16.xpose.msra.mxu0 0
    %1587 = vmatprep.subr.bf16.mxu0 0
    %1588 = vmatpush1.bf16.xpose.msra.mxu0 0
    %1589 = vmatprep.subr.bf16.mxu0 0
    %1590 = vmatpush1.bf16.xpose.msra.mxu0 0
    %1591 = vmatprep.subr.bf16.mxu0 0
    %1592 = vmatpush1.bf16.xpose.msra.mxu0 0
    %1593 = vmatprep.subr.bf16.mxu0 0
    %1594 = vmatpush1.bf16.xpose.msra.mxu0 0
    %1595 = vmatprep.mubr.bf16.mxu0 0
    %1596 = vmatmul.mubr.bf16.gmra.mrb[0].mxu0 %v1558
    %v1597 = vpop.f32.mrb[0].mxu0
    %v1598 = vadd.f32 0.0, %v1597
    %v1599 = vpop.f32.mrb[0].mxu0
    %v1600 = vpop.f32.mrb[0].mxu0
    %v1601 = vadd.f32 0.0, %v1600
    %v1602 = vpop.f32.mrb[0].mxu0
    %1603 = vdwg.mxu0
    %1604 = vrot.lane.b32.xlu0 %v469, 96
    %v1605 = vpop.permute.xlu0 %1604
    %1606 = vrot.lane.b32.xlu0 %v469, 32
    %v1607 = vpop.permute.xlu0 %1606
    %v1609 = vsel %vm328, %v1605, 0
    %v1612 = vsel %vm328, %v1607, 0
    %1614 = vmatprep.subr.bf16.mxu0 0
    %1615 = vmatpush1.bf16.xpose.msra.mxu0 %v1612
    %1616 = vmatprep.subr.bf16.mxu0 0
    %1617 = vmatpush1.bf16.xpose.msra.mxu0 0
    %1618 = vmatprep.subr.bf16.mxu0 0
    %1619 = vmatpush1.bf16.xpose.msra.mxu0 0
    %1620 = vmatprep.subr.bf16.mxu0 0
    %1621 = vmatpush1.bf16.xpose.msra.mxu0 0
    %1622 = vmatprep.subr.bf16.mxu0 0
    %1623 = vmatpush1.bf16.xpose.msra.mxu0 0
    %1624 = vmatprep.subr.bf16.mxu0 0
    %1625 = vmatpush1.bf16.xpose.msra.mxu0 0
    %1626 = vmatprep.subr.bf16.mxu0 0
    %1627 = vmatpush1.bf16.xpose.msra.mxu0 0
    %1628 = vmatprep.subr.bf16.mxu0 0
    %1629 = vmatpush1.bf16.xpose.msra.mxu0 0
    %1630 = vmatprep.subr.bf16.mxu0 0
    %1631 = vmatpush1.bf16.xpose.msra.mxu0 0
    %1632 = vmatprep.subr.bf16.mxu0 0
    %1633 = vmatpush1.bf16.xpose.msra.mxu0 0
    %1634 = vmatprep.subr.bf16.mxu0 0
    %1635 = vmatpush1.bf16.xpose.msra.mxu0 0
    %1636 = vmatprep.subr.bf16.mxu0 0
    %1637 = vmatpush1.bf16.xpose.msra.mxu0 0
    %1638 = vmatprep.subr.bf16.mxu0 0
    %1639 = vmatpush1.bf16.xpose.msra.mxu0 0
    %1640 = vmatprep.subr.bf16.mxu0 0
    %1641 = vmatpush1.bf16.xpose.msra.mxu0 0
    %1642 = vmatprep.subr.bf16.mxu0 0
    %1643 = vmatpush1.bf16.xpose.msra.mxu0 0
    %1644 = vmatprep.subr.bf16.mxu0 0
    %1645 = vmatpush1.bf16.xpose.msra.mxu0 0
    %1646 = vmatprep.mubr.bf16.mxu0 0
    %1647 = vmatmul.mubr.bf16.gmra.mrb[0].mxu0 %v1609
    %v1648 = vpop.f32.mrb[0].mxu0
    %v1649 = vadd.f32 0.0, %v1648
    %v1650 = vpop.f32.mrb[0].mxu0
    %v1651 = vpop.f32.mrb[0].mxu0
    %v1652 = vadd.f32 0.0, %v1651
    %v1653 = vpop.f32.mrb[0].mxu0
    %1654 = vdwg.mxu0
    %1655 = vrot.lane.b32.xlu0 %v470, 96
    %v1656 = vpop.permute.xlu0 %1655
    %1657 = vrot.lane.b32.xlu0 %v470, 32
    %v1658 = vpop.permute.xlu0 %1657
    %v1660 = vsel %vm328, %v1656, 0
    %v1663 = vsel %vm328, %v1658, 0
    %1665 = vmatprep.subr.bf16.mxu0 0
    %1666 = vmatpush1.bf16.xpose.msra.mxu0 %v1663
    %1667 = vmatprep.subr.bf16.mxu0 0
    %1668 = vmatpush1.bf16.xpose.msra.mxu0 0
    %1669 = vmatprep.subr.bf16.mxu0 0
    %1670 = vmatpush1.bf16.xpose.msra.mxu0 0
    %1671 = vmatprep.subr.bf16.mxu0 0
    %1672 = vmatpush1.bf16.xpose.msra.mxu0 0
    %1673 = vmatprep.subr.bf16.mxu0 0
    %1674 = vmatpush1.bf16.xpose.msra.mxu0 0
    %1675 = vmatprep.subr.bf16.mxu0 0
    %1676 = vmatpush1.bf16.xpose.msra.mxu0 0
    %1677 = vmatprep.subr.bf16.mxu0 0
    %1678 = vmatpush1.bf16.xpose.msra.mxu0 0
    %1679 = vmatprep.subr.bf16.mxu0 0
    %1680 = vmatpush1.bf16.xpose.msra.mxu0 0
    %1681 = vmatprep.subr.bf16.mxu0 0
    %1682 = vmatpush1.bf16.xpose.msra.mxu0 0
    %1683 = vmatprep.subr.bf16.mxu0 0
    %1684 = vmatpush1.bf16.xpose.msra.mxu0 0
    %1685 = vmatprep.subr.bf16.mxu0 0
    %1686 = vmatpush1.bf16.xpose.msra.mxu0 0
    %1687 = vmatprep.subr.bf16.mxu0 0
    %1688 = vmatpush1.bf16.xpose.msra.mxu0 0
    %1689 = vmatprep.subr.bf16.mxu0 0
    %1690 = vmatpush1.bf16.xpose.msra.mxu0 0
    %1691 = vmatprep.subr.bf16.mxu0 0
    %1692 = vmatpush1.bf16.xpose.msra.mxu0 0
    %1693 = vmatprep.subr.bf16.mxu0 0
    %1694 = vmatpush1.bf16.xpose.msra.mxu0 0
    %1695 = vmatprep.subr.bf16.mxu0 0
    %1696 = vmatpush1.bf16.xpose.msra.mxu0 0
    %1697 = vmatprep.mubr.bf16.mxu0 0
    %1698 = vmatmul.mubr.bf16.gmra.mrb[0].mxu0 %v1660
    %v1699 = vpop.f32.mrb[0].mxu0
    %v1700 = vadd.f32 0.0, %v1699
    %v1701 = vpop.f32.mrb[0].mxu0
    %v1702 = vpop.f32.mrb[0].mxu0
    %v1703 = vadd.f32 0.0, %v1702
    %v1704 = vpop.f32.mrb[0].mxu0
    %1705 = vdwg.mxu0
    %1706 = vrot.lane.b32.xlu0 %v471, 96
    %v1707 = vpop.permute.xlu0 %1706
    %1708 = vrot.lane.b32.xlu0 %v471, 32
    %v1709 = vpop.permute.xlu0 %1708
    %v1711 = vsel %vm328, %v1707, 0
    %v1714 = vsel %vm328, %v1709, 0
    %1716 = vmatprep.subr.bf16.mxu0 0
    %1717 = vmatpush1.bf16.xpose.msra.mxu0 %v1714
    %1718 = vmatprep.subr.bf16.mxu0 0
    %1719 = vmatpush1.bf16.xpose.msra.mxu0 0
    %1720 = vmatprep.subr.bf16.mxu0 0
    %1721 = vmatpush1.bf16.xpose.msra.mxu0 0
    %1722 = vmatprep.subr.bf16.mxu0 0
    %1723 = vmatpush1.bf16.xpose.msra.mxu0 0
    %1724 = vmatprep.subr.bf16.mxu0 0
    %1725 = vmatpush1.bf16.xpose.msra.mxu0 0
    %1726 = vmatprep.subr.bf16.mxu0 0
    %1727 = vmatpush1.bf16.xpose.msra.mxu0 0
    %1728 = vmatprep.subr.bf16.mxu0 0
    %1729 = vmatpush1.bf16.xpose.msra.mxu0 0
    %1730 = vmatprep.subr.bf16.mxu0 0
    %1731 = vmatpush1.bf16.xpose.msra.mxu0 0
    %1732 = vmatprep.subr.bf16.mxu0 0
    %1733 = vmatpush1.bf16.xpose.msra.mxu0 0
    %1734 = vmatprep.subr.bf16.mxu0 0
    %1735 = vmatpush1.bf16.xpose.msra.mxu0 0
    %1736 = vmatprep.subr.bf16.mxu0 0
    %1737 = vmatpush1.bf16.xpose.msra.mxu0 0
    %1738 = vmatprep.subr.bf16.mxu0 0
    %1739 = vmatpush1.bf16.xpose.msra.mxu0 0
    %1740 = vmatprep.subr.bf16.mxu0 0
    %1741 = vmatpush1.bf16.xpose.msra.mxu0 0
    %1742 = vmatprep.subr.bf16.mxu0 0
    %1743 = vmatpush1.bf16.xpose.msra.mxu0 0
    %1744 = vmatprep.subr.bf16.mxu0 0
    %1745 = vmatpush1.bf16.xpose.msra.mxu0 0
    %1746 = vmatprep.subr.bf16.mxu0 0
    %1747 = vmatpush1.bf16.xpose.msra.mxu0 0
    %1748 = vmatprep.mubr.bf16.mxu0 0
    %1749 = vmatmul.mubr.bf16.gmra.mrb[0].mxu0 %v1711
    %v1750 = vpop.f32.mrb[0].mxu0
    %v1751 = vadd.f32 0.0, %v1750
    %v1752 = vpop.f32.mrb[0].mxu0
    %v1753 = vpop.f32.mrb[0].mxu0
    %v1754 = vadd.f32 0.0, %v1753
    %v1755 = vpop.f32.mrb[0].mxu0
    %1756 = vdwg.mxu0
    %1757 = vrot.lane.b32.xlu0 %v472, 96
    %v1758 = vpop.permute.xlu0 %1757
    %1759 = vrot.lane.b32.xlu0 %v472, 32
    %v1760 = vpop.permute.xlu0 %1759
    %v1762 = vsel %vm328, %v1758, 0
    %v1765 = vsel %vm328, %v1760, 0
    %1767 = vmatprep.subr.bf16.mxu0 0
    %1768 = vmatpush1.bf16.xpose.msra.mxu0 %v1765
    %1769 = vmatprep.subr.bf16.mxu0 0
    %1770 = vmatpush1.bf16.xpose.msra.mxu0 0
    %1771 = vmatprep.subr.bf16.mxu0 0
    %1772 = vmatpush1.bf16.xpose.msra.mxu0 0
    %1773 = vmatprep.subr.bf16.mxu0 0
    %1774 = vmatpush1.bf16.xpose.msra.mxu0 0
    %1775 = vmatprep.subr.bf16.mxu0 0
    %1776 = vmatpush1.bf16.xpose.msra.mxu0 0
    %1777 = vmatprep.subr.bf16.mxu0 0
    %1778 = vmatpush1.bf16.xpose.msra.mxu0 0
    %1779 = vmatprep.subr.bf16.mxu0 0
    %1780 = vmatpush1.bf16.xpose.msra.mxu0 0
    %1781 = vmatprep.subr.bf16.mxu0 0
    %1782 = vmatpush1.bf16.xpose.msra.mxu0 0
    %1783 = vmatprep.subr.bf16.mxu0 0
    %1784 = vmatpush1.bf16.xpose.msra.mxu0 0
    %1785 = vmatprep.subr.bf16.mxu0 0
    %1786 = vmatpush1.bf16.xpose.msra.mxu0 0
    %1787 = vmatprep.subr.bf16.mxu0 0
    %1788 = vmatpush1.bf16.xpose.msra.mxu0 0
    %1789 = vmatprep.subr.bf16.mxu0 0
    %1790 = vmatpush1.bf16.xpose.msra.mxu0 0
    %1791 = vmatprep.subr.bf16.mxu0 0
    %1792 = vmatpush1.bf16.xpose.msra.mxu0 0
    %1793 = vmatprep.subr.bf16.mxu0 0
    %1794 = vmatpush1.bf16.xpose.msra.mxu0 0
    %1795 = vmatprep.subr.bf16.mxu0 0
    %1796 = vmatpush1.bf16.xpose.msra.mxu0 0
    %1797 = vmatprep.subr.bf16.mxu0 0
    %1798 = vmatpush1.bf16.xpose.msra.mxu0 0
    %1799 = vmatprep.mubr.bf16.mxu0 0
    %1800 = vmatmul.mubr.bf16.gmra.mrb[0].mxu0 %v1762
    %v1801 = vpop.f32.mrb[0].mxu0
    %v1802 = vadd.f32 0.0, %v1801
    %v1803 = vpop.f32.mrb[0].mxu0
    %v1804 = vpop.f32.mrb[0].mxu0
    %v1805 = vadd.f32 0.0, %v1804
    %v1806 = vpop.f32.mrb[0].mxu0
    %1807 = vdwg.mxu0
    %1808 = vrot.lane.b32.xlu0 %v473, 96
    %v1809 = vpop.permute.xlu0 %1808
    %1810 = vrot.lane.b32.xlu0 %v473, 32
    %v1811 = vpop.permute.xlu0 %1810
    %v1813 = vsel %vm328, %v1809, 0
    %v1816 = vsel %vm328, %v1811, 0
    %1818 = vmatprep.subr.bf16.mxu0 0
    %1819 = vmatpush1.bf16.xpose.msra.mxu0 %v1816
    %1820 = vmatprep.subr.bf16.mxu0 0
    %1821 = vmatpush1.bf16.xpose.msra.mxu0 0
    %1822 = vmatprep.subr.bf16.mxu0 0
    %1823 = vmatpush1.bf16.xpose.msra.mxu0 0
    %1824 = vmatprep.subr.bf16.mxu0 0
    %1825 = vmatpush1.bf16.xpose.msra.mxu0 0
    %1826 = vmatprep.subr.bf16.mxu0 0
    %1827 = vmatpush1.bf16.xpose.msra.mxu0 0
    %1828 = vmatprep.subr.bf16.mxu0 0
    %1829 = vmatpush1.bf16.xpose.msra.mxu0 0
    %1830 = vmatprep.subr.bf16.mxu0 0
    %1831 = vmatpush1.bf16.xpose.msra.mxu0 0
    %1832 = vmatprep.subr.bf16.mxu0 0
    %1833 = vmatpush1.bf16.xpose.msra.mxu0 0
    %1834 = vmatprep.subr.bf16.mxu0 0
    %1835 = vmatpush1.bf16.xpose.msra.mxu0 0
    %1836 = vmatprep.subr.bf16.mxu0 0
    %1837 = vmatpush1.bf16.xpose.msra.mxu0 0
    %1838 = vmatprep.subr.bf16.mxu0 0
    %1839 = vmatpush1.bf16.xpose.msra.mxu0 0
    %1840 = vmatprep.subr.bf16.mxu0 0
    %1841 = vmatpush1.bf16.xpose.msra.mxu0 0
    %1842 = vmatprep.subr.bf16.mxu0 0
    %1843 = vmatpush1.bf16.xpose.msra.mxu0 0
    %1844 = vmatprep.subr.bf16.mxu0 0
    %1845 = vmatpush1.bf16.xpose.msra.mxu0 0
    %1846 = vmatprep.subr.bf16.mxu0 0
    %1847 = vmatpush1.bf16.xpose.msra.mxu0 0
    %1848 = vmatprep.subr.bf16.mxu0 0
    %1849 = vmatpush1.bf16.xpose.msra.mxu0 0
    %1850 = vmatprep.mubr.bf16.mxu0 0
    %1851 = vmatmul.mubr.bf16.gmra.mrb[0].mxu0 %v1813
    %v1852 = vpop.f32.mrb[0].mxu0
    %v1853 = vadd.f32 0.0, %v1852
    %v1854 = vpop.f32.mrb[0].mxu0
    %v1855 = vpop.f32.mrb[0].mxu0
    %v1856 = vadd.f32 0.0, %v1855
    %v1857 = vpop.f32.mrb[0].mxu0
    %1858 = vdwg.mxu0
    %v1859 = vmul.f32 %v1496, 0.17677669
    %v1860 = vmul.f32 %v1499, 0.17677669
    %v1861 = vmul.f32 %v1547, 0.17677669
    %v1862 = vmul.f32 %v1550, 0.17677669
    %v1863 = vmul.f32 %v1598, 0.17677669
    %v1864 = vmul.f32 %v1601, 0.17677669
    %v1865 = vmul.f32 %v1649, 0.17677669
    %v1866 = vmul.f32 %v1652, 0.17677669
    %v1867 = vmul.f32 %v1700, 0.17677669
    %v1868 = vmul.f32 %v1703, 0.17677669
    %v1869 = vmul.f32 %v1751, 0.17677669
    %v1870 = vmul.f32 %v1754, 0.17677669
    %v1871 = vmul.f32 %v1802, 0.17677669
    %v1872 = vmul.f32 %v1805, 0.17677669
    %v1873 = vmul.f32 %v1853, 0.17677669
    %v1874 = vmul.f32 %v1856, 0.17677669
    %v1875 = vadd.f32 %v1859, %v294
    %v1876 = vadd.f32 %v1860, %v294
    %v1877 = vadd.f32 %v1861, %v294
    %v1878 = vadd.f32 %v1862, %v294
    %v1879 = vadd.f32 %v1863, %v294
    %v1880 = vadd.f32 %v1864, %v294
    %v1881 = vadd.f32 %v1865, %v294
    %v1882 = vadd.f32 %v1866, %v294
    %v1883 = vadd.f32 %v1867, %v294
    %v1884 = vadd.f32 %v1868, %v294
    %v1885 = vadd.f32 %v1869, %v294
    %v1886 = vadd.f32 %v1870, %v294
    %v1887 = vadd.f32 %v1871, %v294
    %v1888 = vadd.f32 %v1872, %v294
    %v1889 = vadd.f32 %v1873, %v294
    %v1890 = vadd.f32 %v1874, %v294
    %v1891 = vsel %vm914, %v1875, -inf
    %1892 = vmax.xlane.f32.xlu0 %v1891
    %v1893 = vpop.xlane.xlu0 %1892
    %v1894 = vsel %vm914, %v1876, -inf
    %1895 = vmax.xlane.f32.xlu0 %v1894
    %v1896 = vpop.xlane.xlu0 %1895
    %v1897 = vsel %vm914, %v1877, -inf
    %1898 = vmax.xlane.f32.xlu0 %v1897
    %v1899 = vpop.xlane.xlu0 %1898
    %v1900 = vsel %vm914, %v1878, -inf
    %1901 = vmax.xlane.f32.xlu0 %v1900
    %v1902 = vpop.xlane.xlu0 %1901
    %v1903 = vsel %vm914, %v1879, -inf
    %1904 = vmax.xlane.f32.xlu0 %v1903
    %v1905 = vpop.xlane.xlu0 %1904
    %v1906 = vsel %vm914, %v1880, -inf
    %1907 = vmax.xlane.f32.xlu0 %v1906
    %v1908 = vpop.xlane.xlu0 %1907
    %v1909 = vsel %vm914, %v1881, -inf
    %1910 = vmax.xlane.f32.xlu0 %v1909
    %v1911 = vpop.xlane.xlu0 %1910
    %v1912 = vsel %vm914, %v1882, -inf
    %1913 = vmax.xlane.f32.xlu0 %v1912
    %v1914 = vpop.xlane.xlu0 %1913
    %v1915 = vsel %vm914, %v1883, -inf
    %1916 = vmax.xlane.f32.xlu0 %v1915
    %v1917 = vpop.xlane.xlu0 %1916
    %v1918 = vsel %vm914, %v1884, -inf
    %1919 = vmax.xlane.f32.xlu0 %v1918
    %v1920 = vpop.xlane.xlu0 %1919
    %v1921 = vsel %vm914, %v1885, -inf
    %1922 = vmax.xlane.f32.xlu0 %v1921
    %v1923 = vpop.xlane.xlu0 %1922
    %v1924 = vsel %vm914, %v1886, -inf
    %1925 = vmax.xlane.f32.xlu0 %v1924
    %v1926 = vpop.xlane.xlu0 %1925
    %v1927 = vsel %vm914, %v1887, -inf
    %1928 = vmax.xlane.f32.xlu0 %v1927
    %v1929 = vpop.xlane.xlu0 %1928
    %v1930 = vsel %vm914, %v1888, -inf
    %1931 = vmax.xlane.f32.xlu0 %v1930
    %v1932 = vpop.xlane.xlu0 %1931
    %v1933 = vsel %vm914, %v1889, -inf
    %1934 = vmax.xlane.f32.xlu0 %v1933
    %v1935 = vpop.xlane.xlu0 %1934
    %v1936 = vsel %vm914, %v1890, -inf
    %1937 = vmax.xlane.f32.xlu0 %v1936
    %v1938 = vpop.xlane.xlu0 %1937
    %v1939 = vsub.f32 %v1875, %v1893
    %v1940 = vsub.f32 %v1876, %v1896
    %v1941 = vsub.f32 %v1877, %v1899
    %v1942 = vsub.f32 %v1878, %v1902
    %v1943 = vsub.f32 %v1879, %v1905
    %v1944 = vsub.f32 %v1880, %v1908
    %v1945 = vsub.f32 %v1881, %v1911
    %v1946 = vsub.f32 %v1882, %v1914
    %v1947 = vsub.f32 %v1883, %v1917
    %v1948 = vsub.f32 %v1884, %v1920
    %v1949 = vsub.f32 %v1885, %v1923
    %v1950 = vsub.f32 %v1886, %v1926
    %v1951 = vsub.f32 %v1887, %v1929
    %v1952 = vsub.f32 %v1888, %v1932
    %v1953 = vsub.f32 %v1889, %v1935
    %v1954 = vsub.f32 %v1890, %v1938
    %v1955 = vmul.f32 %v1939, 1.442695
    %v1956 = vpow.pop %v1955
    %v1957 = vmul.f32 %v1940, 1.442695
    %v1958 = vpow.pop %v1957
    %v1959 = vmul.f32 %v1941, 1.442695
    %v1960 = vpow.pop %v1959
    %v1961 = vmul.f32 %v1942, 1.442695
    %v1962 = vpow.pop %v1961
    %v1963 = vmul.f32 %v1943, 1.442695
    %v1964 = vpow.pop %v1963
    %v1965 = vmul.f32 %v1944, 1.442695
    %v1966 = vpow.pop %v1965
    %v1967 = vmul.f32 %v1945, 1.442695
    %v1968 = vpow.pop %v1967
    %v1969 = vmul.f32 %v1946, 1.442695
    %v1970 = vpow.pop %v1969
    %v1971 = vmul.f32 %v1947, 1.442695
    %v1972 = vpow.pop %v1971
    %v1973 = vmul.f32 %v1948, 1.442695
    %v1974 = vpow.pop %v1973
    %v1975 = vmul.f32 %v1949, 1.442695
    %v1976 = vpow.pop %v1975
    %v1977 = vmul.f32 %v1950, 1.442695
    %v1978 = vpow.pop %v1977
    %v1979 = vmul.f32 %v1951, 1.442695
    %v1980 = vpow.pop %v1979
    %v1981 = vmul.f32 %v1952, 1.442695
    %v1982 = vpow.pop %v1981
    %v1983 = vmul.f32 %v1953, 1.442695
    %v1984 = vpow.pop %v1983
    %v1985 = vmul.f32 %v1954, 1.442695
    %v1986 = vpow.pop %v1985
    %v1987 = vsel %vm914, %v1956, 0.0
    %1988 = vadd.xlane.f32.xlu0 %v1987
    %v1989 = vpop.xlane.xlu0 %1988
    %v1990 = vsel %vm914, %v1958, 0.0
    %1991 = vadd.xlane.f32.xlu0 %v1990
    %v1992 = vpop.xlane.xlu0 %1991
    %v1993 = vsel %vm914, %v1960, 0.0
    %1994 = vadd.xlane.f32.xlu0 %v1993
    %v1995 = vpop.xlane.xlu0 %1994
    %v1996 = vsel %vm914, %v1962, 0.0
    %1997 = vadd.xlane.f32.xlu0 %v1996
    %v1998 = vpop.xlane.xlu0 %1997
    %v1999 = vsel %vm914, %v1964, 0.0
    %2000 = vadd.xlane.f32.xlu0 %v1999
    %v2001 = vpop.xlane.xlu0 %2000
    %v2002 = vsel %vm914, %v1966, 0.0
    %2003 = vadd.xlane.f32.xlu0 %v2002
    %v2004 = vpop.xlane.xlu0 %2003
    %v2005 = vsel %vm914, %v1968, 0.0
    %2006 = vadd.xlane.f32.xlu0 %v2005
    %v2007 = vpop.xlane.xlu0 %2006
    %v2008 = vsel %vm914, %v1970, 0.0
    %2009 = vadd.xlane.f32.xlu0 %v2008
    %v2010 = vpop.xlane.xlu0 %2009
    %v2011 = vsel %vm914, %v1972, 0.0
    %2012 = vadd.xlane.f32.xlu0 %v2011
    %v2013 = vpop.xlane.xlu0 %2012
    %v2014 = vsel %vm914, %v1974, 0.0
    %2015 = vadd.xlane.f32.xlu0 %v2014
    %v2016 = vpop.xlane.xlu0 %2015
    %v2017 = vsel %vm914, %v1976, 0.0
    %2018 = vadd.xlane.f32.xlu0 %v2017
    %v2019 = vpop.xlane.xlu0 %2018
    %v2020 = vsel %vm914, %v1978, 0.0
    %2021 = vadd.xlane.f32.xlu0 %v2020
    %v2022 = vpop.xlane.xlu0 %2021
    %v2023 = vsel %vm914, %v1980, 0.0
    %2024 = vadd.xlane.f32.xlu0 %v2023
    %v2025 = vpop.xlane.xlu0 %2024
    %v2026 = vsel %vm914, %v1982, 0.0
    %2027 = vadd.xlane.f32.xlu0 %v2026
    %v2028 = vpop.xlane.xlu0 %2027
    %v2029 = vsel %vm914, %v1984, 0.0
    %2030 = vadd.xlane.f32.xlu0 %v2029
    %v2031 = vpop.xlane.xlu0 %2030
    %v2032 = vsel %vm914, %v1986, 0.0
    %2033 = vadd.xlane.f32.xlu0 %v2032
    %v2034 = vpop.xlane.xlu0 %2033
    %v2035 = vrcp.pop %v1989
    %v2036 = vrcp.pop %v1992
    %v2037 = vrcp.pop %v1995
    %v2038 = vrcp.pop %v1998
    %v2039 = vrcp.pop %v2001
    %v2040 = vrcp.pop %v2004
    %v2041 = vrcp.pop %v2007
    %v2042 = vrcp.pop %v2010
    %v2043 = vrcp.pop %v2013
    %v2044 = vrcp.pop %v2016
    %v2045 = vrcp.pop %v2019
    %v2046 = vrcp.pop %v2022
    %v2047 = vrcp.pop %v2025
    %v2048 = vrcp.pop %v2028
    %v2049 = vrcp.pop %v2031
    %v2050 = vrcp.pop %v2034
    %v2051 = vmul.f32 %v1956, %v2035
    %v2052 = vmul.f32 %v1958, %v2036
    %v2053 = vmul.f32 %v1960, %v2037
    %v2054 = vmul.f32 %v1962, %v2038
    %v2055 = vmul.f32 %v1964, %v2039
    %v2056 = vmul.f32 %v1966, %v2040
    %v2057 = vmul.f32 %v1968, %v2041
    %v2058 = vmul.f32 %v1970, %v2042
    %v2059 = vmul.f32 %v1972, %v2043
    %v2060 = vmul.f32 %v1974, %v2044
    %v2061 = vmul.f32 %v1976, %v2045
    %v2062 = vmul.f32 %v1978, %v2046
    %v2063 = vmul.f32 %v1980, %v2047
    %v2064 = vmul.f32 %v1982, %v2048
    %v2065 = vmul.f32 %v1984, %v2049
    %v2066 = vmul.f32 %v1986, %v2050
    %v2067 = vpack.c.bf16 %v2052, %v2051
    %v2068 = vpack.c.bf16 %v2054, %v2053
    %v2069 = vpack.c.bf16 %v2056, %v2055
    %v2070 = vpack.c.bf16 %v2058, %v2057
    %v2071 = vpack.c.bf16 %v2060, %v2059
    %v2072 = vpack.c.bf16 %v2062, %v2061
    %v2073 = vpack.c.bf16 %v2064, %v2063
    %v2074 = vpack.c.bf16 %v2066, %v2065
    %2076 = vrot.lane.b32.xlu0 %v474, 96
    %v2077 = vpop.permute.xlu0 %2076
    %v2080 = vsel %vm914, %v2067, 0
    %2082 = vmatprep.subr.bf16.mxu0 0
    %2083 = vmatpush1.bf16.msra.mxu0 %v2077
    %2084 = vmatprep.subr.bf16.mxu0 0
    %2085 = vmatpush1.bf16.msra.mxu0 0
    %2086 = vmatprep.subr.bf16.mxu0 0
    %2087 = vmatpush1.bf16.msra.mxu0 0
    %2088 = vmatprep.subr.bf16.mxu0 0
    %2089 = vmatpush1.bf16.msra.mxu0 0
    %2090 = vmatprep.subr.bf16.mxu0 0
    %2091 = vmatpush1.bf16.msra.mxu0 0
    %2092 = vmatprep.subr.bf16.mxu0 0
    %2093 = vmatpush1.bf16.msra.mxu0 0
    %2094 = vmatprep.subr.bf16.mxu0 0
    %2095 = vmatpush1.bf16.msra.mxu0 0
    %2096 = vmatprep.subr.bf16.mxu0 0
    %2097 = vmatpush1.bf16.msra.mxu0 0
    %2098 = vmatprep.subr.bf16.mxu0 0
    %2099 = vmatpush1.bf16.msra.mxu0 0
    %2100 = vmatprep.subr.bf16.mxu0 0
    %2101 = vmatpush1.bf16.msra.mxu0 0
    %2102 = vmatprep.subr.bf16.mxu0 0
    %2103 = vmatpush1.bf16.msra.mxu0 0
    %2104 = vmatprep.subr.bf16.mxu0 0
    %2105 = vmatpush1.bf16.msra.mxu0 0
    %2106 = vmatprep.subr.bf16.mxu0 0
    %2107 = vmatpush1.bf16.msra.mxu0 0
    %2108 = vmatprep.subr.bf16.mxu0 0
    %2109 = vmatpush1.bf16.msra.mxu0 0
    %2110 = vmatprep.subr.bf16.mxu0 0
    %2111 = vmatpush1.bf16.msra.mxu0 0
    %2112 = vmatprep.subr.bf16.mxu0 0
    %2113 = vmatpush1.bf16.msra.mxu0 0
    %2114 = vmatprep.mubr.bf16.mxu0 0
    %2115 = vmatmul.mubr.bf16.gmra.mrb[0].mxu0 %v2080
    %v2116 = vpop.f32.mrb[0].mxu0
    %v2117 = vadd.f32 0.0, %v2116
    %v2118 = vpop.f32.mrb[0].mxu0
    %v2119 = vpop.f32.mrb[0].mxu0
    %v2120 = vadd.f32 0.0, %v2119
    %v2121 = vpop.f32.mrb[0].mxu0
    %2122 = vdwg.mxu0
    %2124 = vrot.lane.b32.xlu0 %v475, 96
    %v2125 = vpop.permute.xlu0 %2124
    %v2128 = vsel %vm914, %v2068, 0
    %2130 = vmatprep.subr.bf16.mxu0 0
    %2131 = vmatpush1.bf16.msra.mxu0 %v2125
    %2132 = vmatprep.subr.bf16.mxu0 0
    %2133 = vmatpush1.bf16.msra.mxu0 0
    %2134 = vmatprep.subr.bf16.mxu0 0
    %2135 = vmatpush1.bf16.msra.mxu0 0
    %2136 = vmatprep.subr.bf16.mxu0 0
    %2137 = vmatpush1.bf16.msra.mxu0 0
    %2138 = vmatprep.subr.bf16.mxu0 0
    %2139 = vmatpush1.bf16.msra.mxu0 0
    %2140 = vmatprep.subr.bf16.mxu0 0
    %2141 = vmatpush1.bf16.msra.mxu0 0
    %2142 = vmatprep.subr.bf16.mxu0 0
    %2143 = vmatpush1.bf16.msra.mxu0 0
    %2144 = vmatprep.subr.bf16.mxu0 0
    %2145 = vmatpush1.bf16.msra.mxu0 0
    %2146 = vmatprep.subr.bf16.mxu0 0
    %2147 = vmatpush1.bf16.msra.mxu0 0
    %2148 = vmatprep.subr.bf16.mxu0 0
    %2149 = vmatpush1.bf16.msra.mxu0 0
    %2150 = vmatprep.subr.bf16.mxu0 0
    %2151 = vmatpush1.bf16.msra.mxu0 0
    %2152 = vmatprep.subr.bf16.mxu0 0
    %2153 = vmatpush1.bf16.msra.mxu0 0
    %2154 = vmatprep.subr.bf16.mxu0 0
    %2155 = vmatpush1.bf16.msra.mxu0 0
    %2156 = vmatprep.subr.bf16.mxu0 0
    %2157 = vmatpush1.bf16.msra.mxu0 0
    %2158 = vmatprep.subr.bf16.mxu0 0
    %2159 = vmatpush1.bf16.msra.mxu0 0
    %2160 = vmatprep.subr.bf16.mxu0 0
    %2161 = vmatpush1.bf16.msra.mxu0 0
    %2162 = vmatprep.mubr.bf16.mxu0 0
    %2163 = vmatmul.mubr.bf16.gmra.mrb[0].mxu0 %v2128
    %v2164 = vpop.f32.mrb[0].mxu0
    %v2165 = vadd.f32 0.0, %v2164
    %v2166 = vpop.f32.mrb[0].mxu0
    %v2167 = vpop.f32.mrb[0].mxu0
    %v2168 = vadd.f32 0.0, %v2167
    %v2169 = vpop.f32.mrb[0].mxu0
    %2170 = vdwg.mxu0
    %2172 = vrot.lane.b32.xlu0 %v476, 96
    %v2173 = vpop.permute.xlu0 %2172
    %v2176 = vsel %vm914, %v2069, 0
    %2178 = vmatprep.subr.bf16.mxu0 0
    %2179 = vmatpush1.bf16.msra.mxu0 %v2173
    %2180 = vmatprep.subr.bf16.mxu0 0
    %2181 = vmatpush1.bf16.msra.mxu0 0
    %2182 = vmatprep.subr.bf16.mxu0 0
    %2183 = vmatpush1.bf16.msra.mxu0 0
    %2184 = vmatprep.subr.bf16.mxu0 0
    %2185 = vmatpush1.bf16.msra.mxu0 0
    %2186 = vmatprep.subr.bf16.mxu0 0
    %2187 = vmatpush1.bf16.msra.mxu0 0
    %2188 = vmatprep.subr.bf16.mxu0 0
    %2189 = vmatpush1.bf16.msra.mxu0 0
    %2190 = vmatprep.subr.bf16.mxu0 0
    %2191 = vmatpush1.bf16.msra.mxu0 0
    %2192 = vmatprep.subr.bf16.mxu0 0
    %2193 = vmatpush1.bf16.msra.mxu0 0
    %2194 = vmatprep.subr.bf16.mxu0 0
    %2195 = vmatpush1.bf16.msra.mxu0 0
    %2196 = vmatprep.subr.bf16.mxu0 0
    %2197 = vmatpush1.bf16.msra.mxu0 0
    %2198 = vmatprep.subr.bf16.mxu0 0
    %2199 = vmatpush1.bf16.msra.mxu0 0
    %2200 = vmatprep.subr.bf16.mxu0 0
    %2201 = vmatpush1.bf16.msra.mxu0 0
    %2202 = vmatprep.subr.bf16.mxu0 0
    %2203 = vmatpush1.bf16.msra.mxu0 0
    %2204 = vmatprep.subr.bf16.mxu0 0
    %2205 = vmatpush1.bf16.msra.mxu0 0
    %2206 = vmatprep.subr.bf16.mxu0 0
    %2207 = vmatpush1.bf16.msra.mxu0 0
    %2208 = vmatprep.subr.bf16.mxu0 0
    %2209 = vmatpush1.bf16.msra.mxu0 0
    %2210 = vmatprep.mubr.bf16.mxu0 0
    %2211 = vmatmul.mubr.bf16.gmra.mrb[0].mxu0 %v2176
    %v2212 = vpop.f32.mrb[0].mxu0
    %v2213 = vadd.f32 0.0, %v2212
    %v2214 = vpop.f32.mrb[0].mxu0
    %v2215 = vpop.f32.mrb[0].mxu0
    %v2216 = vadd.f32 0.0, %v2215
    %v2217 = vpop.f32.mrb[0].mxu0
    %2218 = vdwg.mxu0
    %2220 = vrot.lane.b32.xlu0 %v477, 96
    %v2221 = vpop.permute.xlu0 %2220
    %v2224 = vsel %vm914, %v2070, 0
    %2226 = vmatprep.subr.bf16.mxu0 0
    %2227 = vmatpush1.bf16.msra.mxu0 %v2221
    %2228 = vmatprep.subr.bf16.mxu0 0
    %2229 = vmatpush1.bf16.msra.mxu0 0
    %2230 = vmatprep.subr.bf16.mxu0 0
    %2231 = vmatpush1.bf16.msra.mxu0 0
    %2232 = vmatprep.subr.bf16.mxu0 0
    %2233 = vmatpush1.bf16.msra.mxu0 0
    %2234 = vmatprep.subr.bf16.mxu0 0
    %2235 = vmatpush1.bf16.msra.mxu0 0
    %2236 = vmatprep.subr.bf16.mxu0 0
    %2237 = vmatpush1.bf16.msra.mxu0 0
    %2238 = vmatprep.subr.bf16.mxu0 0
    %2239 = vmatpush1.bf16.msra.mxu0 0
    %2240 = vmatprep.subr.bf16.mxu0 0
    %2241 = vmatpush1.bf16.msra.mxu0 0
    %2242 = vmatprep.subr.bf16.mxu0 0
    %2243 = vmatpush1.bf16.msra.mxu0 0
    %2244 = vmatprep.subr.bf16.mxu0 0
    %2245 = vmatpush1.bf16.msra.mxu0 0
    %2246 = vmatprep.subr.bf16.mxu0 0
    %2247 = vmatpush1.bf16.msra.mxu0 0
    %2248 = vmatprep.subr.bf16.mxu0 0
    %2249 = vmatpush1.bf16.msra.mxu0 0
    %2250 = vmatprep.subr.bf16.mxu0 0
    %2251 = vmatpush1.bf16.msra.mxu0 0
    %2252 = vmatprep.subr.bf16.mxu0 0
    %2253 = vmatpush1.bf16.msra.mxu0 0
    %2254 = vmatprep.subr.bf16.mxu0 0
    %2255 = vmatpush1.bf16.msra.mxu0 0
    %2256 = vmatprep.subr.bf16.mxu0 0
    %2257 = vmatpush1.bf16.msra.mxu0 0
    %2258 = vmatprep.mubr.bf16.mxu0 0
    %2259 = vmatmul.mubr.bf16.gmra.mrb[0].mxu0 %v2224
    %v2260 = vpop.f32.mrb[0].mxu0
    %v2261 = vadd.f32 0.0, %v2260
    %v2262 = vpop.f32.mrb[0].mxu0
    %v2263 = vpop.f32.mrb[0].mxu0
    %v2264 = vadd.f32 0.0, %v2263
    %v2265 = vpop.f32.mrb[0].mxu0
    %2266 = vdwg.mxu0
    %2268 = vrot.lane.b32.xlu0 %v478, 96
    %v2269 = vpop.permute.xlu0 %2268
    %v2272 = vsel %vm914, %v2071, 0
    %2274 = vmatprep.subr.bf16.mxu0 0
    %2275 = vmatpush1.bf16.msra.mxu0 %v2269
    %2276 = vmatprep.subr.bf16.mxu0 0
    %2277 = vmatpush1.bf16.msra.mxu0 0
    %2278 = vmatprep.subr.bf16.mxu0 0
    %2279 = vmatpush1.bf16.msra.mxu0 0
    %2280 = vmatprep.subr.bf16.mxu0 0
    %2281 = vmatpush1.bf16.msra.mxu0 0
    %2282 = vmatprep.subr.bf16.mxu0 0
    %2283 = vmatpush1.bf16.msra.mxu0 0
    %2284 = vmatprep.subr.bf16.mxu0 0
    %2285 = vmatpush1.bf16.msra.mxu0 0
    %2286 = vmatprep.subr.bf16.mxu0 0
    %2287 = vmatpush1.bf16.msra.mxu0 0
    %2288 = vmatprep.subr.bf16.mxu0 0
    %2289 = vmatpush1.bf16.msra.mxu0 0
    %2290 = vmatprep.subr.bf16.mxu0 0
    %2291 = vmatpush1.bf16.msra.mxu0 0
    %2292 = vmatprep.subr.bf16.mxu0 0
    %2293 = vmatpush1.bf16.msra.mxu0 0
    %2294 = vmatprep.subr.bf16.mxu0 0
    %2295 = vmatpush1.bf16.msra.mxu0 0
    %2296 = vmatprep.subr.bf16.mxu0 0
    %2297 = vmatpush1.bf16.msra.mxu0 0
    %2298 = vmatprep.subr.bf16.mxu0 0
    %2299 = vmatpush1.bf16.msra.mxu0 0
    %2300 = vmatprep.subr.bf16.mxu0 0
    %2301 = vmatpush1.bf16.msra.mxu0 0
    %2302 = vmatprep.subr.bf16.mxu0 0
    %2303 = vmatpush1.bf16.msra.mxu0 0
    %2304 = vmatprep.subr.bf16.mxu0 0
    %2305 = vmatpush1.bf16.msra.mxu0 0
    %2306 = vmatprep.mubr.bf16.mxu0 0
    %2307 = vmatmul.mubr.bf16.gmra.mrb[0].mxu0 %v2272
    %v2308 = vpop.f32.mrb[0].mxu0
    %v2309 = vadd.f32 0.0, %v2308
    %v2310 = vpop.f32.mrb[0].mxu0
    %v2311 = vpop.f32.mrb[0].mxu0
    %v2312 = vadd.f32 0.0, %v2311
    %v2313 = vpop.f32.mrb[0].mxu0
    %2314 = vdwg.mxu0
    %2316 = vrot.lane.b32.xlu0 %v479, 96
    %v2317 = vpop.permute.xlu0 %2316
    %v2320 = vsel %vm914, %v2072, 0
    %2322 = vmatprep.subr.bf16.mxu0 0
    %2323 = vmatpush1.bf16.msra.mxu0 %v2317
    %2324 = vmatprep.subr.bf16.mxu0 0
    %2325 = vmatpush1.bf16.msra.mxu0 0
    %2326 = vmatprep.subr.bf16.mxu0 0
    %2327 = vmatpush1.bf16.msra.mxu0 0
    %2328 = vmatprep.subr.bf16.mxu0 0
    %2329 = vmatpush1.bf16.msra.mxu0 0
    %2330 = vmatprep.subr.bf16.mxu0 0
    %2331 = vmatpush1.bf16.msra.mxu0 0
    %2332 = vmatprep.subr.bf16.mxu0 0
    %2333 = vmatpush1.bf16.msra.mxu0 0
    %2334 = vmatprep.subr.bf16.mxu0 0
    %2335 = vmatpush1.bf16.msra.mxu0 0
    %2336 = vmatprep.subr.bf16.mxu0 0
    %2337 = vmatpush1.bf16.msra.mxu0 0
    %2338 = vmatprep.subr.bf16.mxu0 0
    %2339 = vmatpush1.bf16.msra.mxu0 0
    %2340 = vmatprep.subr.bf16.mxu0 0
    %2341 = vmatpush1.bf16.msra.mxu0 0
    %2342 = vmatprep.subr.bf16.mxu0 0
    %2343 = vmatpush1.bf16.msra.mxu0 0
    %2344 = vmatprep.subr.bf16.mxu0 0
    %2345 = vmatpush1.bf16.msra.mxu0 0
    %2346 = vmatprep.subr.bf16.mxu0 0
    %2347 = vmatpush1.bf16.msra.mxu0 0
    %2348 = vmatprep.subr.bf16.mxu0 0
    %2349 = vmatpush1.bf16.msra.mxu0 0
    %2350 = vmatprep.subr.bf16.mxu0 0
    %2351 = vmatpush1.bf16.msra.mxu0 0
    %2352 = vmatprep.subr.bf16.mxu0 0
    %2353 = vmatpush1.bf16.msra.mxu0 0
    %2354 = vmatprep.mubr.bf16.mxu0 0
    %2355 = vmatmul.mubr.bf16.gmra.mrb[0].mxu0 %v2320
    %v2356 = vpop.f32.mrb[0].mxu0
    %v2357 = vadd.f32 0.0, %v2356
    %v2358 = vpop.f32.mrb[0].mxu0
    %v2359 = vpop.f32.mrb[0].mxu0
    %v2360 = vadd.f32 0.0, %v2359
    %v2361 = vpop.f32.mrb[0].mxu0
    %2362 = vdwg.mxu0
    %2364 = vrot.lane.b32.xlu0 %v480, 96
    %v2365 = vpop.permute.xlu0 %2364
    %v2368 = vsel %vm914, %v2073, 0
    %2370 = vmatprep.subr.bf16.mxu0 0
    %2371 = vmatpush1.bf16.msra.mxu0 %v2365
    %2372 = vmatprep.subr.bf16.mxu0 0
    %2373 = vmatpush1.bf16.msra.mxu0 0
    %2374 = vmatprep.subr.bf16.mxu0 0
    %2375 = vmatpush1.bf16.msra.mxu0 0
    %2376 = vmatprep.subr.bf16.mxu0 0
    %2377 = vmatpush1.bf16.msra.mxu0 0
    %2378 = vmatprep.subr.bf16.mxu0 0
    %2379 = vmatpush1.bf16.msra.mxu0 0
    %2380 = vmatprep.subr.bf16.mxu0 0
    %2381 = vmatpush1.bf16.msra.mxu0 0
    %2382 = vmatprep.subr.bf16.mxu0 0
    %2383 = vmatpush1.bf16.msra.mxu0 0
    %2384 = vmatprep.subr.bf16.mxu0 0
    %2385 = vmatpush1.bf16.msra.mxu0 0
    %2386 = vmatprep.subr.bf16.mxu0 0
    %2387 = vmatpush1.bf16.msra.mxu0 0
    %2388 = vmatprep.subr.bf16.mxu0 0
    %2389 = vmatpush1.bf16.msra.mxu0 0
    %2390 = vmatprep.subr.bf16.mxu0 0
    %2391 = vmatpush1.bf16.msra.mxu0 0
    %2392 = vmatprep.subr.bf16.mxu0 0
    %2393 = vmatpush1.bf16.msra.mxu0 0
    %2394 = vmatprep.subr.bf16.mxu0 0
    %2395 = vmatpush1.bf16.msra.mxu0 0
    %2396 = vmatprep.subr.bf16.mxu0 0
    %2397 = vmatpush1.bf16.msra.mxu0 0
    %2398 = vmatprep.subr.bf16.mxu0 0
    %2399 = vmatpush1.bf16.msra.mxu0 0
    %2400 = vmatprep.subr.bf16.mxu0 0
    %2401 = vmatpush1.bf16.msra.mxu0 0
    %2402 = vmatprep.mubr.bf16.mxu0 0
    %2403 = vmatmul.mubr.bf16.gmra.mrb[0].mxu0 %v2368
    %v2404 = vpop.f32.mrb[0].mxu0
    %v2405 = vadd.f32 0.0, %v2404
    %v2406 = vpop.f32.mrb[0].mxu0
    %v2407 = vpop.f32.mrb[0].mxu0
    %v2408 = vadd.f32 0.0, %v2407
    %v2409 = vpop.f32.mrb[0].mxu0
    %2410 = vdwg.mxu0
    %2412 = vrot.lane.b32.xlu0 %v481, 96
    %v2413 = vpop.permute.xlu0 %2412
    %v2416 = vsel %vm914, %v2074, 0
    %2418 = vmatprep.subr.bf16.mxu0 0
    %2419 = vmatpush1.bf16.msra.mxu0 %v2413
    %2420 = vmatprep.subr.bf16.mxu0 0
    %2421 = vmatpush1.bf16.msra.mxu0 0
    %2422 = vmatprep.subr.bf16.mxu0 0
    %2423 = vmatpush1.bf16.msra.mxu0 0
    %2424 = vmatprep.subr.bf16.mxu0 0
    %2425 = vmatpush1.bf16.msra.mxu0 0
    %2426 = vmatprep.subr.bf16.mxu0 0
    %2427 = vmatpush1.bf16.msra.mxu0 0
    %2428 = vmatprep.subr.bf16.mxu0 0
    %2429 = vmatpush1.bf16.msra.mxu0 0
    %2430 = vmatprep.subr.bf16.mxu0 0
    %2431 = vmatpush1.bf16.msra.mxu0 0
    %2432 = vmatprep.subr.bf16.mxu0 0
    %2433 = vmatpush1.bf16.msra.mxu0 0
    %2434 = vmatprep.subr.bf16.mxu0 0
    %2435 = vmatpush1.bf16.msra.mxu0 0
    %2436 = vmatprep.subr.bf16.mxu0 0
    %2437 = vmatpush1.bf16.msra.mxu0 0
    %2438 = vmatprep.subr.bf16.mxu0 0
    %2439 = vmatpush1.bf16.msra.mxu0 0
    %2440 = vmatprep.subr.bf16.mxu0 0
    %2441 = vmatpush1.bf16.msra.mxu0 0
    %2442 = vmatprep.subr.bf16.mxu0 0
    %2443 = vmatpush1.bf16.msra.mxu0 0
    %2444 = vmatprep.subr.bf16.mxu0 0
    %2445 = vmatpush1.bf16.msra.mxu0 0
    %2446 = vmatprep.subr.bf16.mxu0 0
    %2447 = vmatpush1.bf16.msra.mxu0 0
    %2448 = vmatprep.subr.bf16.mxu0 0
    %2449 = vmatpush1.bf16.msra.mxu0 0
    %2450 = vmatprep.mubr.bf16.mxu0 0
    %2451 = vmatmul.mubr.bf16.gmra.mrb[0].mxu0 %v2416
    %v2452 = vpop.f32.mrb[0].mxu0
    %v2453 = vadd.f32 0.0, %v2452
    %v2454 = vpop.f32.mrb[0].mxu0
    %v2455 = vpop.f32.mrb[0].mxu0
    %v2456 = vadd.f32 0.0, %v2455
    %v2457 = vpop.f32.mrb[0].mxu0
    %2458 = vdwg.mxu0
    %2475 = vrot.lane.b32.xlu0 %v2117, 32
    %v2476 = vpop.permute.xlu0 %2475
    %2477 = vrot.lane.b32.xlu0 %v2120, 32
    %v2478 = vpop.permute.xlu0 %2477
    %2479 = vrot.lane.b32.xlu0 %v2165, 32
    %v2480 = vpop.permute.xlu0 %2479
    %2481 = vrot.lane.b32.xlu0 %v2168, 32
    %v2482 = vpop.permute.xlu0 %2481
    %2483 = vrot.lane.b32.xlu0 %v2213, 32
    %v2484 = vpop.permute.xlu0 %2483
    %2485 = vrot.lane.b32.xlu0 %v2216, 32
    %v2486 = vpop.permute.xlu0 %2485
    %2487 = vrot.lane.b32.xlu0 %v2261, 32
    %v2488 = vpop.permute.xlu0 %2487
    %2489 = vrot.lane.b32.xlu0 %v2264, 32
    %v2490 = vpop.permute.xlu0 %2489
    %2491 = vrot.lane.b32.xlu0 %v2309, 32
    %v2492 = vpop.permute.xlu0 %2491
    %2493 = vrot.lane.b32.xlu0 %v2312, 32
    %v2494 = vpop.permute.xlu0 %2493
    %2495 = vrot.lane.b32.xlu0 %v2357, 32
    %v2496 = vpop.permute.xlu0 %2495
    %2497 = vrot.lane.b32.xlu0 %v2360, 32
    %v2498 = vpop.permute.xlu0 %2497
    %2499 = vrot.lane.b32.xlu0 %v2405, 32
    %v2500 = vpop.permute.xlu0 %2499
    %2501 = vrot.lane.b32.xlu0 %v2408, 32
    %v2502 = vpop.permute.xlu0 %2501
    %2503 = vrot.lane.b32.xlu0 %v2453, 32
    %v2504 = vpop.permute.xlu0 %2503
    %2505 = vrot.lane.b32.xlu0 %v2456, 32
    %v2506 = vpop.permute.xlu0 %2505
    %v2523 = vsel %vm328, %v1137, %v2476
    %v2524 = vsel %vm328, %v1140, %v2478
    %v2525 = vsel %vm328, %v1181, %v2480
    %v2526 = vsel %vm328, %v1184, %v2482
    %v2527 = vsel %vm328, %v1225, %v2484
    %v2528 = vsel %vm328, %v1228, %v2486
    %v2529 = vsel %vm328, %v1269, %v2488
    %v2530 = vsel %vm328, %v1272, %v2490
    %v2531 = vsel %vm328, %v1313, %v2492
    %v2532 = vsel %vm328, %v1316, %v2494
    %v2533 = vsel %vm328, %v1357, %v2496
    %v2534 = vsel %vm328, %v1360, %v2498
    %v2535 = vsel %vm328, %v1401, %v2500
    %v2536 = vsel %vm328, %v1404, %v2502
    %v2537 = vsel %vm328, %v1445, %v2504
    %v2538 = vsel %vm328, %v1448, %v2506
    %v2539 = vpack.c.bf16 %v2524, %v2523
    %v2540 = vpack.c.bf16 %v2526, %v2525
    %v2541 = vpack.c.bf16 %v2528, %v2527
    %v2542 = vpack.c.bf16 %v2530, %v2529
    %v2543 = vpack.c.bf16 %v2532, %v2531
    %v2544 = vpack.c.bf16 %v2534, %v2533
    %v2545 = vpack.c.bf16 %v2536, %v2535
    %v2546 = vpack.c.bf16 %v2538, %v2537
    %v2547 = vld [vmem:[%s5] sm:$0xf]
    %v2548 = vld [vmem:[%s5 + $0x4] sm:$0xf]
    %v2549 = vld [vmem:[%s5 + $0x8] sm:$0xf]
    %v2550 = vld [vmem:[%s5 + $0xc] sm:$0xf]
    %v2551 = vld [vmem:[%s5 + $0x10] sm:$0xf]
    %v2552 = vld [vmem:[%s5 + $0x14] sm:$0xf]
    %v2553 = vld [vmem:[%s5 + $0x18] sm:$0xf]
    %v2554 = vld [vmem:[%s5 + $0x1c] sm:$0xf]
    %v2555 = vlaneseq
    %v2556 = vshrl.u32 %v2555, 7
    %v2557 = vsub.s32 0, %v2556
    %v2558 = vrot.slane %v295, %v2557
    %v2567 = vunpack.c.l.b16 %v2547
    %v2568 = vunpack.c.l.b16 %v2548
    %v2569 = vunpack.c.l.b16 %v2549
    %v2570 = vunpack.c.l.b16 %v2550
    %v2571 = vunpack.c.l.b16 %v2551
    %v2572 = vunpack.c.l.b16 %v2552
    %v2573 = vunpack.c.l.b16 %v2553
    %v2574 = vunpack.c.l.b16 %v2554
    %v2575 = vpack.c.b16 %v2568, %v2567
    %v2576 = vpack.c.b16 %v2570, %v2569
    %v2577 = vpack.c.b16 %v2572, %v2571
    %v2578 = vpack.c.b16 %v2574, %v2573
    %vm2583 = vcmask 523264
    %v2585 = vsel %vm2583, %v2539, 0
    %v2588 = vsel %vm2583, %v2540, 0
    %v2591 = vsel %vm2583, %v2541, 0
    %v2594 = vsel %vm2583, %v2542, 0
    %v2597 = vsel %vm2583, %v2543, 0
    %v2600 = vsel %vm2583, %v2544, 0
    %v2603 = vsel %vm2583, %v2545, 0
    %v2606 = vsel %vm2583, %v2546, 0
    %2608 = vmatprep.subr.bf16.mxu0 0
    %2609 = vmatpush1.bf16.msra.mxu0 %v2575
    %2610 = vmatprep.subr.bf16.mxu0 0
    %2611 = vmatpush1.bf16.msra.mxu0 %v2576
    %2612 = vmatprep.subr.bf16.mxu0 0
    %2613 = vmatpush1.bf16.msra.mxu0 %v2577
    %2614 = vmatprep.subr.bf16.mxu0 0
    %2615 = vmatpush1.bf16.msra.mxu0 %v2578
    %2616 = vmatprep.subr.bf16.mxu0 0
    %2617 = vmatpush1.bf16.msra.mxu0 0
    %2618 = vmatprep.subr.bf16.mxu0 0
    %2619 = vmatpush1.bf16.msra.mxu0 0
    %2620 = vmatprep.subr.bf16.mxu0 0
    %2621 = vmatpush1.bf16.msra.mxu0 0
    %2622 = vmatprep.subr.bf16.mxu0 0
    %2623 = vmatpush1.bf16.msra.mxu0 0
    %2624 = vmatprep.subr.bf16.mxu0 0
    %2625 = vmatpush1.bf16.msra.mxu0 0
    %2626 = vmatprep.subr.bf16.mxu0 0
    %2627 = vmatpush1.bf16.msra.mxu0 0
    %2628 = vmatprep.subr.bf16.mxu0 0
    %2629 = vmatpush1.bf16.msra.mxu0 0
    %2630 = vmatprep.subr.bf16.mxu0 0
    %2631 = vmatpush1.bf16.msra.mxu0 0
    %2632 = vmatprep.subr.bf16.mxu0 0
    %2633 = vmatpush1.bf16.msra.mxu0 0
    %2634 = vmatprep.subr.bf16.mxu0 0
    %2635 = vmatpush1.bf16.msra.mxu0 0
    %2636 = vmatprep.subr.bf16.mxu0 0
    %2637 = vmatpush1.bf16.msra.mxu0 0
    %2638 = vmatprep.subr.bf16.mxu0 0
    %2639 = vmatpush1.bf16.msra.mxu0 0
    %2640 = vmatprep.mubr.bf16.mxu0 0
    %2641 = vmatmul.mubr.bf16.gmra.mrb[0].mxu0 %v2585
    %v2642 = vpop.f32.mrb[0].mxu0
    %v2643 = vadd.f32 %v2558, %v2642
    %v2644 = vpop.f32.mrb[0].mxu0
    %v2645 = vpop.f32.mrb[0].mxu0
    %v2646 = vadd.f32 %v2558, %v2645
    %v2647 = vpop.f32.mrb[0].mxu0
    %2648 = vmatprep.mubr.bf16.mxu0 0
    %2649 = vmatmul.mubr.bf16.gmra.mrb[0].mxu0 %v2588
    %v2650 = vpop.f32.mrb[0].mxu0
    %v2651 = vadd.f32 %v2558, %v2650
    %v2652 = vpop.f32.mrb[0].mxu0
    %v2653 = vpop.f32.mrb[0].mxu0
    %v2654 = vadd.f32 %v2558, %v2653
    %v2655 = vpop.f32.mrb[0].mxu0
    %2656 = vmatprep.mubr.bf16.mxu0 0
    %2657 = vmatmul.mubr.bf16.gmra.mrb[0].mxu0 %v2591
    %v2658 = vpop.f32.mrb[0].mxu0
    %v2659 = vadd.f32 %v2558, %v2658
    %v2660 = vpop.f32.mrb[0].mxu0
    %v2661 = vpop.f32.mrb[0].mxu0
    %v2662 = vadd.f32 %v2558, %v2661
    %v2663 = vpop.f32.mrb[0].mxu0
    %2664 = vmatprep.mubr.bf16.mxu0 0
    %2665 = vmatmul.mubr.bf16.gmra.mrb[0].mxu0 %v2594
    %v2666 = vpop.f32.mrb[0].mxu0
    %v2667 = vadd.f32 %v2558, %v2666
    %v2668 = vpop.f32.mrb[0].mxu0
    %v2669 = vpop.f32.mrb[0].mxu0
    %v2670 = vadd.f32 %v2558, %v2669
    %v2671 = vpop.f32.mrb[0].mxu0
    %2672 = vmatprep.mubr.bf16.mxu0 0
    %2673 = vmatmul.mubr.bf16.gmra.mrb[0].mxu0 %v2597
    %v2674 = vpop.f32.mrb[0].mxu0
    %v2675 = vadd.f32 %v2558, %v2674
    %v2676 = vpop.f32.mrb[0].mxu0
    %v2677 = vpop.f32.mrb[0].mxu0
    %v2678 = vadd.f32 %v2558, %v2677
    %v2679 = vpop.f32.mrb[0].mxu0
    %2680 = vmatprep.mubr.bf16.mxu0 0
    %2681 = vmatmul.mubr.bf16.gmra.mrb[0].mxu0 %v2600
    %v2682 = vpop.f32.mrb[0].mxu0
    %v2683 = vadd.f32 %v2558, %v2682
    %v2684 = vpop.f32.mrb[0].mxu0
    %v2685 = vpop.f32.mrb[0].mxu0
    %v2686 = vadd.f32 %v2558, %v2685
    %v2687 = vpop.f32.mrb[0].mxu0
    %2688 = vmatprep.mubr.bf16.mxu0 0
    %2689 = vmatmul.mubr.bf16.gmra.mrb[0].mxu0 %v2603
    %v2690 = vpop.f32.mrb[0].mxu0
    %v2691 = vadd.f32 %v2558, %v2690
    %v2692 = vpop.f32.mrb[0].mxu0
    %v2693 = vpop.f32.mrb[0].mxu0
    %v2694 = vadd.f32 %v2558, %v2693
    %v2695 = vpop.f32.mrb[0].mxu0
    %2696 = vmatprep.mubr.bf16.mxu0 0
    %2697 = vmatmul.mubr.bf16.gmra.mrb[0].mxu0 %v2606
    %v2698 = vpop.f32.mrb[0].mxu0
    %v2699 = vadd.f32 %v2558, %v2698
    %v2700 = vpop.f32.mrb[0].mxu0
    %v2701 = vpop.f32.mrb[0].mxu0
    %v2702 = vadd.f32 %v2558, %v2701
    %v2703 = vpop.f32.mrb[0].mxu0
    %2704 = vdwg.mxu0
    %v2705 = vadd.f32 %v2643, %v275
    %v2706 = vadd.f32 %v2646, %v276
    %v2707 = vadd.f32 %v2651, %v277
    %v2708 = vadd.f32 %v2654, %v278
    %v2709 = vadd.f32 %v2659, %v279
    %v2710 = vadd.f32 %v2662, %v280
    %v2711 = vadd.f32 %v2667, %v281
    %v2712 = vadd.f32 %v2670, %v282
    %v2713 = vadd.f32 %v2675, %v283
    %v2714 = vadd.f32 %v2678, %v284
    %v2715 = vadd.f32 %v2683, %v285
    %v2716 = vadd.f32 %v2686, %v286
    %v2717 = vadd.f32 %v2691, %v287
    %v2718 = vadd.f32 %v2694, %v288
    %v2719 = vadd.f32 %v2699, %v289
    %v2720 = vadd.f32 %v2702, %v290
    %v2721 = vsel %vm328, %v2705, 0.0
    %2722 = vadd.xlane.f32.xlu0 %v2721
    %v2723 = vpop.xlane.xlu0 %2722
    %v2724 = vsel %vm328, %v2706, 0.0
    %2725 = vadd.xlane.f32.xlu0 %v2724
    %v2726 = vpop.xlane.xlu0 %2725
    %v2727 = vsel %vm328, %v2707, 0.0
    %2728 = vadd.xlane.f32.xlu0 %v2727
    %v2729 = vpop.xlane.xlu0 %2728
    %v2730 = vsel %vm328, %v2708, 0.0
    %2731 = vadd.xlane.f32.xlu0 %v2730
    %v2732 = vpop.xlane.xlu0 %2731
    %v2733 = vsel %vm328, %v2709, 0.0
    %2734 = vadd.xlane.f32.xlu0 %v2733
    %v2735 = vpop.xlane.xlu0 %2734
    %v2736 = vsel %vm328, %v2710, 0.0
    %2737 = vadd.xlane.f32.xlu0 %v2736
    %v2738 = vpop.xlane.xlu0 %2737
    %v2739 = vsel %vm328, %v2711, 0.0
    %2740 = vadd.xlane.f32.xlu0 %v2739
    %v2741 = vpop.xlane.xlu0 %2740
    %v2742 = vsel %vm328, %v2712, 0.0
    %2743 = vadd.xlane.f32.xlu0 %v2742
    %v2744 = vpop.xlane.xlu0 %2743
    %v2745 = vsel %vm328, %v2713, 0.0
    %2746 = vadd.xlane.f32.xlu0 %v2745
    %v2747 = vpop.xlane.xlu0 %2746
    %v2748 = vsel %vm328, %v2714, 0.0
    %2749 = vadd.xlane.f32.xlu0 %v2748
    %v2750 = vpop.xlane.xlu0 %2749
    %v2751 = vsel %vm328, %v2715, 0.0
    %2752 = vadd.xlane.f32.xlu0 %v2751
    %v2753 = vpop.xlane.xlu0 %2752
    %v2754 = vsel %vm328, %v2716, 0.0
    %2755 = vadd.xlane.f32.xlu0 %v2754
    %v2756 = vpop.xlane.xlu0 %2755
    %v2757 = vsel %vm328, %v2717, 0.0
    %2758 = vadd.xlane.f32.xlu0 %v2757
    %v2759 = vpop.xlane.xlu0 %2758
    %v2760 = vsel %vm328, %v2718, 0.0
    %2761 = vadd.xlane.f32.xlu0 %v2760
    %v2762 = vpop.xlane.xlu0 %2761
    %v2763 = vsel %vm328, %v2719, 0.0
    %2764 = vadd.xlane.f32.xlu0 %v2763
    %v2765 = vpop.xlane.xlu0 %2764
    %v2766 = vsel %vm328, %v2720, 0.0
    %2767 = vadd.xlane.f32.xlu0 %v2766
    %v2768 = vpop.xlane.xlu0 %2767
    %v2769 = vrcp.pop 32.0
    %v2770 = vmul.f32 %v2723, %v2769
    %v2771 = vmul.f32 %v2726, %v2769
    %v2772 = vmul.f32 %v2729, %v2769
    %v2773 = vmul.f32 %v2732, %v2769
    %v2774 = vmul.f32 %v2735, %v2769
    %v2775 = vmul.f32 %v2738, %v2769
    %v2776 = vmul.f32 %v2741, %v2769
    %v2777 = vmul.f32 %v2744, %v2769
    %v2778 = vmul.f32 %v2747, %v2769
    %v2779 = vmul.f32 %v2750, %v2769
    %v2780 = vmul.f32 %v2753, %v2769
    %v2781 = vmul.f32 %v2756, %v2769
    %v2782 = vmul.f32 %v2759, %v2769
    %v2783 = vmul.f32 %v2762, %v2769
    %v2784 = vmul.f32 %v2765, %v2769
    %v2785 = vmul.f32 %v2768, %v2769
    %v2786 = vsub.f32 %v2705, %v2770
    %v2787 = vsub.f32 %v2706, %v2771
    %v2788 = vsub.f32 %v2707, %v2772
    %v2789 = vsub.f32 %v2708, %v2773
    %v2790 = vsub.f32 %v2709, %v2774
    %v2791 = vsub.f32 %v2710, %v2775
    %v2792 = vsub.f32 %v2711, %v2776
    %v2793 = vsub.f32 %v2712, %v2777
    %v2794 = vsub.f32 %v2713, %v2778
    %v2795 = vsub.f32 %v2714, %v2779
    %v2796 = vsub.f32 %v2715, %v2780
    %v2797 = vsub.f32 %v2716, %v2781
    %v2798 = vsub.f32 %v2717, %v2782
    %v2799 = vsub.f32 %v2718, %v2783
    %v2800 = vsub.f32 %v2719, %v2784
    %v2801 = vsub.f32 %v2720, %v2785
    %v2802 = vmul.f32 %v2786, %v2786
    %v2803 = vmul.f32 %v2787, %v2787
    %v2804 = vmul.f32 %v2788, %v2788
    %v2805 = vmul.f32 %v2789, %v2789
    %v2806 = vmul.f32 %v2790, %v2790
    %v2807 = vmul.f32 %v2791, %v2791
    %v2808 = vmul.f32 %v2792, %v2792
    %v2809 = vmul.f32 %v2793, %v2793
    %v2810 = vmul.f32 %v2794, %v2794
    %v2811 = vmul.f32 %v2795, %v2795
    %v2812 = vmul.f32 %v2796, %v2796
    %v2813 = vmul.f32 %v2797, %v2797
    %v2814 = vmul.f32 %v2798, %v2798
    %v2815 = vmul.f32 %v2799, %v2799
    %v2816 = vmul.f32 %v2800, %v2800
    %v2817 = vmul.f32 %v2801, %v2801
    %v2818 = vsel %vm328, %v2802, 0.0
    %2819 = vadd.xlane.f32.xlu0 %v2818
    %v2820 = vpop.xlane.xlu0 %2819
    %v2821 = vsel %vm328, %v2803, 0.0
    %2822 = vadd.xlane.f32.xlu0 %v2821
    %v2823 = vpop.xlane.xlu0 %2822
    %v2824 = vsel %vm328, %v2804, 0.0
    %2825 = vadd.xlane.f32.xlu0 %v2824
    %v2826 = vpop.xlane.xlu0 %2825
    %v2827 = vsel %vm328, %v2805, 0.0
    %2828 = vadd.xlane.f32.xlu0 %v2827
    %v2829 = vpop.xlane.xlu0 %2828
    %v2830 = vsel %vm328, %v2806, 0.0
    %2831 = vadd.xlane.f32.xlu0 %v2830
    %v2832 = vpop.xlane.xlu0 %2831
    %v2833 = vsel %vm328, %v2807, 0.0
    %2834 = vadd.xlane.f32.xlu0 %v2833
    %v2835 = vpop.xlane.xlu0 %2834
    %v2836 = vsel %vm328, %v2808, 0.0
    %2837 = vadd.xlane.f32.xlu0 %v2836
    %v2838 = vpop.xlane.xlu0 %2837
    %v2839 = vsel %vm328, %v2809, 0.0
    %2840 = vadd.xlane.f32.xlu0 %v2839
    %v2841 = vpop.xlane.xlu0 %2840
    %v2842 = vsel %vm328, %v2810, 0.0
    %2843 = vadd.xlane.f32.xlu0 %v2842
    %v2844 = vpop.xlane.xlu0 %2843
    %v2845 = vsel %vm328, %v2811, 0.0
    %2846 = vadd.xlane.f32.xlu0 %v2845
    %v2847 = vpop.xlane.xlu0 %2846
    %v2848 = vsel %vm328, %v2812, 0.0
    %2849 = vadd.xlane.f32.xlu0 %v2848
    %v2850 = vpop.xlane.xlu0 %2849
    %v2851 = vsel %vm328, %v2813, 0.0
    %2852 = vadd.xlane.f32.xlu0 %v2851
    %v2853 = vpop.xlane.xlu0 %2852
    %v2854 = vsel %vm328, %v2814, 0.0
    %2855 = vadd.xlane.f32.xlu0 %v2854
    %v2856 = vpop.xlane.xlu0 %2855
    %v2857 = vsel %vm328, %v2815, 0.0
    %2858 = vadd.xlane.f32.xlu0 %v2857
    %v2859 = vpop.xlane.xlu0 %2858
    %v2860 = vsel %vm328, %v2816, 0.0
    %2861 = vadd.xlane.f32.xlu0 %v2860
    %v2862 = vpop.xlane.xlu0 %2861
    %v2863 = vsel %vm328, %v2817, 0.0
    %2864 = vadd.xlane.f32.xlu0 %v2863
    %v2865 = vpop.xlane.xlu0 %2864
    %v2866 = vmul.f32 %v2820, %v2769
    %v2867 = vmul.f32 %v2823, %v2769
    %v2868 = vmul.f32 %v2826, %v2769
    %v2869 = vmul.f32 %v2829, %v2769
    %v2870 = vmul.f32 %v2832, %v2769
    %v2871 = vmul.f32 %v2835, %v2769
    %v2872 = vmul.f32 %v2838, %v2769
    %v2873 = vmul.f32 %v2841, %v2769
    %v2874 = vmul.f32 %v2844, %v2769
    %v2875 = vmul.f32 %v2847, %v2769
    %v2876 = vmul.f32 %v2850, %v2769
    %v2877 = vmul.f32 %v2853, %v2769
    %v2878 = vmul.f32 %v2856, %v2769
    %v2879 = vmul.f32 %v2859, %v2769
    %v2880 = vmul.f32 %v2862, %v2769
    %v2881 = vmul.f32 %v2865, %v2769
    %v2882 = vadd.f32 %v2866, 1e-05
    %v2883 = vadd.f32 %v2867, 1e-05
    %v2884 = vadd.f32 %v2868, 1e-05
    %v2885 = vadd.f32 %v2869, 1e-05
    %v2886 = vadd.f32 %v2870, 1e-05
    %v2887 = vadd.f32 %v2871, 1e-05
    %v2888 = vadd.f32 %v2872, 1e-05
    %v2889 = vadd.f32 %v2873, 1e-05
    %v2890 = vadd.f32 %v2874, 1e-05
    %v2891 = vadd.f32 %v2875, 1e-05
    %v2892 = vadd.f32 %v2876, 1e-05
    %v2893 = vadd.f32 %v2877, 1e-05
    %v2894 = vadd.f32 %v2878, 1e-05
    %v2895 = vadd.f32 %v2879, 1e-05
    %v2896 = vadd.f32 %v2880, 1e-05
    %v2897 = vadd.f32 %v2881, 1e-05
    %v2898 = vrsqrt.pop %v2882
    %v2899 = vrsqrt.pop %v2883
    %v2900 = vrsqrt.pop %v2884
    %v2901 = vrsqrt.pop %v2885
    %v2902 = vrsqrt.pop %v2886
    %v2903 = vrsqrt.pop %v2887
    %v2904 = vrsqrt.pop %v2888
    %v2905 = vrsqrt.pop %v2889
    %v2906 = vrsqrt.pop %v2890
    %v2907 = vrsqrt.pop %v2891
    %v2908 = vrsqrt.pop %v2892
    %v2909 = vrsqrt.pop %v2893
    %v2910 = vrsqrt.pop %v2894
    %v2911 = vrsqrt.pop %v2895
    %v2912 = vrsqrt.pop %v2896
    %v2913 = vrsqrt.pop %v2897
    %v2914 = vmul.f32 %v2786, %v2898
    %v2915 = vmul.f32 %v2787, %v2899
    %v2916 = vmul.f32 %v2788, %v2900
    %v2917 = vmul.f32 %v2789, %v2901
    %v2918 = vmul.f32 %v2790, %v2902
    %v2919 = vmul.f32 %v2791, %v2903
    %v2920 = vmul.f32 %v2792, %v2904
    %v2921 = vmul.f32 %v2793, %v2905
    %v2922 = vmul.f32 %v2794, %v2906
    %v2923 = vmul.f32 %v2795, %v2907
    %v2924 = vmul.f32 %v2796, %v2908
    %v2925 = vmul.f32 %v2797, %v2909
    %v2926 = vmul.f32 %v2798, %v2910
    %v2927 = vmul.f32 %v2799, %v2911
    %v2928 = vmul.f32 %v2800, %v2912
    %v2929 = vmul.f32 %v2801, %v2913
    %v2930 = vlaneseq
    %v2931 = vshrl.u32 %v2930, 7
    %v2932 = vsub.s32 1, %v2931
    %v2933 = vrot.slane %v295, %v2932
    %v2934 = vmul.f32 %v2914, %v2933
    %v2935 = vmul.f32 %v2915, %v2933
    %v2936 = vmul.f32 %v2916, %v2933
    %v2937 = vmul.f32 %v2917, %v2933
    %v2938 = vmul.f32 %v2918, %v2933
    %v2939 = vmul.f32 %v2919, %v2933
    %v2940 = vmul.f32 %v2920, %v2933
    %v2941 = vmul.f32 %v2921, %v2933
    %v2942 = vmul.f32 %v2922, %v2933
    %v2943 = vmul.f32 %v2923, %v2933
    %v2944 = vmul.f32 %v2924, %v2933
    %v2945 = vmul.f32 %v2925, %v2933
    %v2946 = vmul.f32 %v2926, %v2933
    %v2947 = vmul.f32 %v2927, %v2933
    %v2948 = vmul.f32 %v2928, %v2933
    %v2949 = vmul.f32 %v2929, %v2933
    %v2950 = vlaneseq
    %v2951 = vshrl.u32 %v2950, 7
    %v2952 = vsub.s32 2, %v2951
    %v2953 = vrot.slane %v295, %v2952
    %v2954 = vadd.f32 %v2934, %v2953
    %v2955 = vadd.f32 %v2935, %v2953
    %v2956 = vadd.f32 %v2936, %v2953
    %v2957 = vadd.f32 %v2937, %v2953
    %v2958 = vadd.f32 %v2938, %v2953
    %v2959 = vadd.f32 %v2939, %v2953
    %v2960 = vadd.f32 %v2940, %v2953
    %v2961 = vadd.f32 %v2941, %v2953
    %v2962 = vadd.f32 %v2942, %v2953
    %v2963 = vadd.f32 %v2943, %v2953
    %v2964 = vadd.f32 %v2944, %v2953
    %v2965 = vadd.f32 %v2945, %v2953
    %v2966 = vadd.f32 %v2946, %v2953
    %v2967 = vadd.f32 %v2947, %v2953
    %v2968 = vadd.f32 %v2948, %v2953
    %v2969 = vadd.f32 %v2949, %v2953
    %v2970 = vpack.c.bf16 %v2955, %v2954
    %v2971 = vpack.c.bf16 %v2957, %v2956
    %v2972 = vpack.c.bf16 %v2959, %v2958
    %v2973 = vpack.c.bf16 %v2961, %v2960
    %v2974 = vpack.c.bf16 %v2963, %v2962
    %v2975 = vpack.c.bf16 %v2965, %v2964
    %v2976 = vpack.c.bf16 %v2967, %v2966
    %v2977 = vpack.c.bf16 %v2969, %v2968
    %v2978 = vld [vmem:[%s6] sm:$0xf]
    %v2979 = vld [vmem:[%s6 + $0x4] sm:$0xf]
    %v2980 = vld [vmem:[%s6 + $0x8] sm:$0xf]
    %v2981 = vld [vmem:[%s6 + $0xc] sm:$0xf]
    %v2982 = vld [vmem:[%s7] sm:$0x1]
    %v2984 = vlaneseq
    %v2985 = vshrl.u32 %v2984, 7
    %v2986 = vsub.s32 0, %v2985
    %v2987 = vrot.slane %v2982, %v2986
    %v2993 = vunpack.c.l.b16 %v2978
    %v2994 = vunpack.c.l.b16 %v2979
    %v2995 = vunpack.c.l.b16 %v2980
    %v2996 = vunpack.c.l.b16 %v2981
    %v2997 = vpack.c.b16 %v2994, %v2993
    %v2998 = vpack.c.b16 %v2996, %v2995
    %v3002 = vsel %vm328, %v2970, 0
    %v3005 = vsel %vm328, %v2971, 0
    %v3008 = vsel %vm328, %v2972, 0
    %v3011 = vsel %vm328, %v2973, 0
    %v3014 = vsel %vm328, %v2974, 0
    %v3017 = vsel %vm328, %v2975, 0
    %v3020 = vsel %vm328, %v2976, 0
    %v3023 = vsel %vm328, %v2977, 0
    %3025 = vmatprep.subr.bf16.mxu0 0
    %3026 = vmatpush1.bf16.msra.mxu0 %v2997
    %3027 = vmatprep.subr.bf16.mxu0 0
    %3028 = vmatpush1.bf16.msra.mxu0 %v2998
    %3029 = vmatprep.subr.bf16.mxu0 0
    %3030 = vmatpush1.bf16.msra.mxu0 0
    %3031 = vmatprep.subr.bf16.mxu0 0
    %3032 = vmatpush1.bf16.msra.mxu0 0
    %3033 = vmatprep.subr.bf16.mxu0 0
    %3034 = vmatpush1.bf16.msra.mxu0 0
    %3035 = vmatprep.subr.bf16.mxu0 0
    %3036 = vmatpush1.bf16.msra.mxu0 0
    %3037 = vmatprep.subr.bf16.mxu0 0
    %3038 = vmatpush1.bf16.msra.mxu0 0
    %3039 = vmatprep.subr.bf16.mxu0 0
    %3040 = vmatpush1.bf16.msra.mxu0 0
    %3041 = vmatprep.subr.bf16.mxu0 0
    %3042 = vmatpush1.bf16.msra.mxu0 0
    %3043 = vmatprep.subr.bf16.mxu0 0
    %3044 = vmatpush1.bf16.msra.mxu0 0
    %3045 = vmatprep.subr.bf16.mxu0 0
    %3046 = vmatpush1.bf16.msra.mxu0 0
    %3047 = vmatprep.subr.bf16.mxu0 0
    %3048 = vmatpush1.bf16.msra.mxu0 0
    %3049 = vmatprep.subr.bf16.mxu0 0
    %3050 = vmatpush1.bf16.msra.mxu0 0
    %3051 = vmatprep.subr.bf16.mxu0 0
    %3052 = vmatpush1.bf16.msra.mxu0 0
    %3053 = vmatprep.subr.bf16.mxu0 0
    %3054 = vmatpush1.bf16.msra.mxu0 0
    %3055 = vmatprep.subr.bf16.mxu0 0
    %3056 = vmatpush1.bf16.msra.mxu0 0
    %3057 = vmatprep.mubr.bf16.mxu0 0
    %3058 = vmatmul.mubr.bf16.gmra.mrb[0].mxu0 %v3002
    %v3059 = vpop.f32.mrb[0].mxu0
    %v3060 = vadd.f32 %v2987, %v3059
    %v3061 = vpop.f32.mrb[0].mxu0
    %v3062 = vpop.f32.mrb[0].mxu0
    %v3063 = vadd.f32 %v2987, %v3062
    %v3064 = vpop.f32.mrb[0].mxu0
    %3065 = vmatprep.mubr.bf16.mxu0 0
    %3066 = vmatmul.mubr.bf16.gmra.mrb[0].mxu0 %v3005
    %v3067 = vpop.f32.mrb[0].mxu0
    %v3068 = vadd.f32 %v2987, %v3067
    %v3069 = vpop.f32.mrb[0].mxu0
    %v3070 = vpop.f32.mrb[0].mxu0
    %v3071 = vadd.f32 %v2987, %v3070
    %v3072 = vpop.f32.mrb[0].mxu0
    %3073 = vmatprep.mubr.bf16.mxu0 0
    %3074 = vmatmul.mubr.bf16.gmra.mrb[0].mxu0 %v3008
    %v3075 = vpop.f32.mrb[0].mxu0
    %v3076 = vadd.f32 %v2987, %v3075
    %v3077 = vpop.f32.mrb[0].mxu0
    %v3078 = vpop.f32.mrb[0].mxu0
    %v3079 = vadd.f32 %v2987, %v3078
    %v3080 = vpop.f32.mrb[0].mxu0
    %3081 = vmatprep.mubr.bf16.mxu0 0
    %3082 = vmatmul.mubr.bf16.gmra.mrb[0].mxu0 %v3011
    %v3083 = vpop.f32.mrb[0].mxu0
    %v3084 = vadd.f32 %v2987, %v3083
    %v3085 = vpop.f32.mrb[0].mxu0
    %v3086 = vpop.f32.mrb[0].mxu0
    %v3087 = vadd.f32 %v2987, %v3086
    %v3088 = vpop.f32.mrb[0].mxu0
    %3089 = vmatprep.mubr.bf16.mxu0 0
    %3090 = vmatmul.mubr.bf16.gmra.mrb[0].mxu0 %v3014
    %v3091 = vpop.f32.mrb[0].mxu0
    %v3092 = vadd.f32 %v2987, %v3091
    %v3093 = vpop.f32.mrb[0].mxu0
    %v3094 = vpop.f32.mrb[0].mxu0
    %v3095 = vadd.f32 %v2987, %v3094
    %v3096 = vpop.f32.mrb[0].mxu0
    %3097 = vmatprep.mubr.bf16.mxu0 0
    %3098 = vmatmul.mubr.bf16.gmra.mrb[0].mxu0 %v3017
    %v3099 = vpop.f32.mrb[0].mxu0
    %v3100 = vadd.f32 %v2987, %v3099
    %v3101 = vpop.f32.mrb[0].mxu0
    %v3102 = vpop.f32.mrb[0].mxu0
    %v3103 = vadd.f32 %v2987, %v3102
    %v3104 = vpop.f32.mrb[0].mxu0
    %3105 = vmatprep.mubr.bf16.mxu0 0
    %3106 = vmatmul.mubr.bf16.gmra.mrb[0].mxu0 %v3020
    %v3107 = vpop.f32.mrb[0].mxu0
    %v3108 = vadd.f32 %v2987, %v3107
    %v3109 = vpop.f32.mrb[0].mxu0
    %v3110 = vpop.f32.mrb[0].mxu0
    %v3111 = vadd.f32 %v2987, %v3110
    %v3112 = vpop.f32.mrb[0].mxu0
    %3113 = vmatprep.mubr.bf16.mxu0 0
    %3114 = vmatmul.mubr.bf16.gmra.mrb[0].mxu0 %v3023
    %v3115 = vpop.f32.mrb[0].mxu0
    %v3116 = vadd.f32 %v2987, %v3115
    %v3117 = vpop.f32.mrb[0].mxu0
    %v3118 = vpop.f32.mrb[0].mxu0
    %v3119 = vadd.f32 %v2987, %v3118
    %v3120 = vpop.f32.mrb[0].mxu0
    %3121 = vdwg.mxu0
    %v3122 = vmax.f32 %v3060, 0.0
    %v3123 = vmax.f32 %v3063, 0.0
    %v3124 = vmax.f32 %v3068, 0.0
    %v3125 = vmax.f32 %v3071, 0.0
    %v3126 = vmax.f32 %v3076, 0.0
    %v3127 = vmax.f32 %v3079, 0.0
    %v3128 = vmax.f32 %v3084, 0.0
    %v3129 = vmax.f32 %v3087, 0.0
    %v3130 = vmax.f32 %v3092, 0.0
    %v3131 = vmax.f32 %v3095, 0.0
    %v3132 = vmax.f32 %v3100, 0.0
    %v3133 = vmax.f32 %v3103, 0.0
    %v3134 = vmax.f32 %v3108, 0.0
    %v3135 = vmax.f32 %v3111, 0.0
    %v3136 = vmax.f32 %v3116, 0.0
    %v3137 = vmax.f32 %v3119, 0.0
    %v3138 = vpack.c.bf16 %v3123, %v3122
    %v3139 = vpack.c.bf16 %v3125, %v3124
    %v3140 = vpack.c.bf16 %v3127, %v3126
    %v3141 = vpack.c.bf16 %v3129, %v3128
    %v3142 = vpack.c.bf16 %v3131, %v3130
    %v3143 = vpack.c.bf16 %v3133, %v3132
    %v3144 = vpack.c.bf16 %v3135, %v3134
    %v3145 = vpack.c.bf16 %v3137, %v3136
    %v3146 = vld [vmem:[%s8] sm:$0xf]
    %v3147 = vld [vmem:[%s8 + $0x4] sm:$0xf]
    %v3148 = vld [vmem:[%s8 + $0x8] sm:$0xf]
    %v3149 = vld [vmem:[%s8 + $0xc] sm:$0xf]
    %v3150 = vld [vmem:[%s8 + $0x10] sm:$0xf]
    %v3151 = vld [vmem:[%s8 + $0x14] sm:$0xf]
    %v3152 = vld [vmem:[%s8 + $0x18] sm:$0xf]
    %v3153 = vld [vmem:[%s8 + $0x1c] sm:$0xf]
    %v3154 = vld [vmem:[%s8 + $0x20] sm:$0xf]
    %v3155 = vld [vmem:[%s8 + $0x24] sm:$0xf]
    %v3156 = vld [vmem:[%s8 + $0x28] sm:$0xf]
    %v3157 = vld [vmem:[%s8 + $0x2c] sm:$0xf]
    %v3158 = vld [vmem:[%s8 + $0x30] sm:$0xf]
    %v3159 = vld [vmem:[%s8 + $0x34] sm:$0xf]
    %v3160 = vld [vmem:[%s8 + $0x38] sm:$0xf]
    %v3161 = vld [vmem:[%s8 + $0x3c] sm:$0xf]
    %v3162 = vlaneseq
    %v3163 = vshrl.u32 %v3162, 7
    %v3164 = vsub.s32 5, %v3163
    %v3165 = vrot.slane %v295, %v3164
    %v3182 = vunpack.c.l.b16 %v3146
    %v3183 = vunpack.c.l.b16 %v3147
    %v3184 = vunpack.c.l.b16 %v3148
    %v3185 = vunpack.c.l.b16 %v3149
    %v3186 = vunpack.c.l.b16 %v3150
    %v3187 = vunpack.c.l.b16 %v3151
    %v3188 = vunpack.c.l.b16 %v3152
    %v3189 = vunpack.c.l.b16 %v3153
    %v3190 = vunpack.c.l.b16 %v3154
    %v3191 = vunpack.c.l.b16 %v3155
    %v3192 = vunpack.c.l.b16 %v3156
    %v3193 = vunpack.c.l.b16 %v3157
    %v3194 = vunpack.c.l.b16 %v3158
    %v3195 = vunpack.c.l.b16 %v3159
    %v3196 = vunpack.c.l.b16 %v3160
    %v3197 = vunpack.c.l.b16 %v3161
    %v3198 = vpack.c.b16 %v3183, %v3182
    %v3199 = vpack.c.b16 %v3185, %v3184
    %v3200 = vpack.c.b16 %v3187, %v3186
    %v3201 = vpack.c.b16 %v3189, %v3188
    %v3202 = vpack.c.b16 %v3191, %v3190
    %v3203 = vpack.c.b16 %v3193, %v3192
    %v3204 = vpack.c.b16 %v3195, %v3194
    %v3205 = vpack.c.b16 %v3197, %v3196
    %3214 = vmatprep.subr.bf16.mxu0 0
    %3215 = vmatpush1.bf16.msra.mxu0 %v3198
    %3216 = vmatprep.subr.bf16.mxu0 0
    %3217 = vmatpush1.bf16.msra.mxu0 %v3199
    %3218 = vmatprep.subr.bf16.mxu0 0
    %3219 = vmatpush1.bf16.msra.mxu0 %v3200
    %3220 = vmatprep.subr.bf16.mxu0 0
    %3221 = vmatpush1.bf16.msra.mxu0 %v3201
    %3222 = vmatprep.subr.bf16.mxu0 0
    %3223 = vmatpush1.bf16.msra.mxu0 %v3202
    %3224 = vmatprep.subr.bf16.mxu0 0
    %3225 = vmatpush1.bf16.msra.mxu0 %v3203
    %3226 = vmatprep.subr.bf16.mxu0 0
    %3227 = vmatpush1.bf16.msra.mxu0 %v3204
    %3228 = vmatprep.subr.bf16.mxu0 0
    %3229 = vmatpush1.bf16.msra.mxu0 %v3205
    %3230 = vmatprep.subr.bf16.mxu0 0
    %3231 = vmatpush1.bf16.msra.mxu0 0
    %3232 = vmatprep.subr.bf16.mxu0 0
    %3233 = vmatpush1.bf16.msra.mxu0 0
    %3234 = vmatprep.subr.bf16.mxu0 0
    %3235 = vmatpush1.bf16.msra.mxu0 0
    %3236 = vmatprep.subr.bf16.mxu0 0
    %3237 = vmatpush1.bf16.msra.mxu0 0
    %3238 = vmatprep.subr.bf16.mxu0 0
    %3239 = vmatpush1.bf16.msra.mxu0 0
    %3240 = vmatprep.subr.bf16.mxu0 0
    %3241 = vmatpush1.bf16.msra.mxu0 0
    %3242 = vmatprep.subr.bf16.mxu0 0
    %3243 = vmatpush1.bf16.msra.mxu0 0
    %3244 = vmatprep.subr.bf16.mxu0 0
    %3245 = vmatpush1.bf16.msra.mxu0 0
    %3246 = vmatprep.mubr.bf16.mxu0 0
    %3247 = vmatmul.mubr.bf16.gmra.mrb[0].mxu0 %v3138
    %v3248 = vpop.f32.mrb[0].mxu0
    %v3249 = vadd.f32 %v3165, %v3248
    %v3250 = vpop.f32.mrb[0].mxu0
    %v3251 = vpop.f32.mrb[0].mxu0
    %v3252 = vadd.f32 %v3165, %v3251
    %v3253 = vpop.f32.mrb[0].mxu0
    %3254 = vmatprep.mubr.bf16.mxu0 0
    %3255 = vmatmul.mubr.bf16.gmra.mrb[0].mxu0 %v3139
    %v3256 = vpop.f32.mrb[0].mxu0
    %v3257 = vadd.f32 %v3165, %v3256
    %v3258 = vpop.f32.mrb[0].mxu0
    %v3259 = vpop.f32.mrb[0].mxu0
    %v3260 = vadd.f32 %v3165, %v3259
    %v3261 = vpop.f32.mrb[0].mxu0
    %3262 = vmatprep.mubr.bf16.mxu0 0
    %3263 = vmatmul.mubr.bf16.gmra.mrb[0].mxu0 %v3140
    %v3264 = vpop.f32.mrb[0].mxu0
    %v3265 = vadd.f32 %v3165, %v3264
    %v3266 = vpop.f32.mrb[0].mxu0
    %v3267 = vpop.f32.mrb[0].mxu0
    %v3268 = vadd.f32 %v3165, %v3267
    %v3269 = vpop.f32.mrb[0].mxu0
    %3270 = vmatprep.mubr.bf16.mxu0 0
    %3271 = vmatmul.mubr.bf16.gmra.mrb[0].mxu0 %v3141
    %v3272 = vpop.f32.mrb[0].mxu0
    %v3273 = vadd.f32 %v3165, %v3272
    %v3274 = vpop.f32.mrb[0].mxu0
    %v3275 = vpop.f32.mrb[0].mxu0
    %v3276 = vadd.f32 %v3165, %v3275
    %v3277 = vpop.f32.mrb[0].mxu0
    %3278 = vmatprep.mubr.bf16.mxu0 0
    %3279 = vmatmul.mubr.bf16.gmra.mrb[0].mxu0 %v3142
    %v3280 = vpop.f32.mrb[0].mxu0
    %v3281 = vadd.f32 %v3165, %v3280
    %v3282 = vpop.f32.mrb[0].mxu0
    %v3283 = vpop.f32.mrb[0].mxu0
    %v3284 = vadd.f32 %v3165, %v3283
    %v3285 = vpop.f32.mrb[0].mxu0
    %3286 = vmatprep.mubr.bf16.mxu0 0
    %3287 = vmatmul.mubr.bf16.gmra.mrb[0].mxu0 %v3143
    %v3288 = vpop.f32.mrb[0].mxu0
    %v3289 = vadd.f32 %v3165, %v3288
    %v3290 = vpop.f32.mrb[0].mxu0
    %v3291 = vpop.f32.mrb[0].mxu0
    %v3292 = vadd.f32 %v3165, %v3291
    %v3293 = vpop.f32.mrb[0].mxu0
    %3294 = vmatprep.mubr.bf16.mxu0 0
    %3295 = vmatmul.mubr.bf16.gmra.mrb[0].mxu0 %v3144
    %v3296 = vpop.f32.mrb[0].mxu0
    %v3297 = vadd.f32 %v3165, %v3296
    %v3298 = vpop.f32.mrb[0].mxu0
    %v3299 = vpop.f32.mrb[0].mxu0
    %v3300 = vadd.f32 %v3165, %v3299
    %v3301 = vpop.f32.mrb[0].mxu0
    %3302 = vmatprep.mubr.bf16.mxu0 0
    %3303 = vmatmul.mubr.bf16.gmra.mrb[0].mxu0 %v3145
    %v3304 = vpop.f32.mrb[0].mxu0
    %v3305 = vadd.f32 %v3165, %v3304
    %v3306 = vpop.f32.mrb[0].mxu0
    %v3307 = vpop.f32.mrb[0].mxu0
    %v3308 = vadd.f32 %v3165, %v3307
    %v3309 = vpop.f32.mrb[0].mxu0
    %3310 = vdwg.mxu0
    %v3311 = vadd.f32 %v3249, %v2954
    %v3312 = vadd.f32 %v3252, %v2955
    %v3313 = vadd.f32 %v3257, %v2956
    %v3314 = vadd.f32 %v3260, %v2957
    %v3315 = vadd.f32 %v3265, %v2958
    %v3316 = vadd.f32 %v3268, %v2959
    %v3317 = vadd.f32 %v3273, %v2960
    %v3318 = vadd.f32 %v3276, %v2961
    %v3319 = vadd.f32 %v3281, %v2962
    %v3320 = vadd.f32 %v3284, %v2963
    %v3321 = vadd.f32 %v3289, %v2964
    %v3322 = vadd.f32 %v3292, %v2965
    %v3323 = vadd.f32 %v3297, %v2966
    %v3324 = vadd.f32 %v3300, %v2967
    %v3325 = vadd.f32 %v3305, %v2968
    %v3326 = vadd.f32 %v3308, %v2969
    %v3327 = vsel %vm328, %v3311, 0.0
    %3328 = vadd.xlane.f32.xlu0 %v3327
    %v3329 = vpop.xlane.xlu0 %3328
    %v3330 = vsel %vm328, %v3312, 0.0
    %3331 = vadd.xlane.f32.xlu0 %v3330
    %v3332 = vpop.xlane.xlu0 %3331
    %v3333 = vsel %vm328, %v3313, 0.0
    %3334 = vadd.xlane.f32.xlu0 %v3333
    %v3335 = vpop.xlane.xlu0 %3334
    %v3336 = vsel %vm328, %v3314, 0.0
    %3337 = vadd.xlane.f32.xlu0 %v3336
    %v3338 = vpop.xlane.xlu0 %3337
    %v3339 = vsel %vm328, %v3315, 0.0
    %3340 = vadd.xlane.f32.xlu0 %v3339
    %v3341 = vpop.xlane.xlu0 %3340
    %v3342 = vsel %vm328, %v3316, 0.0
    %3343 = vadd.xlane.f32.xlu0 %v3342
    %v3344 = vpop.xlane.xlu0 %3343
    %v3345 = vsel %vm328, %v3317, 0.0
    %3346 = vadd.xlane.f32.xlu0 %v3345
    %v3347 = vpop.xlane.xlu0 %3346
    %v3348 = vsel %vm328, %v3318, 0.0
    %3349 = vadd.xlane.f32.xlu0 %v3348
    %v3350 = vpop.xlane.xlu0 %3349
    %v3351 = vsel %vm328, %v3319, 0.0
    %3352 = vadd.xlane.f32.xlu0 %v3351
    %v3353 = vpop.xlane.xlu0 %3352
    %v3354 = vsel %vm328, %v3320, 0.0
    %3355 = vadd.xlane.f32.xlu0 %v3354
    %v3356 = vpop.xlane.xlu0 %3355
    %v3357 = vsel %vm328, %v3321, 0.0
    %3358 = vadd.xlane.f32.xlu0 %v3357
    %v3359 = vpop.xlane.xlu0 %3358
    %v3360 = vsel %vm328, %v3322, 0.0
    %3361 = vadd.xlane.f32.xlu0 %v3360
    %v3362 = vpop.xlane.xlu0 %3361
    %v3363 = vsel %vm328, %v3323, 0.0
    %3364 = vadd.xlane.f32.xlu0 %v3363
    %v3365 = vpop.xlane.xlu0 %3364
    %v3366 = vsel %vm328, %v3324, 0.0
    %3367 = vadd.xlane.f32.xlu0 %v3366
    %v3368 = vpop.xlane.xlu0 %3367
    %v3369 = vsel %vm328, %v3325, 0.0
    %3370 = vadd.xlane.f32.xlu0 %v3369
    %v3371 = vpop.xlane.xlu0 %3370
    %v3372 = vsel %vm328, %v3326, 0.0
    %3373 = vadd.xlane.f32.xlu0 %v3372
    %v3374 = vpop.xlane.xlu0 %3373
    %v3375 = vmul.f32 %v3329, %v2769
    %v3376 = vmul.f32 %v3332, %v2769
    %v3377 = vmul.f32 %v3335, %v2769
    %v3378 = vmul.f32 %v3338, %v2769
    %v3379 = vmul.f32 %v3341, %v2769
    %v3380 = vmul.f32 %v3344, %v2769
    %v3381 = vmul.f32 %v3347, %v2769
    %v3382 = vmul.f32 %v3350, %v2769
    %v3383 = vmul.f32 %v3353, %v2769
    %v3384 = vmul.f32 %v3356, %v2769
    %v3385 = vmul.f32 %v3359, %v2769
    %v3386 = vmul.f32 %v3362, %v2769
    %v3387 = vmul.f32 %v3365, %v2769
    %v3388 = vmul.f32 %v3368, %v2769
    %v3389 = vmul.f32 %v3371, %v2769
    %v3390 = vmul.f32 %v3374, %v2769
    %v3391 = vsub.f32 %v3311, %v3375
    %v3392 = vsub.f32 %v3312, %v3376
    %v3393 = vsub.f32 %v3313, %v3377
    %v3394 = vsub.f32 %v3314, %v3378
    %v3395 = vsub.f32 %v3315, %v3379
    %v3396 = vsub.f32 %v3316, %v3380
    %v3397 = vsub.f32 %v3317, %v3381
    %v3398 = vsub.f32 %v3318, %v3382
    %v3399 = vsub.f32 %v3319, %v3383
    %v3400 = vsub.f32 %v3320, %v3384
    %v3401 = vsub.f32 %v3321, %v3385
    %v3402 = vsub.f32 %v3322, %v3386
    %v3403 = vsub.f32 %v3323, %v3387
    %v3404 = vsub.f32 %v3324, %v3388
    %v3405 = vsub.f32 %v3325, %v3389
    %v3406 = vsub.f32 %v3326, %v3390
    %v3407 = vmul.f32 %v3391, %v3391
    %v3408 = vmul.f32 %v3392, %v3392
    %v3409 = vmul.f32 %v3393, %v3393
    %v3410 = vmul.f32 %v3394, %v3394
    %v3411 = vmul.f32 %v3395, %v3395
    %v3412 = vmul.f32 %v3396, %v3396
    %v3413 = vmul.f32 %v3397, %v3397
    %v3414 = vmul.f32 %v3398, %v3398
    %v3415 = vmul.f32 %v3399, %v3399
    %v3416 = vmul.f32 %v3400, %v3400
    %v3417 = vmul.f32 %v3401, %v3401
    %v3418 = vmul.f32 %v3402, %v3402
    %v3419 = vmul.f32 %v3403, %v3403
    %v3420 = vmul.f32 %v3404, %v3404
    %v3421 = vmul.f32 %v3405, %v3405
    %v3422 = vmul.f32 %v3406, %v3406
    %v3423 = vsel %vm328, %v3407, 0.0
    %3424 = vadd.xlane.f32.xlu0 %v3423
    %v3425 = vpop.xlane.xlu0 %3424
    %v3426 = vsel %vm328, %v3408, 0.0
    %3427 = vadd.xlane.f32.xlu0 %v3426
    %v3428 = vpop.xlane.xlu0 %3427
    %v3429 = vsel %vm328, %v3409, 0.0
    %3430 = vadd.xlane.f32.xlu0 %v3429
    %v3431 = vpop.xlane.xlu0 %3430
    %v3432 = vsel %vm328, %v3410, 0.0
    %3433 = vadd.xlane.f32.xlu0 %v3432
    %v3434 = vpop.xlane.xlu0 %3433
    %v3435 = vsel %vm328, %v3411, 0.0
    %3436 = vadd.xlane.f32.xlu0 %v3435
    %v3437 = vpop.xlane.xlu0 %3436
    %v3438 = vsel %vm328, %v3412, 0.0
    %3439 = vadd.xlane.f32.xlu0 %v3438
    %v3440 = vpop.xlane.xlu0 %3439
    %v3441 = vsel %vm328, %v3413, 0.0
    %3442 = vadd.xlane.f32.xlu0 %v3441
    %v3443 = vpop.xlane.xlu0 %3442
    %v3444 = vsel %vm328, %v3414, 0.0
    %3445 = vadd.xlane.f32.xlu0 %v3444
    %v3446 = vpop.xlane.xlu0 %3445
    %v3447 = vsel %vm328, %v3415, 0.0
    %3448 = vadd.xlane.f32.xlu0 %v3447
    %v3449 = vpop.xlane.xlu0 %3448
    %v3450 = vsel %vm328, %v3416, 0.0
    %3451 = vadd.xlane.f32.xlu0 %v3450
    %v3452 = vpop.xlane.xlu0 %3451
    %v3453 = vsel %vm328, %v3417, 0.0
    %3454 = vadd.xlane.f32.xlu0 %v3453
    %v3455 = vpop.xlane.xlu0 %3454
    %v3456 = vsel %vm328, %v3418, 0.0
    %3457 = vadd.xlane.f32.xlu0 %v3456
    %v3458 = vpop.xlane.xlu0 %3457
    %v3459 = vsel %vm328, %v3419, 0.0
    %3460 = vadd.xlane.f32.xlu0 %v3459
    %v3461 = vpop.xlane.xlu0 %3460
    %v3462 = vsel %vm328, %v3420, 0.0
    %3463 = vadd.xlane.f32.xlu0 %v3462
    %v3464 = vpop.xlane.xlu0 %3463
    %v3465 = vsel %vm328, %v3421, 0.0
    %3466 = vadd.xlane.f32.xlu0 %v3465
    %v3467 = vpop.xlane.xlu0 %3466
    %v3468 = vsel %vm328, %v3422, 0.0
    %3469 = vadd.xlane.f32.xlu0 %v3468
    %v3470 = vpop.xlane.xlu0 %3469
    %v3471 = vmul.f32 %v3425, %v2769
    %v3472 = vmul.f32 %v3428, %v2769
    %v3473 = vmul.f32 %v3431, %v2769
    %v3474 = vmul.f32 %v3434, %v2769
    %v3475 = vmul.f32 %v3437, %v2769
    %v3476 = vmul.f32 %v3440, %v2769
    %v3477 = vmul.f32 %v3443, %v2769
    %v3478 = vmul.f32 %v3446, %v2769
    %v3479 = vmul.f32 %v3449, %v2769
    %v3480 = vmul.f32 %v3452, %v2769
    %v3481 = vmul.f32 %v3455, %v2769
    %v3482 = vmul.f32 %v3458, %v2769
    %v3483 = vmul.f32 %v3461, %v2769
    %v3484 = vmul.f32 %v3464, %v2769
    %v3485 = vmul.f32 %v3467, %v2769
    %v3486 = vmul.f32 %v3470, %v2769
    %v3487 = vadd.f32 %v3471, 1e-05
    %v3488 = vadd.f32 %v3472, 1e-05
    %v3489 = vadd.f32 %v3473, 1e-05
    %v3490 = vadd.f32 %v3474, 1e-05
    %v3491 = vadd.f32 %v3475, 1e-05
    %v3492 = vadd.f32 %v3476, 1e-05
    %v3493 = vadd.f32 %v3477, 1e-05
    %v3494 = vadd.f32 %v3478, 1e-05
    %v3495 = vadd.f32 %v3479, 1e-05
    %v3496 = vadd.f32 %v3480, 1e-05
    %v3497 = vadd.f32 %v3481, 1e-05
    %v3498 = vadd.f32 %v3482, 1e-05
    %v3499 = vadd.f32 %v3483, 1e-05
    %v3500 = vadd.f32 %v3484, 1e-05
    %v3501 = vadd.f32 %v3485, 1e-05
    %v3502 = vadd.f32 %v3486, 1e-05
    %v3503 = vrsqrt.pop %v3487
    %v3504 = vrsqrt.pop %v3488
    %v3505 = vrsqrt.pop %v3489
    %v3506 = vrsqrt.pop %v3490
    %v3507 = vrsqrt.pop %v3491
    %v3508 = vrsqrt.pop %v3492
    %v3509 = vrsqrt.pop %v3493
    %v3510 = vrsqrt.pop %v3494
    %v3511 = vrsqrt.pop %v3495
    %v3512 = vrsqrt.pop %v3496
    %v3513 = vrsqrt.pop %v3497
    %v3514 = vrsqrt.pop %v3498
    %v3515 = vrsqrt.pop %v3499
    %v3516 = vrsqrt.pop %v3500
    %v3517 = vrsqrt.pop %v3501
    %v3518 = vrsqrt.pop %v3502
    %v3519 = vmul.f32 %v3391, %v3503
    %v3520 = vmul.f32 %v3392, %v3504
    %v3521 = vmul.f32 %v3393, %v3505
    %v3522 = vmul.f32 %v3394, %v3506
    %v3523 = vmul.f32 %v3395, %v3507
    %v3524 = vmul.f32 %v3396, %v3508
    %v3525 = vmul.f32 %v3397, %v3509
    %v3526 = vmul.f32 %v3398, %v3510
    %v3527 = vmul.f32 %v3399, %v3511
    %v3528 = vmul.f32 %v3400, %v3512
    %v3529 = vmul.f32 %v3401, %v3513
    %v3530 = vmul.f32 %v3402, %v3514
    %v3531 = vmul.f32 %v3403, %v3515
    %v3532 = vmul.f32 %v3404, %v3516
    %v3533 = vmul.f32 %v3405, %v3517
    %v3534 = vmul.f32 %v3406, %v3518
    %v3535 = vlaneseq
    %v3536 = vshrl.u32 %v3535, 7
    %v3537 = vsub.s32 3, %v3536
    %v3538 = vrot.slane %v295, %v3537
    %v3539 = vmul.f32 %v3519, %v3538
    %v3540 = vmul.f32 %v3520, %v3538
    %v3541 = vmul.f32 %v3521, %v3538
    %v3542 = vmul.f32 %v3522, %v3538
    %v3543 = vmul.f32 %v3523, %v3538
    %v3544 = vmul.f32 %v3524, %v3538
    %v3545 = vmul.f32 %v3525, %v3538
    %v3546 = vmul.f32 %v3526, %v3538
    %v3547 = vmul.f32 %v3527, %v3538
    %v3548 = vmul.f32 %v3528, %v3538
    %v3549 = vmul.f32 %v3529, %v3538
    %v3550 = vmul.f32 %v3530, %v3538
    %v3551 = vmul.f32 %v3531, %v3538
    %v3552 = vmul.f32 %v3532, %v3538
    %v3553 = vmul.f32 %v3533, %v3538
    %v3554 = vmul.f32 %v3534, %v3538
    %v3555 = vlaneseq
    %v3556 = vshrl.u32 %v3555, 7
    %v3557 = vsub.s32 4, %v3556
    %v3558 = vrot.slane %v295, %v3557
    %v3559 = vadd.f32 %v3539, %v3558
    %v3560 = vadd.f32 %v3540, %v3558
    %v3561 = vadd.f32 %v3541, %v3558
    %v3562 = vadd.f32 %v3542, %v3558
    %v3563 = vadd.f32 %v3543, %v3558
    %v3564 = vadd.f32 %v3544, %v3558
    %v3565 = vadd.f32 %v3545, %v3558
    %v3566 = vadd.f32 %v3546, %v3558
    %v3567 = vadd.f32 %v3547, %v3558
    %v3568 = vadd.f32 %v3548, %v3558
    %v3569 = vadd.f32 %v3549, %v3558
    %v3570 = vadd.f32 %v3550, %v3558
    %v3571 = vadd.f32 %v3551, %v3558
    %v3572 = vadd.f32 %v3552, %v3558
    %v3573 = vadd.f32 %v3553, %v3558
    %v3574 = vadd.f32 %v3554, %v3558
    %s3575 = scalar_lea.vmem %s9, 8
    %v3576 = vld [vmem:[%s3575] sm:$0x3f]
    %v3577 = vpack.c.bf16 %v3560, %v3559
    %v3578 = vpack.c.bf16 %v3562, %v3561
    %v3579 = vpack.c.bf16 %v3564, %v3563
    %v3580 = vpack.c.bf16 %v3566, %v3565
    %v3581 = vpack.c.bf16 %v3568, %v3567
    %v3582 = vpack.c.bf16 %v3570, %v3569
    %v3583 = vpack.c.bf16 %v3572, %v3571
    %v3584 = vpack.c.bf16 %v3574, %v3573
    %s3585 = scalar_lea.vmem %s4, 32
    %v3586 = vld [vmem:[%s3585] sm:$0xff]
    %v3587 = vld [vmem:[%s3585 + $0x8] sm:$0xff]
    %v3588 = vld [vmem:[%s3585 + $0x10] sm:$0xff]
    %v3589 = vld [vmem:[%s3585 + $0x18] sm:$0xff]
    %v3594 = vunpack.c.l.b16 %v3586
    %v3595 = vunpack.c.h.b16 %v3586
    %v3596 = vunpack.c.l.b16 %v3587
    %v3597 = vunpack.c.h.b16 %v3587
    %v3598 = vunpack.c.l.b16 %v3588
    %v3599 = vunpack.c.h.b16 %v3588
    %v3600 = vunpack.c.l.b16 %v3589
    %v3601 = vunpack.c.h.b16 %v3589
    %v3602 = vpack.c.b16 %v3596, %v3594
    %v3603 = vpack.c.b16 %v3597, %v3595
    %v3604 = vpack.c.b16 %v3600, %v3598
    %v3605 = vpack.c.b16 %v3601, %v3599
    %v3611 = vsel %vm328, %v3577, 0
    %v3614 = vsel %vm328, %v3578, 0
    %v3617 = vsel %vm328, %v3579, 0
    %v3620 = vsel %vm328, %v3580, 0
    %v3623 = vsel %vm328, %v3581, 0
    %v3626 = vsel %vm328, %v3582, 0
    %v3629 = vsel %vm328, %v3583, 0
    %v3632 = vsel %vm328, %v3584, 0
    %3634 = vmatprep.subr.bf16.mxu0 %v3603
    %3635 = vmatpush1.bf16.msra.mxu0 %v3602
    %3636 = vmatprep.subr.bf16.mxu0 %v3605
    %3637 = vmatpush1.bf16.msra.mxu0 %v3604
    %3638 = vmatprep.subr.bf16.mxu0 0
    %3639 = vmatpush1.bf16.msra.mxu0 0
    %3640 = vmatprep.subr.bf16.mxu0 0
    %3641 = vmatpush1.bf16.msra.mxu0 0
    %3642 = vmatprep.subr.bf16.mxu0 0
    %3643 = vmatpush1.bf16.msra.mxu0 0
    %3644 = vmatprep.subr.bf16.mxu0 0
    %3645 = vmatpush1.bf16.msra.mxu0 0
    %3646 = vmatprep.subr.bf16.mxu0 0
    %3647 = vmatpush1.bf16.msra.mxu0 0
    %3648 = vmatprep.subr.bf16.mxu0 0
    %3649 = vmatpush1.bf16.msra.mxu0 0
    %3650 = vmatprep.subr.bf16.mxu0 0
    %3651 = vmatpush1.bf16.msra.mxu0 0
    %3652 = vmatprep.subr.bf16.mxu0 0
    %3653 = vmatpush1.bf16.msra.mxu0 0
    %3654 = vmatprep.subr.bf16.mxu0 0
    %3655 = vmatpush1.bf16.msra.mxu0 0
    %3656 = vmatprep.subr.bf16.mxu0 0
    %3657 = vmatpush1.bf16.msra.mxu0 0
    %3658 = vmatprep.subr.bf16.mxu0 0
    %3659 = vmatpush1.bf16.msra.mxu0 0
    %3660 = vmatprep.subr.bf16.mxu0 0
    %3661 = vmatpush1.bf16.msra.mxu0 0
    %3662 = vmatprep.subr.bf16.mxu0 0
    %3663 = vmatpush1.bf16.msra.mxu0 0
    %3664 = vmatprep.subr.bf16.mxu0 0
    %3665 = vmatpush1.bf16.msra.mxu0 0
    %3666 = vmatprep.mubr.bf16.mxu0 0
    %3667 = vmatmul.mubr.bf16.gmra.mrb[0].mxu0 %v3611
    %v3668 = vpop.f32.mrb[0].mxu0
    %v3669 = vadd.f32 0.0, %v3668
    %v3670 = vpop.f32.mrb[0].mxu0
    %v3671 = vadd.f32 0.0, %v3670
    %v3672 = vpop.f32.mrb[0].mxu0
    %v3673 = vadd.f32 0.0, %v3672
    %v3674 = vpop.f32.mrb[0].mxu0
    %v3675 = vadd.f32 0.0, %v3674
    %3676 = vmatprep.mubr.bf16.mxu0 0
    %3677 = vmatmul.mubr.bf16.gmra.mrb[0].mxu0 %v3614
    %v3678 = vpop.f32.mrb[0].mxu0
    %v3679 = vadd.f32 0.0, %v3678
    %v3680 = vpop.f32.mrb[0].mxu0
    %v3681 = vadd.f32 0.0, %v3680
    %v3682 = vpop.f32.mrb[0].mxu0
    %v3683 = vadd.f32 0.0, %v3682
    %v3684 = vpop.f32.mrb[0].mxu0
    %v3685 = vadd.f32 0.0, %v3684
    %3686 = vmatprep.mubr.bf16.mxu0 0
    %3687 = vmatmul.mubr.bf16.gmra.mrb[0].mxu0 %v3617
    %v3688 = vpop.f32.mrb[0].mxu0
    %v3689 = vadd.f32 0.0, %v3688
    %v3690 = vpop.f32.mrb[0].mxu0
    %v3691 = vadd.f32 0.0, %v3690
    %v3692 = vpop.f32.mrb[0].mxu0
    %v3693 = vadd.f32 0.0, %v3692
    %v3694 = vpop.f32.mrb[0].mxu0
    %v3695 = vadd.f32 0.0, %v3694
    %3696 = vmatprep.mubr.bf16.mxu0 0
    %3697 = vmatmul.mubr.bf16.gmra.mrb[0].mxu0 %v3620
    %v3698 = vpop.f32.mrb[0].mxu0
    %v3699 = vadd.f32 0.0, %v3698
    %v3700 = vpop.f32.mrb[0].mxu0
    %v3701 = vadd.f32 0.0, %v3700
    %v3702 = vpop.f32.mrb[0].mxu0
    %v3703 = vadd.f32 0.0, %v3702
    %v3704 = vpop.f32.mrb[0].mxu0
    %v3705 = vadd.f32 0.0, %v3704
    %3706 = vmatprep.mubr.bf16.mxu0 0
    %3707 = vmatmul.mubr.bf16.gmra.mrb[0].mxu0 %v3623
    %v3708 = vpop.f32.mrb[0].mxu0
    %v3709 = vadd.f32 0.0, %v3708
    %v3710 = vpop.f32.mrb[0].mxu0
    %v3711 = vadd.f32 0.0, %v3710
    %v3712 = vpop.f32.mrb[0].mxu0
    %v3713 = vadd.f32 0.0, %v3712
    %v3714 = vpop.f32.mrb[0].mxu0
    %v3715 = vadd.f32 0.0, %v3714
    %3716 = vmatprep.mubr.bf16.mxu0 0
    %3717 = vmatmul.mubr.bf16.gmra.mrb[0].mxu0 %v3626
    %v3718 = vpop.f32.mrb[0].mxu0
    %v3719 = vadd.f32 0.0, %v3718
    %v3720 = vpop.f32.mrb[0].mxu0
    %v3721 = vadd.f32 0.0, %v3720
    %v3722 = vpop.f32.mrb[0].mxu0
    %v3723 = vadd.f32 0.0, %v3722
    %v3724 = vpop.f32.mrb[0].mxu0
    %v3725 = vadd.f32 0.0, %v3724
    %3726 = vmatprep.mubr.bf16.mxu0 0
    %3727 = vmatmul.mubr.bf16.gmra.mrb[0].mxu0 %v3629
    %v3728 = vpop.f32.mrb[0].mxu0
    %v3729 = vadd.f32 0.0, %v3728
    %v3730 = vpop.f32.mrb[0].mxu0
    %v3731 = vadd.f32 0.0, %v3730
    %v3732 = vpop.f32.mrb[0].mxu0
    %v3733 = vadd.f32 0.0, %v3732
    %v3734 = vpop.f32.mrb[0].mxu0
    %v3735 = vadd.f32 0.0, %v3734
    %3736 = vmatprep.mubr.bf16.mxu0 0
    %3737 = vmatmul.mubr.bf16.gmra.mrb[0].mxu0 %v3632
    %v3738 = vpop.f32.mrb[0].mxu0
    %v3739 = vadd.f32 0.0, %v3738
    %v3740 = vpop.f32.mrb[0].mxu0
    %v3741 = vadd.f32 0.0, %v3740
    %v3742 = vpop.f32.mrb[0].mxu0
    %v3743 = vadd.f32 0.0, %v3742
    %v3744 = vpop.f32.mrb[0].mxu0
    %v3745 = vadd.f32 0.0, %v3744
    %3746 = vdwg.mxu0
    %v3747 = vpack.c.bf16 %v3673, %v3669
    %v3748 = vpack.c.bf16 %v3683, %v3679
    %v3749 = vpack.c.bf16 %v3693, %v3689
    %v3750 = vpack.c.bf16 %v3703, %v3699
    %v3751 = vpack.c.bf16 %v3713, %v3709
    %v3752 = vpack.c.bf16 %v3723, %v3719
    %v3753 = vpack.c.bf16 %v3733, %v3729
    %v3754 = vpack.c.bf16 %v3743, %v3739
    %v3755 = vpack.c.bf16 %v3675, %v3671
    %v3756 = vpack.c.bf16 %v3685, %v3681
    %v3757 = vpack.c.bf16 %v3695, %v3691
    %v3758 = vpack.c.bf16 %v3705, %v3701
    %v3759 = vpack.c.bf16 %v3715, %v3711
    %v3760 = vpack.c.bf16 %v3725, %v3721
    %v3761 = vpack.c.bf16 %v3735, %v3731
    %v3762 = vpack.c.bf16 %v3745, %v3741
    %3764 = vrot.lane.b32.xlu0 %v3747, 64
    %v3765 = vpop.permute.xlu0 %3764
    %v3767 = vsel %vm328, %v3747, 0
    %v3770 = vsel %vm328, %v3765, 0
    %3772 = vmatprep.subr.bf16.mxu0 0
    %3773 = vmatpush1.bf16.xpose.msra.mxu0 %v3770
    %3774 = vmatprep.subr.bf16.mxu0 0
    %3775 = vmatpush1.bf16.xpose.msra.mxu0 0
    %3776 = vmatprep.subr.bf16.mxu0 0
    %3777 = vmatpush1.bf16.xpose.msra.mxu0 0
    %3778 = vmatprep.subr.bf16.mxu0 0
    %3779 = vmatpush1.bf16.xpose.msra.mxu0 0
    %3780 = vmatprep.subr.bf16.mxu0 0
    %3781 = vmatpush1.bf16.xpose.msra.mxu0 0
    %3782 = vmatprep.subr.bf16.mxu0 0
    %3783 = vmatpush1.bf16.xpose.msra.mxu0 0
    %3784 = vmatprep.subr.bf16.mxu0 0
    %3785 = vmatpush1.bf16.xpose.msra.mxu0 0
    %3786 = vmatprep.subr.bf16.mxu0 0
    %3787 = vmatpush1.bf16.xpose.msra.mxu0 0
    %3788 = vmatprep.subr.bf16.mxu0 0
    %3789 = vmatpush1.bf16.xpose.msra.mxu0 0
    %3790 = vmatprep.subr.bf16.mxu0 0
    %3791 = vmatpush1.bf16.xpose.msra.mxu0 0
    %3792 = vmatprep.subr.bf16.mxu0 0
    %3793 = vmatpush1.bf16.xpose.msra.mxu0 0
    %3794 = vmatprep.subr.bf16.mxu0 0
    %3795 = vmatpush1.bf16.xpose.msra.mxu0 0
    %3796 = vmatprep.subr.bf16.mxu0 0
    %3797 = vmatpush1.bf16.xpose.msra.mxu0 0
    %3798 = vmatprep.subr.bf16.mxu0 0
    %3799 = vmatpush1.bf16.xpose.msra.mxu0 0
    %3800 = vmatprep.subr.bf16.mxu0 0
    %3801 = vmatpush1.bf16.xpose.msra.mxu0 0
    %3802 = vmatprep.subr.bf16.mxu0 0
    %3803 = vmatpush1.bf16.xpose.msra.mxu0 0
    %3804 = vmatprep.mubr.bf16.mxu0 0
    %3805 = vmatmul.mubr.bf16.gmra.mrb[0].mxu0 %v3767
    %v3806 = vpop.f32.mrb[0].mxu0
    %v3807 = vadd.f32 0.0, %v3806
    %v3808 = vpop.f32.mrb[0].mxu0
    %v3809 = vpop.f32.mrb[0].mxu0
    %v3810 = vadd.f32 0.0, %v3809
    %v3811 = vpop.f32.mrb[0].mxu0
    %3812 = vdwg.mxu0
    %3814 = vrot.lane.b32.xlu0 %v3748, 64
    %v3815 = vpop.permute.xlu0 %3814
    %v3817 = vsel %vm328, %v3748, 0
    %v3820 = vsel %vm328, %v3815, 0
    %3822 = vmatprep.subr.bf16.mxu0 0
    %3823 = vmatpush1.bf16.xpose.msra.mxu0 %v3820
    %3824 = vmatprep.subr.bf16.mxu0 0
    %3825 = vmatpush1.bf16.xpose.msra.mxu0 0
    %3826 = vmatprep.subr.bf16.mxu0 0
    %3827 = vmatpush1.bf16.xpose.msra.mxu0 0
    %3828 = vmatprep.subr.bf16.mxu0 0
    %3829 = vmatpush1.bf16.xpose.msra.mxu0 0
    %3830 = vmatprep.subr.bf16.mxu0 0
    %3831 = vmatpush1.bf16.xpose.msra.mxu0 0
    %3832 = vmatprep.subr.bf16.mxu0 0
    %3833 = vmatpush1.bf16.xpose.msra.mxu0 0
    %3834 = vmatprep.subr.bf16.mxu0 0
    %3835 = vmatpush1.bf16.xpose.msra.mxu0 0
    %3836 = vmatprep.subr.bf16.mxu0 0
    %3837 = vmatpush1.bf16.xpose.msra.mxu0 0
    %3838 = vmatprep.subr.bf16.mxu0 0
    %3839 = vmatpush1.bf16.xpose.msra.mxu0 0
    %3840 = vmatprep.subr.bf16.mxu0 0
    %3841 = vmatpush1.bf16.xpose.msra.mxu0 0
    %3842 = vmatprep.subr.bf16.mxu0 0
    %3843 = vmatpush1.bf16.xpose.msra.mxu0 0
    %3844 = vmatprep.subr.bf16.mxu0 0
    %3845 = vmatpush1.bf16.xpose.msra.mxu0 0
    %3846 = vmatprep.subr.bf16.mxu0 0
    %3847 = vmatpush1.bf16.xpose.msra.mxu0 0
    %3848 = vmatprep.subr.bf16.mxu0 0
    %3849 = vmatpush1.bf16.xpose.msra.mxu0 0
    %3850 = vmatprep.subr.bf16.mxu0 0
    %3851 = vmatpush1.bf16.xpose.msra.mxu0 0
    %3852 = vmatprep.subr.bf16.mxu0 0
    %3853 = vmatpush1.bf16.xpose.msra.mxu0 0
    %3854 = vmatprep.mubr.bf16.mxu0 0
    %3855 = vmatmul.mubr.bf16.gmra.mrb[0].mxu0 %v3817
    %v3856 = vpop.f32.mrb[0].mxu0
    %v3857 = vadd.f32 0.0, %v3856
    %v3858 = vpop.f32.mrb[0].mxu0
    %v3859 = vpop.f32.mrb[0].mxu0
    %v3860 = vadd.f32 0.0, %v3859
    %v3861 = vpop.f32.mrb[0].mxu0
    %3862 = vdwg.mxu0
    %3864 = vrot.lane.b32.xlu0 %v3749, 64
    %v3865 = vpop.permute.xlu0 %3864
    %v3867 = vsel %vm328, %v3749, 0
    %v3870 = vsel %vm328, %v3865, 0
    %3872 = vmatprep.subr.bf16.mxu0 0
    %3873 = vmatpush1.bf16.xpose.msra.mxu0 %v3870
    %3874 = vmatprep.subr.bf16.mxu0 0
    %3875 = vmatpush1.bf16.xpose.msra.mxu0 0
    %3876 = vmatprep.subr.bf16.mxu0 0
    %3877 = vmatpush1.bf16.xpose.msra.mxu0 0
    %3878 = vmatprep.subr.bf16.mxu0 0
    %3879 = vmatpush1.bf16.xpose.msra.mxu0 0
    %3880 = vmatprep.subr.bf16.mxu0 0
    %3881 = vmatpush1.bf16.xpose.msra.mxu0 0
    %3882 = vmatprep.subr.bf16.mxu0 0
    %3883 = vmatpush1.bf16.xpose.msra.mxu0 0
    %3884 = vmatprep.subr.bf16.mxu0 0
    %3885 = vmatpush1.bf16.xpose.msra.mxu0 0
    %3886 = vmatprep.subr.bf16.mxu0 0
    %3887 = vmatpush1.bf16.xpose.msra.mxu0 0
    %3888 = vmatprep.subr.bf16.mxu0 0
    %3889 = vmatpush1.bf16.xpose.msra.mxu0 0
    %3890 = vmatprep.subr.bf16.mxu0 0
    %3891 = vmatpush1.bf16.xpose.msra.mxu0 0
    %3892 = vmatprep.subr.bf16.mxu0 0
    %3893 = vmatpush1.bf16.xpose.msra.mxu0 0
    %3894 = vmatprep.subr.bf16.mxu0 0
    %3895 = vmatpush1.bf16.xpose.msra.mxu0 0
    %3896 = vmatprep.subr.bf16.mxu0 0
    %3897 = vmatpush1.bf16.xpose.msra.mxu0 0
    %3898 = vmatprep.subr.bf16.mxu0 0
    %3899 = vmatpush1.bf16.xpose.msra.mxu0 0
    %3900 = vmatprep.subr.bf16.mxu0 0
    %3901 = vmatpush1.bf16.xpose.msra.mxu0 0
    %3902 = vmatprep.subr.bf16.mxu0 0
    %3903 = vmatpush1.bf16.xpose.msra.mxu0 0
    %3904 = vmatprep.mubr.bf16.mxu0 0
    %3905 = vmatmul.mubr.bf16.gmra.mrb[0].mxu0 %v3867
    %v3906 = vpop.f32.mrb[0].mxu0
    %v3907 = vadd.f32 0.0, %v3906
    %v3908 = vpop.f32.mrb[0].mxu0
    %v3909 = vpop.f32.mrb[0].mxu0
    %v3910 = vadd.f32 0.0, %v3909
    %v3911 = vpop.f32.mrb[0].mxu0
    %3912 = vdwg.mxu0
    %3914 = vrot.lane.b32.xlu0 %v3750, 64
    %v3915 = vpop.permute.xlu0 %3914
    %v3917 = vsel %vm328, %v3750, 0
    %v3920 = vsel %vm328, %v3915, 0
    %3922 = vmatprep.subr.bf16.mxu0 0
    %3923 = vmatpush1.bf16.xpose.msra.mxu0 %v3920
    %3924 = vmatprep.subr.bf16.mxu0 0
    %3925 = vmatpush1.bf16.xpose.msra.mxu0 0
    %3926 = vmatprep.subr.bf16.mxu0 0
    %3927 = vmatpush1.bf16.xpose.msra.mxu0 0
    %3928 = vmatprep.subr.bf16.mxu0 0
    %3929 = vmatpush1.bf16.xpose.msra.mxu0 0
    %3930 = vmatprep.subr.bf16.mxu0 0
    %3931 = vmatpush1.bf16.xpose.msra.mxu0 0
    %3932 = vmatprep.subr.bf16.mxu0 0
    %3933 = vmatpush1.bf16.xpose.msra.mxu0 0
    %3934 = vmatprep.subr.bf16.mxu0 0
    %3935 = vmatpush1.bf16.xpose.msra.mxu0 0
    %3936 = vmatprep.subr.bf16.mxu0 0
    %3937 = vmatpush1.bf16.xpose.msra.mxu0 0
    %3938 = vmatprep.subr.bf16.mxu0 0
    %3939 = vmatpush1.bf16.xpose.msra.mxu0 0
    %3940 = vmatprep.subr.bf16.mxu0 0
    %3941 = vmatpush1.bf16.xpose.msra.mxu0 0
    %3942 = vmatprep.subr.bf16.mxu0 0
    %3943 = vmatpush1.bf16.xpose.msra.mxu0 0
    %3944 = vmatprep.subr.bf16.mxu0 0
    %3945 = vmatpush1.bf16.xpose.msra.mxu0 0
    %3946 = vmatprep.subr.bf16.mxu0 0
    %3947 = vmatpush1.bf16.xpose.msra.mxu0 0
    %3948 = vmatprep.subr.bf16.mxu0 0
    %3949 = vmatpush1.bf16.xpose.msra.mxu0 0
    %3950 = vmatprep.subr.bf16.mxu0 0
    %3951 = vmatpush1.bf16.xpose.msra.mxu0 0
    %3952 = vmatprep.subr.bf16.mxu0 0
    %3953 = vmatpush1.bf16.xpose.msra.mxu0 0
    %3954 = vmatprep.mubr.bf16.mxu0 0
    %3955 = vmatmul.mubr.bf16.gmra.mrb[0].mxu0 %v3917
    %v3956 = vpop.f32.mrb[0].mxu0
    %v3957 = vadd.f32 0.0, %v3956
    %v3958 = vpop.f32.mrb[0].mxu0
    %v3959 = vpop.f32.mrb[0].mxu0
    %v3960 = vadd.f32 0.0, %v3959
    %v3961 = vpop.f32.mrb[0].mxu0
    %3962 = vdwg.mxu0
    %3964 = vrot.lane.b32.xlu0 %v3751, 64
    %v3965 = vpop.permute.xlu0 %3964
    %v3967 = vsel %vm328, %v3751, 0
    %v3970 = vsel %vm328, %v3965, 0
    %3972 = vmatprep.subr.bf16.mxu0 0
    %3973 = vmatpush1.bf16.xpose.msra.mxu0 %v3970
    %3974 = vmatprep.subr.bf16.mxu0 0
    %3975 = vmatpush1.bf16.xpose.msra.mxu0 0
    %3976 = vmatprep.subr.bf16.mxu0 0
    %3977 = vmatpush1.bf16.xpose.msra.mxu0 0
    %3978 = vmatprep.subr.bf16.mxu0 0
    %3979 = vmatpush1.bf16.xpose.msra.mxu0 0
    %3980 = vmatprep.subr.bf16.mxu0 0
    %3981 = vmatpush1.bf16.xpose.msra.mxu0 0
    %3982 = vmatprep.subr.bf16.mxu0 0
    %3983 = vmatpush1.bf16.xpose.msra.mxu0 0
    %3984 = vmatprep.subr.bf16.mxu0 0
    %3985 = vmatpush1.bf16.xpose.msra.mxu0 0
    %3986 = vmatprep.subr.bf16.mxu0 0
    %3987 = vmatpush1.bf16.xpose.msra.mxu0 0
    %3988 = vmatprep.subr.bf16.mxu0 0
    %3989 = vmatpush1.bf16.xpose.msra.mxu0 0
    %3990 = vmatprep.subr.bf16.mxu0 0
    %3991 = vmatpush1.bf16.xpose.msra.mxu0 0
    %3992 = vmatprep.subr.bf16.mxu0 0
    %3993 = vmatpush1.bf16.xpose.msra.mxu0 0
    %3994 = vmatprep.subr.bf16.mxu0 0
    %3995 = vmatpush1.bf16.xpose.msra.mxu0 0
    %3996 = vmatprep.subr.bf16.mxu0 0
    %3997 = vmatpush1.bf16.xpose.msra.mxu0 0
    %3998 = vmatprep.subr.bf16.mxu0 0
    %3999 = vmatpush1.bf16.xpose.msra.mxu0 0
    %4000 = vmatprep.subr.bf16.mxu0 0
    %4001 = vmatpush1.bf16.xpose.msra.mxu0 0
    %4002 = vmatprep.subr.bf16.mxu0 0
    %4003 = vmatpush1.bf16.xpose.msra.mxu0 0
    %4004 = vmatprep.mubr.bf16.mxu0 0
    %4005 = vmatmul.mubr.bf16.gmra.mrb[0].mxu0 %v3967
    %v4006 = vpop.f32.mrb[0].mxu0
    %v4007 = vadd.f32 0.0, %v4006
    %v4008 = vpop.f32.mrb[0].mxu0
    %v4009 = vpop.f32.mrb[0].mxu0
    %v4010 = vadd.f32 0.0, %v4009
    %v4011 = vpop.f32.mrb[0].mxu0
    %4012 = vdwg.mxu0
    %4014 = vrot.lane.b32.xlu0 %v3752, 64
    %v4015 = vpop.permute.xlu0 %4014
    %v4017 = vsel %vm328, %v3752, 0
    %v4020 = vsel %vm328, %v4015, 0
    %4022 = vmatprep.subr.bf16.mxu0 0
    %4023 = vmatpush1.bf16.xpose.msra.mxu0 %v4020
    %4024 = vmatprep.subr.bf16.mxu0 0
    %4025 = vmatpush1.bf16.xpose.msra.mxu0 0
    %4026 = vmatprep.subr.bf16.mxu0 0
    %4027 = vmatpush1.bf16.xpose.msra.mxu0 0
    %4028 = vmatprep.subr.bf16.mxu0 0
    %4029 = vmatpush1.bf16.xpose.msra.mxu0 0
    %4030 = vmatprep.subr.bf16.mxu0 0
    %4031 = vmatpush1.bf16.xpose.msra.mxu0 0
    %4032 = vmatprep.subr.bf16.mxu0 0
    %4033 = vmatpush1.bf16.xpose.msra.mxu0 0
    %4034 = vmatprep.subr.bf16.mxu0 0
    %4035 = vmatpush1.bf16.xpose.msra.mxu0 0
    %4036 = vmatprep.subr.bf16.mxu0 0
    %4037 = vmatpush1.bf16.xpose.msra.mxu0 0
    %4038 = vmatprep.subr.bf16.mxu0 0
    %4039 = vmatpush1.bf16.xpose.msra.mxu0 0
    %4040 = vmatprep.subr.bf16.mxu0 0
    %4041 = vmatpush1.bf16.xpose.msra.mxu0 0
    %4042 = vmatprep.subr.bf16.mxu0 0
    %4043 = vmatpush1.bf16.xpose.msra.mxu0 0
    %4044 = vmatprep.subr.bf16.mxu0 0
    %4045 = vmatpush1.bf16.xpose.msra.mxu0 0
    %4046 = vmatprep.subr.bf16.mxu0 0
    %4047 = vmatpush1.bf16.xpose.msra.mxu0 0
    %4048 = vmatprep.subr.bf16.mxu0 0
    %4049 = vmatpush1.bf16.xpose.msra.mxu0 0
    %4050 = vmatprep.subr.bf16.mxu0 0
    %4051 = vmatpush1.bf16.xpose.msra.mxu0 0
    %4052 = vmatprep.subr.bf16.mxu0 0
    %4053 = vmatpush1.bf16.xpose.msra.mxu0 0
    %4054 = vmatprep.mubr.bf16.mxu0 0
    %4055 = vmatmul.mubr.bf16.gmra.mrb[0].mxu0 %v4017
    %v4056 = vpop.f32.mrb[0].mxu0
    %v4057 = vadd.f32 0.0, %v4056
    %v4058 = vpop.f32.mrb[0].mxu0
    %v4059 = vpop.f32.mrb[0].mxu0
    %v4060 = vadd.f32 0.0, %v4059
    %v4061 = vpop.f32.mrb[0].mxu0
    %4062 = vdwg.mxu0
    %4064 = vrot.lane.b32.xlu0 %v3753, 64
    %v4065 = vpop.permute.xlu0 %4064
    %v4067 = vsel %vm328, %v3753, 0
    %v4070 = vsel %vm328, %v4065, 0
    %4072 = vmatprep.subr.bf16.mxu0 0
    %4073 = vmatpush1.bf16.xpose.msra.mxu0 %v4070
    %4074 = vmatprep.subr.bf16.mxu0 0
    %4075 = vmatpush1.bf16.xpose.msra.mxu0 0
    %4076 = vmatprep.subr.bf16.mxu0 0
    %4077 = vmatpush1.bf16.xpose.msra.mxu0 0
    %4078 = vmatprep.subr.bf16.mxu0 0
    %4079 = vmatpush1.bf16.xpose.msra.mxu0 0
    %4080 = vmatprep.subr.bf16.mxu0 0
    %4081 = vmatpush1.bf16.xpose.msra.mxu0 0
    %4082 = vmatprep.subr.bf16.mxu0 0
    %4083 = vmatpush1.bf16.xpose.msra.mxu0 0
    %4084 = vmatprep.subr.bf16.mxu0 0
    %4085 = vmatpush1.bf16.xpose.msra.mxu0 0
    %4086 = vmatprep.subr.bf16.mxu0 0
    %4087 = vmatpush1.bf16.xpose.msra.mxu0 0
    %4088 = vmatprep.subr.bf16.mxu0 0
    %4089 = vmatpush1.bf16.xpose.msra.mxu0 0
    %4090 = vmatprep.subr.bf16.mxu0 0
    %4091 = vmatpush1.bf16.xpose.msra.mxu0 0
    %4092 = vmatprep.subr.bf16.mxu0 0
    %4093 = vmatpush1.bf16.xpose.msra.mxu0 0
    %4094 = vmatprep.subr.bf16.mxu0 0
    %4095 = vmatpush1.bf16.xpose.msra.mxu0 0
    %4096 = vmatprep.subr.bf16.mxu0 0
    %4097 = vmatpush1.bf16.xpose.msra.mxu0 0
    %4098 = vmatprep.subr.bf16.mxu0 0
    %4099 = vmatpush1.bf16.xpose.msra.mxu0 0
    %4100 = vmatprep.subr.bf16.mxu0 0
    %4101 = vmatpush1.bf16.xpose.msra.mxu0 0
    %4102 = vmatprep.subr.bf16.mxu0 0
    %4103 = vmatpush1.bf16.xpose.msra.mxu0 0
    %4104 = vmatprep.mubr.bf16.mxu0 0
    %4105 = vmatmul.mubr.bf16.gmra.mrb[0].mxu0 %v4067
    %v4106 = vpop.f32.mrb[0].mxu0
    %v4107 = vadd.f32 0.0, %v4106
    %v4108 = vpop.f32.mrb[0].mxu0
    %v4109 = vpop.f32.mrb[0].mxu0
    %v4110 = vadd.f32 0.0, %v4109
    %v4111 = vpop.f32.mrb[0].mxu0
    %4112 = vdwg.mxu0
    %4114 = vrot.lane.b32.xlu0 %v3754, 64
    %v4115 = vpop.permute.xlu0 %4114
    %v4117 = vsel %vm328, %v3754, 0
    %v4120 = vsel %vm328, %v4115, 0
    %4122 = vmatprep.subr.bf16.mxu0 0
    %4123 = vmatpush1.bf16.xpose.msra.mxu0 %v4120
    %4124 = vmatprep.subr.bf16.mxu0 0
    %4125 = vmatpush1.bf16.xpose.msra.mxu0 0
    %4126 = vmatprep.subr.bf16.mxu0 0
    %4127 = vmatpush1.bf16.xpose.msra.mxu0 0
    %4128 = vmatprep.subr.bf16.mxu0 0
    %4129 = vmatpush1.bf16.xpose.msra.mxu0 0
    %4130 = vmatprep.subr.bf16.mxu0 0
    %4131 = vmatpush1.bf16.xpose.msra.mxu0 0
    %4132 = vmatprep.subr.bf16.mxu0 0
    %4133 = vmatpush1.bf16.xpose.msra.mxu0 0
    %4134 = vmatprep.subr.bf16.mxu0 0
    %4135 = vmatpush1.bf16.xpose.msra.mxu0 0
    %4136 = vmatprep.subr.bf16.mxu0 0
    %4137 = vmatpush1.bf16.xpose.msra.mxu0 0
    %4138 = vmatprep.subr.bf16.mxu0 0
    %4139 = vmatpush1.bf16.xpose.msra.mxu0 0
    %4140 = vmatprep.subr.bf16.mxu0 0
    %4141 = vmatpush1.bf16.xpose.msra.mxu0 0
    %4142 = vmatprep.subr.bf16.mxu0 0
    %4143 = vmatpush1.bf16.xpose.msra.mxu0 0
    %4144 = vmatprep.subr.bf16.mxu0 0
    %4145 = vmatpush1.bf16.xpose.msra.mxu0 0
    %4146 = vmatprep.subr.bf16.mxu0 0
    %4147 = vmatpush1.bf16.xpose.msra.mxu0 0
    %4148 = vmatprep.subr.bf16.mxu0 0
    %4149 = vmatpush1.bf16.xpose.msra.mxu0 0
    %4150 = vmatprep.subr.bf16.mxu0 0
    %4151 = vmatpush1.bf16.xpose.msra.mxu0 0
    %4152 = vmatprep.subr.bf16.mxu0 0
    %4153 = vmatpush1.bf16.xpose.msra.mxu0 0
    %4154 = vmatprep.mubr.bf16.mxu0 0
    %4155 = vmatmul.mubr.bf16.gmra.mrb[0].mxu0 %v4117
    %v4156 = vpop.f32.mrb[0].mxu0
    %v4157 = vadd.f32 0.0, %v4156
    %v4158 = vpop.f32.mrb[0].mxu0
    %v4159 = vpop.f32.mrb[0].mxu0
    %v4160 = vadd.f32 0.0, %v4159
    %v4161 = vpop.f32.mrb[0].mxu0
    %4162 = vdwg.mxu0
    %v4163 = vmul.f32 %v3807, 0.17677669
    %v4164 = vmul.f32 %v3810, 0.17677669
    %v4165 = vmul.f32 %v3857, 0.17677669
    %v4166 = vmul.f32 %v3860, 0.17677669
    %v4167 = vmul.f32 %v3907, 0.17677669
    %v4168 = vmul.f32 %v3910, 0.17677669
    %v4169 = vmul.f32 %v3957, 0.17677669
    %v4170 = vmul.f32 %v3960, 0.17677669
    %v4171 = vmul.f32 %v4007, 0.17677669
    %v4172 = vmul.f32 %v4010, 0.17677669
    %v4173 = vmul.f32 %v4057, 0.17677669
    %v4174 = vmul.f32 %v4060, 0.17677669
    %v4175 = vmul.f32 %v4107, 0.17677669
    %v4176 = vmul.f32 %v4110, 0.17677669
    %v4177 = vmul.f32 %v4157, 0.17677669
    %v4178 = vmul.f32 %v4160, 0.17677669
    %v4179 = vadd.f32 %v4163, %v294
    %v4180 = vadd.f32 %v4164, %v294
    %v4181 = vadd.f32 %v4165, %v294
    %v4182 = vadd.f32 %v4166, %v294
    %v4183 = vadd.f32 %v4167, %v294
    %v4184 = vadd.f32 %v4168, %v294
    %v4185 = vadd.f32 %v4169, %v294
    %v4186 = vadd.f32 %v4170, %v294
    %v4187 = vadd.f32 %v4171, %v294
    %v4188 = vadd.f32 %v4172, %v294
    %v4189 = vadd.f32 %v4173, %v294
    %v4190 = vadd.f32 %v4174, %v294
    %v4191 = vadd.f32 %v4175, %v294
    %v4192 = vadd.f32 %v4176, %v294
    %v4193 = vadd.f32 %v4177, %v294
    %v4194 = vadd.f32 %v4178, %v294
    %v4195 = vsel %vm914, %v4179, -inf
    %4196 = vmax.xlane.f32.xlu0 %v4195
    %v4197 = vpop.xlane.xlu0 %4196
    %v4198 = vsel %vm914, %v4180, -inf
    %4199 = vmax.xlane.f32.xlu0 %v4198
    %v4200 = vpop.xlane.xlu0 %4199
    %v4201 = vsel %vm914, %v4181, -inf
    %4202 = vmax.xlane.f32.xlu0 %v4201
    %v4203 = vpop.xlane.xlu0 %4202
    %v4204 = vsel %vm914, %v4182, -inf
    %4205 = vmax.xlane.f32.xlu0 %v4204
    %v4206 = vpop.xlane.xlu0 %4205
    %v4207 = vsel %vm914, %v4183, -inf
    %4208 = vmax.xlane.f32.xlu0 %v4207
    %v4209 = vpop.xlane.xlu0 %4208
    %v4210 = vsel %vm914, %v4184, -inf
    %4211 = vmax.xlane.f32.xlu0 %v4210
    %v4212 = vpop.xlane.xlu0 %4211
    %v4213 = vsel %vm914, %v4185, -inf
    %4214 = vmax.xlane.f32.xlu0 %v4213
    %v4215 = vpop.xlane.xlu0 %4214
    %v4216 = vsel %vm914, %v4186, -inf
    %4217 = vmax.xlane.f32.xlu0 %v4216
    %v4218 = vpop.xlane.xlu0 %4217
    %v4219 = vsel %vm914, %v4187, -inf
    %4220 = vmax.xlane.f32.xlu0 %v4219
    %v4221 = vpop.xlane.xlu0 %4220
    %v4222 = vsel %vm914, %v4188, -inf
    %4223 = vmax.xlane.f32.xlu0 %v4222
    %v4224 = vpop.xlane.xlu0 %4223
    %v4225 = vsel %vm914, %v4189, -inf
    %4226 = vmax.xlane.f32.xlu0 %v4225
    %v4227 = vpop.xlane.xlu0 %4226
    %v4228 = vsel %vm914, %v4190, -inf
    %4229 = vmax.xlane.f32.xlu0 %v4228
    %v4230 = vpop.xlane.xlu0 %4229
    %v4231 = vsel %vm914, %v4191, -inf
    %4232 = vmax.xlane.f32.xlu0 %v4231
    %v4233 = vpop.xlane.xlu0 %4232
    %v4234 = vsel %vm914, %v4192, -inf
    %4235 = vmax.xlane.f32.xlu0 %v4234
    %v4236 = vpop.xlane.xlu0 %4235
    %v4237 = vsel %vm914, %v4193, -inf
    %4238 = vmax.xlane.f32.xlu0 %v4237
    %v4239 = vpop.xlane.xlu0 %4238
    %v4240 = vsel %vm914, %v4194, -inf
    %4241 = vmax.xlane.f32.xlu0 %v4240
    %v4242 = vpop.xlane.xlu0 %4241
    %v4243 = vsub.f32 %v4179, %v4197
    %v4244 = vsub.f32 %v4180, %v4200
    %v4245 = vsub.f32 %v4181, %v4203
    %v4246 = vsub.f32 %v4182, %v4206
    %v4247 = vsub.f32 %v4183, %v4209
    %v4248 = vsub.f32 %v4184, %v4212
    %v4249 = vsub.f32 %v4185, %v4215
    %v4250 = vsub.f32 %v4186, %v4218
    %v4251 = vsub.f32 %v4187, %v4221
    %v4252 = vsub.f32 %v4188, %v4224
    %v4253 = vsub.f32 %v4189, %v4227
    %v4254 = vsub.f32 %v4190, %v4230
    %v4255 = vsub.f32 %v4191, %v4233
    %v4256 = vsub.f32 %v4192, %v4236
    %v4257 = vsub.f32 %v4193, %v4239
    %v4258 = vsub.f32 %v4194, %v4242
    %v4259 = vmul.f32 %v4243, 1.442695
    %v4260 = vpow.pop %v4259
    %v4261 = vmul.f32 %v4244, 1.442695
    %v4262 = vpow.pop %v4261
    %v4263 = vmul.f32 %v4245, 1.442695
    %v4264 = vpow.pop %v4263
    %v4265 = vmul.f32 %v4246, 1.442695
    %v4266 = vpow.pop %v4265
    %v4267 = vmul.f32 %v4247, 1.442695
    %v4268 = vpow.pop %v4267
    %v4269 = vmul.f32 %v4248, 1.442695
    %v4270 = vpow.pop %v4269
    %v4271 = vmul.f32 %v4249, 1.442695
    %v4272 = vpow.pop %v4271
    %v4273 = vmul.f32 %v4250, 1.442695
    %v4274 = vpow.pop %v4273
    %v4275 = vmul.f32 %v4251, 1.442695
    %v4276 = vpow.pop %v4275
    %v4277 = vmul.f32 %v4252, 1.442695
    %v4278 = vpow.pop %v4277
    %v4279 = vmul.f32 %v4253, 1.442695
    %v4280 = vpow.pop %v4279
    %v4281 = vmul.f32 %v4254, 1.442695
    %v4282 = vpow.pop %v4281
    %v4283 = vmul.f32 %v4255, 1.442695
    %v4284 = vpow.pop %v4283
    %v4285 = vmul.f32 %v4256, 1.442695
    %v4286 = vpow.pop %v4285
    %v4287 = vmul.f32 %v4257, 1.442695
    %v4288 = vpow.pop %v4287
    %v4289 = vmul.f32 %v4258, 1.442695
    %v4290 = vpow.pop %v4289
    %v4291 = vsel %vm914, %v4260, 0.0
    %4292 = vadd.xlane.f32.xlu0 %v4291
    %v4293 = vpop.xlane.xlu0 %4292
    %v4294 = vsel %vm914, %v4262, 0.0
    %4295 = vadd.xlane.f32.xlu0 %v4294
    %v4296 = vpop.xlane.xlu0 %4295
    %v4297 = vsel %vm914, %v4264, 0.0
    %4298 = vadd.xlane.f32.xlu0 %v4297
    %v4299 = vpop.xlane.xlu0 %4298
    %v4300 = vsel %vm914, %v4266, 0.0
    %4301 = vadd.xlane.f32.xlu0 %v4300
    %v4302 = vpop.xlane.xlu0 %4301
    %v4303 = vsel %vm914, %v4268, 0.0
    %4304 = vadd.xlane.f32.xlu0 %v4303
    %v4305 = vpop.xlane.xlu0 %4304
    %v4306 = vsel %vm914, %v4270, 0.0
    %4307 = vadd.xlane.f32.xlu0 %v4306
    %v4308 = vpop.xlane.xlu0 %4307
    %v4309 = vsel %vm914, %v4272, 0.0
    %4310 = vadd.xlane.f32.xlu0 %v4309
    %v4311 = vpop.xlane.xlu0 %4310
    %v4312 = vsel %vm914, %v4274, 0.0
    %4313 = vadd.xlane.f32.xlu0 %v4312
    %v4314 = vpop.xlane.xlu0 %4313
    %v4315 = vsel %vm914, %v4276, 0.0
    %4316 = vadd.xlane.f32.xlu0 %v4315
    %v4317 = vpop.xlane.xlu0 %4316
    %v4318 = vsel %vm914, %v4278, 0.0
    %4319 = vadd.xlane.f32.xlu0 %v4318
    %v4320 = vpop.xlane.xlu0 %4319
    %v4321 = vsel %vm914, %v4280, 0.0
    %4322 = vadd.xlane.f32.xlu0 %v4321
    %v4323 = vpop.xlane.xlu0 %4322
    %v4324 = vsel %vm914, %v4282, 0.0
    %4325 = vadd.xlane.f32.xlu0 %v4324
    %v4326 = vpop.xlane.xlu0 %4325
    %v4327 = vsel %vm914, %v4284, 0.0
    %4328 = vadd.xlane.f32.xlu0 %v4327
    %v4329 = vpop.xlane.xlu0 %4328
    %v4330 = vsel %vm914, %v4286, 0.0
    %4331 = vadd.xlane.f32.xlu0 %v4330
    %v4332 = vpop.xlane.xlu0 %4331
    %v4333 = vsel %vm914, %v4288, 0.0
    %4334 = vadd.xlane.f32.xlu0 %v4333
    %v4335 = vpop.xlane.xlu0 %4334
    %v4336 = vsel %vm914, %v4290, 0.0
    %4337 = vadd.xlane.f32.xlu0 %v4336
    %v4338 = vpop.xlane.xlu0 %4337
    %v4339 = vrcp.pop %v4293
    %v4340 = vrcp.pop %v4296
    %v4341 = vrcp.pop %v4299
    %v4342 = vrcp.pop %v4302
    %v4343 = vrcp.pop %v4305
    %v4344 = vrcp.pop %v4308
    %v4345 = vrcp.pop %v4311
    %v4346 = vrcp.pop %v4314
    %v4347 = vrcp.pop %v4317
    %v4348 = vrcp.pop %v4320
    %v4349 = vrcp.pop %v4323
    %v4350 = vrcp.pop %v4326
    %v4351 = vrcp.pop %v4329
    %v4352 = vrcp.pop %v4332
    %v4353 = vrcp.pop %v4335
    %v4354 = vrcp.pop %v4338
    %v4355 = vmul.f32 %v4260, %v4339
    %v4356 = vmul.f32 %v4262, %v4340
    %v4357 = vmul.f32 %v4264, %v4341
    %v4358 = vmul.f32 %v4266, %v4342
    %v4359 = vmul.f32 %v4268, %v4343
    %v4360 = vmul.f32 %v4270, %v4344
    %v4361 = vmul.f32 %v4272, %v4345
    %v4362 = vmul.f32 %v4274, %v4346
    %v4363 = vmul.f32 %v4276, %v4347
    %v4364 = vmul.f32 %v4278, %v4348
    %v4365 = vmul.f32 %v4280, %v4349
    %v4366 = vmul.f32 %v4282, %v4350
    %v4367 = vmul.f32 %v4284, %v4351
    %v4368 = vmul.f32 %v4286, %v4352
    %v4369 = vmul.f32 %v4288, %v4353
    %v4370 = vmul.f32 %v4290, %v4354
    %v4371 = vpack.c.bf16 %v4356, %v4355
    %v4372 = vpack.c.bf16 %v4358, %v4357
    %v4373 = vpack.c.bf16 %v4360, %v4359
    %v4374 = vpack.c.bf16 %v4362, %v4361
    %v4375 = vpack.c.bf16 %v4364, %v4363
    %v4376 = vpack.c.bf16 %v4366, %v4365
    %v4377 = vpack.c.bf16 %v4368, %v4367
    %v4378 = vpack.c.bf16 %v4370, %v4369
    %v4380 = vsel %vm914, %v4371, 0
    %4382 = vmatprep.subr.bf16.mxu0 0
    %4383 = vmatpush1.bf16.msra.mxu0 %v3755
    %4384 = vmatprep.subr.bf16.mxu0 0
    %4385 = vmatpush1.bf16.msra.mxu0 0
    %4386 = vmatprep.subr.bf16.mxu0 0
    %4387 = vmatpush1.bf16.msra.mxu0 0
    %4388 = vmatprep.subr.bf16.mxu0 0
    %4389 = vmatpush1.bf16.msra.mxu0 0
    %4390 = vmatprep.subr.bf16.mxu0 0
    %4391 = vmatpush1.bf16.msra.mxu0 0
    %4392 = vmatprep.subr.bf16.mxu0 0
    %4393 = vmatpush1.bf16.msra.mxu0 0
    %4394 = vmatprep.subr.bf16.mxu0 0
    %4395 = vmatpush1.bf16.msra.mxu0 0
    %4396 = vmatprep.subr.bf16.mxu0 0
    %4397 = vmatpush1.bf16.msra.mxu0 0
    %4398 = vmatprep.subr.bf16.mxu0 0
    %4399 = vmatpush1.bf16.msra.mxu0 0
    %4400 = vmatprep.subr.bf16.mxu0 0
    %4401 = vmatpush1.bf16.msra.mxu0 0
    %4402 = vmatprep.subr.bf16.mxu0 0
    %4403 = vmatpush1.bf16.msra.mxu0 0
    %4404 = vmatprep.subr.bf16.mxu0 0
    %4405 = vmatpush1.bf16.msra.mxu0 0
    %4406 = vmatprep.subr.bf16.mxu0 0
    %4407 = vmatpush1.bf16.msra.mxu0 0
    %4408 = vmatprep.subr.bf16.mxu0 0
    %4409 = vmatpush1.bf16.msra.mxu0 0
    %4410 = vmatprep.subr.bf16.mxu0 0
    %4411 = vmatpush1.bf16.msra.mxu0 0
    %4412 = vmatprep.subr.bf16.mxu0 0
    %4413 = vmatpush1.bf16.msra.mxu0 0
    %4414 = vmatprep.mubr.bf16.mxu0 0
    %4415 = vmatmul.mubr.bf16.gmra.mrb[0].mxu0 %v4380
    %v4416 = vpop.f32.mrb[0].mxu0
    %v4417 = vadd.f32 0.0, %v4416
    %v4418 = vpop.f32.mrb[0].mxu0
    %v4419 = vpop.f32.mrb[0].mxu0
    %v4420 = vadd.f32 0.0, %v4419
    %v4421 = vpop.f32.mrb[0].mxu0
    %4422 = vdwg.mxu0
    %v4424 = vsel %vm914, %v4372, 0
    %4426 = vmatprep.subr.bf16.mxu0 0
    %4427 = vmatpush1.bf16.msra.mxu0 %v3756
    %4428 = vmatprep.subr.bf16.mxu0 0
    %4429 = vmatpush1.bf16.msra.mxu0 0
    %4430 = vmatprep.subr.bf16.mxu0 0
    %4431 = vmatpush1.bf16.msra.mxu0 0
    %4432 = vmatprep.subr.bf16.mxu0 0
    %4433 = vmatpush1.bf16.msra.mxu0 0
    %4434 = vmatprep.subr.bf16.mxu0 0
    %4435 = vmatpush1.bf16.msra.mxu0 0
    %4436 = vmatprep.subr.bf16.mxu0 0
    %4437 = vmatpush1.bf16.msra.mxu0 0
    %4438 = vmatprep.subr.bf16.mxu0 0
    %4439 = vmatpush1.bf16.msra.mxu0 0
    %4440 = vmatprep.subr.bf16.mxu0 0
    %4441 = vmatpush1.bf16.msra.mxu0 0
    %4442 = vmatprep.subr.bf16.mxu0 0
    %4443 = vmatpush1.bf16.msra.mxu0 0
    %4444 = vmatprep.subr.bf16.mxu0 0
    %4445 = vmatpush1.bf16.msra.mxu0 0
    %4446 = vmatprep.subr.bf16.mxu0 0
    %4447 = vmatpush1.bf16.msra.mxu0 0
    %4448 = vmatprep.subr.bf16.mxu0 0
    %4449 = vmatpush1.bf16.msra.mxu0 0
    %4450 = vmatprep.subr.bf16.mxu0 0
    %4451 = vmatpush1.bf16.msra.mxu0 0
    %4452 = vmatprep.subr.bf16.mxu0 0
    %4453 = vmatpush1.bf16.msra.mxu0 0
    %4454 = vmatprep.subr.bf16.mxu0 0
    %4455 = vmatpush1.bf16.msra.mxu0 0
    %4456 = vmatprep.subr.bf16.mxu0 0
    %4457 = vmatpush1.bf16.msra.mxu0 0
    %4458 = vmatprep.mubr.bf16.mxu0 0
    %4459 = vmatmul.mubr.bf16.gmra.mrb[0].mxu0 %v4424
    %v4460 = vpop.f32.mrb[0].mxu0
    %v4461 = vadd.f32 0.0, %v4460
    %v4462 = vpop.f32.mrb[0].mxu0
    %v4463 = vpop.f32.mrb[0].mxu0
    %v4464 = vadd.f32 0.0, %v4463
    %v4465 = vpop.f32.mrb[0].mxu0
    %4466 = vdwg.mxu0
    %v4468 = vsel %vm914, %v4373, 0
    %4470 = vmatprep.subr.bf16.mxu0 0
    %4471 = vmatpush1.bf16.msra.mxu0 %v3757
    %4472 = vmatprep.subr.bf16.mxu0 0
    %4473 = vmatpush1.bf16.msra.mxu0 0
    %4474 = vmatprep.subr.bf16.mxu0 0
    %4475 = vmatpush1.bf16.msra.mxu0 0
    %4476 = vmatprep.subr.bf16.mxu0 0
    %4477 = vmatpush1.bf16.msra.mxu0 0
    %4478 = vmatprep.subr.bf16.mxu0 0
    %4479 = vmatpush1.bf16.msra.mxu0 0
    %4480 = vmatprep.subr.bf16.mxu0 0
    %4481 = vmatpush1.bf16.msra.mxu0 0
    %4482 = vmatprep.subr.bf16.mxu0 0
    %4483 = vmatpush1.bf16.msra.mxu0 0
    %4484 = vmatprep.subr.bf16.mxu0 0
    %4485 = vmatpush1.bf16.msra.mxu0 0
    %4486 = vmatprep.subr.bf16.mxu0 0
    %4487 = vmatpush1.bf16.msra.mxu0 0
    %4488 = vmatprep.subr.bf16.mxu0 0
    %4489 = vmatpush1.bf16.msra.mxu0 0
    %4490 = vmatprep.subr.bf16.mxu0 0
    %4491 = vmatpush1.bf16.msra.mxu0 0
    %4492 = vmatprep.subr.bf16.mxu0 0
    %4493 = vmatpush1.bf16.msra.mxu0 0
    %4494 = vmatprep.subr.bf16.mxu0 0
    %4495 = vmatpush1.bf16.msra.mxu0 0
    %4496 = vmatprep.subr.bf16.mxu0 0
    %4497 = vmatpush1.bf16.msra.mxu0 0
    %4498 = vmatprep.subr.bf16.mxu0 0
    %4499 = vmatpush1.bf16.msra.mxu0 0
    %4500 = vmatprep.subr.bf16.mxu0 0
    %4501 = vmatpush1.bf16.msra.mxu0 0
    %4502 = vmatprep.mubr.bf16.mxu0 0
    %4503 = vmatmul.mubr.bf16.gmra.mrb[0].mxu0 %v4468
    %v4504 = vpop.f32.mrb[0].mxu0
    %v4505 = vadd.f32 0.0, %v4504
    %v4506 = vpop.f32.mrb[0].mxu0
    %v4507 = vpop.f32.mrb[0].mxu0
    %v4508 = vadd.f32 0.0, %v4507
    %v4509 = vpop.f32.mrb[0].mxu0
    %4510 = vdwg.mxu0
    %v4512 = vsel %vm914, %v4374, 0
    %4514 = vmatprep.subr.bf16.mxu0 0
    %4515 = vmatpush1.bf16.msra.mxu0 %v3758
    %4516 = vmatprep.subr.bf16.mxu0 0
    %4517 = vmatpush1.bf16.msra.mxu0 0
    %4518 = vmatprep.subr.bf16.mxu0 0
    %4519 = vmatpush1.bf16.msra.mxu0 0
    %4520 = vmatprep.subr.bf16.mxu0 0
    %4521 = vmatpush1.bf16.msra.mxu0 0
    %4522 = vmatprep.subr.bf16.mxu0 0
    %4523 = vmatpush1.bf16.msra.mxu0 0
    %4524 = vmatprep.subr.bf16.mxu0 0
    %4525 = vmatpush1.bf16.msra.mxu0 0
    %4526 = vmatprep.subr.bf16.mxu0 0
    %4527 = vmatpush1.bf16.msra.mxu0 0
    %4528 = vmatprep.subr.bf16.mxu0 0
    %4529 = vmatpush1.bf16.msra.mxu0 0
    %4530 = vmatprep.subr.bf16.mxu0 0
    %4531 = vmatpush1.bf16.msra.mxu0 0
    %4532 = vmatprep.subr.bf16.mxu0 0
    %4533 = vmatpush1.bf16.msra.mxu0 0
    %4534 = vmatprep.subr.bf16.mxu0 0
    %4535 = vmatpush1.bf16.msra.mxu0 0
    %4536 = vmatprep.subr.bf16.mxu0 0
    %4537 = vmatpush1.bf16.msra.mxu0 0
    %4538 = vmatprep.subr.bf16.mxu0 0
    %4539 = vmatpush1.bf16.msra.mxu0 0
    %4540 = vmatprep.subr.bf16.mxu0 0
    %4541 = vmatpush1.bf16.msra.mxu0 0
    %4542 = vmatprep.subr.bf16.mxu0 0
    %4543 = vmatpush1.bf16.msra.mxu0 0
    %4544 = vmatprep.subr.bf16.mxu0 0
    %4545 = vmatpush1.bf16.msra.mxu0 0
    %4546 = vmatprep.mubr.bf16.mxu0 0
    %4547 = vmatmul.mubr.bf16.gmra.mrb[0].mxu0 %v4512
    %v4548 = vpop.f32.mrb[0].mxu0
    %v4549 = vadd.f32 0.0, %v4548
    %v4550 = vpop.f32.mrb[0].mxu0
    %v4551 = vpop.f32.mrb[0].mxu0
    %v4552 = vadd.f32 0.0, %v4551
    %v4553 = vpop.f32.mrb[0].mxu0
    %4554 = vdwg.mxu0
    %v4556 = vsel %vm914, %v4375, 0
    %4558 = vmatprep.subr.bf16.mxu0 0
    %4559 = vmatpush1.bf16.msra.mxu0 %v3759
    %4560 = vmatprep.subr.bf16.mxu0 0
    %4561 = vmatpush1.bf16.msra.mxu0 0
    %4562 = vmatprep.subr.bf16.mxu0 0
    %4563 = vmatpush1.bf16.msra.mxu0 0
    %4564 = vmatprep.subr.bf16.mxu0 0
    %4565 = vmatpush1.bf16.msra.mxu0 0
    %4566 = vmatprep.subr.bf16.mxu0 0
    %4567 = vmatpush1.bf16.msra.mxu0 0
    %4568 = vmatprep.subr.bf16.mxu0 0
    %4569 = vmatpush1.bf16.msra.mxu0 0
    %4570 = vmatprep.subr.bf16.mxu0 0
    %4571 = vmatpush1.bf16.msra.mxu0 0
    %4572 = vmatprep.subr.bf16.mxu0 0
    %4573 = vmatpush1.bf16.msra.mxu0 0
    %4574 = vmatprep.subr.bf16.mxu0 0
    %4575 = vmatpush1.bf16.msra.mxu0 0
    %4576 = vmatprep.subr.bf16.mxu0 0
    %4577 = vmatpush1.bf16.msra.mxu0 0
    %4578 = vmatprep.subr.bf16.mxu0 0
    %4579 = vmatpush1.bf16.msra.mxu0 0
    %4580 = vmatprep.subr.bf16.mxu0 0
    %4581 = vmatpush1.bf16.msra.mxu0 0
    %4582 = vmatprep.subr.bf16.mxu0 0
    %4583 = vmatpush1.bf16.msra.mxu0 0
    %4584 = vmatprep.subr.bf16.mxu0 0
    %4585 = vmatpush1.bf16.msra.mxu0 0
    %4586 = vmatprep.subr.bf16.mxu0 0
    %4587 = vmatpush1.bf16.msra.mxu0 0
    %4588 = vmatprep.subr.bf16.mxu0 0
    %4589 = vmatpush1.bf16.msra.mxu0 0
    %4590 = vmatprep.mubr.bf16.mxu0 0
    %4591 = vmatmul.mubr.bf16.gmra.mrb[0].mxu0 %v4556
    %v4592 = vpop.f32.mrb[0].mxu0
    %v4593 = vadd.f32 0.0, %v4592
    %v4594 = vpop.f32.mrb[0].mxu0
    %v4595 = vpop.f32.mrb[0].mxu0
    %v4596 = vadd.f32 0.0, %v4595
    %v4597 = vpop.f32.mrb[0].mxu0
    %4598 = vdwg.mxu0
    %v4600 = vsel %vm914, %v4376, 0
    %4602 = vmatprep.subr.bf16.mxu0 0
    %4603 = vmatpush1.bf16.msra.mxu0 %v3760
    %4604 = vmatprep.subr.bf16.mxu0 0
    %4605 = vmatpush1.bf16.msra.mxu0 0
    %4606 = vmatprep.subr.bf16.mxu0 0
    %4607 = vmatpush1.bf16.msra.mxu0 0
    %4608 = vmatprep.subr.bf16.mxu0 0
    %4609 = vmatpush1.bf16.msra.mxu0 0
    %4610 = vmatprep.subr.bf16.mxu0 0
    %4611 = vmatpush1.bf16.msra.mxu0 0
    %4612 = vmatprep.subr.bf16.mxu0 0
    %4613 = vmatpush1.bf16.msra.mxu0 0
    %4614 = vmatprep.subr.bf16.mxu0 0
    %4615 = vmatpush1.bf16.msra.mxu0 0
    %4616 = vmatprep.subr.bf16.mxu0 0
    %4617 = vmatpush1.bf16.msra.mxu0 0
    %4618 = vmatprep.subr.bf16.mxu0 0
    %4619 = vmatpush1.bf16.msra.mxu0 0
    %4620 = vmatprep.subr.bf16.mxu0 0
    %4621 = vmatpush1.bf16.msra.mxu0 0
    %4622 = vmatprep.subr.bf16.mxu0 0
    %4623 = vmatpush1.bf16.msra.mxu0 0
    %4624 = vmatprep.subr.bf16.mxu0 0
    %4625 = vmatpush1.bf16.msra.mxu0 0
    %4626 = vmatprep.subr.bf16.mxu0 0
    %4627 = vmatpush1.bf16.msra.mxu0 0
    %4628 = vmatprep.subr.bf16.mxu0 0
    %4629 = vmatpush1.bf16.msra.mxu0 0
    %4630 = vmatprep.subr.bf16.mxu0 0
    %4631 = vmatpush1.bf16.msra.mxu0 0
    %4632 = vmatprep.subr.bf16.mxu0 0
    %4633 = vmatpush1.bf16.msra.mxu0 0
    %4634 = vmatprep.mubr.bf16.mxu0 0
    %4635 = vmatmul.mubr.bf16.gmra.mrb[0].mxu0 %v4600
    %v4636 = vpop.f32.mrb[0].mxu0
    %v4637 = vadd.f32 0.0, %v4636
    %v4638 = vpop.f32.mrb[0].mxu0
    %v4639 = vpop.f32.mrb[0].mxu0
    %v4640 = vadd.f32 0.0, %v4639
    %v4641 = vpop.f32.mrb[0].mxu0
    %4642 = vdwg.mxu0
    %v4644 = vsel %vm914, %v4377, 0
    %4646 = vmatprep.subr.bf16.mxu0 0
    %4647 = vmatpush1.bf16.msra.mxu0 %v3761
    %4648 = vmatprep.subr.bf16.mxu0 0
    %4649 = vmatpush1.bf16.msra.mxu0 0
    %4650 = vmatprep.subr.bf16.mxu0 0
    %4651 = vmatpush1.bf16.msra.mxu0 0
    %4652 = vmatprep.subr.bf16.mxu0 0
    %4653 = vmatpush1.bf16.msra.mxu0 0
    %4654 = vmatprep.subr.bf16.mxu0 0
    %4655 = vmatpush1.bf16.msra.mxu0 0
    %4656 = vmatprep.subr.bf16.mxu0 0
    %4657 = vmatpush1.bf16.msra.mxu0 0
    %4658 = vmatprep.subr.bf16.mxu0 0
    %4659 = vmatpush1.bf16.msra.mxu0 0
    %4660 = vmatprep.subr.bf16.mxu0 0
    %4661 = vmatpush1.bf16.msra.mxu0 0
    %4662 = vmatprep.subr.bf16.mxu0 0
    %4663 = vmatpush1.bf16.msra.mxu0 0
    %4664 = vmatprep.subr.bf16.mxu0 0
    %4665 = vmatpush1.bf16.msra.mxu0 0
    %4666 = vmatprep.subr.bf16.mxu0 0
    %4667 = vmatpush1.bf16.msra.mxu0 0
    %4668 = vmatprep.subr.bf16.mxu0 0
    %4669 = vmatpush1.bf16.msra.mxu0 0
    %4670 = vmatprep.subr.bf16.mxu0 0
    %4671 = vmatpush1.bf16.msra.mxu0 0
    %4672 = vmatprep.subr.bf16.mxu0 0
    %4673 = vmatpush1.bf16.msra.mxu0 0
    %4674 = vmatprep.subr.bf16.mxu0 0
    %4675 = vmatpush1.bf16.msra.mxu0 0
    %4676 = vmatprep.subr.bf16.mxu0 0
    %4677 = vmatpush1.bf16.msra.mxu0 0
    %4678 = vmatprep.mubr.bf16.mxu0 0
    %4679 = vmatmul.mubr.bf16.gmra.mrb[0].mxu0 %v4644
    %v4680 = vpop.f32.mrb[0].mxu0
    %v4681 = vadd.f32 0.0, %v4680
    %v4682 = vpop.f32.mrb[0].mxu0
    %v4683 = vpop.f32.mrb[0].mxu0
    %v4684 = vadd.f32 0.0, %v4683
    %v4685 = vpop.f32.mrb[0].mxu0
    %4686 = vdwg.mxu0
    %v4688 = vsel %vm914, %v4378, 0
    %4690 = vmatprep.subr.bf16.mxu0 0
    %4691 = vmatpush1.bf16.msra.mxu0 %v3762
    %4692 = vmatprep.subr.bf16.mxu0 0
    %4693 = vmatpush1.bf16.msra.mxu0 0
    %4694 = vmatprep.subr.bf16.mxu0 0
    %4695 = vmatpush1.bf16.msra.mxu0 0
    %4696 = vmatprep.subr.bf16.mxu0 0
    %4697 = vmatpush1.bf16.msra.mxu0 0
    %4698 = vmatprep.subr.bf16.mxu0 0
    %4699 = vmatpush1.bf16.msra.mxu0 0
    %4700 = vmatprep.subr.bf16.mxu0 0
    %4701 = vmatpush1.bf16.msra.mxu0 0
    %4702 = vmatprep.subr.bf16.mxu0 0
    %4703 = vmatpush1.bf16.msra.mxu0 0
    %4704 = vmatprep.subr.bf16.mxu0 0
    %4705 = vmatpush1.bf16.msra.mxu0 0
    %4706 = vmatprep.subr.bf16.mxu0 0
    %4707 = vmatpush1.bf16.msra.mxu0 0
    %4708 = vmatprep.subr.bf16.mxu0 0
    %4709 = vmatpush1.bf16.msra.mxu0 0
    %4710 = vmatprep.subr.bf16.mxu0 0
    %4711 = vmatpush1.bf16.msra.mxu0 0
    %4712 = vmatprep.subr.bf16.mxu0 0
    %4713 = vmatpush1.bf16.msra.mxu0 0
    %4714 = vmatprep.subr.bf16.mxu0 0
    %4715 = vmatpush1.bf16.msra.mxu0 0
    %4716 = vmatprep.subr.bf16.mxu0 0
    %4717 = vmatpush1.bf16.msra.mxu0 0
    %4718 = vmatprep.subr.bf16.mxu0 0
    %4719 = vmatpush1.bf16.msra.mxu0 0
    %4720 = vmatprep.subr.bf16.mxu0 0
    %4721 = vmatpush1.bf16.msra.mxu0 0
    %4722 = vmatprep.mubr.bf16.mxu0 0
    %4723 = vmatmul.mubr.bf16.gmra.mrb[0].mxu0 %v4688
    %v4724 = vpop.f32.mrb[0].mxu0
    %v4725 = vadd.f32 0.0, %v4724
    %v4726 = vpop.f32.mrb[0].mxu0
    %v4727 = vpop.f32.mrb[0].mxu0
    %v4728 = vadd.f32 0.0, %v4727
    %v4729 = vpop.f32.mrb[0].mxu0
    %4730 = vdwg.mxu0
    %4731 = vrot.lane.b32.xlu0 %v3747, 96
    %v4732 = vpop.permute.xlu0 %4731
    %4733 = vrot.lane.b32.xlu0 %v3747, 32
    %v4734 = vpop.permute.xlu0 %4733
    %v4736 = vsel %vm328, %v4732, 0
    %v4739 = vsel %vm328, %v4734, 0
    %4741 = vmatprep.subr.bf16.mxu0 0
    %4742 = vmatpush1.bf16.xpose.msra.mxu0 %v4739
    %4743 = vmatprep.subr.bf16.mxu0 0
    %4744 = vmatpush1.bf16.xpose.msra.mxu0 0
    %4745 = vmatprep.subr.bf16.mxu0 0
    %4746 = vmatpush1.bf16.xpose.msra.mxu0 0
    %4747 = vmatprep.subr.bf16.mxu0 0
    %4748 = vmatpush1.bf16.xpose.msra.mxu0 0
    %4749 = vmatprep.subr.bf16.mxu0 0
    %4750 = vmatpush1.bf16.xpose.msra.mxu0 0
    %4751 = vmatprep.subr.bf16.mxu0 0
    %4752 = vmatpush1.bf16.xpose.msra.mxu0 0
    %4753 = vmatprep.subr.bf16.mxu0 0
    %4754 = vmatpush1.bf16.xpose.msra.mxu0 0
    %4755 = vmatprep.subr.bf16.mxu0 0
    %4756 = vmatpush1.bf16.xpose.msra.mxu0 0
    %4757 = vmatprep.subr.bf16.mxu0 0
    %4758 = vmatpush1.bf16.xpose.msra.mxu0 0
    %4759 = vmatprep.subr.bf16.mxu0 0
    %4760 = vmatpush1.bf16.xpose.msra.mxu0 0
    %4761 = vmatprep.subr.bf16.mxu0 0
    %4762 = vmatpush1.bf16.xpose.msra.mxu0 0
    %4763 = vmatprep.subr.bf16.mxu0 0
    %4764 = vmatpush1.bf16.xpose.msra.mxu0 0
    %4765 = vmatprep.subr.bf16.mxu0 0
    %4766 = vmatpush1.bf16.xpose.msra.mxu0 0
    %4767 = vmatprep.subr.bf16.mxu0 0
    %4768 = vmatpush1.bf16.xpose.msra.mxu0 0
    %4769 = vmatprep.subr.bf16.mxu0 0
    %4770 = vmatpush1.bf16.xpose.msra.mxu0 0
    %4771 = vmatprep.subr.bf16.mxu0 0
    %4772 = vmatpush1.bf16.xpose.msra.mxu0 0
    %4773 = vmatprep.mubr.bf16.mxu0 0
    %4774 = vmatmul.mubr.bf16.gmra.mrb[0].mxu0 %v4736
    %v4775 = vpop.f32.mrb[0].mxu0
    %v4776 = vadd.f32 0.0, %v4775
    %v4777 = vpop.f32.mrb[0].mxu0
    %v4778 = vpop.f32.mrb[0].mxu0
    %v4779 = vadd.f32 0.0, %v4778
    %v4780 = vpop.f32.mrb[0].mxu0
    %4781 = vdwg.mxu0
    %4782 = vrot.lane.b32.xlu0 %v3748, 96
    %v4783 = vpop.permute.xlu0 %4782
    %4784 = vrot.lane.b32.xlu0 %v3748, 32
    %v4785 = vpop.permute.xlu0 %4784
    %v4787 = vsel %vm328, %v4783, 0
    %v4790 = vsel %vm328, %v4785, 0
    %4792 = vmatprep.subr.bf16.mxu0 0
    %4793 = vmatpush1.bf16.xpose.msra.mxu0 %v4790
    %4794 = vmatprep.subr.bf16.mxu0 0
    %4795 = vmatpush1.bf16.xpose.msra.mxu0 0
    %4796 = vmatprep.subr.bf16.mxu0 0
    %4797 = vmatpush1.bf16.xpose.msra.mxu0 0
    %4798 = vmatprep.subr.bf16.mxu0 0
    %4799 = vmatpush1.bf16.xpose.msra.mxu0 0
    %4800 = vmatprep.subr.bf16.mxu0 0
    %4801 = vmatpush1.bf16.xpose.msra.mxu0 0
    %4802 = vmatprep.subr.bf16.mxu0 0
    %4803 = vmatpush1.bf16.xpose.msra.mxu0 0
    %4804 = vmatprep.subr.bf16.mxu0 0
    %4805 = vmatpush1.bf16.xpose.msra.mxu0 0
    %4806 = vmatprep.subr.bf16.mxu0 0
    %4807 = vmatpush1.bf16.xpose.msra.mxu0 0
    %4808 = vmatprep.subr.bf16.mxu0 0
    %4809 = vmatpush1.bf16.xpose.msra.mxu0 0
    %4810 = vmatprep.subr.bf16.mxu0 0
    %4811 = vmatpush1.bf16.xpose.msra.mxu0 0
    %4812 = vmatprep.subr.bf16.mxu0 0
    %4813 = vmatpush1.bf16.xpose.msra.mxu0 0
    %4814 = vmatprep.subr.bf16.mxu0 0
    %4815 = vmatpush1.bf16.xpose.msra.mxu0 0
    %4816 = vmatprep.subr.bf16.mxu0 0
    %4817 = vmatpush1.bf16.xpose.msra.mxu0 0
    %4818 = vmatprep.subr.bf16.mxu0 0
    %4819 = vmatpush1.bf16.xpose.msra.mxu0 0
    %4820 = vmatprep.subr.bf16.mxu0 0
    %4821 = vmatpush1.bf16.xpose.msra.mxu0 0
    %4822 = vmatprep.subr.bf16.mxu0 0
    %4823 = vmatpush1.bf16.xpose.msra.mxu0 0
    %4824 = vmatprep.mubr.bf16.mxu0 0
    %4825 = vmatmul.mubr.bf16.gmra.mrb[0].mxu0 %v4787
    %v4826 = vpop.f32.mrb[0].mxu0
    %v4827 = vadd.f32 0.0, %v4826
    %v4828 = vpop.f32.mrb[0].mxu0
    %v4829 = vpop.f32.mrb[0].mxu0
    %v4830 = vadd.f32 0.0, %v4829
    %v4831 = vpop.f32.mrb[0].mxu0
    %4832 = vdwg.mxu0
    %4833 = vrot.lane.b32.xlu0 %v3749, 96
    %v4834 = vpop.permute.xlu0 %4833
    %4835 = vrot.lane.b32.xlu0 %v3749, 32
    %v4836 = vpop.permute.xlu0 %4835
    %v4838 = vsel %vm328, %v4834, 0
    %v4841 = vsel %vm328, %v4836, 0
    %4843 = vmatprep.subr.bf16.mxu0 0
    %4844 = vmatpush1.bf16.xpose.msra.mxu0 %v4841
    %4845 = vmatprep.subr.bf16.mxu0 0
    %4846 = vmatpush1.bf16.xpose.msra.mxu0 0
    %4847 = vmatprep.subr.bf16.mxu0 0
    %4848 = vmatpush1.bf16.xpose.msra.mxu0 0
    %4849 = vmatprep.subr.bf16.mxu0 0
    %4850 = vmatpush1.bf16.xpose.msra.mxu0 0
    %4851 = vmatprep.subr.bf16.mxu0 0
    %4852 = vmatpush1.bf16.xpose.msra.mxu0 0
    %4853 = vmatprep.subr.bf16.mxu0 0
    %4854 = vmatpush1.bf16.xpose.msra.mxu0 0
    %4855 = vmatprep.subr.bf16.mxu0 0
    %4856 = vmatpush1.bf16.xpose.msra.mxu0 0
    %4857 = vmatprep.subr.bf16.mxu0 0
    %4858 = vmatpush1.bf16.xpose.msra.mxu0 0
    %4859 = vmatprep.subr.bf16.mxu0 0
    %4860 = vmatpush1.bf16.xpose.msra.mxu0 0
    %4861 = vmatprep.subr.bf16.mxu0 0
    %4862 = vmatpush1.bf16.xpose.msra.mxu0 0
    %4863 = vmatprep.subr.bf16.mxu0 0
    %4864 = vmatpush1.bf16.xpose.msra.mxu0 0
    %4865 = vmatprep.subr.bf16.mxu0 0
    %4866 = vmatpush1.bf16.xpose.msra.mxu0 0
    %4867 = vmatprep.subr.bf16.mxu0 0
    %4868 = vmatpush1.bf16.xpose.msra.mxu0 0
    %4869 = vmatprep.subr.bf16.mxu0 0
    %4870 = vmatpush1.bf16.xpose.msra.mxu0 0
    %4871 = vmatprep.subr.bf16.mxu0 0
    %4872 = vmatpush1.bf16.xpose.msra.mxu0 0
    %4873 = vmatprep.subr.bf16.mxu0 0
    %4874 = vmatpush1.bf16.xpose.msra.mxu0 0
    %4875 = vmatprep.mubr.bf16.mxu0 0
    %4876 = vmatmul.mubr.bf16.gmra.mrb[0].mxu0 %v4838
    %v4877 = vpop.f32.mrb[0].mxu0
    %v4878 = vadd.f32 0.0, %v4877
    %v4879 = vpop.f32.mrb[0].mxu0
    %v4880 = vpop.f32.mrb[0].mxu0
    %v4881 = vadd.f32 0.0, %v4880
    %v4882 = vpop.f32.mrb[0].mxu0
    %4883 = vdwg.mxu0
    %4884 = vrot.lane.b32.xlu0 %v3750, 96
    %v4885 = vpop.permute.xlu0 %4884
    %4886 = vrot.lane.b32.xlu0 %v3750, 32
    %v4887 = vpop.permute.xlu0 %4886
    %v4889 = vsel %vm328, %v4885, 0
    %v4892 = vsel %vm328, %v4887, 0
    %4894 = vmatprep.subr.bf16.mxu0 0
    %4895 = vmatpush1.bf16.xpose.msra.mxu0 %v4892
    %4896 = vmatprep.subr.bf16.mxu0 0
    %4897 = vmatpush1.bf16.xpose.msra.mxu0 0
    %4898 = vmatprep.subr.bf16.mxu0 0
    %4899 = vmatpush1.bf16.xpose.msra.mxu0 0
    %4900 = vmatprep.subr.bf16.mxu0 0
    %4901 = vmatpush1.bf16.xpose.msra.mxu0 0
    %4902 = vmatprep.subr.bf16.mxu0 0
    %4903 = vmatpush1.bf16.xpose.msra.mxu0 0
    %4904 = vmatprep.subr.bf16.mxu0 0
    %4905 = vmatpush1.bf16.xpose.msra.mxu0 0
    %4906 = vmatprep.subr.bf16.mxu0 0
    %4907 = vmatpush1.bf16.xpose.msra.mxu0 0
    %4908 = vmatprep.subr.bf16.mxu0 0
    %4909 = vmatpush1.bf16.xpose.msra.mxu0 0
    %4910 = vmatprep.subr.bf16.mxu0 0
    %4911 = vmatpush1.bf16.xpose.msra.mxu0 0
    %4912 = vmatprep.subr.bf16.mxu0 0
    %4913 = vmatpush1.bf16.xpose.msra.mxu0 0
    %4914 = vmatprep.subr.bf16.mxu0 0
    %4915 = vmatpush1.bf16.xpose.msra.mxu0 0
    %4916 = vmatprep.subr.bf16.mxu0 0
    %4917 = vmatpush1.bf16.xpose.msra.mxu0 0
    %4918 = vmatprep.subr.bf16.mxu0 0
    %4919 = vmatpush1.bf16.xpose.msra.mxu0 0
    %4920 = vmatprep.subr.bf16.mxu0 0
    %4921 = vmatpush1.bf16.xpose.msra.mxu0 0
    %4922 = vmatprep.subr.bf16.mxu0 0
    %4923 = vmatpush1.bf16.xpose.msra.mxu0 0
    %4924 = vmatprep.subr.bf16.mxu0 0
    %4925 = vmatpush1.bf16.xpose.msra.mxu0 0
    %4926 = vmatprep.mubr.bf16.mxu0 0
    %4927 = vmatmul.mubr.bf16.gmra.mrb[0].mxu0 %v4889
    %v4928 = vpop.f32.mrb[0].mxu0
    %v4929 = vadd.f32 0.0, %v4928
    %v4930 = vpop.f32.mrb[0].mxu0
    %v4931 = vpop.f32.mrb[0].mxu0
    %v4932 = vadd.f32 0.0, %v4931
    %v4933 = vpop.f32.mrb[0].mxu0
    %4934 = vdwg.mxu0
    %4935 = vrot.lane.b32.xlu0 %v3751, 96
    %v4936 = vpop.permute.xlu0 %4935
    %4937 = vrot.lane.b32.xlu0 %v3751, 32
    %v4938 = vpop.permute.xlu0 %4937
    %v4940 = vsel %vm328, %v4936, 0
    %v4943 = vsel %vm328, %v4938, 0
    %4945 = vmatprep.subr.bf16.mxu0 0
    %4946 = vmatpush1.bf16.xpose.msra.mxu0 %v4943
    %4947 = vmatprep.subr.bf16.mxu0 0
    %4948 = vmatpush1.bf16.xpose.msra.mxu0 0
    %4949 = vmatprep.subr.bf16.mxu0 0
    %4950 = vmatpush1.bf16.xpose.msra.mxu0 0
    %4951 = vmatprep.subr.bf16.mxu0 0
    %4952 = vmatpush1.bf16.xpose.msra.mxu0 0
    %4953 = vmatprep.subr.bf16.mxu0 0
    %4954 = vmatpush1.bf16.xpose.msra.mxu0 0
    %4955 = vmatprep.subr.bf16.mxu0 0
    %4956 = vmatpush1.bf16.xpose.msra.mxu0 0
    %4957 = vmatprep.subr.bf16.mxu0 0
    %4958 = vmatpush1.bf16.xpose.msra.mxu0 0
    %4959 = vmatprep.subr.bf16.mxu0 0
    %4960 = vmatpush1.bf16.xpose.msra.mxu0 0
    %4961 = vmatprep.subr.bf16.mxu0 0
    %4962 = vmatpush1.bf16.xpose.msra.mxu0 0
    %4963 = vmatprep.subr.bf16.mxu0 0
    %4964 = vmatpush1.bf16.xpose.msra.mxu0 0
    %4965 = vmatprep.subr.bf16.mxu0 0
    %4966 = vmatpush1.bf16.xpose.msra.mxu0 0
    %4967 = vmatprep.subr.bf16.mxu0 0
    %4968 = vmatpush1.bf16.xpose.msra.mxu0 0
    %4969 = vmatprep.subr.bf16.mxu0 0
    %4970 = vmatpush1.bf16.xpose.msra.mxu0 0
    %4971 = vmatprep.subr.bf16.mxu0 0
    %4972 = vmatpush1.bf16.xpose.msra.mxu0 0
    %4973 = vmatprep.subr.bf16.mxu0 0
    %4974 = vmatpush1.bf16.xpose.msra.mxu0 0
    %4975 = vmatprep.subr.bf16.mxu0 0
    %4976 = vmatpush1.bf16.xpose.msra.mxu0 0
    %4977 = vmatprep.mubr.bf16.mxu0 0
    %4978 = vmatmul.mubr.bf16.gmra.mrb[0].mxu0 %v4940
    %v4979 = vpop.f32.mrb[0].mxu0
    %v4980 = vadd.f32 0.0, %v4979
    %v4981 = vpop.f32.mrb[0].mxu0
    %v4982 = vpop.f32.mrb[0].mxu0
    %v4983 = vadd.f32 0.0, %v4982
    %v4984 = vpop.f32.mrb[0].mxu0
    %4985 = vdwg.mxu0
    %4986 = vrot.lane.b32.xlu0 %v3752, 96
    %v4987 = vpop.permute.xlu0 %4986
    %4988 = vrot.lane.b32.xlu0 %v3752, 32
    %v4989 = vpop.permute.xlu0 %4988
    %v4991 = vsel %vm328, %v4987, 0
    %v4994 = vsel %vm328, %v4989, 0
    %4996 = vmatprep.subr.bf16.mxu0 0
    %4997 = vmatpush1.bf16.xpose.msra.mxu0 %v4994
    %4998 = vmatprep.subr.bf16.mxu0 0
    %4999 = vmatpush1.bf16.xpose.msra.mxu0 0
    %5000 = vmatprep.subr.bf16.mxu0 0
    %5001 = vmatpush1.bf16.xpose.msra.mxu0 0
    %5002 = vmatprep.subr.bf16.mxu0 0
    %5003 = vmatpush1.bf16.xpose.msra.mxu0 0
    %5004 = vmatprep.subr.bf16.mxu0 0
    %5005 = vmatpush1.bf16.xpose.msra.mxu0 0
    %5006 = vmatprep.subr.bf16.mxu0 0
    %5007 = vmatpush1.bf16.xpose.msra.mxu0 0
    %5008 = vmatprep.subr.bf16.mxu0 0
    %5009 = vmatpush1.bf16.xpose.msra.mxu0 0
    %5010 = vmatprep.subr.bf16.mxu0 0
    %5011 = vmatpush1.bf16.xpose.msra.mxu0 0
    %5012 = vmatprep.subr.bf16.mxu0 0
    %5013 = vmatpush1.bf16.xpose.msra.mxu0 0
    %5014 = vmatprep.subr.bf16.mxu0 0
    %5015 = vmatpush1.bf16.xpose.msra.mxu0 0
    %5016 = vmatprep.subr.bf16.mxu0 0
    %5017 = vmatpush1.bf16.xpose.msra.mxu0 0
    %5018 = vmatprep.subr.bf16.mxu0 0
    %5019 = vmatpush1.bf16.xpose.msra.mxu0 0
    %5020 = vmatprep.subr.bf16.mxu0 0
    %5021 = vmatpush1.bf16.xpose.msra.mxu0 0
    %5022 = vmatprep.subr.bf16.mxu0 0
    %5023 = vmatpush1.bf16.xpose.msra.mxu0 0
    %5024 = vmatprep.subr.bf16.mxu0 0
    %5025 = vmatpush1.bf16.xpose.msra.mxu0 0
    %5026 = vmatprep.subr.bf16.mxu0 0
    %5027 = vmatpush1.bf16.xpose.msra.mxu0 0
    %5028 = vmatprep.mubr.bf16.mxu0 0
    %5029 = vmatmul.mubr.bf16.gmra.mrb[0].mxu0 %v4991
    %v5030 = vpop.f32.mrb[0].mxu0
    %v5031 = vadd.f32 0.0, %v5030
    %v5032 = vpop.f32.mrb[0].mxu0
    %v5033 = vpop.f32.mrb[0].mxu0
    %v5034 = vadd.f32 0.0, %v5033
    %v5035 = vpop.f32.mrb[0].mxu0
    %5036 = vdwg.mxu0
    %5037 = vrot.lane.b32.xlu0 %v3753, 96
    %v5038 = vpop.permute.xlu0 %5037
    %5039 = vrot.lane.b32.xlu0 %v3753, 32
    %v5040 = vpop.permute.xlu0 %5039
    %v5042 = vsel %vm328, %v5038, 0
    %v5045 = vsel %vm328, %v5040, 0
    %5047 = vmatprep.subr.bf16.mxu0 0
    %5048 = vmatpush1.bf16.xpose.msra.mxu0 %v5045
    %5049 = vmatprep.subr.bf16.mxu0 0
    %5050 = vmatpush1.bf16.xpose.msra.mxu0 0
    %5051 = vmatprep.subr.bf16.mxu0 0
    %5052 = vmatpush1.bf16.xpose.msra.mxu0 0
    %5053 = vmatprep.subr.bf16.mxu0 0
    %5054 = vmatpush1.bf16.xpose.msra.mxu0 0
    %5055 = vmatprep.subr.bf16.mxu0 0
    %5056 = vmatpush1.bf16.xpose.msra.mxu0 0
    %5057 = vmatprep.subr.bf16.mxu0 0
    %5058 = vmatpush1.bf16.xpose.msra.mxu0 0
    %5059 = vmatprep.subr.bf16.mxu0 0
    %5060 = vmatpush1.bf16.xpose.msra.mxu0 0
    %5061 = vmatprep.subr.bf16.mxu0 0
    %5062 = vmatpush1.bf16.xpose.msra.mxu0 0
    %5063 = vmatprep.subr.bf16.mxu0 0
    %5064 = vmatpush1.bf16.xpose.msra.mxu0 0
    %5065 = vmatprep.subr.bf16.mxu0 0
    %5066 = vmatpush1.bf16.xpose.msra.mxu0 0
    %5067 = vmatprep.subr.bf16.mxu0 0
    %5068 = vmatpush1.bf16.xpose.msra.mxu0 0
    %5069 = vmatprep.subr.bf16.mxu0 0
    %5070 = vmatpush1.bf16.xpose.msra.mxu0 0
    %5071 = vmatprep.subr.bf16.mxu0 0
    %5072 = vmatpush1.bf16.xpose.msra.mxu0 0
    %5073 = vmatprep.subr.bf16.mxu0 0
    %5074 = vmatpush1.bf16.xpose.msra.mxu0 0
    %5075 = vmatprep.subr.bf16.mxu0 0
    %5076 = vmatpush1.bf16.xpose.msra.mxu0 0
    %5077 = vmatprep.subr.bf16.mxu0 0
    %5078 = vmatpush1.bf16.xpose.msra.mxu0 0
    %5079 = vmatprep.mubr.bf16.mxu0 0
    %5080 = vmatmul.mubr.bf16.gmra.mrb[0].mxu0 %v5042
    %v5081 = vpop.f32.mrb[0].mxu0
    %v5082 = vadd.f32 0.0, %v5081
    %v5083 = vpop.f32.mrb[0].mxu0
    %v5084 = vpop.f32.mrb[0].mxu0
    %v5085 = vadd.f32 0.0, %v5084
    %v5086 = vpop.f32.mrb[0].mxu0
    %5087 = vdwg.mxu0
    %5088 = vrot.lane.b32.xlu0 %v3754, 96
    %v5089 = vpop.permute.xlu0 %5088
    %5090 = vrot.lane.b32.xlu0 %v3754, 32
    %v5091 = vpop.permute.xlu0 %5090
    %v5093 = vsel %vm328, %v5089, 0
    %v5096 = vsel %vm328, %v5091, 0
    %5098 = vmatprep.subr.bf16.mxu0 0
    %5099 = vmatpush1.bf16.xpose.msra.mxu0 %v5096
    %5100 = vmatprep.subr.bf16.mxu0 0
    %5101 = vmatpush1.bf16.xpose.msra.mxu0 0
    %5102 = vmatprep.subr.bf16.mxu0 0
    %5103 = vmatpush1.bf16.xpose.msra.mxu0 0
    %5104 = vmatprep.subr.bf16.mxu0 0
    %5105 = vmatpush1.bf16.xpose.msra.mxu0 0
    %5106 = vmatprep.subr.bf16.mxu0 0
    %5107 = vmatpush1.bf16.xpose.msra.mxu0 0
    %5108 = vmatprep.subr.bf16.mxu0 0
    %5109 = vmatpush1.bf16.xpose.msra.mxu0 0
    %5110 = vmatprep.subr.bf16.mxu0 0
    %5111 = vmatpush1.bf16.xpose.msra.mxu0 0
    %5112 = vmatprep.subr.bf16.mxu0 0
    %5113 = vmatpush1.bf16.xpose.msra.mxu0 0
    %5114 = vmatprep.subr.bf16.mxu0 0
    %5115 = vmatpush1.bf16.xpose.msra.mxu0 0
    %5116 = vmatprep.subr.bf16.mxu0 0
    %5117 = vmatpush1.bf16.xpose.msra.mxu0 0
    %5118 = vmatprep.subr.bf16.mxu0 0
    %5119 = vmatpush1.bf16.xpose.msra.mxu0 0
    %5120 = vmatprep.subr.bf16.mxu0 0
    %5121 = vmatpush1.bf16.xpose.msra.mxu0 0
    %5122 = vmatprep.subr.bf16.mxu0 0
    %5123 = vmatpush1.bf16.xpose.msra.mxu0 0
    %5124 = vmatprep.subr.bf16.mxu0 0
    %5125 = vmatpush1.bf16.xpose.msra.mxu0 0
    %5126 = vmatprep.subr.bf16.mxu0 0
    %5127 = vmatpush1.bf16.xpose.msra.mxu0 0
    %5128 = vmatprep.subr.bf16.mxu0 0
    %5129 = vmatpush1.bf16.xpose.msra.mxu0 0
    %5130 = vmatprep.mubr.bf16.mxu0 0
    %5131 = vmatmul.mubr.bf16.gmra.mrb[0].mxu0 %v5093
    %v5132 = vpop.f32.mrb[0].mxu0
    %v5133 = vadd.f32 0.0, %v5132
    %v5134 = vpop.f32.mrb[0].mxu0
    %v5135 = vpop.f32.mrb[0].mxu0
    %v5136 = vadd.f32 0.0, %v5135
    %v5137 = vpop.f32.mrb[0].mxu0
    %5138 = vdwg.mxu0
    %v5139 = vmul.f32 %v4776, 0.17677669
    %v5140 = vmul.f32 %v4779, 0.17677669
    %v5141 = vmul.f32 %v4827, 0.17677669
    %v5142 = vmul.f32 %v4830, 0.17677669
    %v5143 = vmul.f32 %v4878, 0.17677669
    %v5144 = vmul.f32 %v4881, 0.17677669
    %v5145 = vmul.f32 %v4929, 0.17677669
    %v5146 = vmul.f32 %v4932, 0.17677669
    %v5147 = vmul.f32 %v4980, 0.17677669
    %v5148 = vmul.f32 %v4983, 0.17677669
    %v5149 = vmul.f32 %v5031, 0.17677669
    %v5150 = vmul.f32 %v5034, 0.17677669
    %v5151 = vmul.f32 %v5082, 0.17677669
    %v5152 = vmul.f32 %v5085, 0.17677669
    %v5153 = vmul.f32 %v5133, 0.17677669
    %v5154 = vmul.f32 %v5136, 0.17677669
    %v5155 = vadd.f32 %v5139, %v294
    %v5156 = vadd.f32 %v5140, %v294
    %v5157 = vadd.f32 %v5141, %v294
    %v5158 = vadd.f32 %v5142, %v294
    %v5159 = vadd.f32 %v5143, %v294
    %v5160 = vadd.f32 %v5144, %v294
    %v5161 = vadd.f32 %v5145, %v294
    %v5162 = vadd.f32 %v5146, %v294
    %v5163 = vadd.f32 %v5147, %v294
    %v5164 = vadd.f32 %v5148, %v294
    %v5165 = vadd.f32 %v5149, %v294
    %v5166 = vadd.f32 %v5150, %v294
    %v5167 = vadd.f32 %v5151, %v294
    %v5168 = vadd.f32 %v5152, %v294
    %v5169 = vadd.f32 %v5153, %v294
    %v5170 = vadd.f32 %v5154, %v294
    %v5171 = vsel %vm914, %v5155, -inf
    %5172 = vmax.xlane.f32.xlu0 %v5171
    %v5173 = vpop.xlane.xlu0 %5172
    %v5174 = vsel %vm914, %v5156, -inf
    %5175 = vmax.xlane.f32.xlu0 %v5174
    %v5176 = vpop.xlane.xlu0 %5175
    %v5177 = vsel %vm914, %v5157, -inf
    %5178 = vmax.xlane.f32.xlu0 %v5177
    %v5179 = vpop.xlane.xlu0 %5178
    %v5180 = vsel %vm914, %v5158, -inf
    %5181 = vmax.xlane.f32.xlu0 %v5180
    %v5182 = vpop.xlane.xlu0 %5181
    %v5183 = vsel %vm914, %v5159, -inf
    %5184 = vmax.xlane.f32.xlu0 %v5183
    %v5185 = vpop.xlane.xlu0 %5184
    %v5186 = vsel %vm914, %v5160, -inf
    %5187 = vmax.xlane.f32.xlu0 %v5186
    %v5188 = vpop.xlane.xlu0 %5187
    %v5189 = vsel %vm914, %v5161, -inf
    %5190 = vmax.xlane.f32.xlu0 %v5189
    %v5191 = vpop.xlane.xlu0 %5190
    %v5192 = vsel %vm914, %v5162, -inf
    %5193 = vmax.xlane.f32.xlu0 %v5192
    %v5194 = vpop.xlane.xlu0 %5193
    %v5195 = vsel %vm914, %v5163, -inf
    %5196 = vmax.xlane.f32.xlu0 %v5195
    %v5197 = vpop.xlane.xlu0 %5196
    %v5198 = vsel %vm914, %v5164, -inf
    %5199 = vmax.xlane.f32.xlu0 %v5198
    %v5200 = vpop.xlane.xlu0 %5199
    %v5201 = vsel %vm914, %v5165, -inf
    %5202 = vmax.xlane.f32.xlu0 %v5201
    %v5203 = vpop.xlane.xlu0 %5202
    %v5204 = vsel %vm914, %v5166, -inf
    %5205 = vmax.xlane.f32.xlu0 %v5204
    %v5206 = vpop.xlane.xlu0 %5205
    %v5207 = vsel %vm914, %v5167, -inf
    %5208 = vmax.xlane.f32.xlu0 %v5207
    %v5209 = vpop.xlane.xlu0 %5208
    %v5210 = vsel %vm914, %v5168, -inf
    %5211 = vmax.xlane.f32.xlu0 %v5210
    %v5212 = vpop.xlane.xlu0 %5211
    %v5213 = vsel %vm914, %v5169, -inf
    %5214 = vmax.xlane.f32.xlu0 %v5213
    %v5215 = vpop.xlane.xlu0 %5214
    %v5216 = vsel %vm914, %v5170, -inf
    %5217 = vmax.xlane.f32.xlu0 %v5216
    %v5218 = vpop.xlane.xlu0 %5217
    %v5219 = vsub.f32 %v5155, %v5173
    %v5220 = vsub.f32 %v5156, %v5176
    %v5221 = vsub.f32 %v5157, %v5179
    %v5222 = vsub.f32 %v5158, %v5182
    %v5223 = vsub.f32 %v5159, %v5185
    %v5224 = vsub.f32 %v5160, %v5188
    %v5225 = vsub.f32 %v5161, %v5191
    %v5226 = vsub.f32 %v5162, %v5194
    %v5227 = vsub.f32 %v5163, %v5197
    %v5228 = vsub.f32 %v5164, %v5200
    %v5229 = vsub.f32 %v5165, %v5203
    %v5230 = vsub.f32 %v5166, %v5206
    %v5231 = vsub.f32 %v5167, %v5209
    %v5232 = vsub.f32 %v5168, %v5212
    %v5233 = vsub.f32 %v5169, %v5215
    %v5234 = vsub.f32 %v5170, %v5218
    %v5235 = vmul.f32 %v5219, 1.442695
    %v5236 = vpow.pop %v5235
    %v5237 = vmul.f32 %v5220, 1.442695
    %v5238 = vpow.pop %v5237
    %v5239 = vmul.f32 %v5221, 1.442695
    %v5240 = vpow.pop %v5239
    %v5241 = vmul.f32 %v5222, 1.442695
    %v5242 = vpow.pop %v5241
    %v5243 = vmul.f32 %v5223, 1.442695
    %v5244 = vpow.pop %v5243
    %v5245 = vmul.f32 %v5224, 1.442695
    %v5246 = vpow.pop %v5245
    %v5247 = vmul.f32 %v5225, 1.442695
    %v5248 = vpow.pop %v5247
    %v5249 = vmul.f32 %v5226, 1.442695
    %v5250 = vpow.pop %v5249
    %v5251 = vmul.f32 %v5227, 1.442695
    %v5252 = vpow.pop %v5251
    %v5253 = vmul.f32 %v5228, 1.442695
    %v5254 = vpow.pop %v5253
    %v5255 = vmul.f32 %v5229, 1.442695
    %v5256 = vpow.pop %v5255
    %v5257 = vmul.f32 %v5230, 1.442695
    %v5258 = vpow.pop %v5257
    %v5259 = vmul.f32 %v5231, 1.442695
    %v5260 = vpow.pop %v5259
    %v5261 = vmul.f32 %v5232, 1.442695
    %v5262 = vpow.pop %v5261
    %v5263 = vmul.f32 %v5233, 1.442695
    %v5264 = vpow.pop %v5263
    %v5265 = vmul.f32 %v5234, 1.442695
    %v5266 = vpow.pop %v5265
    %v5267 = vsel %vm914, %v5236, 0.0
    %5268 = vadd.xlane.f32.xlu0 %v5267
    %v5269 = vpop.xlane.xlu0 %5268
    %v5270 = vsel %vm914, %v5238, 0.0
    %5271 = vadd.xlane.f32.xlu0 %v5270
    %v5272 = vpop.xlane.xlu0 %5271
    %v5273 = vsel %vm914, %v5240, 0.0
    %5274 = vadd.xlane.f32.xlu0 %v5273
    %v5275 = vpop.xlane.xlu0 %5274
    %v5276 = vsel %vm914, %v5242, 0.0
    %5277 = vadd.xlane.f32.xlu0 %v5276
    %v5278 = vpop.xlane.xlu0 %5277
    %v5279 = vsel %vm914, %v5244, 0.0
    %5280 = vadd.xlane.f32.xlu0 %v5279
    %v5281 = vpop.xlane.xlu0 %5280
    %v5282 = vsel %vm914, %v5246, 0.0
    %5283 = vadd.xlane.f32.xlu0 %v5282
    %v5284 = vpop.xlane.xlu0 %5283
    %v5285 = vsel %vm914, %v5248, 0.0
    %5286 = vadd.xlane.f32.xlu0 %v5285
    %v5287 = vpop.xlane.xlu0 %5286
    %v5288 = vsel %vm914, %v5250, 0.0
    %5289 = vadd.xlane.f32.xlu0 %v5288
    %v5290 = vpop.xlane.xlu0 %5289
    %v5291 = vsel %vm914, %v5252, 0.0
    %5292 = vadd.xlane.f32.xlu0 %v5291
    %v5293 = vpop.xlane.xlu0 %5292
    %v5294 = vsel %vm914, %v5254, 0.0
    %5295 = vadd.xlane.f32.xlu0 %v5294
    %v5296 = vpop.xlane.xlu0 %5295
    %v5297 = vsel %vm914, %v5256, 0.0
    %5298 = vadd.xlane.f32.xlu0 %v5297
    %v5299 = vpop.xlane.xlu0 %5298
    %v5300 = vsel %vm914, %v5258, 0.0
    %5301 = vadd.xlane.f32.xlu0 %v5300
    %v5302 = vpop.xlane.xlu0 %5301
    %v5303 = vsel %vm914, %v5260, 0.0
    %5304 = vadd.xlane.f32.xlu0 %v5303
    %v5305 = vpop.xlane.xlu0 %5304
    %v5306 = vsel %vm914, %v5262, 0.0
    %5307 = vadd.xlane.f32.xlu0 %v5306
    %v5308 = vpop.xlane.xlu0 %5307
    %v5309 = vsel %vm914, %v5264, 0.0
    %5310 = vadd.xlane.f32.xlu0 %v5309
    %v5311 = vpop.xlane.xlu0 %5310
    %v5312 = vsel %vm914, %v5266, 0.0
    %5313 = vadd.xlane.f32.xlu0 %v5312
    %v5314 = vpop.xlane.xlu0 %5313
    %v5315 = vrcp.pop %v5269
    %v5316 = vrcp.pop %v5272
    %v5317 = vrcp.pop %v5275
    %v5318 = vrcp.pop %v5278
    %v5319 = vrcp.pop %v5281
    %v5320 = vrcp.pop %v5284
    %v5321 = vrcp.pop %v5287
    %v5322 = vrcp.pop %v5290
    %v5323 = vrcp.pop %v5293
    %v5324 = vrcp.pop %v5296
    %v5325 = vrcp.pop %v5299
    %v5326 = vrcp.pop %v5302
    %v5327 = vrcp.pop %v5305
    %v5328 = vrcp.pop %v5308
    %v5329 = vrcp.pop %v5311
    %v5330 = vrcp.pop %v5314
    %v5331 = vmul.f32 %v5236, %v5315
    %v5332 = vmul.f32 %v5238, %v5316
    %v5333 = vmul.f32 %v5240, %v5317
    %v5334 = vmul.f32 %v5242, %v5318
    %v5335 = vmul.f32 %v5244, %v5319
    %v5336 = vmul.f32 %v5246, %v5320
    %v5337 = vmul.f32 %v5248, %v5321
    %v5338 = vmul.f32 %v5250, %v5322
    %v5339 = vmul.f32 %v5252, %v5323
    %v5340 = vmul.f32 %v5254, %v5324
    %v5341 = vmul.f32 %v5256, %v5325
    %v5342 = vmul.f32 %v5258, %v5326
    %v5343 = vmul.f32 %v5260, %v5327
    %v5344 = vmul.f32 %v5262, %v5328
    %v5345 = vmul.f32 %v5264, %v5329
    %v5346 = vmul.f32 %v5266, %v5330
    %v5347 = vpack.c.bf16 %v5332, %v5331
    %v5348 = vpack.c.bf16 %v5334, %v5333
    %v5349 = vpack.c.bf16 %v5336, %v5335
    %v5350 = vpack.c.bf16 %v5338, %v5337
    %v5351 = vpack.c.bf16 %v5340, %v5339
    %v5352 = vpack.c.bf16 %v5342, %v5341
    %v5353 = vpack.c.bf16 %v5344, %v5343
    %v5354 = vpack.c.bf16 %v5346, %v5345
    %5356 = vrot.lane.b32.xlu0 %v3755, 96
    %v5357 = vpop.permute.xlu0 %5356
    %v5360 = vsel %vm914, %v5347, 0
    %5362 = vmatprep.subr.bf16.mxu0 0
    %5363 = vmatpush1.bf16.msra.mxu0 %v5357
    %5364 = vmatprep.subr.bf16.mxu0 0
    %5365 = vmatpush1.bf16.msra.mxu0 0
    %5366 = vmatprep.subr.bf16.mxu0 0
    %5367 = vmatpush1.bf16.msra.mxu0 0
    %5368 = vmatprep.subr.bf16.mxu0 0
    %5369 = vmatpush1.bf16.msra.mxu0 0
    %5370 = vmatprep.subr.bf16.mxu0 0
    %5371 = vmatpush1.bf16.msra.mxu0 0
    %5372 = vmatprep.subr.bf16.mxu0 0
    %5373 = vmatpush1.bf16.msra.mxu0 0
    %5374 = vmatprep.subr.bf16.mxu0 0
    %5375 = vmatpush1.bf16.msra.mxu0 0
    %5376 = vmatprep.subr.bf16.mxu0 0
    %5377 = vmatpush1.bf16.msra.mxu0 0
    %5378 = vmatprep.subr.bf16.mxu0 0
    %5379 = vmatpush1.bf16.msra.mxu0 0
    %5380 = vmatprep.subr.bf16.mxu0 0
    %5381 = vmatpush1.bf16.msra.mxu0 0
    %5382 = vmatprep.subr.bf16.mxu0 0
    %5383 = vmatpush1.bf16.msra.mxu0 0
    %5384 = vmatprep.subr.bf16.mxu0 0
    %5385 = vmatpush1.bf16.msra.mxu0 0
    %5386 = vmatprep.subr.bf16.mxu0 0
    %5387 = vmatpush1.bf16.msra.mxu0 0
    %5388 = vmatprep.subr.bf16.mxu0 0
    %5389 = vmatpush1.bf16.msra.mxu0 0
    %5390 = vmatprep.subr.bf16.mxu0 0
    %5391 = vmatpush1.bf16.msra.mxu0 0
    %5392 = vmatprep.subr.bf16.mxu0 0
    %5393 = vmatpush1.bf16.msra.mxu0 0
    %5394 = vmatprep.mubr.bf16.mxu0 0
    %5395 = vmatmul.mubr.bf16.gmra.mrb[0].mxu0 %v5360
    %v5396 = vpop.f32.mrb[0].mxu0
    %v5397 = vadd.f32 0.0, %v5396
    %v5398 = vpop.f32.mrb[0].mxu0
    %v5399 = vpop.f32.mrb[0].mxu0
    %v5400 = vadd.f32 0.0, %v5399
    %v5401 = vpop.f32.mrb[0].mxu0
    %5402 = vdwg.mxu0
    %5404 = vrot.lane.b32.xlu0 %v3756, 96
    %v5405 = vpop.permute.xlu0 %5404
    %v5408 = vsel %vm914, %v5348, 0
    %5410 = vmatprep.subr.bf16.mxu0 0
    %5411 = vmatpush1.bf16.msra.mxu0 %v5405
    %5412 = vmatprep.subr.bf16.mxu0 0
    %5413 = vmatpush1.bf16.msra.mxu0 0
    %5414 = vmatprep.subr.bf16.mxu0 0
    %5415 = vmatpush1.bf16.msra.mxu0 0
    %5416 = vmatprep.subr.bf16.mxu0 0
    %5417 = vmatpush1.bf16.msra.mxu0 0
    %5418 = vmatprep.subr.bf16.mxu0 0
    %5419 = vmatpush1.bf16.msra.mxu0 0
    %5420 = vmatprep.subr.bf16.mxu0 0
    %5421 = vmatpush1.bf16.msra.mxu0 0
    %5422 = vmatprep.subr.bf16.mxu0 0
    %5423 = vmatpush1.bf16.msra.mxu0 0
    %5424 = vmatprep.subr.bf16.mxu0 0
    %5425 = vmatpush1.bf16.msra.mxu0 0
    %5426 = vmatprep.subr.bf16.mxu0 0
    %5427 = vmatpush1.bf16.msra.mxu0 0
    %5428 = vmatprep.subr.bf16.mxu0 0
    %5429 = vmatpush1.bf16.msra.mxu0 0
    %5430 = vmatprep.subr.bf16.mxu0 0
    %5431 = vmatpush1.bf16.msra.mxu0 0
    %5432 = vmatprep.subr.bf16.mxu0 0
    %5433 = vmatpush1.bf16.msra.mxu0 0
    %5434 = vmatprep.subr.bf16.mxu0 0
    %5435 = vmatpush1.bf16.msra.mxu0 0
    %5436 = vmatprep.subr.bf16.mxu0 0
    %5437 = vmatpush1.bf16.msra.mxu0 0
    %5438 = vmatprep.subr.bf16.mxu0 0
    %5439 = vmatpush1.bf16.msra.mxu0 0
    %5440 = vmatprep.subr.bf16.mxu0 0
    %5441 = vmatpush1.bf16.msra.mxu0 0
    %5442 = vmatprep.mubr.bf16.mxu0 0
    %5443 = vmatmul.mubr.bf16.gmra.mrb[0].mxu0 %v5408
    %v5444 = vpop.f32.mrb[0].mxu0
    %v5445 = vadd.f32 0.0, %v5444
    %v5446 = vpop.f32.mrb[0].mxu0
    %v5447 = vpop.f32.mrb[0].mxu0
    %v5448 = vadd.f32 0.0, %v5447
    %v5449 = vpop.f32.mrb[0].mxu0
    %5450 = vdwg.mxu0
    %5452 = vrot.lane.b32.xlu0 %v3757, 96
    %v5453 = vpop.permute.xlu0 %5452
    %v5456 = vsel %vm914, %v5349, 0
    %5458 = vmatprep.subr.bf16.mxu0 0
    %5459 = vmatpush1.bf16.msra.mxu0 %v5453
    %5460 = vmatprep.subr.bf16.mxu0 0
    %5461 = vmatpush1.bf16.msra.mxu0 0
    %5462 = vmatprep.subr.bf16.mxu0 0
    %5463 = vmatpush1.bf16.msra.mxu0 0
    %5464 = vmatprep.subr.bf16.mxu0 0
    %5465 = vmatpush1.bf16.msra.mxu0 0
    %5466 = vmatprep.subr.bf16.mxu0 0
    %5467 = vmatpush1.bf16.msra.mxu0 0
    %5468 = vmatprep.subr.bf16.mxu0 0
    %5469 = vmatpush1.bf16.msra.mxu0 0
    %5470 = vmatprep.subr.bf16.mxu0 0
    %5471 = vmatpush1.bf16.msra.mxu0 0
    %5472 = vmatprep.subr.bf16.mxu0 0
    %5473 = vmatpush1.bf16.msra.mxu0 0
    %5474 = vmatprep.subr.bf16.mxu0 0
    %5475 = vmatpush1.bf16.msra.mxu0 0
    %5476 = vmatprep.subr.bf16.mxu0 0
    %5477 = vmatpush1.bf16.msra.mxu0 0
    %5478 = vmatprep.subr.bf16.mxu0 0
    %5479 = vmatpush1.bf16.msra.mxu0 0
    %5480 = vmatprep.subr.bf16.mxu0 0
    %5481 = vmatpush1.bf16.msra.mxu0 0
    %5482 = vmatprep.subr.bf16.mxu0 0
    %5483 = vmatpush1.bf16.msra.mxu0 0
    %5484 = vmatprep.subr.bf16.mxu0 0
    %5485 = vmatpush1.bf16.msra.mxu0 0
    %5486 = vmatprep.subr.bf16.mxu0 0
    %5487 = vmatpush1.bf16.msra.mxu0 0
    %5488 = vmatprep.subr.bf16.mxu0 0
    %5489 = vmatpush1.bf16.msra.mxu0 0
    %5490 = vmatprep.mubr.bf16.mxu0 0
    %5491 = vmatmul.mubr.bf16.gmra.mrb[0].mxu0 %v5456
    %v5492 = vpop.f32.mrb[0].mxu0
    %v5493 = vadd.f32 0.0, %v5492
    %v5494 = vpop.f32.mrb[0].mxu0
    %v5495 = vpop.f32.mrb[0].mxu0
    %v5496 = vadd.f32 0.0, %v5495
    %v5497 = vpop.f32.mrb[0].mxu0
    %5498 = vdwg.mxu0
    %5500 = vrot.lane.b32.xlu0 %v3758, 96
    %v5501 = vpop.permute.xlu0 %5500
    %v5504 = vsel %vm914, %v5350, 0
    %5506 = vmatprep.subr.bf16.mxu0 0
    %5507 = vmatpush1.bf16.msra.mxu0 %v5501
    %5508 = vmatprep.subr.bf16.mxu0 0
    %5509 = vmatpush1.bf16.msra.mxu0 0
    %5510 = vmatprep.subr.bf16.mxu0 0
    %5511 = vmatpush1.bf16.msra.mxu0 0
    %5512 = vmatprep.subr.bf16.mxu0 0
    %5513 = vmatpush1.bf16.msra.mxu0 0
    %5514 = vmatprep.subr.bf16.mxu0 0
    %5515 = vmatpush1.bf16.msra.mxu0 0
    %5516 = vmatprep.subr.bf16.mxu0 0
    %5517 = vmatpush1.bf16.msra.mxu0 0
    %5518 = vmatprep.subr.bf16.mxu0 0
    %5519 = vmatpush1.bf16.msra.mxu0 0
    %5520 = vmatprep.subr.bf16.mxu0 0
    %5521 = vmatpush1.bf16.msra.mxu0 0
    %5522 = vmatprep.subr.bf16.mxu0 0
    %5523 = vmatpush1.bf16.msra.mxu0 0
    %5524 = vmatprep.subr.bf16.mxu0 0
    %5525 = vmatpush1.bf16.msra.mxu0 0
    %5526 = vmatprep.subr.bf16.mxu0 0
    %5527 = vmatpush1.bf16.msra.mxu0 0
    %5528 = vmatprep.subr.bf16.mxu0 0
    %5529 = vmatpush1.bf16.msra.mxu0 0
    %5530 = vmatprep.subr.bf16.mxu0 0
    %5531 = vmatpush1.bf16.msra.mxu0 0
    %5532 = vmatprep.subr.bf16.mxu0 0
    %5533 = vmatpush1.bf16.msra.mxu0 0
    %5534 = vmatprep.subr.bf16.mxu0 0
    %5535 = vmatpush1.bf16.msra.mxu0 0
    %5536 = vmatprep.subr.bf16.mxu0 0
    %5537 = vmatpush1.bf16.msra.mxu0 0
    %5538 = vmatprep.mubr.bf16.mxu0 0
    %5539 = vmatmul.mubr.bf16.gmra.mrb[0].mxu0 %v5504
    %v5540 = vpop.f32.mrb[0].mxu0
    %v5541 = vadd.f32 0.0, %v5540
    %v5542 = vpop.f32.mrb[0].mxu0
    %v5543 = vpop.f32.mrb[0].mxu0
    %v5544 = vadd.f32 0.0, %v5543
    %v5545 = vpop.f32.mrb[0].mxu0
    %5546 = vdwg.mxu0
    %5548 = vrot.lane.b32.xlu0 %v3759, 96
    %v5549 = vpop.permute.xlu0 %5548
    %v5552 = vsel %vm914, %v5351, 0
    %5554 = vmatprep.subr.bf16.mxu0 0
    %5555 = vmatpush1.bf16.msra.mxu0 %v5549
    %5556 = vmatprep.subr.bf16.mxu0 0
    %5557 = vmatpush1.bf16.msra.mxu0 0
    %5558 = vmatprep.subr.bf16.mxu0 0
    %5559 = vmatpush1.bf16.msra.mxu0 0
    %5560 = vmatprep.subr.bf16.mxu0 0
    %5561 = vmatpush1.bf16.msra.mxu0 0
    %5562 = vmatprep.subr.bf16.mxu0 0
    %5563 = vmatpush1.bf16.msra.mxu0 0
    %5564 = vmatprep.subr.bf16.mxu0 0
    %5565 = vmatpush1.bf16.msra.mxu0 0
    %5566 = vmatprep.subr.bf16.mxu0 0
    %5567 = vmatpush1.bf16.msra.mxu0 0
    %5568 = vmatprep.subr.bf16.mxu0 0
    %5569 = vmatpush1.bf16.msra.mxu0 0
    %5570 = vmatprep.subr.bf16.mxu0 0
    %5571 = vmatpush1.bf16.msra.mxu0 0
    %5572 = vmatprep.subr.bf16.mxu0 0
    %5573 = vmatpush1.bf16.msra.mxu0 0
    %5574 = vmatprep.subr.bf16.mxu0 0
    %5575 = vmatpush1.bf16.msra.mxu0 0
    %5576 = vmatprep.subr.bf16.mxu0 0
    %5577 = vmatpush1.bf16.msra.mxu0 0
    %5578 = vmatprep.subr.bf16.mxu0 0
    %5579 = vmatpush1.bf16.msra.mxu0 0
    %5580 = vmatprep.subr.bf16.mxu0 0
    %5581 = vmatpush1.bf16.msra.mxu0 0
    %5582 = vmatprep.subr.bf16.mxu0 0
    %5583 = vmatpush1.bf16.msra.mxu0 0
    %5584 = vmatprep.subr.bf16.mxu0 0
    %5585 = vmatpush1.bf16.msra.mxu0 0
    %5586 = vmatprep.mubr.bf16.mxu0 0
    %5587 = vmatmul.mubr.bf16.gmra.mrb[0].mxu0 %v5552
    %v5588 = vpop.f32.mrb[0].mxu0
    %v5589 = vadd.f32 0.0, %v5588
    %v5590 = vpop.f32.mrb[0].mxu0
    %v5591 = vpop.f32.mrb[0].mxu0
    %v5592 = vadd.f32 0.0, %v5591
    %v5593 = vpop.f32.mrb[0].mxu0
    %5594 = vdwg.mxu0
    %5596 = vrot.lane.b32.xlu0 %v3760, 96
    %v5597 = vpop.permute.xlu0 %5596
    %v5600 = vsel %vm914, %v5352, 0
    %5602 = vmatprep.subr.bf16.mxu0 0
    %5603 = vmatpush1.bf16.msra.mxu0 %v5597
    %5604 = vmatprep.subr.bf16.mxu0 0
    %5605 = vmatpush1.bf16.msra.mxu0 0
    %5606 = vmatprep.subr.bf16.mxu0 0
    %5607 = vmatpush1.bf16.msra.mxu0 0
    %5608 = vmatprep.subr.bf16.mxu0 0
    %5609 = vmatpush1.bf16.msra.mxu0 0
    %5610 = vmatprep.subr.bf16.mxu0 0
    %5611 = vmatpush1.bf16.msra.mxu0 0
    %5612 = vmatprep.subr.bf16.mxu0 0
    %5613 = vmatpush1.bf16.msra.mxu0 0
    %5614 = vmatprep.subr.bf16.mxu0 0
    %5615 = vmatpush1.bf16.msra.mxu0 0
    %5616 = vmatprep.subr.bf16.mxu0 0
    %5617 = vmatpush1.bf16.msra.mxu0 0
    %5618 = vmatprep.subr.bf16.mxu0 0
    %5619 = vmatpush1.bf16.msra.mxu0 0
    %5620 = vmatprep.subr.bf16.mxu0 0
    %5621 = vmatpush1.bf16.msra.mxu0 0
    %5622 = vmatprep.subr.bf16.mxu0 0
    %5623 = vmatpush1.bf16.msra.mxu0 0
    %5624 = vmatprep.subr.bf16.mxu0 0
    %5625 = vmatpush1.bf16.msra.mxu0 0
    %5626 = vmatprep.subr.bf16.mxu0 0
    %5627 = vmatpush1.bf16.msra.mxu0 0
    %5628 = vmatprep.subr.bf16.mxu0 0
    %5629 = vmatpush1.bf16.msra.mxu0 0
    %5630 = vmatprep.subr.bf16.mxu0 0
    %5631 = vmatpush1.bf16.msra.mxu0 0
    %5632 = vmatprep.subr.bf16.mxu0 0
    %5633 = vmatpush1.bf16.msra.mxu0 0
    %5634 = vmatprep.mubr.bf16.mxu0 0
    %5635 = vmatmul.mubr.bf16.gmra.mrb[0].mxu0 %v5600
    %v5636 = vpop.f32.mrb[0].mxu0
    %v5637 = vadd.f32 0.0, %v5636
    %v5638 = vpop.f32.mrb[0].mxu0
    %v5639 = vpop.f32.mrb[0].mxu0
    %v5640 = vadd.f32 0.0, %v5639
    %v5641 = vpop.f32.mrb[0].mxu0
    %5642 = vdwg.mxu0
    %5644 = vrot.lane.b32.xlu0 %v3761, 96
    %v5645 = vpop.permute.xlu0 %5644
    %v5648 = vsel %vm914, %v5353, 0
    %5650 = vmatprep.subr.bf16.mxu0 0
    %5651 = vmatpush1.bf16.msra.mxu0 %v5645
    %5652 = vmatprep.subr.bf16.mxu0 0
    %5653 = vmatpush1.bf16.msra.mxu0 0
    %5654 = vmatprep.subr.bf16.mxu0 0
    %5655 = vmatpush1.bf16.msra.mxu0 0
    %5656 = vmatprep.subr.bf16.mxu0 0
    %5657 = vmatpush1.bf16.msra.mxu0 0
    %5658 = vmatprep.subr.bf16.mxu0 0
    %5659 = vmatpush1.bf16.msra.mxu0 0
    %5660 = vmatprep.subr.bf16.mxu0 0
    %5661 = vmatpush1.bf16.msra.mxu0 0
    %5662 = vmatprep.subr.bf16.mxu0 0
    %5663 = vmatpush1.bf16.msra.mxu0 0
    %5664 = vmatprep.subr.bf16.mxu0 0
    %5665 = vmatpush1.bf16.msra.mxu0 0
    %5666 = vmatprep.subr.bf16.mxu0 0
    %5667 = vmatpush1.bf16.msra.mxu0 0
    %5668 = vmatprep.subr.bf16.mxu0 0
    %5669 = vmatpush1.bf16.msra.mxu0 0
    %5670 = vmatprep.subr.bf16.mxu0 0
    %5671 = vmatpush1.bf16.msra.mxu0 0
    %5672 = vmatprep.subr.bf16.mxu0 0
    %5673 = vmatpush1.bf16.msra.mxu0 0
    %5674 = vmatprep.subr.bf16.mxu0 0
    %5675 = vmatpush1.bf16.msra.mxu0 0
    %5676 = vmatprep.subr.bf16.mxu0 0
    %5677 = vmatpush1.bf16.msra.mxu0 0
    %5678 = vmatprep.subr.bf16.mxu0 0
    %5679 = vmatpush1.bf16.msra.mxu0 0
    %5680 = vmatprep.subr.bf16.mxu0 0
    %5681 = vmatpush1.bf16.msra.mxu0 0
    %5682 = vmatprep.mubr.bf16.mxu0 0
    %5683 = vmatmul.mubr.bf16.gmra.mrb[0].mxu0 %v5648
    %v5684 = vpop.f32.mrb[0].mxu0
    %v5685 = vadd.f32 0.0, %v5684
    %v5686 = vpop.f32.mrb[0].mxu0
    %v5687 = vpop.f32.mrb[0].mxu0
    %v5688 = vadd.f32 0.0, %v5687
    %v5689 = vpop.f32.mrb[0].mxu0
    %5690 = vdwg.mxu0
    %5692 = vrot.lane.b32.xlu0 %v3762, 96
    %v5693 = vpop.permute.xlu0 %5692
    %v5696 = vsel %vm914, %v5354, 0
    %5698 = vmatprep.subr.bf16.mxu0 0
    %5699 = vmatpush1.bf16.msra.mxu0 %v5693
    %5700 = vmatprep.subr.bf16.mxu0 0
    %5701 = vmatpush1.bf16.msra.mxu0 0
    %5702 = vmatprep.subr.bf16.mxu0 0
    %5703 = vmatpush1.bf16.msra.mxu0 0
    %5704 = vmatprep.subr.bf16.mxu0 0
    %5705 = vmatpush1.bf16.msra.mxu0 0
    %5706 = vmatprep.subr.bf16.mxu0 0
    %5707 = vmatpush1.bf16.msra.mxu0 0
    %5708 = vmatprep.subr.bf16.mxu0 0
    %5709 = vmatpush1.bf16.msra.mxu0 0
    %5710 = vmatprep.subr.bf16.mxu0 0
    %5711 = vmatpush1.bf16.msra.mxu0 0
    %5712 = vmatprep.subr.bf16.mxu0 0
    %5713 = vmatpush1.bf16.msra.mxu0 0
    %5714 = vmatprep.subr.bf16.mxu0 0
    %5715 = vmatpush1.bf16.msra.mxu0 0
    %5716 = vmatprep.subr.bf16.mxu0 0
    %5717 = vmatpush1.bf16.msra.mxu0 0
    %5718 = vmatprep.subr.bf16.mxu0 0
    %5719 = vmatpush1.bf16.msra.mxu0 0
    %5720 = vmatprep.subr.bf16.mxu0 0
    %5721 = vmatpush1.bf16.msra.mxu0 0
    %5722 = vmatprep.subr.bf16.mxu0 0
    %5723 = vmatpush1.bf16.msra.mxu0 0
    %5724 = vmatprep.subr.bf16.mxu0 0
    %5725 = vmatpush1.bf16.msra.mxu0 0
    %5726 = vmatprep.subr.bf16.mxu0 0
    %5727 = vmatpush1.bf16.msra.mxu0 0
    %5728 = vmatprep.subr.bf16.mxu0 0
    %5729 = vmatpush1.bf16.msra.mxu0 0
    %5730 = vmatprep.mubr.bf16.mxu0 0
    %5731 = vmatmul.mubr.bf16.gmra.mrb[0].mxu0 %v5696
    %v5732 = vpop.f32.mrb[0].mxu0
    %v5733 = vadd.f32 0.0, %v5732
    %v5734 = vpop.f32.mrb[0].mxu0
    %v5735 = vpop.f32.mrb[0].mxu0
    %v5736 = vadd.f32 0.0, %v5735
    %v5737 = vpop.f32.mrb[0].mxu0
    %5738 = vdwg.mxu0
    %5755 = vrot.lane.b32.xlu0 %v5397, 32
    %v5756 = vpop.permute.xlu0 %5755
    %5757 = vrot.lane.b32.xlu0 %v5400, 32
    %v5758 = vpop.permute.xlu0 %5757
    %5759 = vrot.lane.b32.xlu0 %v5445, 32
    %v5760 = vpop.permute.xlu0 %5759
    %5761 = vrot.lane.b32.xlu0 %v5448, 32
    %v5762 = vpop.permute.xlu0 %5761
    %5763 = vrot.lane.b32.xlu0 %v5493, 32
    %v5764 = vpop.permute.xlu0 %5763
    %5765 = vrot.lane.b32.xlu0 %v5496, 32
    %v5766 = vpop.permute.xlu0 %5765
    %5767 = vrot.lane.b32.xlu0 %v5541, 32
    %v5768 = vpop.permute.xlu0 %5767
    %5769 = vrot.lane.b32.xlu0 %v5544, 32
    %v5770 = vpop.permute.xlu0 %5769
    %5771 = vrot.lane.b32.xlu0 %v5589, 32
    %v5772 = vpop.permute.xlu0 %5771
    %5773 = vrot.lane.b32.xlu0 %v5592, 32
    %v5774 = vpop.permute.xlu0 %5773
    %5775 = vrot.lane.b32.xlu0 %v5637, 32
    %v5776 = vpop.permute.xlu0 %5775
    %5777 = vrot.lane.b32.xlu0 %v5640, 32
    %v5778 = vpop.permute.xlu0 %5777
    %5779 = vrot.lane.b32.xlu0 %v5685, 32
    %v5780 = vpop.permute.xlu0 %5779
    %5781 = vrot.lane.b32.xlu0 %v5688, 32
    %v5782 = vpop.permute.xlu0 %5781
    %5783 = vrot.lane.b32.xlu0 %v5733, 32
    %v5784 = vpop.permute.xlu0 %5783
    %5785 = vrot.lane.b32.xlu0 %v5736, 32
    %v5786 = vpop.permute.xlu0 %5785
    %v5803 = vsel %vm328, %v4417, %v5756
    %v5804 = vsel %vm328, %v4420, %v5758
    %v5805 = vsel %vm328, %v4461, %v5760
    %v5806 = vsel %vm328, %v4464, %v5762
    %v5807 = vsel %vm328, %v4505, %v5764
    %v5808 = vsel %vm328, %v4508, %v5766
    %v5809 = vsel %vm328, %v4549, %v5768
    %v5810 = vsel %vm328, %v4552, %v5770
    %v5811 = vsel %vm328, %v4593, %v5772
    %v5812 = vsel %vm328, %v4596, %v5774
    %v5813 = vsel %vm328, %v4637, %v5776
    %v5814 = vsel %vm328, %v4640, %v5778
    %v5815 = vsel %vm328, %v4681, %v5780
    %v5816 = vsel %vm328, %v4684, %v5782
    %v5817 = vsel %vm328, %v4725, %v5784
    %v5818 = vsel %vm328, %v4728, %v5786
    %v5819 = vpack.c.bf16 %v5804, %v5803
    %v5820 = vpack.c.bf16 %v5806, %v5805
    %v5821 = vpack.c.bf16 %v5808, %v5807
    %v5822 = vpack.c.bf16 %v5810, %v5809
    %v5823 = vpack.c.bf16 %v5812, %v5811
    %v5824 = vpack.c.bf16 %v5814, %v5813
    %v5825 = vpack.c.bf16 %v5816, %v5815
    %v5826 = vpack.c.bf16 %v5818, %v5817
    %s5827 = scalar_lea.vmem %s5, 32
    %v5828 = vld [vmem:[%s5827] sm:$0xf]
    %v5829 = vld [vmem:[%s5827 + $0x4] sm:$0xf]
    %v5830 = vld [vmem:[%s5827 + $0x8] sm:$0xf]
    %v5831 = vld [vmem:[%s5827 + $0xc] sm:$0xf]
    %v5832 = vld [vmem:[%s5827 + $0x10] sm:$0xf]
    %v5833 = vld [vmem:[%s5827 + $0x14] sm:$0xf]
    %v5834 = vld [vmem:[%s5827 + $0x18] sm:$0xf]
    %v5835 = vld [vmem:[%s5827 + $0x1c] sm:$0xf]
    %v5836 = vlaneseq
    %v5837 = vshrl.u32 %v5836, 7
    %v5838 = vsub.s32 0, %v5837
    %v5839 = vrot.slane %v3576, %v5838
    %v5848 = vunpack.c.l.b16 %v5828
    %v5849 = vunpack.c.l.b16 %v5829
    %v5850 = vunpack.c.l.b16 %v5830
    %v5851 = vunpack.c.l.b16 %v5831
    %v5852 = vunpack.c.l.b16 %v5832
    %v5853 = vunpack.c.l.b16 %v5833
    %v5854 = vunpack.c.l.b16 %v5834
    %v5855 = vunpack.c.l.b16 %v5835
    %v5856 = vpack.c.b16 %v5849, %v5848
    %v5857 = vpack.c.b16 %v5851, %v5850
    %v5858 = vpack.c.b16 %v5853, %v5852
    %v5859 = vpack.c.b16 %v5855, %v5854
    %v5865 = vsel %vm2583, %v5819, 0
    %v5868 = vsel %vm2583, %v5820, 0
    %v5871 = vsel %vm2583, %v5821, 0
    %v5874 = vsel %vm2583, %v5822, 0
    %v5877 = vsel %vm2583, %v5823, 0
    %v5880 = vsel %vm2583, %v5824, 0
    %v5883 = vsel %vm2583, %v5825, 0
    %v5886 = vsel %vm2583, %v5826, 0
    %5888 = vmatprep.subr.bf16.mxu0 0
    %5889 = vmatpush1.bf16.msra.mxu0 %v5856
    %5890 = vmatprep.subr.bf16.mxu0 0
    %5891 = vmatpush1.bf16.msra.mxu0 %v5857
    %5892 = vmatprep.subr.bf16.mxu0 0
    %5893 = vmatpush1.bf16.msra.mxu0 %v5858
    %5894 = vmatprep.subr.bf16.mxu0 0
    %5895 = vmatpush1.bf16.msra.mxu0 %v5859
    %5896 = vmatprep.subr.bf16.mxu0 0
    %5897 = vmatpush1.bf16.msra.mxu0 0
    %5898 = vmatprep.subr.bf16.mxu0 0
    %5899 = vmatpush1.bf16.msra.mxu0 0
    %5900 = vmatprep.subr.bf16.mxu0 0
    %5901 = vmatpush1.bf16.msra.mxu0 0
    %5902 = vmatprep.subr.bf16.mxu0 0
    %5903 = vmatpush1.bf16.msra.mxu0 0
    %5904 = vmatprep.subr.bf16.mxu0 0
    %5905 = vmatpush1.bf16.msra.mxu0 0
    %5906 = vmatprep.subr.bf16.mxu0 0
    %5907 = vmatpush1.bf16.msra.mxu0 0
    %5908 = vmatprep.subr.bf16.mxu0 0
    %5909 = vmatpush1.bf16.msra.mxu0 0
    %5910 = vmatprep.subr.bf16.mxu0 0
    %5911 = vmatpush1.bf16.msra.mxu0 0
    %5912 = vmatprep.subr.bf16.mxu0 0
    %5913 = vmatpush1.bf16.msra.mxu0 0
    %5914 = vmatprep.subr.bf16.mxu0 0
    %5915 = vmatpush1.bf16.msra.mxu0 0
    %5916 = vmatprep.subr.bf16.mxu0 0
    %5917 = vmatpush1.bf16.msra.mxu0 0
    %5918 = vmatprep.subr.bf16.mxu0 0
    %5919 = vmatpush1.bf16.msra.mxu0 0
    %5920 = vmatprep.mubr.bf16.mxu0 0
    %5921 = vmatmul.mubr.bf16.gmra.mrb[0].mxu0 %v5865
    %v5922 = vpop.f32.mrb[0].mxu0
    %v5923 = vadd.f32 %v5839, %v5922
    %v5924 = vpop.f32.mrb[0].mxu0
    %v5925 = vpop.f32.mrb[0].mxu0
    %v5926 = vadd.f32 %v5839, %v5925
    %v5927 = vpop.f32.mrb[0].mxu0
    %5928 = vmatprep.mubr.bf16.mxu0 0
    %5929 = vmatmul.mubr.bf16.gmra.mrb[0].mxu0 %v5868
    %v5930 = vpop.f32.mrb[0].mxu0
    %v5931 = vadd.f32 %v5839, %v5930
    %v5932 = vpop.f32.mrb[0].mxu0
    %v5933 = vpop.f32.mrb[0].mxu0
    %v5934 = vadd.f32 %v5839, %v5933
    %v5935 = vpop.f32.mrb[0].mxu0
    %5936 = vmatprep.mubr.bf16.mxu0 0
    %5937 = vmatmul.mubr.bf16.gmra.mrb[0].mxu0 %v5871
    %v5938 = vpop.f32.mrb[0].mxu0
    %v5939 = vadd.f32 %v5839, %v5938
    %v5940 = vpop.f32.mrb[0].mxu0
    %v5941 = vpop.f32.mrb[0].mxu0
    %v5942 = vadd.f32 %v5839, %v5941
    %v5943 = vpop.f32.mrb[0].mxu0
    %5944 = vmatprep.mubr.bf16.mxu0 0
    %5945 = vmatmul.mubr.bf16.gmra.mrb[0].mxu0 %v5874
    %v5946 = vpop.f32.mrb[0].mxu0
    %v5947 = vadd.f32 %v5839, %v5946
    %v5948 = vpop.f32.mrb[0].mxu0
    %v5949 = vpop.f32.mrb[0].mxu0
    %v5950 = vadd.f32 %v5839, %v5949
    %v5951 = vpop.f32.mrb[0].mxu0
    %5952 = vmatprep.mubr.bf16.mxu0 0
    %5953 = vmatmul.mubr.bf16.gmra.mrb[0].mxu0 %v5877
    %v5954 = vpop.f32.mrb[0].mxu0
    %v5955 = vadd.f32 %v5839, %v5954
    %v5956 = vpop.f32.mrb[0].mxu0
    %v5957 = vpop.f32.mrb[0].mxu0
    %v5958 = vadd.f32 %v5839, %v5957
    %v5959 = vpop.f32.mrb[0].mxu0
    %5960 = vmatprep.mubr.bf16.mxu0 0
    %5961 = vmatmul.mubr.bf16.gmra.mrb[0].mxu0 %v5880
    %v5962 = vpop.f32.mrb[0].mxu0
    %v5963 = vadd.f32 %v5839, %v5962
    %v5964 = vpop.f32.mrb[0].mxu0
    %v5965 = vpop.f32.mrb[0].mxu0
    %v5966 = vadd.f32 %v5839, %v5965
    %v5967 = vpop.f32.mrb[0].mxu0
    %5968 = vmatprep.mubr.bf16.mxu0 0
    %5969 = vmatmul.mubr.bf16.gmra.mrb[0].mxu0 %v5883
    %v5970 = vpop.f32.mrb[0].mxu0
    %v5971 = vadd.f32 %v5839, %v5970
    %v5972 = vpop.f32.mrb[0].mxu0
    %v5973 = vpop.f32.mrb[0].mxu0
    %v5974 = vadd.f32 %v5839, %v5973
    %v5975 = vpop.f32.mrb[0].mxu0
    %5976 = vmatprep.mubr.bf16.mxu0 0
    %5977 = vmatmul.mubr.bf16.gmra.mrb[0].mxu0 %v5886
    %v5978 = vpop.f32.mrb[0].mxu0
    %v5979 = vadd.f32 %v5839, %v5978
    %v5980 = vpop.f32.mrb[0].mxu0
    %v5981 = vpop.f32.mrb[0].mxu0
    %v5982 = vadd.f32 %v5839, %v5981
    %v5983 = vpop.f32.mrb[0].mxu0
    %5984 = vdwg.mxu0
    %v5985 = vadd.f32 %v5923, %v3559
    %v5986 = vadd.f32 %v5926, %v3560
    %v5987 = vadd.f32 %v5931, %v3561
    %v5988 = vadd.f32 %v5934, %v3562
    %v5989 = vadd.f32 %v5939, %v3563
    %v5990 = vadd.f32 %v5942, %v3564
    %v5991 = vadd.f32 %v5947, %v3565
    %v5992 = vadd.f32 %v5950, %v3566
    %v5993 = vadd.f32 %v5955, %v3567
    %v5994 = vadd.f32 %v5958, %v3568
    %v5995 = vadd.f32 %v5963, %v3569
    %v5996 = vadd.f32 %v5966, %v3570
    %v5997 = vadd.f32 %v5971, %v3571
    %v5998 = vadd.f32 %v5974, %v3572
    %v5999 = vadd.f32 %v5979, %v3573
    %v6000 = vadd.f32 %v5982, %v3574
    %v6001 = vsel %vm328, %v5985, 0.0
    %6002 = vadd.xlane.f32.xlu0 %v6001
    %v6003 = vpop.xlane.xlu0 %6002
    %v6004 = vsel %vm328, %v5986, 0.0
    %6005 = vadd.xlane.f32.xlu0 %v6004
    %v6006 = vpop.xlane.xlu0 %6005
    %v6007 = vsel %vm328, %v5987, 0.0
    %6008 = vadd.xlane.f32.xlu0 %v6007
    %v6009 = vpop.xlane.xlu0 %6008
    %v6010 = vsel %vm328, %v5988, 0.0
    %6011 = vadd.xlane.f32.xlu0 %v6010
    %v6012 = vpop.xlane.xlu0 %6011
    %v6013 = vsel %vm328, %v5989, 0.0
    %6014 = vadd.xlane.f32.xlu0 %v6013
    %v6015 = vpop.xlane.xlu0 %6014
    %v6016 = vsel %vm328, %v5990, 0.0
    %6017 = vadd.xlane.f32.xlu0 %v6016
    %v6018 = vpop.xlane.xlu0 %6017
    %v6019 = vsel %vm328, %v5991, 0.0
    %6020 = vadd.xlane.f32.xlu0 %v6019
    %v6021 = vpop.xlane.xlu0 %6020
    %v6022 = vsel %vm328, %v5992, 0.0
    %6023 = vadd.xlane.f32.xlu0 %v6022
    %v6024 = vpop.xlane.xlu0 %6023
    %v6025 = vsel %vm328, %v5993, 0.0
    %6026 = vadd.xlane.f32.xlu0 %v6025
    %v6027 = vpop.xlane.xlu0 %6026
    %v6028 = vsel %vm328, %v5994, 0.0
    %6029 = vadd.xlane.f32.xlu0 %v6028
    %v6030 = vpop.xlane.xlu0 %6029
    %v6031 = vsel %vm328, %v5995, 0.0
    %6032 = vadd.xlane.f32.xlu0 %v6031
    %v6033 = vpop.xlane.xlu0 %6032
    %v6034 = vsel %vm328, %v5996, 0.0
    %6035 = vadd.xlane.f32.xlu0 %v6034
    %v6036 = vpop.xlane.xlu0 %6035
    %v6037 = vsel %vm328, %v5997, 0.0
    %6038 = vadd.xlane.f32.xlu0 %v6037
    %v6039 = vpop.xlane.xlu0 %6038
    %v6040 = vsel %vm328, %v5998, 0.0
    %6041 = vadd.xlane.f32.xlu0 %v6040
    %v6042 = vpop.xlane.xlu0 %6041
    %v6043 = vsel %vm328, %v5999, 0.0
    %6044 = vadd.xlane.f32.xlu0 %v6043
    %v6045 = vpop.xlane.xlu0 %6044
    %v6046 = vsel %vm328, %v6000, 0.0
    %6047 = vadd.xlane.f32.xlu0 %v6046
    %v6048 = vpop.xlane.xlu0 %6047
    %v6049 = vmul.f32 %v6003, %v2769
    %v6050 = vmul.f32 %v6006, %v2769
    %v6051 = vmul.f32 %v6009, %v2769
    %v6052 = vmul.f32 %v6012, %v2769
    %v6053 = vmul.f32 %v6015, %v2769
    %v6054 = vmul.f32 %v6018, %v2769
    %v6055 = vmul.f32 %v6021, %v2769
    %v6056 = vmul.f32 %v6024, %v2769
    %v6057 = vmul.f32 %v6027, %v2769
    %v6058 = vmul.f32 %v6030, %v2769
    %v6059 = vmul.f32 %v6033, %v2769
    %v6060 = vmul.f32 %v6036, %v2769
    %v6061 = vmul.f32 %v6039, %v2769
    %v6062 = vmul.f32 %v6042, %v2769
    %v6063 = vmul.f32 %v6045, %v2769
    %v6064 = vmul.f32 %v6048, %v2769
    %v6065 = vsub.f32 %v5985, %v6049
    %v6066 = vsub.f32 %v5986, %v6050
    %v6067 = vsub.f32 %v5987, %v6051
    %v6068 = vsub.f32 %v5988, %v6052
    %v6069 = vsub.f32 %v5989, %v6053
    %v6070 = vsub.f32 %v5990, %v6054
    %v6071 = vsub.f32 %v5991, %v6055
    %v6072 = vsub.f32 %v5992, %v6056
    %v6073 = vsub.f32 %v5993, %v6057
    %v6074 = vsub.f32 %v5994, %v6058
    %v6075 = vsub.f32 %v5995, %v6059
    %v6076 = vsub.f32 %v5996, %v6060
    %v6077 = vsub.f32 %v5997, %v6061
    %v6078 = vsub.f32 %v5998, %v6062
    %v6079 = vsub.f32 %v5999, %v6063
    %v6080 = vsub.f32 %v6000, %v6064
    %v6081 = vmul.f32 %v6065, %v6065
    %v6082 = vmul.f32 %v6066, %v6066
    %v6083 = vmul.f32 %v6067, %v6067
    %v6084 = vmul.f32 %v6068, %v6068
    %v6085 = vmul.f32 %v6069, %v6069
    %v6086 = vmul.f32 %v6070, %v6070
    %v6087 = vmul.f32 %v6071, %v6071
    %v6088 = vmul.f32 %v6072, %v6072
    %v6089 = vmul.f32 %v6073, %v6073
    %v6090 = vmul.f32 %v6074, %v6074
    %v6091 = vmul.f32 %v6075, %v6075
    %v6092 = vmul.f32 %v6076, %v6076
    %v6093 = vmul.f32 %v6077, %v6077
    %v6094 = vmul.f32 %v6078, %v6078
    %v6095 = vmul.f32 %v6079, %v6079
    %v6096 = vmul.f32 %v6080, %v6080
    %v6097 = vsel %vm328, %v6081, 0.0
    %6098 = vadd.xlane.f32.xlu0 %v6097
    %v6099 = vpop.xlane.xlu0 %6098
    %v6100 = vsel %vm328, %v6082, 0.0
    %6101 = vadd.xlane.f32.xlu0 %v6100
    %v6102 = vpop.xlane.xlu0 %6101
    %v6103 = vsel %vm328, %v6083, 0.0
    %6104 = vadd.xlane.f32.xlu0 %v6103
    %v6105 = vpop.xlane.xlu0 %6104
    %v6106 = vsel %vm328, %v6084, 0.0
    %6107 = vadd.xlane.f32.xlu0 %v6106
    %v6108 = vpop.xlane.xlu0 %6107
    %v6109 = vsel %vm328, %v6085, 0.0
    %6110 = vadd.xlane.f32.xlu0 %v6109
    %v6111 = vpop.xlane.xlu0 %6110
    %v6112 = vsel %vm328, %v6086, 0.0
    %6113 = vadd.xlane.f32.xlu0 %v6112
    %v6114 = vpop.xlane.xlu0 %6113
    %v6115 = vsel %vm328, %v6087, 0.0
    %6116 = vadd.xlane.f32.xlu0 %v6115
    %v6117 = vpop.xlane.xlu0 %6116
    %v6118 = vsel %vm328, %v6088, 0.0
    %6119 = vadd.xlane.f32.xlu0 %v6118
    %v6120 = vpop.xlane.xlu0 %6119
    %v6121 = vsel %vm328, %v6089, 0.0
    %6122 = vadd.xlane.f32.xlu0 %v6121
    %v6123 = vpop.xlane.xlu0 %6122
    %v6124 = vsel %vm328, %v6090, 0.0
    %6125 = vadd.xlane.f32.xlu0 %v6124
    %v6126 = vpop.xlane.xlu0 %6125
    %v6127 = vsel %vm328, %v6091, 0.0
    %6128 = vadd.xlane.f32.xlu0 %v6127
    %v6129 = vpop.xlane.xlu0 %6128
    %v6130 = vsel %vm328, %v6092, 0.0
    %6131 = vadd.xlane.f32.xlu0 %v6130
    %v6132 = vpop.xlane.xlu0 %6131
    %v6133 = vsel %vm328, %v6093, 0.0
    %6134 = vadd.xlane.f32.xlu0 %v6133
    %v6135 = vpop.xlane.xlu0 %6134
    %v6136 = vsel %vm328, %v6094, 0.0
    %6137 = vadd.xlane.f32.xlu0 %v6136
    %v6138 = vpop.xlane.xlu0 %6137
    %v6139 = vsel %vm328, %v6095, 0.0
    %6140 = vadd.xlane.f32.xlu0 %v6139
    %v6141 = vpop.xlane.xlu0 %6140
    %v6142 = vsel %vm328, %v6096, 0.0
    %6143 = vadd.xlane.f32.xlu0 %v6142
    %v6144 = vpop.xlane.xlu0 %6143
    %v6145 = vmul.f32 %v6099, %v2769
    %v6146 = vmul.f32 %v6102, %v2769
    %v6147 = vmul.f32 %v6105, %v2769
    %v6148 = vmul.f32 %v6108, %v2769
    %v6149 = vmul.f32 %v6111, %v2769
    %v6150 = vmul.f32 %v6114, %v2769
    %v6151 = vmul.f32 %v6117, %v2769
    %v6152 = vmul.f32 %v6120, %v2769
    %v6153 = vmul.f32 %v6123, %v2769
    %v6154 = vmul.f32 %v6126, %v2769
    %v6155 = vmul.f32 %v6129, %v2769
    %v6156 = vmul.f32 %v6132, %v2769
    %v6157 = vmul.f32 %v6135, %v2769
    %v6158 = vmul.f32 %v6138, %v2769
    %v6159 = vmul.f32 %v6141, %v2769
    %v6160 = vmul.f32 %v6144, %v2769
    %v6161 = vadd.f32 %v6145, 1e-05
    %v6162 = vadd.f32 %v6146, 1e-05
    %v6163 = vadd.f32 %v6147, 1e-05
    %v6164 = vadd.f32 %v6148, 1e-05
    %v6165 = vadd.f32 %v6149, 1e-05
    %v6166 = vadd.f32 %v6150, 1e-05
    %v6167 = vadd.f32 %v6151, 1e-05
    %v6168 = vadd.f32 %v6152, 1e-05
    %v6169 = vadd.f32 %v6153, 1e-05
    %v6170 = vadd.f32 %v6154, 1e-05
    %v6171 = vadd.f32 %v6155, 1e-05
    %v6172 = vadd.f32 %v6156, 1e-05
    %v6173 = vadd.f32 %v6157, 1e-05
    %v6174 = vadd.f32 %v6158, 1e-05
    %v6175 = vadd.f32 %v6159, 1e-05
    %v6176 = vadd.f32 %v6160, 1e-05
    %v6177 = vrsqrt.pop %v6161
    %v6178 = vrsqrt.pop %v6162
    %v6179 = vrsqrt.pop %v6163
    %v6180 = vrsqrt.pop %v6164
    %v6181 = vrsqrt.pop %v6165
    %v6182 = vrsqrt.pop %v6166
    %v6183 = vrsqrt.pop %v6167
    %v6184 = vrsqrt.pop %v6168
    %v6185 = vrsqrt.pop %v6169
    %v6186 = vrsqrt.pop %v6170
    %v6187 = vrsqrt.pop %v6171
    %v6188 = vrsqrt.pop %v6172
    %v6189 = vrsqrt.pop %v6173
    %v6190 = vrsqrt.pop %v6174
    %v6191 = vrsqrt.pop %v6175
    %v6192 = vrsqrt.pop %v6176
    %v6193 = vmul.f32 %v6065, %v6177
    %v6194 = vmul.f32 %v6066, %v6178
    %v6195 = vmul.f32 %v6067, %v6179
    %v6196 = vmul.f32 %v6068, %v6180
    %v6197 = vmul.f32 %v6069, %v6181
    %v6198 = vmul.f32 %v6070, %v6182
    %v6199 = vmul.f32 %v6071, %v6183
    %v6200 = vmul.f32 %v6072, %v6184
    %v6201 = vmul.f32 %v6073, %v6185
    %v6202 = vmul.f32 %v6074, %v6186
    %v6203 = vmul.f32 %v6075, %v6187
    %v6204 = vmul.f32 %v6076, %v6188
    %v6205 = vmul.f32 %v6077, %v6189
    %v6206 = vmul.f32 %v6078, %v6190
    %v6207 = vmul.f32 %v6079, %v6191
    %v6208 = vmul.f32 %v6080, %v6192
    %v6209 = vlaneseq
    %v6210 = vshrl.u32 %v6209, 7
    %v6211 = vsub.s32 1, %v6210
    %v6212 = vrot.slane %v3576, %v6211
    %v6213 = vmul.f32 %v6193, %v6212
    %v6214 = vmul.f32 %v6194, %v6212
    %v6215 = vmul.f32 %v6195, %v6212
    %v6216 = vmul.f32 %v6196, %v6212
    %v6217 = vmul.f32 %v6197, %v6212
    %v6218 = vmul.f32 %v6198, %v6212
    %v6219 = vmul.f32 %v6199, %v6212
    %v6220 = vmul.f32 %v6200, %v6212
    %v6221 = vmul.f32 %v6201, %v6212
    %v6222 = vmul.f32 %v6202, %v6212
    %v6223 = vmul.f32 %v6203, %v6212
    %v6224 = vmul.f32 %v6204, %v6212
    %v6225 = vmul.f32 %v6205, %v6212
    %v6226 = vmul.f32 %v6206, %v6212
    %v6227 = vmul.f32 %v6207, %v6212
    %v6228 = vmul.f32 %v6208, %v6212
    %v6229 = vlaneseq
    %v6230 = vshrl.u32 %v6229, 7
    %v6231 = vsub.s32 2, %v6230
    %v6232 = vrot.slane %v3576, %v6231
    %v6233 = vadd.f32 %v6213, %v6232
    %v6234 = vadd.f32 %v6214, %v6232
    %v6235 = vadd.f32 %v6215, %v6232
    %v6236 = vadd.f32 %v6216, %v6232
    %v6237 = vadd.f32 %v6217, %v6232
    %v6238 = vadd.f32 %v6218, %v6232
    %v6239 = vadd.f32 %v6219, %v6232
    %v6240 = vadd.f32 %v6220, %v6232
    %v6241 = vadd.f32 %v6221, %v6232
    %v6242 = vadd.f32 %v6222, %v6232
    %v6243 = vadd.f32 %v6223, %v6232
    %v6244 = vadd.f32 %v6224, %v6232
    %v6245 = vadd.f32 %v6225, %v6232
    %v6246 = vadd.f32 %v6226, %v6232
    %v6247 = vadd.f32 %v6227, %v6232
    %v6248 = vadd.f32 %v6228, %v6232
    %v6249 = vpack.c.bf16 %v6234, %v6233
    %v6250 = vpack.c.bf16 %v6236, %v6235
    %v6251 = vpack.c.bf16 %v6238, %v6237
    %v6252 = vpack.c.bf16 %v6240, %v6239
    %v6253 = vpack.c.bf16 %v6242, %v6241
    %v6254 = vpack.c.bf16 %v6244, %v6243
    %v6255 = vpack.c.bf16 %v6246, %v6245
    %v6256 = vpack.c.bf16 %v6248, %v6247
    %s6257 = scalar_lea.vmem %s6, 16
    %v6258 = vld [vmem:[%s6257] sm:$0xf]
    %v6259 = vld [vmem:[%s6257 + $0x4] sm:$0xf]
    %v6260 = vld [vmem:[%s6257 + $0x8] sm:$0xf]
    %v6261 = vld [vmem:[%s6257 + $0xc] sm:$0xf]
    %s6262 = scalar_lea.vmem %s7, 1
    %v6263 = vld [vmem:[%s6262] sm:$0x1]
    %v6265 = vlaneseq
    %v6266 = vshrl.u32 %v6265, 7
    %v6267 = vsub.s32 0, %v6266
    %v6268 = vrot.slane %v6263, %v6267
    %v6274 = vunpack.c.l.b16 %v6258
    %v6275 = vunpack.c.l.b16 %v6259
    %v6276 = vunpack.c.l.b16 %v6260
    %v6277 = vunpack.c.l.b16 %v6261
    %v6278 = vpack.c.b16 %v6275, %v6274
    %v6279 = vpack.c.b16 %v6277, %v6276
    %v6283 = vsel %vm328, %v6249, 0
    %v6286 = vsel %vm328, %v6250, 0
    %v6289 = vsel %vm328, %v6251, 0
    %v6292 = vsel %vm328, %v6252, 0
    %v6295 = vsel %vm328, %v6253, 0
    %v6298 = vsel %vm328, %v6254, 0
    %v6301 = vsel %vm328, %v6255, 0
    %v6304 = vsel %vm328, %v6256, 0
    %6306 = vmatprep.subr.bf16.mxu0 0
    %6307 = vmatpush1.bf16.msra.mxu0 %v6278
    %6308 = vmatprep.subr.bf16.mxu0 0
    %6309 = vmatpush1.bf16.msra.mxu0 %v6279
    %6310 = vmatprep.subr.bf16.mxu0 0
    %6311 = vmatpush1.bf16.msra.mxu0 0
    %6312 = vmatprep.subr.bf16.mxu0 0
    %6313 = vmatpush1.bf16.msra.mxu0 0
    %6314 = vmatprep.subr.bf16.mxu0 0
    %6315 = vmatpush1.bf16.msra.mxu0 0
    %6316 = vmatprep.subr.bf16.mxu0 0
    %6317 = vmatpush1.bf16.msra.mxu0 0
    %6318 = vmatprep.subr.bf16.mxu0 0
    %6319 = vmatpush1.bf16.msra.mxu0 0
    %6320 = vmatprep.subr.bf16.mxu0 0
    %6321 = vmatpush1.bf16.msra.mxu0 0
    %6322 = vmatprep.subr.bf16.mxu0 0
    %6323 = vmatpush1.bf16.msra.mxu0 0
    %6324 = vmatprep.subr.bf16.mxu0 0
    %6325 = vmatpush1.bf16.msra.mxu0 0
    %6326 = vmatprep.subr.bf16.mxu0 0
    %6327 = vmatpush1.bf16.msra.mxu0 0
    %6328 = vmatprep.subr.bf16.mxu0 0
    %6329 = vmatpush1.bf16.msra.mxu0 0
    %6330 = vmatprep.subr.bf16.mxu0 0
    %6331 = vmatpush1.bf16.msra.mxu0 0
    %6332 = vmatprep.subr.bf16.mxu0 0
    %6333 = vmatpush1.bf16.msra.mxu0 0
    %6334 = vmatprep.subr.bf16.mxu0 0
    %6335 = vmatpush1.bf16.msra.mxu0 0
    %6336 = vmatprep.subr.bf16.mxu0 0
    %6337 = vmatpush1.bf16.msra.mxu0 0
    %6338 = vmatprep.mubr.bf16.mxu0 0
    %6339 = vmatmul.mubr.bf16.gmra.mrb[0].mxu0 %v6283
    %v6340 = vpop.f32.mrb[0].mxu0
    %v6341 = vadd.f32 %v6268, %v6340
    %v6342 = vpop.f32.mrb[0].mxu0
    %v6343 = vpop.f32.mrb[0].mxu0
    %v6344 = vadd.f32 %v6268, %v6343
    %v6345 = vpop.f32.mrb[0].mxu0
    %6346 = vmatprep.mubr.bf16.mxu0 0
    %6347 = vmatmul.mubr.bf16.gmra.mrb[0].mxu0 %v6286
    %v6348 = vpop.f32.mrb[0].mxu0
    %v6349 = vadd.f32 %v6268, %v6348
    %v6350 = vpop.f32.mrb[0].mxu0
    %v6351 = vpop.f32.mrb[0].mxu0
    %v6352 = vadd.f32 %v6268, %v6351
    %v6353 = vpop.f32.mrb[0].mxu0
    %6354 = vmatprep.mubr.bf16.mxu0 0
    %6355 = vmatmul.mubr.bf16.gmra.mrb[0].mxu0 %v6289
    %v6356 = vpop.f32.mrb[0].mxu0
    %v6357 = vadd.f32 %v6268, %v6356
    %v6358 = vpop.f32.mrb[0].mxu0
    %v6359 = vpop.f32.mrb[0].mxu0
    %v6360 = vadd.f32 %v6268, %v6359
    %v6361 = vpop.f32.mrb[0].mxu0
    %6362 = vmatprep.mubr.bf16.mxu0 0
    %6363 = vmatmul.mubr.bf16.gmra.mrb[0].mxu0 %v6292
    %v6364 = vpop.f32.mrb[0].mxu0
    %v6365 = vadd.f32 %v6268, %v6364
    %v6366 = vpop.f32.mrb[0].mxu0
    %v6367 = vpop.f32.mrb[0].mxu0
    %v6368 = vadd.f32 %v6268, %v6367
    %v6369 = vpop.f32.mrb[0].mxu0
    %6370 = vmatprep.mubr.bf16.mxu0 0
    %6371 = vmatmul.mubr.bf16.gmra.mrb[0].mxu0 %v6295
    %v6372 = vpop.f32.mrb[0].mxu0
    %v6373 = vadd.f32 %v6268, %v6372
    %v6374 = vpop.f32.mrb[0].mxu0
    %v6375 = vpop.f32.mrb[0].mxu0
    %v6376 = vadd.f32 %v6268, %v6375
    %v6377 = vpop.f32.mrb[0].mxu0
    %6378 = vmatprep.mubr.bf16.mxu0 0
    %6379 = vmatmul.mubr.bf16.gmra.mrb[0].mxu0 %v6298
    %v6380 = vpop.f32.mrb[0].mxu0
    %v6381 = vadd.f32 %v6268, %v6380
    %v6382 = vpop.f32.mrb[0].mxu0
    %v6383 = vpop.f32.mrb[0].mxu0
    %v6384 = vadd.f32 %v6268, %v6383
    %v6385 = vpop.f32.mrb[0].mxu0
    %6386 = vmatprep.mubr.bf16.mxu0 0
    %6387 = vmatmul.mubr.bf16.gmra.mrb[0].mxu0 %v6301
    %v6388 = vpop.f32.mrb[0].mxu0
    %v6389 = vadd.f32 %v6268, %v6388
    %v6390 = vpop.f32.mrb[0].mxu0
    %v6391 = vpop.f32.mrb[0].mxu0
    %v6392 = vadd.f32 %v6268, %v6391
    %v6393 = vpop.f32.mrb[0].mxu0
    %6394 = vmatprep.mubr.bf16.mxu0 0
    %6395 = vmatmul.mubr.bf16.gmra.mrb[0].mxu0 %v6304
    %v6396 = vpop.f32.mrb[0].mxu0
    %v6397 = vadd.f32 %v6268, %v6396
    %v6398 = vpop.f32.mrb[0].mxu0
    %v6399 = vpop.f32.mrb[0].mxu0
    %v6400 = vadd.f32 %v6268, %v6399
    %v6401 = vpop.f32.mrb[0].mxu0
    %6402 = vdwg.mxu0
    %v6403 = vmax.f32 %v6341, 0.0
    %v6404 = vmax.f32 %v6344, 0.0
    %v6405 = vmax.f32 %v6349, 0.0
    %v6406 = vmax.f32 %v6352, 0.0
    %v6407 = vmax.f32 %v6357, 0.0
    %v6408 = vmax.f32 %v6360, 0.0
    %v6409 = vmax.f32 %v6365, 0.0
    %v6410 = vmax.f32 %v6368, 0.0
    %v6411 = vmax.f32 %v6373, 0.0
    %v6412 = vmax.f32 %v6376, 0.0
    %v6413 = vmax.f32 %v6381, 0.0
    %v6414 = vmax.f32 %v6384, 0.0
    %v6415 = vmax.f32 %v6389, 0.0
    %v6416 = vmax.f32 %v6392, 0.0
    %v6417 = vmax.f32 %v6397, 0.0
    %v6418 = vmax.f32 %v6400, 0.0
    %v6419 = vpack.c.bf16 %v6404, %v6403
    %v6420 = vpack.c.bf16 %v6406, %v6405
    %v6421 = vpack.c.bf16 %v6408, %v6407
    %v6422 = vpack.c.bf16 %v6410, %v6409
    %v6423 = vpack.c.bf16 %v6412, %v6411
    %v6424 = vpack.c.bf16 %v6414, %v6413
    %v6425 = vpack.c.bf16 %v6416, %v6415
    %v6426 = vpack.c.bf16 %v6418, %v6417
    %s6427 = scalar_lea.vmem %s8, 64
    %v6428 = vld [vmem:[%s6427] sm:$0xf]
    %v6429 = vld [vmem:[%s6427 + $0x4] sm:$0xf]
    %v6430 = vld [vmem:[%s6427 + $0x8] sm:$0xf]
    %v6431 = vld [vmem:[%s6427 + $0xc] sm:$0xf]
    %v6432 = vld [vmem:[%s6427 + $0x10] sm:$0xf]
    %v6433 = vld [vmem:[%s6427 + $0x14] sm:$0xf]
    %v6434 = vld [vmem:[%s6427 + $0x18] sm:$0xf]
    %v6435 = vld [vmem:[%s6427 + $0x1c] sm:$0xf]
    %v6436 = vld [vmem:[%s6427 + $0x20] sm:$0xf]
    %v6437 = vld [vmem:[%s6427 + $0x24] sm:$0xf]
    %v6438 = vld [vmem:[%s6427 + $0x28] sm:$0xf]
    %v6439 = vld [vmem:[%s6427 + $0x2c] sm:$0xf]
    %v6440 = vld [vmem:[%s6427 + $0x30] sm:$0xf]
    %v6441 = vld [vmem:[%s6427 + $0x34] sm:$0xf]
    %v6442 = vld [vmem:[%s6427 + $0x38] sm:$0xf]
    %v6443 = vld [vmem:[%s6427 + $0x3c] sm:$0xf]
    %v6444 = vlaneseq
    %v6445 = vshrl.u32 %v6444, 7
    %v6446 = vsub.s32 5, %v6445
    %v6447 = vrot.slane %v3576, %v6446
    %v6464 = vunpack.c.l.b16 %v6428
    %v6465 = vunpack.c.l.b16 %v6429
    %v6466 = vunpack.c.l.b16 %v6430
    %v6467 = vunpack.c.l.b16 %v6431
    %v6468 = vunpack.c.l.b16 %v6432
    %v6469 = vunpack.c.l.b16 %v6433
    %v6470 = vunpack.c.l.b16 %v6434
    %v6471 = vunpack.c.l.b16 %v6435
    %v6472 = vunpack.c.l.b16 %v6436
    %v6473 = vunpack.c.l.b16 %v6437
    %v6474 = vunpack.c.l.b16 %v6438
    %v6475 = vunpack.c.l.b16 %v6439
    %v6476 = vunpack.c.l.b16 %v6440
    %v6477 = vunpack.c.l.b16 %v6441
    %v6478 = vunpack.c.l.b16 %v6442
    %v6479 = vunpack.c.l.b16 %v6443
    %v6480 = vpack.c.b16 %v6465, %v6464
    %v6481 = vpack.c.b16 %v6467, %v6466
    %v6482 = vpack.c.b16 %v6469, %v6468
    %v6483 = vpack.c.b16 %v6471, %v6470
    %v6484 = vpack.c.b16 %v6473, %v6472
    %v6485 = vpack.c.b16 %v6475, %v6474
    %v6486 = vpack.c.b16 %v6477, %v6476
    %v6487 = vpack.c.b16 %v6479, %v6478
    %6496 = vmatprep.subr.bf16.mxu0 0
    %6497 = vmatpush1.bf16.msra.mxu0 %v6480
    %6498 = vmatprep.subr.bf16.mxu0 0
    %6499 = vmatpush1.bf16.msra.mxu0 %v6481
    %6500 = vmatprep.subr.bf16.mxu0 0
    %6501 = vmatpush1.bf16.msra.mxu0 %v6482
    %6502 = vmatprep.subr.bf16.mxu0 0
    %6503 = vmatpush1.bf16.msra.mxu0 %v6483
    %6504 = vmatprep.subr.bf16.mxu0 0
    %6505 = vmatpush1.bf16.msra.mxu0 %v6484
    %6506 = vmatprep.subr.bf16.mxu0 0
    %6507 = vmatpush1.bf16.msra.mxu0 %v6485
    %6508 = vmatprep.subr.bf16.mxu0 0
    %6509 = vmatpush1.bf16.msra.mxu0 %v6486
    %6510 = vmatprep.subr.bf16.mxu0 0
    %6511 = vmatpush1.bf16.msra.mxu0 %v6487
    %6512 = vmatprep.subr.bf16.mxu0 0
    %6513 = vmatpush1.bf16.msra.mxu0 0
    %6514 = vmatprep.subr.bf16.mxu0 0
    %6515 = vmatpush1.bf16.msra.mxu0 0
    %6516 = vmatprep.subr.bf16.mxu0 0
    %6517 = vmatpush1.bf16.msra.mxu0 0
    %6518 = vmatprep.subr.bf16.mxu0 0
    %6519 = vmatpush1.bf16.msra.mxu0 0
    %6520 = vmatprep.subr.bf16.mxu0 0
    %6521 = vmatpush1.bf16.msra.mxu0 0
    %6522 = vmatprep.subr.bf16.mxu0 0
    %6523 = vmatpush1.bf16.msra.mxu0 0
    %6524 = vmatprep.subr.bf16.mxu0 0
    %6525 = vmatpush1.bf16.msra.mxu0 0
    %6526 = vmatprep.subr.bf16.mxu0 0
    %6527 = vmatpush1.bf16.msra.mxu0 0
    %6528 = vmatprep.mubr.bf16.mxu0 0
    %6529 = vmatmul.mubr.bf16.gmra.mrb[0].mxu0 %v6419
    %v6530 = vpop.f32.mrb[0].mxu0
    %v6531 = vadd.f32 %v6447, %v6530
    %v6532 = vpop.f32.mrb[0].mxu0
    %v6533 = vpop.f32.mrb[0].mxu0
    %v6534 = vadd.f32 %v6447, %v6533
    %v6535 = vpop.f32.mrb[0].mxu0
    %6536 = vmatprep.mubr.bf16.mxu0 0
    %6537 = vmatmul.mubr.bf16.gmra.mrb[0].mxu0 %v6420
    %v6538 = vpop.f32.mrb[0].mxu0
    %v6539 = vadd.f32 %v6447, %v6538
    %v6540 = vpop.f32.mrb[0].mxu0
    %v6541 = vpop.f32.mrb[0].mxu0
    %v6542 = vadd.f32 %v6447, %v6541
    %v6543 = vpop.f32.mrb[0].mxu0
    %6544 = vmatprep.mubr.bf16.mxu0 0
    %6545 = vmatmul.mubr.bf16.gmra.mrb[0].mxu0 %v6421
    %v6546 = vpop.f32.mrb[0].mxu0
    %v6547 = vadd.f32 %v6447, %v6546
    %v6548 = vpop.f32.mrb[0].mxu0
    %v6549 = vpop.f32.mrb[0].mxu0
    %v6550 = vadd.f32 %v6447, %v6549
    %v6551 = vpop.f32.mrb[0].mxu0
    %6552 = vmatprep.mubr.bf16.mxu0 0
    %6553 = vmatmul.mubr.bf16.gmra.mrb[0].mxu0 %v6422
    %v6554 = vpop.f32.mrb[0].mxu0
    %v6555 = vadd.f32 %v6447, %v6554
    %v6556 = vpop.f32.mrb[0].mxu0
    %v6557 = vpop.f32.mrb[0].mxu0
    %v6558 = vadd.f32 %v6447, %v6557
    %v6559 = vpop.f32.mrb[0].mxu0
    %6560 = vmatprep.mubr.bf16.mxu0 0
    %6561 = vmatmul.mubr.bf16.gmra.mrb[0].mxu0 %v6423
    %v6562 = vpop.f32.mrb[0].mxu0
    %v6563 = vadd.f32 %v6447, %v6562
    %v6564 = vpop.f32.mrb[0].mxu0
    %v6565 = vpop.f32.mrb[0].mxu0
    %v6566 = vadd.f32 %v6447, %v6565
    %v6567 = vpop.f32.mrb[0].mxu0
    %6568 = vmatprep.mubr.bf16.mxu0 0
    %6569 = vmatmul.mubr.bf16.gmra.mrb[0].mxu0 %v6424
    %v6570 = vpop.f32.mrb[0].mxu0
    %v6571 = vadd.f32 %v6447, %v6570
    %v6572 = vpop.f32.mrb[0].mxu0
    %v6573 = vpop.f32.mrb[0].mxu0
    %v6574 = vadd.f32 %v6447, %v6573
    %v6575 = vpop.f32.mrb[0].mxu0
    %6576 = vmatprep.mubr.bf16.mxu0 0
    %6577 = vmatmul.mubr.bf16.gmra.mrb[0].mxu0 %v6425
    %v6578 = vpop.f32.mrb[0].mxu0
    %v6579 = vadd.f32 %v6447, %v6578
    %v6580 = vpop.f32.mrb[0].mxu0
    %v6581 = vpop.f32.mrb[0].mxu0
    %v6582 = vadd.f32 %v6447, %v6581
    %v6583 = vpop.f32.mrb[0].mxu0
    %6584 = vmatprep.mubr.bf16.mxu0 0
    %6585 = vmatmul.mubr.bf16.gmra.mrb[0].mxu0 %v6426
    %v6586 = vpop.f32.mrb[0].mxu0
    %v6587 = vadd.f32 %v6447, %v6586
    %v6588 = vpop.f32.mrb[0].mxu0
    %v6589 = vpop.f32.mrb[0].mxu0
    %v6590 = vadd.f32 %v6447, %v6589
    %v6591 = vpop.f32.mrb[0].mxu0
    %6592 = vdwg.mxu0
    %v6593 = vadd.f32 %v6531, %v6233
    %v6594 = vadd.f32 %v6534, %v6234
    %v6595 = vadd.f32 %v6539, %v6235
    %v6596 = vadd.f32 %v6542, %v6236
    %v6597 = vadd.f32 %v6547, %v6237
    %v6598 = vadd.f32 %v6550, %v6238
    %v6599 = vadd.f32 %v6555, %v6239
    %v6600 = vadd.f32 %v6558, %v6240
    %v6601 = vadd.f32 %v6563, %v6241
    %v6602 = vadd.f32 %v6566, %v6242
    %v6603 = vadd.f32 %v6571, %v6243
    %v6604 = vadd.f32 %v6574, %v6244
    %v6605 = vadd.f32 %v6579, %v6245
    %v6606 = vadd.f32 %v6582, %v6246
    %v6607 = vadd.f32 %v6587, %v6247
    %v6608 = vadd.f32 %v6590, %v6248
    %v6609 = vsel %vm328, %v6593, 0.0
    %6610 = vadd.xlane.f32.xlu0 %v6609
    %v6611 = vpop.xlane.xlu0 %6610
    %v6612 = vsel %vm328, %v6594, 0.0
    %6613 = vadd.xlane.f32.xlu0 %v6612
    %v6614 = vpop.xlane.xlu0 %6613
    %v6615 = vsel %vm328, %v6595, 0.0
    %6616 = vadd.xlane.f32.xlu0 %v6615
    %v6617 = vpop.xlane.xlu0 %6616
    %v6618 = vsel %vm328, %v6596, 0.0
    %6619 = vadd.xlane.f32.xlu0 %v6618
    %v6620 = vpop.xlane.xlu0 %6619
    %v6621 = vsel %vm328, %v6597, 0.0
    %6622 = vadd.xlane.f32.xlu0 %v6621
    %v6623 = vpop.xlane.xlu0 %6622
    %v6624 = vsel %vm328, %v6598, 0.0
    %6625 = vadd.xlane.f32.xlu0 %v6624
    %v6626 = vpop.xlane.xlu0 %6625
    %v6627 = vsel %vm328, %v6599, 0.0
    %6628 = vadd.xlane.f32.xlu0 %v6627
    %v6629 = vpop.xlane.xlu0 %6628
    %v6630 = vsel %vm328, %v6600, 0.0
    %6631 = vadd.xlane.f32.xlu0 %v6630
    %v6632 = vpop.xlane.xlu0 %6631
    %v6633 = vsel %vm328, %v6601, 0.0
    %6634 = vadd.xlane.f32.xlu0 %v6633
    %v6635 = vpop.xlane.xlu0 %6634
    %v6636 = vsel %vm328, %v6602, 0.0
    %6637 = vadd.xlane.f32.xlu0 %v6636
    %v6638 = vpop.xlane.xlu0 %6637
    %v6639 = vsel %vm328, %v6603, 0.0
    %6640 = vadd.xlane.f32.xlu0 %v6639
    %v6641 = vpop.xlane.xlu0 %6640
    %v6642 = vsel %vm328, %v6604, 0.0
    %6643 = vadd.xlane.f32.xlu0 %v6642
    %v6644 = vpop.xlane.xlu0 %6643
    %v6645 = vsel %vm328, %v6605, 0.0
    %6646 = vadd.xlane.f32.xlu0 %v6645
    %v6647 = vpop.xlane.xlu0 %6646
    %v6648 = vsel %vm328, %v6606, 0.0
    %6649 = vadd.xlane.f32.xlu0 %v6648
    %v6650 = vpop.xlane.xlu0 %6649
    %v6651 = vsel %vm328, %v6607, 0.0
    %6652 = vadd.xlane.f32.xlu0 %v6651
    %v6653 = vpop.xlane.xlu0 %6652
    %v6654 = vsel %vm328, %v6608, 0.0
    %6655 = vadd.xlane.f32.xlu0 %v6654
    %v6656 = vpop.xlane.xlu0 %6655
    %v6657 = vmul.f32 %v6611, %v2769
    %v6658 = vmul.f32 %v6614, %v2769
    %v6659 = vmul.f32 %v6617, %v2769
    %v6660 = vmul.f32 %v6620, %v2769
    %v6661 = vmul.f32 %v6623, %v2769
    %v6662 = vmul.f32 %v6626, %v2769
    %v6663 = vmul.f32 %v6629, %v2769
    %v6664 = vmul.f32 %v6632, %v2769
    %v6665 = vmul.f32 %v6635, %v2769
    %v6666 = vmul.f32 %v6638, %v2769
    %v6667 = vmul.f32 %v6641, %v2769
    %v6668 = vmul.f32 %v6644, %v2769
    %v6669 = vmul.f32 %v6647, %v2769
    %v6670 = vmul.f32 %v6650, %v2769
    %v6671 = vmul.f32 %v6653, %v2769
    %v6672 = vmul.f32 %v6656, %v2769
    %v6673 = vsub.f32 %v6593, %v6657
    %v6674 = vsub.f32 %v6594, %v6658
    %v6675 = vsub.f32 %v6595, %v6659
    %v6676 = vsub.f32 %v6596, %v6660
    %v6677 = vsub.f32 %v6597, %v6661
    %v6678 = vsub.f32 %v6598, %v6662
    %v6679 = vsub.f32 %v6599, %v6663
    %v6680 = vsub.f32 %v6600, %v6664
    %v6681 = vsub.f32 %v6601, %v6665
    %v6682 = vsub.f32 %v6602, %v6666
    %v6683 = vsub.f32 %v6603, %v6667
    %v6684 = vsub.f32 %v6604, %v6668
    %v6685 = vsub.f32 %v6605, %v6669
    %v6686 = vsub.f32 %v6606, %v6670
    %v6687 = vsub.f32 %v6607, %v6671
    %v6688 = vsub.f32 %v6608, %v6672
    %v6689 = vmul.f32 %v6673, %v6673
    %v6690 = vmul.f32 %v6674, %v6674
    %v6691 = vmul.f32 %v6675, %v6675
    %v6692 = vmul.f32 %v6676, %v6676
    %v6693 = vmul.f32 %v6677, %v6677
    %v6694 = vmul.f32 %v6678, %v6678
    %v6695 = vmul.f32 %v6679, %v6679
    %v6696 = vmul.f32 %v6680, %v6680
    %v6697 = vmul.f32 %v6681, %v6681
    %v6698 = vmul.f32 %v6682, %v6682
    %v6699 = vmul.f32 %v6683, %v6683
    %v6700 = vmul.f32 %v6684, %v6684
    %v6701 = vmul.f32 %v6685, %v6685
    %v6702 = vmul.f32 %v6686, %v6686
    %v6703 = vmul.f32 %v6687, %v6687
    %v6704 = vmul.f32 %v6688, %v6688
    %v6705 = vsel %vm328, %v6689, 0.0
    %6706 = vadd.xlane.f32.xlu0 %v6705
    %v6707 = vpop.xlane.xlu0 %6706
    %v6708 = vsel %vm328, %v6690, 0.0
    %6709 = vadd.xlane.f32.xlu0 %v6708
    %v6710 = vpop.xlane.xlu0 %6709
    %v6711 = vsel %vm328, %v6691, 0.0
    %6712 = vadd.xlane.f32.xlu0 %v6711
    %v6713 = vpop.xlane.xlu0 %6712
    %v6714 = vsel %vm328, %v6692, 0.0
    %6715 = vadd.xlane.f32.xlu0 %v6714
    %v6716 = vpop.xlane.xlu0 %6715
    %v6717 = vsel %vm328, %v6693, 0.0
    %6718 = vadd.xlane.f32.xlu0 %v6717
    %v6719 = vpop.xlane.xlu0 %6718
    %v6720 = vsel %vm328, %v6694, 0.0
    %6721 = vadd.xlane.f32.xlu0 %v6720
    %v6722 = vpop.xlane.xlu0 %6721
    %v6723 = vsel %vm328, %v6695, 0.0
    %6724 = vadd.xlane.f32.xlu0 %v6723
    %v6725 = vpop.xlane.xlu0 %6724
    %v6726 = vsel %vm328, %v6696, 0.0
    %6727 = vadd.xlane.f32.xlu0 %v6726
    %v6728 = vpop.xlane.xlu0 %6727
    %v6729 = vsel %vm328, %v6697, 0.0
    %6730 = vadd.xlane.f32.xlu0 %v6729
    %v6731 = vpop.xlane.xlu0 %6730
    %v6732 = vsel %vm328, %v6698, 0.0
    %6733 = vadd.xlane.f32.xlu0 %v6732
    %v6734 = vpop.xlane.xlu0 %6733
    %v6735 = vsel %vm328, %v6699, 0.0
    %6736 = vadd.xlane.f32.xlu0 %v6735
    %v6737 = vpop.xlane.xlu0 %6736
    %v6738 = vsel %vm328, %v6700, 0.0
    %6739 = vadd.xlane.f32.xlu0 %v6738
    %v6740 = vpop.xlane.xlu0 %6739
    %v6741 = vsel %vm328, %v6701, 0.0
    %6742 = vadd.xlane.f32.xlu0 %v6741
    %v6743 = vpop.xlane.xlu0 %6742
    %v6744 = vsel %vm328, %v6702, 0.0
    %6745 = vadd.xlane.f32.xlu0 %v6744
    %v6746 = vpop.xlane.xlu0 %6745
    %v6747 = vsel %vm328, %v6703, 0.0
    %6748 = vadd.xlane.f32.xlu0 %v6747
    %v6749 = vpop.xlane.xlu0 %6748
    %v6750 = vsel %vm328, %v6704, 0.0
    %6751 = vadd.xlane.f32.xlu0 %v6750
    %v6752 = vpop.xlane.xlu0 %6751
    %v6753 = vmul.f32 %v6707, %v2769
    %v6754 = vmul.f32 %v6710, %v2769
    %v6755 = vmul.f32 %v6713, %v2769
    %v6756 = vmul.f32 %v6716, %v2769
    %v6757 = vmul.f32 %v6719, %v2769
    %v6758 = vmul.f32 %v6722, %v2769
    %v6759 = vmul.f32 %v6725, %v2769
    %v6760 = vmul.f32 %v6728, %v2769
    %v6761 = vmul.f32 %v6731, %v2769
    %v6762 = vmul.f32 %v6734, %v2769
    %v6763 = vmul.f32 %v6737, %v2769
    %v6764 = vmul.f32 %v6740, %v2769
    %v6765 = vmul.f32 %v6743, %v2769
    %v6766 = vmul.f32 %v6746, %v2769
    %v6767 = vmul.f32 %v6749, %v2769
    %v6768 = vmul.f32 %v6752, %v2769
    %v6769 = vadd.f32 %v6753, 1e-05
    %v6770 = vadd.f32 %v6754, 1e-05
    %v6771 = vadd.f32 %v6755, 1e-05
    %v6772 = vadd.f32 %v6756, 1e-05
    %v6773 = vadd.f32 %v6757, 1e-05
    %v6774 = vadd.f32 %v6758, 1e-05
    %v6775 = vadd.f32 %v6759, 1e-05
    %v6776 = vadd.f32 %v6760, 1e-05
    %v6777 = vadd.f32 %v6761, 1e-05
    %v6778 = vadd.f32 %v6762, 1e-05
    %v6779 = vadd.f32 %v6763, 1e-05
    %v6780 = vadd.f32 %v6764, 1e-05
    %v6781 = vadd.f32 %v6765, 1e-05
    %v6782 = vadd.f32 %v6766, 1e-05
    %v6783 = vadd.f32 %v6767, 1e-05
    %v6784 = vadd.f32 %v6768, 1e-05
    %v6785 = vrsqrt.pop %v6769
    %v6786 = vrsqrt.pop %v6770
    %v6787 = vrsqrt.pop %v6771
    %v6788 = vrsqrt.pop %v6772
    %v6789 = vrsqrt.pop %v6773
    %v6790 = vrsqrt.pop %v6774
    %v6791 = vrsqrt.pop %v6775
    %v6792 = vrsqrt.pop %v6776
    %v6793 = vrsqrt.pop %v6777
    %v6794 = vrsqrt.pop %v6778
    %v6795 = vrsqrt.pop %v6779
    %v6796 = vrsqrt.pop %v6780
    %v6797 = vrsqrt.pop %v6781
    %v6798 = vrsqrt.pop %v6782
    %v6799 = vrsqrt.pop %v6783
    %v6800 = vrsqrt.pop %v6784
    %v6801 = vmul.f32 %v6673, %v6785
    %v6802 = vmul.f32 %v6674, %v6786
    %v6803 = vmul.f32 %v6675, %v6787
    %v6804 = vmul.f32 %v6676, %v6788
    %v6805 = vmul.f32 %v6677, %v6789
    %v6806 = vmul.f32 %v6678, %v6790
    %v6807 = vmul.f32 %v6679, %v6791
    %v6808 = vmul.f32 %v6680, %v6792
    %v6809 = vmul.f32 %v6681, %v6793
    %v6810 = vmul.f32 %v6682, %v6794
    %v6811 = vmul.f32 %v6683, %v6795
    %v6812 = vmul.f32 %v6684, %v6796
    %v6813 = vmul.f32 %v6685, %v6797
    %v6814 = vmul.f32 %v6686, %v6798
    %v6815 = vmul.f32 %v6687, %v6799
    %v6816 = vmul.f32 %v6688, %v6800
    %v6817 = vlaneseq
    %v6818 = vshrl.u32 %v6817, 7
    %v6819 = vsub.s32 3, %v6818
    %v6820 = vrot.slane %v3576, %v6819
    %v6821 = vmul.f32 %v6801, %v6820
    %v6822 = vmul.f32 %v6802, %v6820
    %v6823 = vmul.f32 %v6803, %v6820
    %v6824 = vmul.f32 %v6804, %v6820
    %v6825 = vmul.f32 %v6805, %v6820
    %v6826 = vmul.f32 %v6806, %v6820
    %v6827 = vmul.f32 %v6807, %v6820
    %v6828 = vmul.f32 %v6808, %v6820
    %v6829 = vmul.f32 %v6809, %v6820
    %v6830 = vmul.f32 %v6810, %v6820
    %v6831 = vmul.f32 %v6811, %v6820
    %v6832 = vmul.f32 %v6812, %v6820
    %v6833 = vmul.f32 %v6813, %v6820
    %v6834 = vmul.f32 %v6814, %v6820
    %v6835 = vmul.f32 %v6815, %v6820
    %v6836 = vmul.f32 %v6816, %v6820
    %v6837 = vlaneseq
    %v6838 = vshrl.u32 %v6837, 7
    %v6839 = vsub.s32 4, %v6838
    %v6840 = vrot.slane %v3576, %v6839
    %v6841 = vadd.f32 %v6821, %v6840
    %v6842 = vadd.f32 %v6822, %v6840
    %v6843 = vadd.f32 %v6823, %v6840
    %v6844 = vadd.f32 %v6824, %v6840
    %v6845 = vadd.f32 %v6825, %v6840
    %v6846 = vadd.f32 %v6826, %v6840
    %v6847 = vadd.f32 %v6827, %v6840
    %v6848 = vadd.f32 %v6828, %v6840
    %v6849 = vadd.f32 %v6829, %v6840
    %v6850 = vadd.f32 %v6830, %v6840
    %v6851 = vadd.f32 %v6831, %v6840
    %v6852 = vadd.f32 %v6832, %v6840
    %v6853 = vadd.f32 %v6833, %v6840
    %v6854 = vadd.f32 %v6834, %v6840
    %v6855 = vadd.f32 %v6835, %v6840
    %v6856 = vadd.f32 %v6836, %v6840
    %v6857 = vpack.c.bf16 %v6842, %v6841
    %v6858 = vpack.c.bf16 %v6844, %v6843
    %v6859 = vpack.c.bf16 %v6846, %v6845
    %v6860 = vpack.c.bf16 %v6848, %v6847
    %v6861 = vpack.c.bf16 %v6850, %v6849
    %v6862 = vpack.c.bf16 %v6852, %v6851
    %v6863 = vpack.c.bf16 %v6854, %v6853
    %v6864 = vpack.c.bf16 %v6856, %v6855
    %v6865 = vld [vmem:[%s10] sm:$0xf]
    %v6866 = vld [vmem:[%s10 + $0x4] sm:$0xf]
    %v6867 = vld [vmem:[%s10 + $0x8] sm:$0xf]
    %v6868 = vld [vmem:[%s10 + $0xc] sm:$0xf]
    %v6869 = vld [vmem:[%s11] sm:$0x1]
    %v6871 = vlaneseq
    %v6872 = vshrl.u32 %v6871, 7
    %v6873 = vsub.s32 0, %v6872
    %v6874 = vrot.slane %v6869, %v6873
    %v6880 = vunpack.c.l.b16 %v6865
    %v6881 = vunpack.c.l.b16 %v6866
    %v6882 = vunpack.c.l.b16 %v6867
    %v6883 = vunpack.c.l.b16 %v6868
    %v6884 = vpack.c.b16 %v6881, %v6880
    %v6885 = vpack.c.b16 %v6883, %v6882
    %v6889 = vsel %vm328, %v6857, 0
    %v6892 = vsel %vm328, %v6858, 0
    %v6895 = vsel %vm328, %v6859, 0
    %v6898 = vsel %vm328, %v6860, 0
    %v6901 = vsel %vm328, %v6861, 0
    %v6904 = vsel %vm328, %v6862, 0
    %v6907 = vsel %vm328, %v6863, 0
    %v6910 = vsel %vm328, %v6864, 0
    %6912 = vmatprep.subr.bf16.mxu0 0
    %6913 = vmatpush1.bf16.msra.mxu0 %v6884
    %6914 = vmatprep.subr.bf16.mxu0 0
    %6915 = vmatpush1.bf16.msra.mxu0 %v6885
    %6916 = vmatprep.subr.bf16.mxu0 0
    %6917 = vmatpush1.bf16.msra.mxu0 0
    %6918 = vmatprep.subr.bf16.mxu0 0
    %6919 = vmatpush1.bf16.msra.mxu0 0
    %6920 = vmatprep.subr.bf16.mxu0 0
    %6921 = vmatpush1.bf16.msra.mxu0 0
    %6922 = vmatprep.subr.bf16.mxu0 0
    %6923 = vmatpush1.bf16.msra.mxu0 0
    %6924 = vmatprep.subr.bf16.mxu0 0
    %6925 = vmatpush1.bf16.msra.mxu0 0
    %6926 = vmatprep.subr.bf16.mxu0 0
    %6927 = vmatpush1.bf16.msra.mxu0 0
    %6928 = vmatprep.subr.bf16.mxu0 0
    %6929 = vmatpush1.bf16.msra.mxu0 0
    %6930 = vmatprep.subr.bf16.mxu0 0
    %6931 = vmatpush1.bf16.msra.mxu0 0
    %6932 = vmatprep.subr.bf16.mxu0 0
    %6933 = vmatpush1.bf16.msra.mxu0 0
    %6934 = vmatprep.subr.bf16.mxu0 0
    %6935 = vmatpush1.bf16.msra.mxu0 0
    %6936 = vmatprep.subr.bf16.mxu0 0
    %6937 = vmatpush1.bf16.msra.mxu0 0
    %6938 = vmatprep.subr.bf16.mxu0 0
    %6939 = vmatpush1.bf16.msra.mxu0 0
    %6940 = vmatprep.subr.bf16.mxu0 0
    %6941 = vmatpush1.bf16.msra.mxu0 0
    %6942 = vmatprep.subr.bf16.mxu0 0
    %6943 = vmatpush1.bf16.msra.mxu0 0
    %6944 = vmatprep.mubr.bf16.mxu0 0
    %6945 = vmatmul.mubr.bf16.gmra.mrb[0].mxu0 %v6889
    %v6946 = vpop.f32.mrb[0].mxu0
    %v6947 = vadd.f32 %v6874, %v6946
    %v6948 = vpop.f32.mrb[0].mxu0
    %v6949 = vpop.f32.mrb[0].mxu0
    %v6950 = vadd.f32 %v6874, %v6949
    %v6951 = vpop.f32.mrb[0].mxu0
    %6952 = vmatprep.mubr.bf16.mxu0 0
    %6953 = vmatmul.mubr.bf16.gmra.mrb[0].mxu0 %v6892
    %v6954 = vpop.f32.mrb[0].mxu0
    %v6955 = vadd.f32 %v6874, %v6954
    %v6956 = vpop.f32.mrb[0].mxu0
    %v6957 = vpop.f32.mrb[0].mxu0
    %v6958 = vadd.f32 %v6874, %v6957
    %v6959 = vpop.f32.mrb[0].mxu0
    %6960 = vmatprep.mubr.bf16.mxu0 0
    %6961 = vmatmul.mubr.bf16.gmra.mrb[0].mxu0 %v6895
    %v6962 = vpop.f32.mrb[0].mxu0
    %v6963 = vadd.f32 %v6874, %v6962
    %v6964 = vpop.f32.mrb[0].mxu0
    %v6965 = vpop.f32.mrb[0].mxu0
    %v6966 = vadd.f32 %v6874, %v6965
    %v6967 = vpop.f32.mrb[0].mxu0
    %6968 = vmatprep.mubr.bf16.mxu0 0
    %6969 = vmatmul.mubr.bf16.gmra.mrb[0].mxu0 %v6898
    %v6970 = vpop.f32.mrb[0].mxu0
    %v6971 = vadd.f32 %v6874, %v6970
    %v6972 = vpop.f32.mrb[0].mxu0
    %v6973 = vpop.f32.mrb[0].mxu0
    %v6974 = vadd.f32 %v6874, %v6973
    %v6975 = vpop.f32.mrb[0].mxu0
    %6976 = vmatprep.mubr.bf16.mxu0 0
    %6977 = vmatmul.mubr.bf16.gmra.mrb[0].mxu0 %v6901
    %v6978 = vpop.f32.mrb[0].mxu0
    %v6979 = vadd.f32 %v6874, %v6978
    %v6980 = vpop.f32.mrb[0].mxu0
    %v6981 = vpop.f32.mrb[0].mxu0
    %v6982 = vadd.f32 %v6874, %v6981
    %v6983 = vpop.f32.mrb[0].mxu0
    %6984 = vmatprep.mubr.bf16.mxu0 0
    %6985 = vmatmul.mubr.bf16.gmra.mrb[0].mxu0 %v6904
    %v6986 = vpop.f32.mrb[0].mxu0
    %v6987 = vadd.f32 %v6874, %v6986
    %v6988 = vpop.f32.mrb[0].mxu0
    %v6989 = vpop.f32.mrb[0].mxu0
    %v6990 = vadd.f32 %v6874, %v6989
    %v6991 = vpop.f32.mrb[0].mxu0
    %6992 = vmatprep.mubr.bf16.mxu0 0
    %6993 = vmatmul.mubr.bf16.gmra.mrb[0].mxu0 %v6907
    %v6994 = vpop.f32.mrb[0].mxu0
    %v6995 = vadd.f32 %v6874, %v6994
    %v6996 = vpop.f32.mrb[0].mxu0
    %v6997 = vpop.f32.mrb[0].mxu0
    %v6998 = vadd.f32 %v6874, %v6997
    %v6999 = vpop.f32.mrb[0].mxu0
    %7000 = vmatprep.mubr.bf16.mxu0 0
    %7001 = vmatmul.mubr.bf16.gmra.mrb[0].mxu0 %v6910
    %v7002 = vpop.f32.mrb[0].mxu0
    %v7003 = vadd.f32 %v6874, %v7002
    %v7004 = vpop.f32.mrb[0].mxu0
    %v7005 = vpop.f32.mrb[0].mxu0
    %v7006 = vadd.f32 %v6874, %v7005
    %v7007 = vpop.f32.mrb[0].mxu0
    %7008 = vdwg.mxu0
    %v7009 = vpack.c.bf16 %v6950, %v6947
    %v7010 = vpack.c.bf16 %v6958, %v6955
    %v7011 = vpack.c.bf16 %v6966, %v6963
    %v7012 = vpack.c.bf16 %v6974, %v6971
    %v7013 = vpack.c.bf16 %v6982, %v6979
    %v7014 = vpack.c.bf16 %v6990, %v6987
    %v7015 = vpack.c.bf16 %v6998, %v6995
    %v7016 = vpack.c.bf16 %v7006, %v7003
    %v7017 = vld [vmem:[%s12] sm:$0xf]
    %v7018 = vld [vmem:[%s12 + $0x4] sm:$0xf]
    %v7019 = vld [vmem:[%s12 + $0x8] sm:$0xf]
    %v7020 = vld [vmem:[%s12 + $0xc] sm:$0xf]
    %v7021 = vld [vmem:[%s13] sm:$0x1]
    %v7023 = vlaneseq
    %v7024 = vshrl.u32 %v7023, 7
    %v7025 = vsub.s32 0, %v7024
    %v7026 = vrot.slane %v7021, %v7025
    %v7032 = vunpack.c.l.b16 %v7017
    %v7033 = vunpack.c.l.b16 %v7018
    %v7034 = vunpack.c.l.b16 %v7019
    %v7035 = vunpack.c.l.b16 %v7020
    %v7036 = vpack.c.b16 %v7033, %v7032
    %v7037 = vpack.c.b16 %v7035, %v7034
    %v7041 = vsel %vm328, %v7009, 0
    %v7044 = vsel %vm328, %v7010, 0
    %v7047 = vsel %vm328, %v7011, 0
    %v7050 = vsel %vm328, %v7012, 0
    %v7053 = vsel %vm328, %v7013, 0
    %v7056 = vsel %vm328, %v7014, 0
    %v7059 = vsel %vm328, %v7015, 0
    %v7062 = vsel %vm328, %v7016, 0
    %7064 = vmatprep.subr.bf16.mxu0 0
    %7065 = vmatpush1.bf16.msra.mxu0 %v7036
    %7066 = vmatprep.subr.bf16.mxu0 0
    %7067 = vmatpush1.bf16.msra.mxu0 %v7037
    %7068 = vmatprep.subr.bf16.mxu0 0
    %7069 = vmatpush1.bf16.msra.mxu0 0
    %7070 = vmatprep.subr.bf16.mxu0 0
    %7071 = vmatpush1.bf16.msra.mxu0 0
    %7072 = vmatprep.subr.bf16.mxu0 0
    %7073 = vmatpush1.bf16.msra.mxu0 0
    %7074 = vmatprep.subr.bf16.mxu0 0
    %7075 = vmatpush1.bf16.msra.mxu0 0
    %7076 = vmatprep.subr.bf16.mxu0 0
    %7077 = vmatpush1.bf16.msra.mxu0 0
    %7078 = vmatprep.subr.bf16.mxu0 0
    %7079 = vmatpush1.bf16.msra.mxu0 0
    %7080 = vmatprep.subr.bf16.mxu0 0
    %7081 = vmatpush1.bf16.msra.mxu0 0
    %7082 = vmatprep.subr.bf16.mxu0 0
    %7083 = vmatpush1.bf16.msra.mxu0 0
    %7084 = vmatprep.subr.bf16.mxu0 0
    %7085 = vmatpush1.bf16.msra.mxu0 0
    %7086 = vmatprep.subr.bf16.mxu0 0
    %7087 = vmatpush1.bf16.msra.mxu0 0
    %7088 = vmatprep.subr.bf16.mxu0 0
    %7089 = vmatpush1.bf16.msra.mxu0 0
    %7090 = vmatprep.subr.bf16.mxu0 0
    %7091 = vmatpush1.bf16.msra.mxu0 0
    %7092 = vmatprep.subr.bf16.mxu0 0
    %7093 = vmatpush1.bf16.msra.mxu0 0
    %7094 = vmatprep.subr.bf16.mxu0 0
    %7095 = vmatpush1.bf16.msra.mxu0 0
    %7096 = vmatprep.mubr.bf16.mxu0 0
    %7097 = vmatmul.mubr.bf16.gmra.mrb[0].mxu0 %v7041
    %v7098 = vpop.f32.mrb[0].mxu0
    %v7099 = vadd.f32 %v7026, %v7098
    %v7100 = vpop.f32.mrb[0].mxu0
    %v7101 = vpop.f32.mrb[0].mxu0
    %v7102 = vpop.f32.mrb[0].mxu0
    %7103 = vmatprep.mubr.bf16.mxu0 0
    %7104 = vmatmul.mubr.bf16.gmra.mrb[0].mxu0 %v7044
    %v7105 = vpop.f32.mrb[0].mxu0
    %v7106 = vadd.f32 %v7026, %v7105
    %v7107 = vpop.f32.mrb[0].mxu0
    %v7108 = vpop.f32.mrb[0].mxu0
    %v7109 = vpop.f32.mrb[0].mxu0
    %7110 = vmatprep.mubr.bf16.mxu0 0
    %7111 = vmatmul.mubr.bf16.gmra.mrb[0].mxu0 %v7047
    %v7112 = vpop.f32.mrb[0].mxu0
    %v7113 = vadd.f32 %v7026, %v7112
    %v7114 = vpop.f32.mrb[0].mxu0
    %v7115 = vpop.f32.mrb[0].mxu0
    %v7116 = vpop.f32.mrb[0].mxu0
    %7117 = vmatprep.mubr.bf16.mxu0 0
    %7118 = vmatmul.mubr.bf16.gmra.mrb[0].mxu0 %v7050
    %v7119 = vpop.f32.mrb[0].mxu0
    %v7120 = vadd.f32 %v7026, %v7119
    %v7121 = vpop.f32.mrb[0].mxu0
    %v7122 = vpop.f32.mrb[0].mxu0
    %v7123 = vpop.f32.mrb[0].mxu0
    %7124 = vmatprep.mubr.bf16.mxu0 0
    %7125 = vmatmul.mubr.bf16.gmra.mrb[0].mxu0 %v7053
    %v7126 = vpop.f32.mrb[0].mxu0
    %v7127 = vadd.f32 %v7026, %v7126
    %v7128 = vpop.f32.mrb[0].mxu0
    %v7129 = vpop.f32.mrb[0].mxu0
    %v7130 = vpop.f32.mrb[0].mxu0
    %7131 = vmatprep.mubr.bf16.mxu0 0
    %7132 = vmatmul.mubr.bf16.gmra.mrb[0].mxu0 %v7056
    %v7133 = vpop.f32.mrb[0].mxu0
    %v7134 = vadd.f32 %v7026, %v7133
    %v7135 = vpop.f32.mrb[0].mxu0
    %v7136 = vpop.f32.mrb[0].mxu0
    %v7137 = vpop.f32.mrb[0].mxu0
    %7138 = vmatprep.mubr.bf16.mxu0 0
    %7139 = vmatmul.mubr.bf16.gmra.mrb[0].mxu0 %v7059
    %v7140 = vpop.f32.mrb[0].mxu0
    %v7141 = vadd.f32 %v7026, %v7140
    %v7142 = vpop.f32.mrb[0].mxu0
    %v7143 = vpop.f32.mrb[0].mxu0
    %v7144 = vpop.f32.mrb[0].mxu0
    %7145 = vmatprep.mubr.bf16.mxu0 0
    %7146 = vmatmul.mubr.bf16.gmra.mrb[0].mxu0 %v7062
    %v7147 = vpop.f32.mrb[0].mxu0
    %v7148 = vadd.f32 %v7026, %v7147
    %v7149 = vpop.f32.mrb[0].mxu0
    %v7150 = vpop.f32.mrb[0].mxu0
    %v7151 = vpop.f32.mrb[0].mxu0
    %7152 = vdwg.mxu0
    %vm7153 = vcmask 253952
    %7154 = vst.msk [vmem:[#allocation2] sm:$0x1] %vm7153, %v6950
    %7155 = vst.msk [vmem:[#allocation2 + $0x1] sm:$0x1] %vm7153, %v6958
    %7156 = vst.msk [vmem:[#allocation2 + $0x2] sm:$0x1] %vm7153, %v6966
    %7157 = vst.msk [vmem:[#allocation2 + $0x3] sm:$0x1] %vm7153, %v6974
    %7158 = vst.msk [vmem:[#allocation2 + $0x4] sm:$0x1] %vm7153, %v6982
    %7159 = vst.msk [vmem:[#allocation2 + $0x5] sm:$0x1] %vm7153, %v6990
    %7160 = vst.msk [vmem:[#allocation2 + $0x6] sm:$0x1] %vm7153, %v6998
    %7161 = vst.msk [vmem:[#allocation2 + $0x7] sm:$0x1] %vm7153, %v7006
    %7162 = vst [vmem:[#allocation4] sm:$0xf] %v7099
    %7163 = vst [vmem:[#allocation4 + $0x4] sm:$0xf] %v7106
    %7164 = vst [vmem:[#allocation4 + $0x8] sm:$0xf] %v7113
    %7165 = vst [vmem:[#allocation4 + $0xc] sm:$0xf] %v7120
    %7166 = vst [vmem:[#allocation4 + $0x10] sm:$0xf] %v7127
    %7167 = vst [vmem:[#allocation4 + $0x14] sm:$0xf] %v7134
    %7168 = vst [vmem:[#allocation4 + $0x18] sm:$0xf] %v7141
    %7169 = vst [vmem:[#allocation4 + $0x1c] sm:$0xf] %v7148
    // Predicated region
    $region58: #{tpu_custom_call.1} parent=1 // pred_check
      _
    $region59: #{tpu_custom_call.1} parent=1 // pred_check_branch
      %7171 = sbr.rel (0) target = $region61
    $region60: #{tpu_custom_call.1} parent=1 // pred_region
      %s7173 = ssub.s32 128, 128
      %7174 = vsyncadd [#allocation3], %s7173
      %s7175 = sshll.u32 [#allocation2], 4
      %s7176 = int_to_ptr.vmem [resolvable:$true] %s7175
      %7181 = dma.vmem_to_hbm [thread:$0]  %s7176, 128, %s14, [#allocation3], 16, 16, 1
    $region61: #{tpu_custom_call.1} parent=1 // pred_fallthru
      _
    // Predicated region
    $region62: #{tpu_custom_call.1} parent=1 // pred_check
      _
    $region63: #{tpu_custom_call.1} parent=1 // pred_check_branch
      %7183 = sbr.rel (0) target = $region65
    $region64: #{tpu_custom_call.1} parent=1 // pred_region
      %s7185 = ssub.s32 512, 512
      %7186 = vsyncadd [#allocation5], %s7185
      %s7187 = sshll.u32 [#allocation4], 4
      %s7188 = int_to_ptr.vmem [resolvable:$true] %s7187
      %7193 = dma.vmem_to_hbm [thread:$0]  %s7188, 512, %s15, [#allocation5], 64, 64, 4
    $region65: #{tpu_custom_call.1} parent=1 // pred_fallthru
      _
    // Predicated region
    $region66: #{tpu_custom_call.1} parent=1 // pred_check
      _
    $region67: #{tpu_custom_call.1} parent=1 // pred_check_branch
      %7195 = sbr.rel (0) target = $region69
    $region68: #{tpu_custom_call.1} parent=1 // pred_region
      %7196 = dma.done [#allocation3], 128
    $region69: #{tpu_custom_call.1} parent=1 // pred_fallthru
      _
    // Predicated region
    $region70: #{tpu_custom_call.1} parent=1 // pred_check
      _
    $region71: #{tpu_custom_call.1} parent=1 // pred_check_branch
      %7198 = sbr.rel (0) target = $region73
    $region72: #{tpu_custom_call.1} parent=1 // pred_region
      %7199 = dma.done [#allocation5], 512
    $region73: #{tpu_custom_call.1} parent=1 // pred_fallthru
      _
    %7200 = vsyncpa [#allocation3], 1
    %7201 = vsyncpa [#allocation5], 1

</llo_original>
